<compile_context>
chip_gen: v7x
topology: tpu7x:2x2x1
jax: 0.10.0
libtpu: 0.0.40
codegen_flags: <defaults>
</compile_context>

<pallas_src>
import functools

import jax
import jax.numpy as jnp
from jax import lax
from jax.experimental import pallas as pl
from jax.experimental.pallas import tpu as pltpu


C_PAD = 128                                   # every layer padded to 128 ch
LAYER_DIMS = [(5, 64), (64, 128), (128, 128), (128, 2)]
N_LAYERS = len(LAYER_DIMS)


def generator_kernel(x_ref, w0_ref, w_ref, b_ref, o_ref, act, *, H, W, B):
    """Fused 4-layer 3x3-conv generator for a block of B images.

    x_ref  : (B, H*W, 128) bf16  wrapper-side im2col of layer 1 (45 real lanes)
    w0_ref : (128, 128)    bf16  layer-1 weights (45x64 real, zero-padded)
    w_ref  : (3, 9*128, 128) bf16  layers 2-4 im2col weights (zero-padded)
    b_ref  : (4, 128) f32        biases (zero-padded)
    o_ref  : (B, H*W, 128) f32   last-layer output (channels 0..1 valid)
    act    : (B, H*W, 128) f32   VMEM scratch, current activation per image
    """
    HW = H * W

    # Boundary-validity masks, shared across layers and batch.  The flattened
    # H*W axis wraps at row/image boundaries, so any tap that steps over an
    # image edge is zeroed here (this replaces the zero-padded halo buffer).
    i_flat = lax.broadcasted_iota(jnp.int32, (HW, 1), 0)
    x_col = i_flat % W
    m_l = x_col >= 1            # kw == 0 valid  (x-1 >= 0)
    m_r = x_col <= W - 2        # kw == 2 valid  (x+1 <  W)
    m_u = i_flat >= W           # kh == 0 valid  (y-1 >= 0)
    m_d = i_flat < HW - W       # kh == 2 valid  (y+1 <  H)

    w0 = w0_ref[...]            # (128,128) bf16, hoisted out of the batch loop

    for b in range(B):
        # ---- layer 1: wrapper-side im2col -> one K=128 MXU matmul ----------
        acc = jnp.dot(x_ref[b], w0, preferred_element_type=jnp.float32)
        acc = acc + b_ref[0:1, :]
        act[b] = jnp.maximum(acc, 0.0)          # padded channels stay zero

        # ---- layers 2..4: three accumulated K=384 matmuls per layer --------
        for li in range(1, N_LAYERS):
            a = act[b]                                          # (HW,128) f32

            # kh-row shifted copies (XLU roll + VPU mask); non-negative shifts.
            rows = (
                jnp.where(m_u, pltpu.roll(a, shift=W, axis=0), 0.0),       # y-1
                a,                                                          # y
                jnp.where(m_d, pltpu.roll(a, shift=HW - W, axis=0), 0.0),  # y+1
            )

            acc = None
            for kh in range(3):
                r = rows[kh]
                t_l = jnp.where(m_l, pltpu.roll(r, shift=1, axis=0), 0.0)      # x-1
                t_r = jnp.where(m_r, pltpu.roll(r, shift=HW - 1, axis=0), 0.0)  # x+1
                # (HW, 384) bf16 row-patch: lane-aligned concat of 3 taps.
                rp = jnp.concatenate(
                    [t_l.astype(jnp.bfloat16),
                     r.astype(jnp.bfloat16),
                     t_r.astype(jnp.bfloat16)], axis=1)
                w_row = w_ref[li - 1, kh * 3 * C_PAD:(kh + 1) * 3 * C_PAD, :]
                d = jnp.dot(rp, w_row, preferred_element_type=jnp.float32)
                acc = d if acc is None else acc + d

            acc = acc + b_ref[li:li + 1, :]
            if li < N_LAYERS - 1:
                act[b] = jnp.maximum(acc, 0.0)                  # ReLU, f32
            else:
                o_ref[b] = acc      # lane-dense unmasked store; ch >= 2 are 0


def init_params(key):
    """Deterministic init matching PyTorch Conv2d default (U(+-1/sqrt(fan_in)))."""
    params = []
    for (cin, cout) in LAYER_DIMS:
        key, kw_, kb_ = jax.random.split(key, 3)
        bound = 1.0 / jnp.sqrt(float(cin * 9))
        w = jax.random.uniform(kw_, (3, 3, cin, cout), jnp.float32, -bound, bound)
        b = jax.random.uniform(kb_, (cout,), jnp.float32, -bound, bound)
        params.append((w, b))
    return params


def prep_params(params):
    """Pad/flatten weights to the kernel layout and cast to bf16."""
    # Layer 1: wrapper-side im2col -> (9*5 -> 128, 64 -> 128) single K block.
    w, b = params[0]
    cin0, cout0 = LAYER_DIMS[0]
    w0 = jnp.zeros((C_PAD, C_PAD), jnp.float32)
    w0 = w0.at[:9 * cin0, :cout0].set(w.reshape(9 * cin0, cout0))
    b_list = [jnp.zeros((C_PAD,), jnp.float32).at[:cout0].set(b)]

    # Layers 2..4: im2col rows ordered (kh, kw, cin), channels padded to 128.
    w_list = []
    for (w, b) in params[1:]:
        cin, cout = w.shape[2], w.shape[3]
        wp = jnp.zeros((3, 3, C_PAD, C_PAD), jnp.float32)
        wp = wp.at[:, :, :cin, :cout].set(w)
        bp = jnp.zeros((C_PAD,), jnp.float32).at[:cout].set(b)
        w_list.append(wp.reshape(9 * C_PAD, C_PAD))
        b_list.append(bp)

    return (w0.astype(jnp.bfloat16),
            jnp.stack(w_list).astype(jnp.bfloat16),     # (3, 1152, 128)
            jnp.stack(b_list))                           # (4, 128) f32


def _pick_batch_block(N):
    """Images per grid step: amortize per-step overhead but keep grid >= 2."""
    for B in (8, 4, 2):
        if N % B == 0 and N // B >= 2:
            return B
    return 1


@jax.jit
def generator_forward(x_nchw, w0, w_rest, b_all):
    """Forward pass, semantics identical to the PyTorch Generator (NCHW in/out)."""
    N, C_in, H, W = x_nchw.shape
    HW = H * W
    assert C_in == LAYER_DIMS[0][0] and 9 * C_in <= C_PAD

    # Layer-1 im2col in the wrapper: (N,H,W,5) -> (N,HW,45) -> pad to 128
    # lanes, cast bf16 (halves input DMA; MXU operands are bf16 anyway).
    xh = jnp.transpose(x_nchw, (0, 2, 3, 1)).astype(jnp.float32)
    xp = jnp.pad(xh, ((0, 0), (1, 1), (1, 1), (0, 0)))
    taps = [xp[:, kh:kh + H, kw:kw + W, :] for kh in range(3) for kw in range(3)]
    patch = jnp.concatenate(taps, axis=-1).reshape(N, HW, 9 * C_in)
    patch = jnp.pad(patch, ((0, 0), (0, 0), (0, C_PAD - 9 * C_in)))
    patch = patch.astype(jnp.bfloat16)

    B = _pick_batch_block(N)
    kernel = functools.partial(generator_kernel, H=H, W=W, B=B)

    flops = 2 * N * HW * C_PAD * (C_PAD + 3 * 9 * C_PAD)
    bytes_accessed = (patch.size * 2 + w0.size * 2 + w_rest.size * 2
                      + b_all.size * 4 + N * HW * C_PAD * 4)

    out = pl.pallas_call(
        kernel,
        out_shape=jax.ShapeDtypeStruct((N, HW, C_PAD), jnp.float32),
        grid=(N // B,),
        in_specs=[
            pl.BlockSpec((B, HW, C_PAD), lambda n: (n, 0, 0)),
            pl.BlockSpec((C_PAD, C_PAD), lambda n: (0, 0)),
            pl.BlockSpec((N_LAYERS - 1, 9 * C_PAD, C_PAD), lambda n: (0, 0, 0)),
            pl.BlockSpec((N_LAYERS, C_PAD), lambda n: (0, 0)),
        ],
        out_specs=pl.BlockSpec((B, HW, C_PAD), lambda n: (n, 0, 0)),
        scratch_shapes=[
            pltpu.VMEM((B, HW, C_PAD), jnp.float32),     # current activations
        ],
        compiler_params=pltpu.CompilerParams(
            dimension_semantics=("parallel",)),
        cost_estimate=pl.CostEstimate(
            flops=flops, transcendentals=0, bytes_accessed=bytes_accessed),
    )(patch, w0, w_rest, b_all)

    # Channels 0..1 are the real A/B outputs; reshape straight to NCHW.
    ab = out[:, :, :2]
    return jnp.transpose(ab.reshape(N, H, W, 2), (0, 3, 1, 2))


def generator_reference(x_nchw, params):
    """Pure-JAX f32 reference (lax conv) for correctness checking."""
    h = jnp.transpose(x_nchw, (0, 2, 3, 1)).astype(jnp.float32)
    for i, (w, b) in enumerate(params):
        h = lax.conv_general_dilated(
            h, w, window_strides=(1, 1), padding="SAME",
            dimension_numbers=("NHWC", "HWIO", "NHWC"))
        h = h + b[None, None, None, :]
        if i < len(params) - 1:
            h = jnp.maximum(h, 0.0)
    return jnp.transpose(h, (0, 3, 1, 2))


if __name__ == "__main__":
    key = jax.random.PRNGKey(0)
    key, kx = jax.random.split(key)

    # Small NCHW input consistent with the module: 5 input channels.
    x = jax.random.normal(kx, (2, 5, 16, 16), dtype=jnp.float32)
    params = init_params(key)
    w0, w_rest, b_all = prep_params(params)

    out = generator_forward(x, w0, w_rest, b_all)
    out = jax.block_until_ready(out)

    ref = generator_reference(x, params)
    assert out.shape == (2, 2, 16, 16), out.shape
    # bf16 MXU operands (f32 accumulation) over 4 chained convs -> loose tol.
    err = float(jnp.max(jnp.abs(out - ref)))
    assert err < 5e-2, f"mismatch vs reference: max abs err {err}"

    print("KERNEL_OK")
</pallas_src>

<mosaic_0001>
module attributes {stable_mosaic.version = 11 : i64} {
  func.func @generator_kernel(%arg0: i32, %arg1: memref<1x256x128xbf16, #tpu.memory_space<vmem>>, %arg2: memref<128x128xbf16, #tpu.memory_space<vmem>>, %arg3: memref<3x1152x128xbf16, #tpu.memory_space<vmem>>, %arg4: memref<4x128xf32, #tpu.memory_space<vmem>>, %arg5: memref<1x256x128xf32, #tpu.memory_space<vmem>>, %arg6: memref<1x256x128xf32, #tpu.memory_space<vmem>>) attributes {dimension_semantics = [#tpu.dimension_semantics<parallel>], iteration_bounds = array<i64: 2>, scalar_prefetch = 0 : i64, scratch_operands = 1 : i64, tpu.core_type = #tpu.core_type<tc>, window_params = [{transform_indices = @transform_0, window_bounds = array<i64: 1, 256, 128>}, {pipeline_mode = #tpu.pipeline_mode<synchronous>, transform_indices = @transform_1, window_bounds = array<i64: 128, 128>}, {pipeline_mode = #tpu.pipeline_mode<synchronous>, transform_indices = @transform_2, window_bounds = array<i64: 3, 1152, 128>}, {pipeline_mode = #tpu.pipeline_mode<synchronous>, transform_indices = @transform_3, window_bounds = array<i64: 4, 128>}, {transform_indices = @transform_4, window_bounds = array<i64: 1, 256, 128>}]} {
    %0 = tpu.iota {dimensions = array<i32: 0>} : vector<256x1xi32>
    %c16_i32 = arith.constant 16 : i32
    %c0_i32 = arith.constant 0 : i32
    %1 = arith.cmpi eq, %c16_i32, %c0_i32 : i32
    %c1_i32 = arith.constant 1 : i32
    %2 = arith.select %1, %c1_i32, %c16_i32 : i32
    %3 = vector.broadcast %2 : i32 to vector<256x1xi32>
    %4 = arith.remsi %0, %3 : vector<256x1xi32>
    %c0_i32_0 = arith.constant 0 : i32
    %5 = vector.broadcast %c0_i32_0 : i32 to vector<256x1xi32>
    %6 = arith.cmpi ne, %4, %5 : vector<256x1xi32>
    %c0_i32_1 = arith.constant 0 : i32
    %7 = vector.broadcast %c0_i32_1 : i32 to vector<256x1xi32>
    %8 = arith.cmpi slt, %4, %7 : vector<256x1xi32>
    %c0_i32_2 = arith.constant 0 : i32
    %9 = arith.cmpi slt, %2, %c0_i32_2 : i32
    %10 = vector.broadcast %9 : i1 to vector<256x1xi1>
    %11 = vector.broadcast %10 : vector<256x1xi1> to vector<256x1xi1>
    %12 = arith.xori %8, %11 : vector<256x1xi1>
    %13 = arith.andi %12, %6 : vector<256x1xi1>
    %14 = vector.broadcast %2 : i32 to vector<256x1xi32>
    %15 = arith.addi %4, %14 : vector<256x1xi32>
    %16 = arith.select %13, %15, %4 : vector<256x1xi1>, vector<256x1xi32>
    %c1_i32_3 = arith.constant 1 : i32
    %17 = vector.broadcast %c1_i32_3 : i32 to vector<256x1xi32>
    %18 = arith.cmpi sge, %16, %17 : vector<256x1xi32>
    %c14_i32 = arith.constant 14 : i32
    %19 = vector.broadcast %c14_i32 : i32 to vector<256x1xi32>
    %20 = arith.cmpi sle, %16, %19 : vector<256x1xi32>
    %c16_i32_4 = arith.constant 16 : i32
    %21 = vector.broadcast %c16_i32_4 : i32 to vector<256x1xi32>
    %22 = arith.cmpi sge, %0, %21 : vector<256x1xi32>
    %c240_i32 = arith.constant 240 : i32
    %23 = vector.broadcast %c240_i32 : i32 to vector<256x1xi32>
    %24 = arith.cmpi slt, %0, %23 : vector<256x1xi32>
    %c0 = arith.constant 0 : index
    %c0_5 = arith.constant 0 : index
    %25 = vector.load %arg2[%c0, %c0_5] : memref<128x128xbf16, #tpu.memory_space<vmem>>, vector<128x128xbf16>
    %c0_6 = arith.constant 0 : index
    %c0_7 = arith.constant 0 : index
    %c0_8 = arith.constant 0 : index
    %26 = vector.load %arg1[%c0_6, %c0_7, %c0_8] : memref<1x256x128xbf16, #tpu.memory_space<vmem>>, vector<1x256x128xbf16>
    %27 = vector.shape_cast %26 : vector<1x256x128xbf16> to vector<256x128xbf16>
    %cst = arith.constant dense<0.000000e+00> : vector<256x128xf32>
    %28 = tpu.matmul %27, %25, %cst {dimension_numbers = #tpu.dot_dimension_numbers<[1], [0], [0], [1], [0, 0, 1, 1], [], []>} : vector<256x128xbf16>, vector<128x128xbf16>, vector<256x128xf32> -> vector<256x128xf32>
    %c0_9 = arith.constant 0 : index
    %c0_10 = arith.constant 0 : index
    %29 = vector.load %arg4[%c0_9, %c0_10] : memref<4x128xf32, #tpu.memory_space<vmem>>, vector<1x128xf32>
    %30 = vector.broadcast %29 : vector<1x128xf32> to vector<256x128xf32>
    %31 = arith.addf %28, %30 : vector<256x128xf32>
    %cst_11 = arith.constant 0.000000e+00 : f32
    %32 = vector.broadcast %cst_11 : f32 to vector<256x128xf32>
    %33 = arith.maximumf %31, %32 : vector<256x128xf32>
    %c0_12 = arith.constant 0 : index
    %c0_13 = arith.constant 0 : index
    %c0_14 = arith.constant 0 : index
    %34 = vector.load %arg6[%c0_12, %c0_13, %c0_14] : memref<1x256x128xf32, #tpu.memory_space<vmem>>, vector<1x256x128xf32>
    %35 = vector.shape_cast %34 : vector<1x256x128xf32> to vector<256x128xf32>
    %36 = vector.shape_cast %33 : vector<256x128xf32> to vector<1x256x128xf32>
    tpu.vector_store %arg6[%c0_12, %c0_13, %c0_14], %36 {strides = array<i32>} : memref<1x256x128xf32, #tpu.memory_space<vmem>>, vector<1x256x128xf32>,
    %c0_15 = arith.constant 0 : index
    %c0_16 = arith.constant 0 : index
    %c0_17 = arith.constant 0 : index
    %37 = vector.load %arg6[%c0_15, %c0_16, %c0_17] : memref<1x256x128xf32, #tpu.memory_space<vmem>>, vector<1x256x128xf32>
    %38 = vector.shape_cast %37 : vector<1x256x128xf32> to vector<256x128xf32>
    %c16_i32_18 = arith.constant 16 : i32
    %39 = tpu.dynamic_rotate %38 by %c16_i32_18 dim 0 : vector<256x128xf32>, i32 -> vector<256x128xf32>
    %cst_19 = arith.constant 0.000000e+00 : f32
    %40 = vector.shape_cast %22 : vector<256x1xi1> to vector<256x1xi1>
    %41 = vector.broadcast %40 : vector<256x1xi1> to vector<256x128xi1>
    %42 = vector.broadcast %cst_19 : f32 to vector<256x128xf32>
    %43 = arith.select %41, %39, %42 : vector<256x128xi1>, vector<256x128xf32>
    %c240_i32_20 = arith.constant 240 : i32
    %44 = tpu.dynamic_rotate %38 by %c240_i32_20 dim 0 : vector<256x128xf32>, i32 -> vector<256x128xf32>
    %cst_21 = arith.constant 0.000000e+00 : f32
    %45 = vector.shape_cast %24 : vector<256x1xi1> to vector<256x1xi1>
    %46 = vector.broadcast %45 : vector<256x1xi1> to vector<256x128xi1>
    %47 = vector.broadcast %cst_21 : f32 to vector<256x128xf32>
    %48 = arith.select %46, %44, %47 : vector<256x128xi1>, vector<256x128xf32>
    %c1_i32_22 = arith.constant 1 : i32
    %49 = tpu.dynamic_rotate %43 by %c1_i32_22 dim 0 : vector<256x128xf32>, i32 -> vector<256x128xf32>
    %cst_23 = arith.constant 0.000000e+00 : f32
    %50 = vector.shape_cast %18 : vector<256x1xi1> to vector<256x1xi1>
    %51 = vector.broadcast %50 : vector<256x1xi1> to vector<256x128xi1>
    %52 = vector.broadcast %cst_23 : f32 to vector<256x128xf32>
    %53 = arith.select %51, %49, %52 : vector<256x128xi1>, vector<256x128xf32>
    %c255_i32 = arith.constant 255 : i32
    %54 = tpu.dynamic_rotate %43 by %c255_i32 dim 0 : vector<256x128xf32>, i32 -> vector<256x128xf32>
    %cst_24 = arith.constant 0.000000e+00 : f32
    %55 = vector.shape_cast %20 : vector<256x1xi1> to vector<256x1xi1>
    %56 = vector.broadcast %55 : vector<256x1xi1> to vector<256x128xi1>
    %57 = vector.broadcast %cst_24 : f32 to vector<256x128xf32>
    %58 = arith.select %56, %54, %57 : vector<256x128xi1>, vector<256x128xf32>
    %59 = arith.truncf %53 : vector<256x128xf32> to vector<256x128xbf16>
    %60 = arith.truncf %43 : vector<256x128xf32> to vector<256x128xbf16>
    %61 = arith.truncf %58 : vector<256x128xf32> to vector<256x128xbf16>
    %62 = tpu.concatenate %59, %60, %61 in 1 : vector<256x128xbf16>, vector<256x128xbf16>, vector<256x128xbf16> -> vector<256x384xbf16>
    %c0_25 = arith.constant 0 : index
    %c0_26 = arith.constant 0 : index
    %c0_27 = arith.constant 0 : index
    %63 = vector.load %arg3[%c0_25, %c0_26, %c0_27] : memref<3x1152x128xbf16, #tpu.memory_space<vmem>>, vector<1x384x128xbf16>
    %64 = vector.shape_cast %63 : vector<1x384x128xbf16> to vector<384x128xbf16>
    %cst_28 = arith.constant dense<0.000000e+00> : vector<256x128xf32>
    %65 = tpu.matmul %62, %64, %cst_28 {dimension_numbers = #tpu.dot_dimension_numbers<[1], [0], [0], [1], [0, 0, 1, 1], [], []>} : vector<256x384xbf16>, vector<384x128xbf16>, vector<256x128xf32> -> vector<256x128xf32>
    %c1_i32_29 = arith.constant 1 : i32
    %66 = tpu.dynamic_rotate %38 by %c1_i32_29 dim 0 : vector<256x128xf32>, i32 -> vector<256x128xf32>
    %cst_30 = arith.constant 0.000000e+00 : f32
    %67 = vector.shape_cast %18 : vector<256x1xi1> to vector<256x1xi1>
    %68 = vector.broadcast %67 : vector<256x1xi1> to vector<256x128xi1>
    %69 = vector.broadcast %cst_30 : f32 to vector<256x128xf32>
    %70 = arith.select %68, %66, %69 : vector<256x128xi1>, vector<256x128xf32>
    %c255_i32_31 = arith.constant 255 : i32
    %71 = tpu.dynamic_rotate %38 by %c255_i32_31 dim 0 : vector<256x128xf32>, i32 -> vector<256x128xf32>
    %cst_32 = arith.constant 0.000000e+00 : f32
    %72 = vector.shape_cast %20 : vector<256x1xi1> to vector<256x1xi1>
    %73 = vector.broadcast %72 : vector<256x1xi1> to vector<256x128xi1>
    %74 = vector.broadcast %cst_32 : f32 to vector<256x128xf32>
    %75 = arith.select %73, %71, %74 : vector<256x128xi1>, vector<256x128xf32>
    %76 = arith.truncf %70 : vector<256x128xf32> to vector<256x128xbf16>
    %77 = arith.truncf %38 : vector<256x128xf32> to vector<256x128xbf16>
    %78 = arith.truncf %75 : vector<256x128xf32> to vector<256x128xbf16>
    %79 = tpu.concatenate %76, %77, %78 in 1 : vector<256x128xbf16>, vector<256x128xbf16>, vector<256x128xbf16> -> vector<256x384xbf16>
    %c0_33 = arith.constant 0 : index
    %c384 = arith.constant 384 : index
    %c0_34 = arith.constant 0 : index
    %80 = vector.load %arg3[%c0_33, %c384, %c0_34] : memref<3x1152x128xbf16, #tpu.memory_space<vmem>>, vector<1x384x128xbf16>
    %81 = vector.shape_cast %80 : vector<1x384x128xbf16> to vector<384x128xbf16>
    %cst_35 = arith.constant dense<0.000000e+00> : vector<256x128xf32>
    %82 = tpu.matmul %79, %81, %cst_35 {dimension_numbers = #tpu.dot_dimension_numbers<[1], [0], [0], [1], [0, 0, 1, 1], [], []>} : vector<256x384xbf16>, vector<384x128xbf16>, vector<256x128xf32> -> vector<256x128xf32>
    %83 = arith.addf %65, %82 : vector<256x128xf32>
    %c1_i32_36 = arith.constant 1 : i32
    %84 = tpu.dynamic_rotate %48 by %c1_i32_36 dim 0 : vector<256x128xf32>, i32 -> vector<256x128xf32>
    %cst_37 = arith.constant 0.000000e+00 : f32
    %85 = vector.shape_cast %18 : vector<256x1xi1> to vector<256x1xi1>
    %86 = vector.broadcast %85 : vector<256x1xi1> to vector<256x128xi1>
    %87 = vector.broadcast %cst_37 : f32 to vector<256x128xf32>
    %88 = arith.select %86, %84, %87 : vector<256x128xi1>, vector<256x128xf32>
    %c255_i32_38 = arith.constant 255 : i32
    %89 = tpu.dynamic_rotate %48 by %c255_i32_38 dim 0 : vector<256x128xf32>, i32 -> vector<256x128xf32>
    %cst_39 = arith.constant 0.000000e+00 : f32
    %90 = vector.shape_cast %20 : vector<256x1xi1> to vector<256x1xi1>
    %91 = vector.broadcast %90 : vector<256x1xi1> to vector<256x128xi1>
    %92 = vector.broadcast %cst_39 : f32 to vector<256x128xf32>
    %93 = arith.select %91, %89, %92 : vector<256x128xi1>, vector<256x128xf32>
    %94 = arith.truncf %88 : vector<256x128xf32> to vector<256x128xbf16>
    %95 = arith.truncf %48 : vector<256x128xf32> to vector<256x128xbf16>
    %96 = arith.truncf %93 : vector<256x128xf32> to vector<256x128xbf16>
    %97 = tpu.concatenate %94, %95, %96 in 1 : vector<256x128xbf16>, vector<256x128xbf16>, vector<256x128xbf16> -> vector<256x384xbf16>
    %c0_40 = arith.constant 0 : index
    %c768 = arith.constant 768 : index
    %c0_41 = arith.constant 0 : index
    %98 = vector.load %arg3[%c0_40, %c768, %c0_41] : memref<3x1152x128xbf16, #tpu.memory_space<vmem>>, vector<1x384x128xbf16>
    %99 = vector.shape_cast %98 : vector<1x384x128xbf16> to vector<384x128xbf16>
    %cst_42 = arith.constant dense<0.000000e+00> : vector<256x128xf32>
    %100 = tpu.matmul %97, %99, %cst_42 {dimension_numbers = #tpu.dot_dimension_numbers<[1], [0], [0], [1], [0, 0, 1, 1], [], []>} : vector<256x384xbf16>, vector<384x128xbf16>, vector<256x128xf32> -> vector<256x128xf32>
    %101 = arith.addf %83, %100 : vector<256x128xf32>
    %c1 = arith.constant 1 : index
    %c0_43 = arith.constant 0 : index
    %102 = vector.load %arg4[%c1, %c0_43] : memref<4x128xf32, #tpu.memory_space<vmem>>, vector<1x128xf32>
    %103 = vector.broadcast %102 : vector<1x128xf32> to vector<256x128xf32>
    %104 = arith.addf %101, %103 : vector<256x128xf32>
    %cst_44 = arith.constant 0.000000e+00 : f32
    %105 = vector.broadcast %cst_44 : f32 to vector<256x128xf32>
    %106 = arith.maximumf %104, %105 : vector<256x128xf32>
    %c0_45 = arith.constant 0 : index
    %c0_46 = arith.constant 0 : index
    %c0_47 = arith.constant 0 : index
    %107 = vector.load %arg6[%c0_45, %c0_46, %c0_47] : memref<1x256x128xf32, #tpu.memory_space<vmem>>, vector<1x256x128xf32>
    %108 = vector.shape_cast %107 : vector<1x256x128xf32> to vector<256x128xf32>
    %109 = vector.shape_cast %106 : vector<256x128xf32> to vector<1x256x128xf32>
    tpu.vector_store %arg6[%c0_45, %c0_46, %c0_47], %109 {strides = array<i32>} : memref<1x256x128xf32, #tpu.memory_space<vmem>>, vector<1x256x128xf32>,
    %c0_48 = arith.constant 0 : index
    %c0_49 = arith.constant 0 : index
    %c0_50 = arith.constant 0 : index
    %110 = vector.load %arg6[%c0_48, %c0_49, %c0_50] : memref<1x256x128xf32, #tpu.memory_space<vmem>>, vector<1x256x128xf32>
    %111 = vector.shape_cast %110 : vector<1x256x128xf32> to vector<256x128xf32>
    %c16_i32_51 = arith.constant 16 : i32
    %112 = tpu.dynamic_rotate %111 by %c16_i32_51 dim 0 : vector<256x128xf32>, i32 -> vector<256x128xf32>
    %cst_52 = arith.constant 0.000000e+00 : f32
    %113 = vector.shape_cast %22 : vector<256x1xi1> to vector<256x1xi1>
    %114 = vector.broadcast %113 : vector<256x1xi1> to vector<256x128xi1>
    %115 = vector.broadcast %cst_52 : f32 to vector<256x128xf32>
    %116 = arith.select %114, %112, %115 : vector<256x128xi1>, vector<256x128xf32>
    %c240_i32_53 = arith.constant 240 : i32
    %117 = tpu.dynamic_rotate %111 by %c240_i32_53 dim 0 : vector<256x128xf32>, i32 -> vector<256x128xf32>
    %cst_54 = arith.constant 0.000000e+00 : f32
    %118 = vector.shape_cast %24 : vector<256x1xi1> to vector<256x1xi1>
    %119 = vector.broadcast %118 : vector<256x1xi1> to vector<256x128xi1>
    %120 = vector.broadcast %cst_54 : f32 to vector<256x128xf32>
    %121 = arith.select %119, %117, %120 : vector<256x128xi1>, vector<256x128xf32>
    %c1_i32_55 = arith.constant 1 : i32
    %122 = tpu.dynamic_rotate %116 by %c1_i32_55 dim 0 : vector<256x128xf32>, i32 -> vector<256x128xf32>
    %cst_56 = arith.constant 0.000000e+00 : f32
    %123 = vector.shape_cast %18 : vector<256x1xi1> to vector<256x1xi1>
    %124 = vector.broadcast %123 : vector<256x1xi1> to vector<256x128xi1>
    %125 = vector.broadcast %cst_56 : f32 to vector<256x128xf32>
    %126 = arith.select %124, %122, %125 : vector<256x128xi1>, vector<256x128xf32>
    %c255_i32_57 = arith.constant 255 : i32
    %127 = tpu.dynamic_rotate %116 by %c255_i32_57 dim 0 : vector<256x128xf32>, i32 -> vector<256x128xf32>
    %cst_58 = arith.constant 0.000000e+00 : f32
    %128 = vector.shape_cast %20 : vector<256x1xi1> to vector<256x1xi1>
    %129 = vector.broadcast %128 : vector<256x1xi1> to vector<256x128xi1>
    %130 = vector.broadcast %cst_58 : f32 to vector<256x128xf32>
    %131 = arith.select %129, %127, %130 : vector<256x128xi1>, vector<256x128xf32>
    %132 = arith.truncf %126 : vector<256x128xf32> to vector<256x128xbf16>
    %133 = arith.truncf %116 : vector<256x128xf32> to vector<256x128xbf16>
    %134 = arith.truncf %131 : vector<256x128xf32> to vector<256x128xbf16>
    %135 = tpu.concatenate %132, %133, %134 in 1 : vector<256x128xbf16>, vector<256x128xbf16>, vector<256x128xbf16> -> vector<256x384xbf16>
    %c1_59 = arith.constant 1 : index
    %c0_60 = arith.constant 0 : index
    %c0_61 = arith.constant 0 : index
    %136 = vector.load %arg3[%c1_59, %c0_60, %c0_61] : memref<3x1152x128xbf16, #tpu.memory_space<vmem>>, vector<1x384x128xbf16>
    %137 = vector.shape_cast %136 : vector<1x384x128xbf16> to vector<384x128xbf16>
    %cst_62 = arith.constant dense<0.000000e+00> : vector<256x128xf32>
    %138 = tpu.matmul %135, %137, %cst_62 {dimension_numbers = #tpu.dot_dimension_numbers<[1], [0], [0], [1], [0, 0, 1, 1], [], []>} : vector<256x384xbf16>, vector<384x128xbf16>, vector<256x128xf32> -> vector<256x128xf32>
    %c1_i32_63 = arith.constant 1 : i32
    %139 = tpu.dynamic_rotate %111 by %c1_i32_63 dim 0 : vector<256x128xf32>, i32 -> vector<256x128xf32>
    %cst_64 = arith.constant 0.000000e+00 : f32
    %140 = vector.shape_cast %18 : vector<256x1xi1> to vector<256x1xi1>
    %141 = vector.broadcast %140 : vector<256x1xi1> to vector<256x128xi1>
    %142 = vector.broadcast %cst_64 : f32 to vector<256x128xf32>
    %143 = arith.select %141, %139, %142 : vector<256x128xi1>, vector<256x128xf32>
    %c255_i32_65 = arith.constant 255 : i32
    %144 = tpu.dynamic_rotate %111 by %c255_i32_65 dim 0 : vector<256x128xf32>, i32 -> vector<256x128xf32>
    %cst_66 = arith.constant 0.000000e+00 : f32
    %145 = vector.shape_cast %20 : vector<256x1xi1> to vector<256x1xi1>
    %146 = vector.broadcast %145 : vector<256x1xi1> to vector<256x128xi1>
    %147 = vector.broadcast %cst_66 : f32 to vector<256x128xf32>
    %148 = arith.select %146, %144, %147 : vector<256x128xi1>, vector<256x128xf32>
    %149 = arith.truncf %143 : vector<256x128xf32> to vector<256x128xbf16>
    %150 = arith.truncf %111 : vector<256x128xf32> to vector<256x128xbf16>
    %151 = arith.truncf %148 : vector<256x128xf32> to vector<256x128xbf16>
    %152 = tpu.concatenate %149, %150, %151 in 1 : vector<256x128xbf16>, vector<256x128xbf16>, vector<256x128xbf16> -> vector<256x384xbf16>
    %c1_67 = arith.constant 1 : index
    %c384_68 = arith.constant 384 : index
    %c0_69 = arith.constant 0 : index
    %153 = vector.load %arg3[%c1_67, %c384_68, %c0_69] : memref<3x1152x128xbf16, #tpu.memory_space<vmem>>, vector<1x384x128xbf16>
    %154 = vector.shape_cast %153 : vector<1x384x128xbf16> to vector<384x128xbf16>
    %cst_70 = arith.constant dense<0.000000e+00> : vector<256x128xf32>
    %155 = tpu.matmul %152, %154, %cst_70 {dimension_numbers = #tpu.dot_dimension_numbers<[1], [0], [0], [1], [0, 0, 1, 1], [], []>} : vector<256x384xbf16>, vector<384x128xbf16>, vector<256x128xf32> -> vector<256x128xf32>
    %156 = arith.addf %138, %155 : vector<256x128xf32>
    %c1_i32_71 = arith.constant 1 : i32
    %157 = tpu.dynamic_rotate %121 by %c1_i32_71 dim 0 : vector<256x128xf32>, i32 -> vector<256x128xf32>
    %cst_72 = arith.constant 0.000000e+00 : f32
    %158 = vector.shape_cast %18 : vector<256x1xi1> to vector<256x1xi1>
    %159 = vector.broadcast %158 : vector<256x1xi1> to vector<256x128xi1>
    %160 = vector.broadcast %cst_72 : f32 to vector<256x128xf32>
    %161 = arith.select %159, %157, %160 : vector<256x128xi1>, vector<256x128xf32>
    %c255_i32_73 = arith.constant 255 : i32
    %162 = tpu.dynamic_rotate %121 by %c255_i32_73 dim 0 : vector<256x128xf32>, i32 -> vector<256x128xf32>
    %cst_74 = arith.constant 0.000000e+00 : f32
    %163 = vector.shape_cast %20 : vector<256x1xi1> to vector<256x1xi1>
    %164 = vector.broadcast %163 : vector<256x1xi1> to vector<256x128xi1>
    %165 = vector.broadcast %cst_74 : f32 to vector<256x128xf32>
    %166 = arith.select %164, %162, %165 : vector<256x128xi1>, vector<256x128xf32>
    %167 = arith.truncf %161 : vector<256x128xf32> to vector<256x128xbf16>
    %168 = arith.truncf %121 : vector<256x128xf32> to vector<256x128xbf16>
    %169 = arith.truncf %166 : vector<256x128xf32> to vector<256x128xbf16>
    %170 = tpu.concatenate %167, %168, %169 in 1 : vector<256x128xbf16>, vector<256x128xbf16>, vector<256x128xbf16> -> vector<256x384xbf16>
    %c1_75 = arith.constant 1 : index
    %c768_76 = arith.constant 768 : index
    %c0_77 = arith.constant 0 : index
    %171 = vector.load %arg3[%c1_75, %c768_76, %c0_77] : memref<3x1152x128xbf16, #tpu.memory_space<vmem>>, vector<1x384x128xbf16>
    %172 = vector.shape_cast %171 : vector<1x384x128xbf16> to vector<384x128xbf16>
    %cst_78 = arith.constant dense<0.000000e+00> : vector<256x128xf32>
    %173 = tpu.matmul %170, %172, %cst_78 {dimension_numbers = #tpu.dot_dimension_numbers<[1], [0], [0], [1], [0, 0, 1, 1], [], []>} : vector<256x384xbf16>, vector<384x128xbf16>, vector<256x128xf32> -> vector<256x128xf32>
    %174 = arith.addf %156, %173 : vector<256x128xf32>
    %c2 = arith.constant 2 : index
    %c0_79 = arith.constant 0 : index
    %175 = vector.load %arg4[%c2, %c0_79] : memref<4x128xf32, #tpu.memory_space<vmem>>, vector<1x128xf32>
    %176 = vector.broadcast %175 : vector<1x128xf32> to vector<256x128xf32>
    %177 = arith.addf %174, %176 : vector<256x128xf32>
    %cst_80 = arith.constant 0.000000e+00 : f32
    %178 = vector.broadcast %cst_80 : f32 to vector<256x128xf32>
    %179 = arith.maximumf %177, %178 : vector<256x128xf32>
    %c0_81 = arith.constant 0 : index
    %c0_82 = arith.constant 0 : index
    %c0_83 = arith.constant 0 : index
    %180 = vector.load %arg6[%c0_81, %c0_82, %c0_83] : memref<1x256x128xf32, #tpu.memory_space<vmem>>, vector<1x256x128xf32>
    %181 = vector.shape_cast %180 : vector<1x256x128xf32> to vector<256x128xf32>
    %182 = vector.shape_cast %179 : vector<256x128xf32> to vector<1x256x128xf32>
    tpu.vector_store %arg6[%c0_81, %c0_82, %c0_83], %182 {strides = array<i32>} : memref<1x256x128xf32, #tpu.memory_space<vmem>>, vector<1x256x128xf32>,
    %c0_84 = arith.constant 0 : index
    %c0_85 = arith.constant 0 : index
    %c0_86 = arith.constant 0 : index
    %183 = vector.load %arg6[%c0_84, %c0_85, %c0_86] : memref<1x256x128xf32, #tpu.memory_space<vmem>>, vector<1x256x128xf32>
    %184 = vector.shape_cast %183 : vector<1x256x128xf32> to vector<256x128xf32>
    %c16_i32_87 = arith.constant 16 : i32
    %185 = tpu.dynamic_rotate %184 by %c16_i32_87 dim 0 : vector<256x128xf32>, i32 -> vector<256x128xf32>
    %cst_88 = arith.constant 0.000000e+00 : f32
    %186 = vector.shape_cast %22 : vector<256x1xi1> to vector<256x1xi1>
    %187 = vector.broadcast %186 : vector<256x1xi1> to vector<256x128xi1>
    %188 = vector.broadcast %cst_88 : f32 to vector<256x128xf32>
    %189 = arith.select %187, %185, %188 : vector<256x128xi1>, vector<256x128xf32>
    %c240_i32_89 = arith.constant 240 : i32
    %190 = tpu.dynamic_rotate %184 by %c240_i32_89 dim 0 : vector<256x128xf32>, i32 -> vector<256x128xf32>
    %cst_90 = arith.constant 0.000000e+00 : f32
    %191 = vector.shape_cast %24 : vector<256x1xi1> to vector<256x1xi1>
    %192 = vector.broadcast %191 : vector<256x1xi1> to vector<256x128xi1>
    %193 = vector.broadcast %cst_90 : f32 to vector<256x128xf32>
    %194 = arith.select %192, %190, %193 : vector<256x128xi1>, vector<256x128xf32>
    %c1_i32_91 = arith.constant 1 : i32
    %195 = tpu.dynamic_rotate %189 by %c1_i32_91 dim 0 : vector<256x128xf32>, i32 -> vector<256x128xf32>
    %cst_92 = arith.constant 0.000000e+00 : f32
    %196 = vector.shape_cast %18 : vector<256x1xi1> to vector<256x1xi1>
    %197 = vector.broadcast %196 : vector<256x1xi1> to vector<256x128xi1>
    %198 = vector.broadcast %cst_92 : f32 to vector<256x128xf32>
    %199 = arith.select %197, %195, %198 : vector<256x128xi1>, vector<256x128xf32>
    %c255_i32_93 = arith.constant 255 : i32
    %200 = tpu.dynamic_rotate %189 by %c255_i32_93 dim 0 : vector<256x128xf32>, i32 -> vector<256x128xf32>
    %cst_94 = arith.constant 0.000000e+00 : f32
    %201 = vector.shape_cast %20 : vector<256x1xi1> to vector<256x1xi1>
    %202 = vector.broadcast %201 : vector<256x1xi1> to vector<256x128xi1>
    %203 = vector.broadcast %cst_94 : f32 to vector<256x128xf32>
    %204 = arith.select %202, %200, %203 : vector<256x128xi1>, vector<256x128xf32>
    %205 = arith.truncf %199 : vector<256x128xf32> to vector<256x128xbf16>
    %206 = arith.truncf %189 : vector<256x128xf32> to vector<256x128xbf16>
    %207 = arith.truncf %204 : vector<256x128xf32> to vector<256x128xbf16>
    %208 = tpu.concatenate %205, %206, %207 in 1 : vector<256x128xbf16>, vector<256x128xbf16>, vector<256x128xbf16> -> vector<256x384xbf16>
    %c2_95 = arith.constant 2 : index
    %c0_96 = arith.constant 0 : index
    %c0_97 = arith.constant 0 : index
    %209 = vector.load %arg3[%c2_95, %c0_96, %c0_97] : memref<3x1152x128xbf16, #tpu.memory_space<vmem>>, vector<1x384x128xbf16>
    %210 = vector.shape_cast %209 : vector<1x384x128xbf16> to vector<384x128xbf16>
    %cst_98 = arith.constant dense<0.000000e+00> : vector<256x128xf32>
    %211 = tpu.matmul %208, %210, %cst_98 {dimension_numbers = #tpu.dot_dimension_numbers<[1], [0], [0], [1], [0, 0, 1, 1], [], []>} : vector<256x384xbf16>, vector<384x128xbf16>, vector<256x128xf32> -> vector<256x128xf32>
    %c1_i32_99 = arith.constant 1 : i32
    %212 = tpu.dynamic_rotate %184 by %c1_i32_99 dim 0 : vector<256x128xf32>, i32 -> vector<256x128xf32>
    %cst_100 = arith.constant 0.000000e+00 : f32
    %213 = vector.shape_cast %18 : vector<256x1xi1> to vector<256x1xi1>
    %214 = vector.broadcast %213 : vector<256x1xi1> to vector<256x128xi1>
    %215 = vector.broadcast %cst_100 : f32 to vector<256x128xf32>
    %216 = arith.select %214, %212, %215 : vector<256x128xi1>, vector<256x128xf32>
    %c255_i32_101 = arith.constant 255 : i32
    %217 = tpu.dynamic_rotate %184 by %c255_i32_101 dim 0 : vector<256x128xf32>, i32 -> vector<256x128xf32>
    %cst_102 = arith.constant 0.000000e+00 : f32
    %218 = vector.shape_cast %20 : vector<256x1xi1> to vector<256x1xi1>
    %219 = vector.broadcast %218 : vector<256x1xi1> to vector<256x128xi1>
    %220 = vector.broadcast %cst_102 : f32 to vector<256x128xf32>
    %221 = arith.select %219, %217, %220 : vector<256x128xi1>, vector<256x128xf32>
    %222 = arith.truncf %216 : vector<256x128xf32> to vector<256x128xbf16>
    %223 = arith.truncf %184 : vector<256x128xf32> to vector<256x128xbf16>
    %224 = arith.truncf %221 : vector<256x128xf32> to vector<256x128xbf16>
    %225 = tpu.concatenate %222, %223, %224 in 1 : vector<256x128xbf16>, vector<256x128xbf16>, vector<256x128xbf16> -> vector<256x384xbf16>
    %c2_103 = arith.constant 2 : index
    %c384_104 = arith.constant 384 : index
    %c0_105 = arith.constant 0 : index
    %226 = vector.load %arg3[%c2_103, %c384_104, %c0_105] : memref<3x1152x128xbf16, #tpu.memory_space<vmem>>, vector<1x384x128xbf16>
    %227 = vector.shape_cast %226 : vector<1x384x128xbf16> to vector<384x128xbf16>
    %cst_106 = arith.constant dense<0.000000e+00> : vector<256x128xf32>
    %228 = tpu.matmul %225, %227, %cst_106 {dimension_numbers = #tpu.dot_dimension_numbers<[1], [0], [0], [1], [0, 0, 1, 1], [], []>} : vector<256x384xbf16>, vector<384x128xbf16>, vector<256x128xf32> -> vector<256x128xf32>
    %229 = arith.addf %211, %228 : vector<256x128xf32>
    %c1_i32_107 = arith.constant 1 : i32
    %230 = tpu.dynamic_rotate %194 by %c1_i32_107 dim 0 : vector<256x128xf32>, i32 -> vector<256x128xf32>
    %cst_108 = arith.constant 0.000000e+00 : f32
    %231 = vector.shape_cast %18 : vector<256x1xi1> to vector<256x1xi1>
    %232 = vector.broadcast %231 : vector<256x1xi1> to vector<256x128xi1>
    %233 = vector.broadcast %cst_108 : f32 to vector<256x128xf32>
    %234 = arith.select %232, %230, %233 : vector<256x128xi1>, vector<256x128xf32>
    %c255_i32_109 = arith.constant 255 : i32
    %235 = tpu.dynamic_rotate %194 by %c255_i32_109 dim 0 : vector<256x128xf32>, i32 -> vector<256x128xf32>
    %cst_110 = arith.constant 0.000000e+00 : f32
    %236 = vector.shape_cast %20 : vector<256x1xi1> to vector<256x1xi1>
    %237 = vector.broadcast %236 : vector<256x1xi1> to vector<256x128xi1>
    %238 = vector.broadcast %cst_110 : f32 to vector<256x128xf32>
    %239 = arith.select %237, %235, %238 : vector<256x128xi1>, vector<256x128xf32>
    %240 = arith.truncf %234 : vector<256x128xf32> to vector<256x128xbf16>
    %241 = arith.truncf %194 : vector<256x128xf32> to vector<256x128xbf16>
    %242 = arith.truncf %239 : vector<256x128xf32> to vector<256x128xbf16>
    %243 = tpu.concatenate %240, %241, %242 in 1 : vector<256x128xbf16>, vector<256x128xbf16>, vector<256x128xbf16> -> vector<256x384xbf16>
    %c2_111 = arith.constant 2 : index
    %c768_112 = arith.constant 768 : index
    %c0_113 = arith.constant 0 : index
    %244 = vector.load %arg3[%c2_111, %c768_112, %c0_113] : memref<3x1152x128xbf16, #tpu.memory_space<vmem>>, vector<1x384x128xbf16>
    %245 = vector.shape_cast %244 : vector<1x384x128xbf16> to vector<384x128xbf16>
    %cst_114 = arith.constant dense<0.000000e+00> : vector<256x128xf32>
    %246 = tpu.matmul %243, %245, %cst_114 {dimension_numbers = #tpu.dot_dimension_numbers<[1], [0], [0], [1], [0, 0, 1, 1], [], []>} : vector<256x384xbf16>, vector<384x128xbf16>, vector<256x128xf32> -> vector<256x128xf32>
    %247 = arith.addf %229, %246 : vector<256x128xf32>
    %c3 = arith.constant 3 : index
    %c0_115 = arith.constant 0 : index
    %248 = vector.load %arg4[%c3, %c0_115] : memref<4x128xf32, #tpu.memory_space<vmem>>, vector<1x128xf32>
    %249 = vector.broadcast %248 : vector<1x128xf32> to vector<256x128xf32>
    %250 = arith.addf %247, %249 : vector<256x128xf32>
    %c0_116 = arith.constant 0 : index
    %c0_117 = arith.constant 0 : index
    %c0_118 = arith.constant 0 : index
    %251 = vector.load %arg5[%c0_116, %c0_117, %c0_118] : memref<1x256x128xf32, #tpu.memory_space<vmem>>, vector<1x256x128xf32>
    %252 = vector.shape_cast %251 : vector<1x256x128xf32> to vector<256x128xf32>
    %253 = vector.shape_cast %250 : vector<256x128xf32> to vector<1x256x128xf32>
    tpu.vector_store %arg5[%c0_116, %c0_117, %c0_118], %253 {strides = array<i32>} : memref<1x256x128xf32, #tpu.memory_space<vmem>>, vector<1x256x128xf32>,
    return
  }
  func.func @transform_0(%arg0: i32) -> (i32, i32, i32) {
    %c0_i32 = arith.constant 0 : i32
    %c0_i32_0 = arith.constant 0 : i32
    %c0_i32_1 = arith.constant 0 : i32
    return %arg0, %c0_i32, %c0_i32_0 : i32, i32, i32
  }
  func.func @transform_1(%arg0: i32) -> (i32, i32) {
    %c0_i32 = arith.constant 0 : i32
    %c0_i32_0 = arith.constant 0 : i32
    %c0_i32_1 = arith.constant 0 : i32
    return %c0_i32, %c0_i32_0 : i32, i32
  }
  func.func @transform_2(%arg0: i32) -> (i32, i32, i32) {
    %c0_i32 = arith.constant 0 : i32
    %c0_i32_0 = arith.constant 0 : i32
    %c0_i32_1 = arith.constant 0 : i32
    %c0_i32_2 = arith.constant 0 : i32
    return %c0_i32, %c0_i32_0, %c0_i32_1 : i32, i32, i32
  }
  func.func @transform_3(%arg0: i32) -> (i32, i32) {
    %c0_i32 = arith.constant 0 : i32
    %c0_i32_0 = arith.constant 0 : i32
    %c0_i32_1 = arith.constant 0 : i32
    return %c0_i32, %c0_i32_0 : i32, i32
  }
  func.func @transform_4(%arg0: i32) -> (i32, i32, i32) {
    %c0_i32 = arith.constant 0 : i32
    %c0_i32_0 = arith.constant 0 : i32
    %c0_i32_1 = arith.constant 0 : i32
    return %arg0, %c0_i32, %c0_i32_0 : i32, i32, i32
  }
}

</mosaic_0001>

<llo_original>
// kernel: generator_forward.1
$region0: #{generator_forward.1}
  #allocation0 [shape = 'u32[]', space=smem, size = 0x4, offset = 0x4, fixed_abs, tag = 'smem constant byte address 0x4 - core index']
  #allocation1 [shape = 'u32[144,128]{1,0:T(1,128)}', space=vmem, size = 0x12000, scoped, tag = 'internal scratch']
  #allocation2 [shape = 'f32[1,256,128]{2,1,0:T(8,128)}', space=vmem, size = 0x20000, scoped, tag = 'scratch operand']
  %s0 = inlined_call_operand.vmem [shape: bf16[2,256,128], index: 0, kind: input, shape index: {}]
  %s1 = inlined_call_operand.vmem [shape: bf16[128,128], index: 1, kind: input, shape index: {}]
  %s2 = inlined_call_operand.vmem [shape: bf16[3,1152,128], index: 2, kind: input, shape index: {}]
  %s3 = inlined_call_operand.vmem [shape: f32[4,128], index: 3, kind: input, shape index: {}]
  %s4 = inlined_call_operand.vmem [shape: f32[2,256,128], index: 4, kind: output, shape index: {}]
  %s5 = sld [smem:[#allocation0]]
  $region49: #{generator_forward.1} parent=0
    _
  %s7 = ssub.s32 1, %s5
  %s8 = scalar_select 0, %s7, %s5
  loop: start=0, step=1, limit=4
  $region2: #{generator_forward.1} parent=0 // loop_pre_header
    _
  $region3: #{generator_forward.1} parent=0 // loop_header
    %s10 = sphi 0, %s14
    %p11 = scmp.ge.s32.totalorder %s10, 4
    %s20 = sphi 0, %s22
    %s23 = sphi 0, %s20
    %s24 = sphi 0, %s23
    %s40 = sphi 0, %s24
    %s44 = sphi 0, %s44
    %s46 = sphi 0, %s44
    %s47 = sphi 0, %s46
    %s61 = sphi 0, %s47
    %s65 = sphi 0, %s65
    %s67 = sphi 0, %s65
    %s68 = sphi 0, %s67
    %s82 = sphi 0, %s68
    %s86 = sphi 0, %s86
    %s88 = sphi 0, %s86
    %s89 = sphi 0, %s88
    %s103 = sphi 0, %s89
    %s109 = sphi 0, %s111
    %s112 = sphi 0, %s109
    %s113 = sphi 0, %s112
    %s129 = sphi 0, %s113
  $region4: #{generator_forward.1} parent=0 // loop_header_branch
    %13 = sbr.rel (%p11) target = $region8
  $region5: #{generator_forward.1} parent=0 // loop_body
    %s15 = ssub.s32 %s10, 1
    %s16 = ssub.s32 %s10, 2
    %s17 = sadd.s32 %s10, 1
    %s18 = ssub.s32 %s10, %s17
    %p19 = scmp.eq.s32.totalorder %s18, 0
    %s21 = sadd.s32 %s20, 1
    %s22 = scalar_select %p19, %s20, %s21
    %p25 = pneg %p19
    %p26 = scmp.eq.s32.totalorder %s10, 1
    %p27 = por %p25, %p26
    %p28 = scmp.ne.s32.totalorder %s20, %s23
    %p29 = scmp.eq.s32.totalorder %s10, 0
    %p30 = por %p28, %p29
    %p31 = scmp.ne.s32.totalorder %s20, %s23
    %p32 = scmp.eq.s32.totalorder %s15, 1
    %p33 = por %p31, %p32
    %p34 = scmp.ne.s32.totalorder %s23, %s24
    %p35 = scmp.eq.s32.totalorder %s15, 0
    %p36 = por %p34, %p35
    %p37 = scmp.ne.s32.totalorder %s23, %s24
    %p38 = scmp.eq.s32.totalorder %s16, 1
    %p39 = por %p37, %p38
    %p41 = scmp.ne.s32.totalorder %s24, %s40
    %p42 = scmp.eq.s32.totalorder %s16, 0
    %p43 = por %p41, %p42
    %s45 = sadd.s32 %s44, 1
    %p48 = scmp.eq.s32.totalorder %s10, 1
    %p49 = scmp.ne.s32.totalorder %s44, %s46
    %p50 = scmp.eq.s32.totalorder %s10, 0
    %p51 = por %p49, %p50
    %p52 = scmp.ne.s32.totalorder %s44, %s46
    %p53 = scmp.eq.s32.totalorder %s15, 1
    %p54 = por %p52, %p53
    %p55 = scmp.ne.s32.totalorder %s46, %s47
    %p56 = scmp.eq.s32.totalorder %s15, 0
    %p57 = por %p55, %p56
    %p58 = scmp.ne.s32.totalorder %s46, %s47
    %p59 = scmp.eq.s32.totalorder %s16, 1
    %p60 = por %p58, %p59
    %p62 = scmp.ne.s32.totalorder %s47, %s61
    %p63 = scmp.eq.s32.totalorder %s16, 0
    %p64 = por %p62, %p63
    %s66 = sadd.s32 %s65, 1
    %p69 = scmp.eq.s32.totalorder %s10, 1
    %p70 = scmp.ne.s32.totalorder %s65, %s67
    %p71 = scmp.eq.s32.totalorder %s10, 0
    %p72 = por %p70, %p71
    %p73 = scmp.ne.s32.totalorder %s65, %s67
    %p74 = scmp.eq.s32.totalorder %s15, 1
    %p75 = por %p73, %p74
    %p76 = scmp.ne.s32.totalorder %s67, %s68
    %p77 = scmp.eq.s32.totalorder %s15, 0
    %p78 = por %p76, %p77
    %p79 = scmp.ne.s32.totalorder %s67, %s68
    %p80 = scmp.eq.s32.totalorder %s16, 1
    %p81 = por %p79, %p80
    %p83 = scmp.ne.s32.totalorder %s68, %s82
    %p84 = scmp.eq.s32.totalorder %s16, 0
    %p85 = por %p83, %p84
    %s87 = sadd.s32 %s86, 1
    %p90 = scmp.eq.s32.totalorder %s10, 1
    %p91 = scmp.ne.s32.totalorder %s86, %s88
    %p92 = scmp.eq.s32.totalorder %s10, 0
    %p93 = por %p91, %p92
    %p94 = scmp.ne.s32.totalorder %s86, %s88
    %p95 = scmp.eq.s32.totalorder %s15, 1
    %p96 = por %p94, %p95
    %p97 = scmp.ne.s32.totalorder %s88, %s89
    %p98 = scmp.eq.s32.totalorder %s15, 0
    %p99 = por %p97, %p98
    %p100 = scmp.ne.s32.totalorder %s88, %s89
    %p101 = scmp.eq.s32.totalorder %s16, 1
    %p102 = por %p100, %p101
    %p104 = scmp.ne.s32.totalorder %s89, %s103
    %p105 = scmp.eq.s32.totalorder %s16, 0
    %p106 = por %p104, %p105
    %s107 = ssub.s32 %s10, %s17
    %p108 = scmp.eq.s32.totalorder %s107, 0
    %s110 = sadd.s32 %s109, 1
    %s111 = scalar_select %p108, %s109, %s110
    %p114 = pneg %p108
    %p115 = scmp.eq.s32.totalorder %s10, 1
    %p116 = por %p114, %p115
    %p117 = scmp.ne.s32.totalorder %s109, %s112
    %p118 = scmp.eq.s32.totalorder %s10, 0
    %p119 = por %p117, %p118
    %p120 = scmp.ne.s32.totalorder %s109, %s112
    %p121 = scmp.eq.s32.totalorder %s15, 1
    %p122 = por %p120, %p121
    %p123 = scmp.ne.s32.totalorder %s112, %s113
    %p124 = scmp.eq.s32.totalorder %s15, 0
    %p125 = por %p123, %p124
    %p126 = scmp.ne.s32.totalorder %s112, %s113
    %p127 = scmp.eq.s32.totalorder %s16, 1
    %p128 = por %p126, %p127
    %p130 = scmp.ne.s32.totalorder %s113, %s129
    %p131 = scmp.eq.s32.totalorder %s16, 0
    %p132 = por %p130, %p131
    %p133 = scmp.le.s32.totalorder 1, %s10
    %p134 = scmp.lt.s32.totalorder %s10, 3
    %p135 = pnand %p133, %p134
    %p136 = pneg %p135
    // Predicated region
    $region9: #{generator_forward.1} parent=5 // pred_check
      _
    $region10: #{generator_forward.1} parent=5 // pred_check_branch
      %138 = sbr.rel (%p135) target = $region12
    $region11: #{generator_forward.1} parent=5 // pred_region
      %s139 = ssub.s32 %s10, 1
      // Predicated region
      $region13: #{generator_forward.1} parent=11 // pred_check
        %p140 = pneg %p57
      $region14: #{generator_forward.1} parent=11 // pred_check_branch
        %142 = sbr.rel (%p140) target = $region16
      $region15: #{generator_forward.1} parent=11 // pred_region
        _
      $region16: #{generator_forward.1} parent=11 // pred_fallthru
        _
      // Predicated region
      $region17: #{generator_forward.1} parent=11 // pred_check
        %p143 = pneg %p78
      $region18: #{generator_forward.1} parent=11 // pred_check_branch
        %145 = sbr.rel (%p143) target = $region20
      $region19: #{generator_forward.1} parent=11 // pred_region
        _
      $region20: #{generator_forward.1} parent=11 // pred_fallthru
        _
      // Predicated region
      $region21: #{generator_forward.1} parent=11 // pred_check
        %p146 = pneg %p99
      $region22: #{generator_forward.1} parent=11 // pred_check_branch
        %148 = sbr.rel (%p146) target = $region24
      $region23: #{generator_forward.1} parent=11 // pred_region
        _
      $region24: #{generator_forward.1} parent=11 // pred_fallthru
        _
    $region12: #{generator_forward.1} parent=5 // pred_fallthru
      _
    %p149 = scmp.lt.s32.totalorder %s10, 2
    // Predicated region
    $region25: #{generator_forward.1} parent=5 // pred_check
      %p150 = pneg %p149
    $region26: #{generator_forward.1} parent=5 // pred_check_branch
      %152 = sbr.rel (%p150) target = $region28
    $region27: #{generator_forward.1} parent=5 // pred_region
      // Predicated region
      $region29: #{generator_forward.1} parent=27 // pred_check
        %p153 = pneg %p30
      $region30: #{generator_forward.1} parent=27 // pred_check_branch
        %155 = sbr.rel (%p153) target = $region32
      $region31: #{generator_forward.1} parent=27 // pred_region
        %p156 = scmp.lt.s32.totalorder %s10, 1
        %s157 = scalar_select %p156, %s10, 1
        %s158 = smul.addr %s157, 32
        %s159 = smul.addr %s158, 4
        %s160 = scalar_lea.vmem %s0, %s159
      $region32: #{generator_forward.1} parent=27 // pred_fallthru
        _
    $region28: #{generator_forward.1} parent=5 // pred_fallthru
      _
    %p161 = scmp.le.s32.totalorder 1, %s10
    %p162 = scmp.lt.s32.totalorder %s10, 3
    %p163 = pnand %p161, %p162
    %p164 = pneg %p163
    // Predicated region
    $region33: #{generator_forward.1} parent=5 // pred_check
      _
    $region34: #{generator_forward.1} parent=5 // pred_check_branch
      %166 = sbr.rel (%p163) target = $region36
    $region35: #{generator_forward.1} parent=5 // pred_region
      %s167 = ssub.s32 %s10, 1
      %p168 = scmp.lt.s32.totalorder %s15, 1
      %s169 = scalar_select %p168, %s15, 1
      %s170 = smul.addr %s169, 32
      %s171 = smul.addr %s170, 4
      %s172 = scalar_lea.vmem %s0, %s171
      %p173 = pneg %p36
      %p174 = pneg %p33
      %p175 = pneg %p57
      %p176 = pneg %p54
      %p177 = pneg %p78
      %p178 = pneg %p75
      %p179 = pneg %p99
      %p180 = pneg %p96
      %p181 = pneg %p125
      %p182 = pneg %p122
      %p183 = scmp.lt.s32.totalorder %s15, 1
      %s184 = scalar_select %p183, %s15, 1
      %s185 = smul.addr %s184, 32
      %s186 = smul.addr %s185, 8
      %s187 = scalar_lea.vmem %s4, %s186
      %p188 = scmp.lt.s32.totalorder %s15, 1
      %s189 = scalar_select %p188, %s15, 1
      %s190 = smul.addr %s189, 32
      %s191 = smul.addr %s190, 4
      %s192 = scalar_lea.vmem %s0, %s191
      %p193 = scmp.lt.s32.totalorder %s15, 1
      %s194 = scalar_select %p193, %s15, 1
      %s195 = smul.addr %s194, 32
      %s196 = smul.addr %s195, 8
      %s197 = scalar_lea.vmem %s4, %s196
      %v199 = vlaneseq
      %v200 = vshrl.u32 %v199, 7
      %v201 = vadd.s32 %v200, 8
      %v202 = vadd.s32 %v200, 16
      %v203 = vadd.s32 %v200, 24
      %v204 = vadd.s32 %v200, 32
      %v205 = vadd.s32 %v200, 40
      %v206 = vadd.s32 %v200, 48
      %v207 = vadd.s32 %v200, 56
      %v208 = vadd.s32 %v200, 64
      %v209 = vadd.s32 %v200, 72
      %v210 = vadd.s32 %v200, 80
      %v211 = vadd.s32 %v200, 88
      %v212 = vadd.s32 %v200, 96
      %v213 = vadd.s32 %v200, 104
      %v214 = vadd.s32 %v200, 112
      %v215 = vadd.s32 %v200, 120
      %v216 = vadd.s32 %v200, 128
      %v217 = vadd.s32 %v200, 136
      %v218 = vadd.s32 %v200, 144
      %v219 = vadd.s32 %v200, 152
      %v220 = vadd.s32 %v200, 160
      %v221 = vadd.s32 %v200, 168
      %v222 = vadd.s32 %v200, 176
      %v223 = vadd.s32 %v200, 184
      %v224 = vadd.s32 %v200, 192
      %v225 = vadd.s32 %v200, 200
      %v226 = vadd.s32 %v200, 208
      %v227 = vadd.s32 %v200, 216
      %v228 = vadd.s32 %v200, 224
      %v229 = vadd.s32 %v200, 232
      %v230 = vadd.s32 %v200, 240
      %v231 = vadd.s32 %v200, 248
      %vm232 = vcmp.lt.s32.totalorder %v200, 0
      %v233 = vsub.s32 0, %v200
      %v234 = vsel %vm232, %v233, %v200
      %v235 = vshrl.u32 %v234, 4
      %v236 = vand.u32 %v234, 15
      %v237 = vsub.s32 0, %v236
      %v238 = vsel %vm232, %v237, %v236
      %vm239 = vcmp.lt.s32.totalorder %v201, 0
      %v240 = vsub.s32 0, %v201
      %v241 = vsel %vm239, %v240, %v201
      %v242 = vshrl.u32 %v241, 4
      %v243 = vand.u32 %v241, 15
      %v244 = vsub.s32 0, %v243
      %v245 = vsel %vm239, %v244, %v243
      %vm246 = vcmp.lt.s32.totalorder %v202, 0
      %v247 = vsub.s32 0, %v202
      %v248 = vsel %vm246, %v247, %v202
      %v249 = vshrl.u32 %v248, 4
      %v250 = vand.u32 %v248, 15
      %v251 = vsub.s32 0, %v250
      %v252 = vsel %vm246, %v251, %v250
      %vm253 = vcmp.lt.s32.totalorder %v203, 0
      %v254 = vsub.s32 0, %v203
      %v255 = vsel %vm253, %v254, %v203
      %v256 = vshrl.u32 %v255, 4
      %v257 = vand.u32 %v255, 15
      %v258 = vsub.s32 0, %v257
      %v259 = vsel %vm253, %v258, %v257
      %vm260 = vcmp.lt.s32.totalorder %v204, 0
      %v261 = vsub.s32 0, %v204
      %v262 = vsel %vm260, %v261, %v204
      %v263 = vshrl.u32 %v262, 4
      %v264 = vand.u32 %v262, 15
      %v265 = vsub.s32 0, %v264
      %v266 = vsel %vm260, %v265, %v264
      %vm267 = vcmp.lt.s32.totalorder %v205, 0
      %v268 = vsub.s32 0, %v205
      %v269 = vsel %vm267, %v268, %v205
      %v270 = vshrl.u32 %v269, 4
      %v271 = vand.u32 %v269, 15
      %v272 = vsub.s32 0, %v271
      %v273 = vsel %vm267, %v272, %v271
      %vm274 = vcmp.lt.s32.totalorder %v206, 0
      %v275 = vsub.s32 0, %v206
      %v276 = vsel %vm274, %v275, %v206
      %v277 = vshrl.u32 %v276, 4
      %v278 = vand.u32 %v276, 15
      %v279 = vsub.s32 0, %v278
      %v280 = vsel %vm274, %v279, %v278
      %vm281 = vcmp.lt.s32.totalorder %v207, 0
      %v282 = vsub.s32 0, %v207
      %v283 = vsel %vm281, %v282, %v207
      %v284 = vshrl.u32 %v283, 4
      %v285 = vand.u32 %v283, 15
      %v286 = vsub.s32 0, %v285
      %v287 = vsel %vm281, %v286, %v285
      %vm288 = vcmp.lt.s32.totalorder %v208, 0
      %v289 = vsub.s32 0, %v208
      %v290 = vsel %vm288, %v289, %v208
      %v291 = vshrl.u32 %v290, 4
      %v292 = vand.u32 %v290, 15
      %v293 = vsub.s32 0, %v292
      %v294 = vsel %vm288, %v293, %v292
      %vm295 = vcmp.lt.s32.totalorder %v209, 0
      %v296 = vsub.s32 0, %v209
      %v297 = vsel %vm295, %v296, %v209
      %v298 = vshrl.u32 %v297, 4
      %v299 = vand.u32 %v297, 15
      %v300 = vsub.s32 0, %v299
      %v301 = vsel %vm295, %v300, %v299
      %vm302 = vcmp.lt.s32.totalorder %v210, 0
      %v303 = vsub.s32 0, %v210
      %v304 = vsel %vm302, %v303, %v210
      %v305 = vshrl.u32 %v304, 4
      %v306 = vand.u32 %v304, 15
      %v307 = vsub.s32 0, %v306
      %v308 = vsel %vm302, %v307, %v306
      %vm309 = vcmp.lt.s32.totalorder %v211, 0
      %v310 = vsub.s32 0, %v211
      %v311 = vsel %vm309, %v310, %v211
      %v312 = vshrl.u32 %v311, 4
      %v313 = vand.u32 %v311, 15
      %v314 = vsub.s32 0, %v313
      %v315 = vsel %vm309, %v314, %v313
      %vm316 = vcmp.lt.s32.totalorder %v212, 0
      %v317 = vsub.s32 0, %v212
      %v318 = vsel %vm316, %v317, %v212
      %v319 = vshrl.u32 %v318, 4
      %v320 = vand.u32 %v318, 15
      %v321 = vsub.s32 0, %v320
      %v322 = vsel %vm316, %v321, %v320
      %vm323 = vcmp.lt.s32.totalorder %v213, 0
      %v324 = vsub.s32 0, %v213
      %v325 = vsel %vm323, %v324, %v213
      %v326 = vshrl.u32 %v325, 4
      %v327 = vand.u32 %v325, 15
      %v328 = vsub.s32 0, %v327
      %v329 = vsel %vm323, %v328, %v327
      %vm330 = vcmp.lt.s32.totalorder %v214, 0
      %v331 = vsub.s32 0, %v214
      %v332 = vsel %vm330, %v331, %v214
      %v333 = vshrl.u32 %v332, 4
      %v334 = vand.u32 %v332, 15
      %v335 = vsub.s32 0, %v334
      %v336 = vsel %vm330, %v335, %v334
      %vm337 = vcmp.lt.s32.totalorder %v215, 0
      %v338 = vsub.s32 0, %v215
      %v339 = vsel %vm337, %v338, %v215
      %v340 = vshrl.u32 %v339, 4
      %v341 = vand.u32 %v339, 15
      %v342 = vsub.s32 0, %v341
      %v343 = vsel %vm337, %v342, %v341
      %vm344 = vcmp.lt.s32.totalorder %v216, 0
      %v345 = vsub.s32 0, %v216
      %v346 = vsel %vm344, %v345, %v216
      %v347 = vshrl.u32 %v346, 4
      %v348 = vand.u32 %v346, 15
      %v349 = vsub.s32 0, %v348
      %v350 = vsel %vm344, %v349, %v348
      %vm351 = vcmp.lt.s32.totalorder %v217, 0
      %v352 = vsub.s32 0, %v217
      %v353 = vsel %vm351, %v352, %v217
      %v354 = vshrl.u32 %v353, 4
      %v355 = vand.u32 %v353, 15
      %v356 = vsub.s32 0, %v355
      %v357 = vsel %vm351, %v356, %v355
      %vm358 = vcmp.lt.s32.totalorder %v218, 0
      %v359 = vsub.s32 0, %v218
      %v360 = vsel %vm358, %v359, %v218
      %v361 = vshrl.u32 %v360, 4
      %v362 = vand.u32 %v360, 15
      %v363 = vsub.s32 0, %v362
      %v364 = vsel %vm358, %v363, %v362
      %vm365 = vcmp.lt.s32.totalorder %v219, 0
      %v366 = vsub.s32 0, %v219
      %v367 = vsel %vm365, %v366, %v219
      %v368 = vshrl.u32 %v367, 4
      %v369 = vand.u32 %v367, 15
      %v370 = vsub.s32 0, %v369
      %v371 = vsel %vm365, %v370, %v369
      %vm372 = vcmp.lt.s32.totalorder %v220, 0
      %v373 = vsub.s32 0, %v220
      %v374 = vsel %vm372, %v373, %v220
      %v375 = vshrl.u32 %v374, 4
      %v376 = vand.u32 %v374, 15
      %v377 = vsub.s32 0, %v376
      %v378 = vsel %vm372, %v377, %v376
      %vm379 = vcmp.lt.s32.totalorder %v221, 0
      %v380 = vsub.s32 0, %v221
      %v381 = vsel %vm379, %v380, %v221
      %v382 = vshrl.u32 %v381, 4
      %v383 = vand.u32 %v381, 15
      %v384 = vsub.s32 0, %v383
      %v385 = vsel %vm379, %v384, %v383
      %vm386 = vcmp.lt.s32.totalorder %v222, 0
      %v387 = vsub.s32 0, %v222
      %v388 = vsel %vm386, %v387, %v222
      %v389 = vshrl.u32 %v388, 4
      %v390 = vand.u32 %v388, 15
      %v391 = vsub.s32 0, %v390
      %v392 = vsel %vm386, %v391, %v390
      %vm393 = vcmp.lt.s32.totalorder %v223, 0
      %v394 = vsub.s32 0, %v223
      %v395 = vsel %vm393, %v394, %v223
      %v396 = vshrl.u32 %v395, 4
      %v397 = vand.u32 %v395, 15
      %v398 = vsub.s32 0, %v397
      %v399 = vsel %vm393, %v398, %v397
      %vm400 = vcmp.lt.s32.totalorder %v224, 0
      %v401 = vsub.s32 0, %v224
      %v402 = vsel %vm400, %v401, %v224
      %v403 = vshrl.u32 %v402, 4
      %v404 = vand.u32 %v402, 15
      %v405 = vsub.s32 0, %v404
      %v406 = vsel %vm400, %v405, %v404
      %vm407 = vcmp.lt.s32.totalorder %v225, 0
      %v408 = vsub.s32 0, %v225
      %v409 = vsel %vm407, %v408, %v225
      %v410 = vshrl.u32 %v409, 4
      %v411 = vand.u32 %v409, 15
      %v412 = vsub.s32 0, %v411
      %v413 = vsel %vm407, %v412, %v411
      %vm414 = vcmp.lt.s32.totalorder %v226, 0
      %v415 = vsub.s32 0, %v226
      %v416 = vsel %vm414, %v415, %v226
      %v417 = vshrl.u32 %v416, 4
      %v418 = vand.u32 %v416, 15
      %v419 = vsub.s32 0, %v418
      %v420 = vsel %vm414, %v419, %v418
      %vm421 = vcmp.lt.s32.totalorder %v227, 0
      %v422 = vsub.s32 0, %v227
      %v423 = vsel %vm421, %v422, %v227
      %v424 = vshrl.u32 %v423, 4
      %v425 = vand.u32 %v423, 15
      %v426 = vsub.s32 0, %v425
      %v427 = vsel %vm421, %v426, %v425
      %vm428 = vcmp.lt.s32.totalorder %v228, 0
      %v429 = vsub.s32 0, %v228
      %v430 = vsel %vm428, %v429, %v228
      %v431 = vshrl.u32 %v430, 4
      %v432 = vand.u32 %v430, 15
      %v433 = vsub.s32 0, %v432
      %v434 = vsel %vm428, %v433, %v432
      %vm435 = vcmp.lt.s32.totalorder %v229, 0
      %v436 = vsub.s32 0, %v229
      %v437 = vsel %vm435, %v436, %v229
      %v438 = vshrl.u32 %v437, 4
      %v439 = vand.u32 %v437, 15
      %v440 = vsub.s32 0, %v439
      %v441 = vsel %vm435, %v440, %v439
      %vm442 = vcmp.lt.s32.totalorder %v230, 0
      %v443 = vsub.s32 0, %v230
      %v444 = vsel %vm442, %v443, %v230
      %v445 = vshrl.u32 %v444, 4
      %v446 = vand.u32 %v444, 15
      %v447 = vsub.s32 0, %v446
      %v448 = vsel %vm442, %v447, %v446
      %vm449 = vcmp.lt.s32.totalorder %v231, 0
      %v450 = vsub.s32 0, %v231
      %v451 = vsel %vm449, %v450, %v231
      %v452 = vshrl.u32 %v451, 4
      %v453 = vand.u32 %v451, 15
      %v454 = vsub.s32 0, %v453
      %v455 = vsel %vm449, %v454, %v453
      %vm456 = vcmp.ne.s32.totalorder %v238, 0
      %vm457 = vcmp.ne.s32.totalorder %v245, 0
      %vm458 = vcmp.ne.s32.totalorder %v252, 0
      %vm459 = vcmp.ne.s32.totalorder %v259, 0
      %vm460 = vcmp.ne.s32.totalorder %v266, 0
      %vm461 = vcmp.ne.s32.totalorder %v273, 0
      %vm462 = vcmp.ne.s32.totalorder %v280, 0
      %vm463 = vcmp.ne.s32.totalorder %v287, 0
      %vm464 = vcmp.ne.s32.totalorder %v294, 0
      %vm465 = vcmp.ne.s32.totalorder %v301, 0
      %vm466 = vcmp.ne.s32.totalorder %v308, 0
      %vm467 = vcmp.ne.s32.totalorder %v315, 0
      %vm468 = vcmp.ne.s32.totalorder %v322, 0
      %vm469 = vcmp.ne.s32.totalorder %v329, 0
      %vm470 = vcmp.ne.s32.totalorder %v336, 0
      %vm471 = vcmp.ne.s32.totalorder %v343, 0
      %vm472 = vcmp.ne.s32.totalorder %v350, 0
      %vm473 = vcmp.ne.s32.totalorder %v357, 0
      %vm474 = vcmp.ne.s32.totalorder %v364, 0
      %vm475 = vcmp.ne.s32.totalorder %v371, 0
      %vm476 = vcmp.ne.s32.totalorder %v378, 0
      %vm477 = vcmp.ne.s32.totalorder %v385, 0
      %vm478 = vcmp.ne.s32.totalorder %v392, 0
      %vm479 = vcmp.ne.s32.totalorder %v399, 0
      %vm480 = vcmp.ne.s32.totalorder %v406, 0
      %vm481 = vcmp.ne.s32.totalorder %v413, 0
      %vm482 = vcmp.ne.s32.totalorder %v420, 0
      %vm483 = vcmp.ne.s32.totalorder %v427, 0
      %vm484 = vcmp.ne.s32.totalorder %v434, 0
      %vm485 = vcmp.ne.s32.totalorder %v441, 0
      %vm486 = vcmp.ne.s32.totalorder %v448, 0
      %vm487 = vcmp.ne.s32.totalorder %v455, 0
      %vm488 = vcmp.lt.s32.totalorder %v238, 0
      %vm489 = vcmp.lt.s32.totalorder %v245, 0
      %vm490 = vcmp.lt.s32.totalorder %v252, 0
      %vm491 = vcmp.lt.s32.totalorder %v259, 0
      %vm492 = vcmp.lt.s32.totalorder %v266, 0
      %vm493 = vcmp.lt.s32.totalorder %v273, 0
      %vm494 = vcmp.lt.s32.totalorder %v280, 0
      %vm495 = vcmp.lt.s32.totalorder %v287, 0
      %vm496 = vcmp.lt.s32.totalorder %v294, 0
      %vm497 = vcmp.lt.s32.totalorder %v301, 0
      %vm498 = vcmp.lt.s32.totalorder %v308, 0
      %vm499 = vcmp.lt.s32.totalorder %v315, 0
      %vm500 = vcmp.lt.s32.totalorder %v322, 0
      %vm501 = vcmp.lt.s32.totalorder %v329, 0
      %vm502 = vcmp.lt.s32.totalorder %v336, 0
      %vm503 = vcmp.lt.s32.totalorder %v343, 0
      %vm504 = vcmp.lt.s32.totalorder %v350, 0
      %vm505 = vcmp.lt.s32.totalorder %v357, 0
      %vm506 = vcmp.lt.s32.totalorder %v364, 0
      %vm507 = vcmp.lt.s32.totalorder %v371, 0
      %vm508 = vcmp.lt.s32.totalorder %v378, 0
      %vm509 = vcmp.lt.s32.totalorder %v385, 0
      %vm510 = vcmp.lt.s32.totalorder %v392, 0
      %vm511 = vcmp.lt.s32.totalorder %v399, 0
      %vm512 = vcmp.lt.s32.totalorder %v406, 0
      %vm513 = vcmp.lt.s32.totalorder %v413, 0
      %vm514 = vcmp.lt.s32.totalorder %v420, 0
      %vm515 = vcmp.lt.s32.totalorder %v427, 0
      %vm516 = vcmp.lt.s32.totalorder %v434, 0
      %vm517 = vcmp.lt.s32.totalorder %v441, 0
      %vm518 = vcmp.lt.s32.totalorder %v448, 0
      %vm519 = vcmp.lt.s32.totalorder %v455, 0
      %vm520 = vmand %vm488, %vm456
      %vm521 = vmand %vm489, %vm457
      %vm522 = vmand %vm490, %vm458
      %vm523 = vmand %vm491, %vm459
      %vm524 = vmand %vm492, %vm460
      %vm525 = vmand %vm493, %vm461
      %vm526 = vmand %vm494, %vm462
      %vm527 = vmand %vm495, %vm463
      %vm528 = vmand %vm496, %vm464
      %vm529 = vmand %vm497, %vm465
      %vm530 = vmand %vm498, %vm466
      %vm531 = vmand %vm499, %vm467
      %vm532 = vmand %vm500, %vm468
      %vm533 = vmand %vm501, %vm469
      %vm534 = vmand %vm502, %vm470
      %vm535 = vmand %vm503, %vm471
      %vm536 = vmand %vm504, %vm472
      %vm537 = vmand %vm505, %vm473
      %vm538 = vmand %vm506, %vm474
      %vm539 = vmand %vm507, %vm475
      %vm540 = vmand %vm508, %vm476
      %vm541 = vmand %vm509, %vm477
      %vm542 = vmand %vm510, %vm478
      %vm543 = vmand %vm511, %vm479
      %vm544 = vmand %vm512, %vm480
      %vm545 = vmand %vm513, %vm481
      %vm546 = vmand %vm514, %vm482
      %vm547 = vmand %vm515, %vm483
      %vm548 = vmand %vm516, %vm484
      %vm549 = vmand %vm517, %vm485
      %vm550 = vmand %vm518, %vm486
      %vm551 = vmand %vm519, %vm487
      %v552 = vadd.s32 %v238, 16
      %v553 = vadd.s32 %v245, 16
      %v554 = vadd.s32 %v252, 16
      %v555 = vadd.s32 %v259, 16
      %v556 = vadd.s32 %v266, 16
      %v557 = vadd.s32 %v273, 16
      %v558 = vadd.s32 %v280, 16
      %v559 = vadd.s32 %v287, 16
      %v560 = vadd.s32 %v294, 16
      %v561 = vadd.s32 %v301, 16
      %v562 = vadd.s32 %v308, 16
      %v563 = vadd.s32 %v315, 16
      %v564 = vadd.s32 %v322, 16
      %v565 = vadd.s32 %v329, 16
      %v566 = vadd.s32 %v336, 16
      %v567 = vadd.s32 %v343, 16
      %v568 = vadd.s32 %v350, 16
      %v569 = vadd.s32 %v357, 16
      %v570 = vadd.s32 %v364, 16
      %v571 = vadd.s32 %v371, 16
      %v572 = vadd.s32 %v378, 16
      %v573 = vadd.s32 %v385, 16
      %v574 = vadd.s32 %v392, 16
      %v575 = vadd.s32 %v399, 16
      %v576 = vadd.s32 %v406, 16
      %v577 = vadd.s32 %v413, 16
      %v578 = vadd.s32 %v420, 16
      %v579 = vadd.s32 %v427, 16
      %v580 = vadd.s32 %v434, 16
      %v581 = vadd.s32 %v441, 16
      %v582 = vadd.s32 %v448, 16
      %v583 = vadd.s32 %v455, 16
      %v584 = vsel %vm520, %v552, %v238
      %v585 = vsel %vm521, %v553, %v245
      %v586 = vsel %vm522, %v554, %v252
      %v587 = vsel %vm523, %v555, %v259
      %v588 = vsel %vm524, %v556, %v266
      %v589 = vsel %vm525, %v557, %v273
      %v590 = vsel %vm526, %v558, %v280
      %v591 = vsel %vm527, %v559, %v287
      %v592 = vsel %vm528, %v560, %v294
      %v593 = vsel %vm529, %v561, %v301
      %v594 = vsel %vm530, %v562, %v308
      %v595 = vsel %vm531, %v563, %v315
      %v596 = vsel %vm532, %v564, %v322
      %v597 = vsel %vm533, %v565, %v329
      %v598 = vsel %vm534, %v566, %v336
      %v599 = vsel %vm535, %v567, %v343
      %v600 = vsel %vm536, %v568, %v350
      %v601 = vsel %vm537, %v569, %v357
      %v602 = vsel %vm538, %v570, %v364
      %v603 = vsel %vm539, %v571, %v371
      %v604 = vsel %vm540, %v572, %v378
      %v605 = vsel %vm541, %v573, %v385
      %v606 = vsel %vm542, %v574, %v392
      %v607 = vsel %vm543, %v575, %v399
      %v608 = vsel %vm544, %v576, %v406
      %v609 = vsel %vm545, %v577, %v413
      %v610 = vsel %vm546, %v578, %v420
      %v611 = vsel %vm547, %v579, %v427
      %v612 = vsel %vm548, %v580, %v434
      %v613 = vsel %vm549, %v581, %v441
      %v614 = vsel %vm550, %v582, %v448
      %v615 = vsel %vm551, %v583, %v455
      %vm616 = vcmp.ge.s32.totalorder %v584, 1
      %vm617 = vcmp.ge.s32.totalorder %v585, 1
      %vm618 = vcmp.ge.s32.totalorder %v586, 1
      %vm619 = vcmp.ge.s32.totalorder %v587, 1
      %vm620 = vcmp.ge.s32.totalorder %v588, 1
      %vm621 = vcmp.ge.s32.totalorder %v589, 1
      %vm622 = vcmp.ge.s32.totalorder %v590, 1
      %vm623 = vcmp.ge.s32.totalorder %v591, 1
      %vm624 = vcmp.ge.s32.totalorder %v592, 1
      %vm625 = vcmp.ge.s32.totalorder %v593, 1
      %vm626 = vcmp.ge.s32.totalorder %v594, 1
      %vm627 = vcmp.ge.s32.totalorder %v595, 1
      %vm628 = vcmp.ge.s32.totalorder %v596, 1
      %vm629 = vcmp.ge.s32.totalorder %v597, 1
      %vm630 = vcmp.ge.s32.totalorder %v598, 1
      %vm631 = vcmp.ge.s32.totalorder %v599, 1
      %vm632 = vcmp.ge.s32.totalorder %v600, 1
      %vm633 = vcmp.ge.s32.totalorder %v601, 1
      %vm634 = vcmp.ge.s32.totalorder %v602, 1
      %vm635 = vcmp.ge.s32.totalorder %v603, 1
      %vm636 = vcmp.ge.s32.totalorder %v604, 1
      %vm637 = vcmp.ge.s32.totalorder %v605, 1
      %vm638 = vcmp.ge.s32.totalorder %v606, 1
      %vm639 = vcmp.ge.s32.totalorder %v607, 1
      %vm640 = vcmp.ge.s32.totalorder %v608, 1
      %vm641 = vcmp.ge.s32.totalorder %v609, 1
      %vm642 = vcmp.ge.s32.totalorder %v610, 1
      %vm643 = vcmp.ge.s32.totalorder %v611, 1
      %vm644 = vcmp.ge.s32.totalorder %v612, 1
      %vm645 = vcmp.ge.s32.totalorder %v613, 1
      %vm646 = vcmp.ge.s32.totalorder %v614, 1
      %vm647 = vcmp.ge.s32.totalorder %v615, 1
      %vm648 = vcmp.le.s32.totalorder %v584, 14
      %vm649 = vcmp.le.s32.totalorder %v585, 14
      %vm650 = vcmp.le.s32.totalorder %v586, 14
      %vm651 = vcmp.le.s32.totalorder %v587, 14
      %vm652 = vcmp.le.s32.totalorder %v588, 14
      %vm653 = vcmp.le.s32.totalorder %v589, 14
      %vm654 = vcmp.le.s32.totalorder %v590, 14
      %vm655 = vcmp.le.s32.totalorder %v591, 14
      %vm656 = vcmp.le.s32.totalorder %v592, 14
      %vm657 = vcmp.le.s32.totalorder %v593, 14
      %vm658 = vcmp.le.s32.totalorder %v594, 14
      %vm659 = vcmp.le.s32.totalorder %v595, 14
      %vm660 = vcmp.le.s32.totalorder %v596, 14
      %vm661 = vcmp.le.s32.totalorder %v597, 14
      %vm662 = vcmp.le.s32.totalorder %v598, 14
      %vm663 = vcmp.le.s32.totalorder %v599, 14
      %vm664 = vcmp.le.s32.totalorder %v600, 14
      %vm665 = vcmp.le.s32.totalorder %v601, 14
      %vm666 = vcmp.le.s32.totalorder %v602, 14
      %vm667 = vcmp.le.s32.totalorder %v603, 14
      %vm668 = vcmp.le.s32.totalorder %v604, 14
      %vm669 = vcmp.le.s32.totalorder %v605, 14
      %vm670 = vcmp.le.s32.totalorder %v606, 14
      %vm671 = vcmp.le.s32.totalorder %v607, 14
      %vm672 = vcmp.le.s32.totalorder %v608, 14
      %vm673 = vcmp.le.s32.totalorder %v609, 14
      %vm674 = vcmp.le.s32.totalorder %v610, 14
      %vm675 = vcmp.le.s32.totalorder %v611, 14
      %vm676 = vcmp.le.s32.totalorder %v612, 14
      %vm677 = vcmp.le.s32.totalorder %v613, 14
      %vm678 = vcmp.le.s32.totalorder %v614, 14
      %vm679 = vcmp.le.s32.totalorder %v615, 14
      %vm680 = vcmp.ge.s32.totalorder %v200, 16
      %vm681 = vcmp.ge.s32.totalorder %v201, 16
      %vm682 = vcmp.ge.s32.totalorder %v202, 16
      %vm683 = vcmp.ge.s32.totalorder %v203, 16
      %vm684 = vcmp.ge.s32.totalorder %v204, 16
      %vm685 = vcmp.ge.s32.totalorder %v205, 16
      %vm686 = vcmp.ge.s32.totalorder %v206, 16
      %vm687 = vcmp.ge.s32.totalorder %v207, 16
      %vm688 = vcmp.ge.s32.totalorder %v208, 16
      %vm689 = vcmp.ge.s32.totalorder %v209, 16
      %vm690 = vcmp.ge.s32.totalorder %v210, 16
      %vm691 = vcmp.ge.s32.totalorder %v211, 16
      %vm692 = vcmp.ge.s32.totalorder %v212, 16
      %vm693 = vcmp.ge.s32.totalorder %v213, 16
      %vm694 = vcmp.ge.s32.totalorder %v214, 16
      %vm695 = vcmp.ge.s32.totalorder %v215, 16
      %vm696 = vcmp.ge.s32.totalorder %v216, 16
      %vm697 = vcmp.ge.s32.totalorder %v217, 16
      %vm698 = vcmp.ge.s32.totalorder %v218, 16
      %vm699 = vcmp.ge.s32.totalorder %v219, 16
      %vm700 = vcmp.ge.s32.totalorder %v220, 16
      %vm701 = vcmp.ge.s32.totalorder %v221, 16
      %vm702 = vcmp.ge.s32.totalorder %v222, 16
      %vm703 = vcmp.ge.s32.totalorder %v223, 16
      %vm704 = vcmp.ge.s32.totalorder %v224, 16
      %vm705 = vcmp.ge.s32.totalorder %v225, 16
      %vm706 = vcmp.ge.s32.totalorder %v226, 16
      %vm707 = vcmp.ge.s32.totalorder %v227, 16
      %vm708 = vcmp.ge.s32.totalorder %v228, 16
      %vm709 = vcmp.ge.s32.totalorder %v229, 16
      %vm710 = vcmp.ge.s32.totalorder %v230, 16
      %vm711 = vcmp.ge.s32.totalorder %v231, 16
      %vm712 = vcmp.lt.s32.totalorder %v200, 240
      %vm713 = vcmp.lt.s32.totalorder %v201, 240
      %vm714 = vcmp.lt.s32.totalorder %v202, 240
      %vm715 = vcmp.lt.s32.totalorder %v203, 240
      %vm716 = vcmp.lt.s32.totalorder %v204, 240
      %vm717 = vcmp.lt.s32.totalorder %v205, 240
      %vm718 = vcmp.lt.s32.totalorder %v206, 240
      %vm719 = vcmp.lt.s32.totalorder %v207, 240
      %vm720 = vcmp.lt.s32.totalorder %v208, 240
      %vm721 = vcmp.lt.s32.totalorder %v209, 240
      %vm722 = vcmp.lt.s32.totalorder %v210, 240
      %vm723 = vcmp.lt.s32.totalorder %v211, 240
      %vm724 = vcmp.lt.s32.totalorder %v212, 240
      %vm725 = vcmp.lt.s32.totalorder %v213, 240
      %vm726 = vcmp.lt.s32.totalorder %v214, 240
      %vm727 = vcmp.lt.s32.totalorder %v215, 240
      %vm728 = vcmp.lt.s32.totalorder %v216, 240
      %vm729 = vcmp.lt.s32.totalorder %v217, 240
      %vm730 = vcmp.lt.s32.totalorder %v218, 240
      %vm731 = vcmp.lt.s32.totalorder %v219, 240
      %vm732 = vcmp.lt.s32.totalorder %v220, 240
      %vm733 = vcmp.lt.s32.totalorder %v221, 240
      %vm734 = vcmp.lt.s32.totalorder %v222, 240
      %vm735 = vcmp.lt.s32.totalorder %v223, 240
      %vm736 = vcmp.lt.s32.totalorder %v224, 240
      %vm737 = vcmp.lt.s32.totalorder %v225, 240
      %vm738 = vcmp.lt.s32.totalorder %v226, 240
      %vm739 = vcmp.lt.s32.totalorder %v227, 240
      %vm740 = vcmp.lt.s32.totalorder %v228, 240
      %vm741 = vcmp.lt.s32.totalorder %v229, 240
      %vm742 = vcmp.lt.s32.totalorder %v230, 240
      %vm743 = vcmp.lt.s32.totalorder %v231, 240
      %v744 = vld [vmem:[%s1] sm:$0xf]
      %v745 = vld [vmem:[%s1 + $0x4] sm:$0xf]
      %v746 = vld [vmem:[%s1 + $0x8] sm:$0xf]
      %v747 = vld [vmem:[%s1 + $0xc] sm:$0xf]
      %v748 = vld [vmem:[%s1 + $0x10] sm:$0xf]
      %v749 = vld [vmem:[%s1 + $0x14] sm:$0xf]
      %v750 = vld [vmem:[%s1 + $0x18] sm:$0xf]
      %v751 = vld [vmem:[%s1 + $0x1c] sm:$0xf]
      %v752 = vld [vmem:[%s1 + $0x20] sm:$0xf]
      %v753 = vld [vmem:[%s1 + $0x24] sm:$0xf]
      %v754 = vld [vmem:[%s1 + $0x28] sm:$0xf]
      %v755 = vld [vmem:[%s1 + $0x2c] sm:$0xf]
      %v756 = vld [vmem:[%s1 + $0x30] sm:$0xf]
      %v757 = vld [vmem:[%s1 + $0x34] sm:$0xf]
      %v758 = vld [vmem:[%s1 + $0x38] sm:$0xf]
      %v759 = vld [vmem:[%s1 + $0x3c] sm:$0xf]
      %v760 = vld [vmem:[%s192] sm:$0xf]
      %v761 = vld [vmem:[%s192 + $0x4] sm:$0xf]
      %v762 = vld [vmem:[%s192 + $0x8] sm:$0xf]
      %v763 = vld [vmem:[%s192 + $0xc] sm:$0xf]
      %v764 = vld [vmem:[%s192 + $0x10] sm:$0xf]
      %v765 = vld [vmem:[%s192 + $0x14] sm:$0xf]
      %v766 = vld [vmem:[%s192 + $0x18] sm:$0xf]
      %v767 = vld [vmem:[%s192 + $0x1c] sm:$0xf]
      %v768 = vld [vmem:[%s192 + $0x20] sm:$0xf]
      %v769 = vld [vmem:[%s192 + $0x24] sm:$0xf]
      %v770 = vld [vmem:[%s192 + $0x28] sm:$0xf]
      %v771 = vld [vmem:[%s192 + $0x2c] sm:$0xf]
      %v772 = vld [vmem:[%s192 + $0x30] sm:$0xf]
      %v773 = vld [vmem:[%s192 + $0x34] sm:$0xf]
      %v774 = vld [vmem:[%s192 + $0x38] sm:$0xf]
      %v775 = vld [vmem:[%s192 + $0x3c] sm:$0xf]
      %v776 = vld [vmem:[%s192 + $0x40] sm:$0xf]
      %v777 = vld [vmem:[%s192 + $0x44] sm:$0xf]
      %v778 = vld [vmem:[%s192 + $0x48] sm:$0xf]
      %v779 = vld [vmem:[%s192 + $0x4c] sm:$0xf]
      %v780 = vld [vmem:[%s192 + $0x50] sm:$0xf]
      %v781 = vld [vmem:[%s192 + $0x54] sm:$0xf]
      %v782 = vld [vmem:[%s192 + $0x58] sm:$0xf]
      %v783 = vld [vmem:[%s192 + $0x5c] sm:$0xf]
      %v784 = vld [vmem:[%s192 + $0x60] sm:$0xf]
      %v785 = vld [vmem:[%s192 + $0x64] sm:$0xf]
      %v786 = vld [vmem:[%s192 + $0x68] sm:$0xf]
      %v787 = vld [vmem:[%s192 + $0x6c] sm:$0xf]
      %v788 = vld [vmem:[%s192 + $0x70] sm:$0xf]
      %v789 = vld [vmem:[%s192 + $0x74] sm:$0xf]
      %v790 = vld [vmem:[%s192 + $0x78] sm:$0xf]
      %v791 = vld [vmem:[%s192 + $0x7c] sm:$0xf]
      %v792 = vld [vmem:[%s3] sm:$0x1]
      %v793 = vlaneseq
      %v794 = vshrl.u32 %v793, 7
      %v795 = vsub.s32 0, %v794
      %v796 = vrot.slane %v792, %v795
      %v829 = vunpack.c.l.b16 %v760
      %v830 = vunpack.c.l.b16 %v761
      %v831 = vunpack.c.l.b16 %v762
      %v832 = vunpack.c.l.b16 %v763
      %v833 = vunpack.c.l.b16 %v764
      %v834 = vunpack.c.l.b16 %v765
      %v835 = vunpack.c.l.b16 %v766
      %v836 = vunpack.c.l.b16 %v767
      %v837 = vunpack.c.l.b16 %v768
      %v838 = vunpack.c.l.b16 %v769
      %v839 = vunpack.c.l.b16 %v770
      %v840 = vunpack.c.l.b16 %v771
      %v841 = vunpack.c.l.b16 %v772
      %v842 = vunpack.c.l.b16 %v773
      %v843 = vunpack.c.l.b16 %v774
      %v844 = vunpack.c.l.b16 %v775
      %v845 = vunpack.c.l.b16 %v776
      %v846 = vunpack.c.l.b16 %v777
      %v847 = vunpack.c.l.b16 %v778
      %v848 = vunpack.c.l.b16 %v779
      %v849 = vunpack.c.l.b16 %v780
      %v850 = vunpack.c.l.b16 %v781
      %v851 = vunpack.c.l.b16 %v782
      %v852 = vunpack.c.l.b16 %v783
      %v853 = vunpack.c.l.b16 %v784
      %v854 = vunpack.c.l.b16 %v785
      %v855 = vunpack.c.l.b16 %v786
      %v856 = vunpack.c.l.b16 %v787
      %v857 = vunpack.c.l.b16 %v788
      %v858 = vunpack.c.l.b16 %v789
      %v859 = vunpack.c.l.b16 %v790
      %v860 = vunpack.c.l.b16 %v791
      %v861 = vpack.c.b16 %v830, %v829
      %v862 = vpack.c.b16 %v832, %v831
      %v863 = vpack.c.b16 %v834, %v833
      %v864 = vpack.c.b16 %v836, %v835
      %v865 = vpack.c.b16 %v838, %v837
      %v866 = vpack.c.b16 %v840, %v839
      %v867 = vpack.c.b16 %v842, %v841
      %v868 = vpack.c.b16 %v844, %v843
      %v869 = vpack.c.b16 %v846, %v845
      %v870 = vpack.c.b16 %v848, %v847
      %v871 = vpack.c.b16 %v850, %v849
      %v872 = vpack.c.b16 %v852, %v851
      %v873 = vpack.c.b16 %v854, %v853
      %v874 = vpack.c.b16 %v856, %v855
      %v875 = vpack.c.b16 %v858, %v857
      %v876 = vpack.c.b16 %v860, %v859
      %v909 = vunpack.c.l.b16 %v744
      %v910 = vunpack.c.l.b16 %v745
      %v911 = vunpack.c.l.b16 %v746
      %v912 = vunpack.c.l.b16 %v747
      %v913 = vunpack.c.l.b16 %v748
      %v914 = vunpack.c.l.b16 %v749
      %v915 = vunpack.c.l.b16 %v750
      %v916 = vunpack.c.l.b16 %v751
      %v917 = vunpack.c.l.b16 %v752
      %v918 = vunpack.c.l.b16 %v753
      %v919 = vunpack.c.l.b16 %v754
      %v920 = vunpack.c.l.b16 %v755
      %v921 = vunpack.c.l.b16 %v756
      %v922 = vunpack.c.l.b16 %v757
      %v923 = vunpack.c.l.b16 %v758
      %v924 = vunpack.c.l.b16 %v759
      %v925 = vpack.c.b16 %v910, %v909
      %v926 = vpack.c.b16 %v912, %v911
      %v927 = vpack.c.b16 %v914, %v913
      %v928 = vpack.c.b16 %v916, %v915
      %v929 = vpack.c.b16 %v918, %v917
      %v930 = vpack.c.b16 %v920, %v919
      %v931 = vpack.c.b16 %v922, %v921
      %v932 = vpack.c.b16 %v924, %v923
      %941 = vmatprep.subr.bf16.mxu0 0
      %942 = vmatpush1.bf16.msra.mxu0 %v925
      %943 = vmatprep.subr.bf16.mxu0 0
      %944 = vmatpush1.bf16.msra.mxu0 %v926
      %945 = vmatprep.subr.bf16.mxu0 0
      %946 = vmatpush1.bf16.msra.mxu0 %v927
      %947 = vmatprep.subr.bf16.mxu0 0
      %948 = vmatpush1.bf16.msra.mxu0 %v928
      %949 = vmatprep.subr.bf16.mxu0 0
      %950 = vmatpush1.bf16.msra.mxu0 %v929
      %951 = vmatprep.subr.bf16.mxu0 0
      %952 = vmatpush1.bf16.msra.mxu0 %v930
      %953 = vmatprep.subr.bf16.mxu0 0
      %954 = vmatpush1.bf16.msra.mxu0 %v931
      %955 = vmatprep.subr.bf16.mxu0 0
      %956 = vmatpush1.bf16.msra.mxu0 %v932
      %957 = vmatprep.subr.bf16.mxu0 0
      %958 = vmatpush1.bf16.msra.mxu0 0
      %959 = vmatprep.subr.bf16.mxu0 0
      %960 = vmatpush1.bf16.msra.mxu0 0
      %961 = vmatprep.subr.bf16.mxu0 0
      %962 = vmatpush1.bf16.msra.mxu0 0
      %963 = vmatprep.subr.bf16.mxu0 0
      %964 = vmatpush1.bf16.msra.mxu0 0
      %965 = vmatprep.subr.bf16.mxu0 0
      %966 = vmatpush1.bf16.msra.mxu0 0
      %967 = vmatprep.subr.bf16.mxu0 0
      %968 = vmatpush1.bf16.msra.mxu0 0
      %969 = vmatprep.subr.bf16.mxu0 0
      %970 = vmatpush1.bf16.msra.mxu0 0
      %971 = vmatprep.subr.bf16.mxu0 0
      %972 = vmatpush1.bf16.msra.mxu0 0
      %973 = vmatprep.mubr.bf16.mxu0 0
      %974 = vmatmul.mubr.bf16.gmra.mrb[0].mxu0 %v861
      %v975 = vpop.f32.mrb[0].mxu0
      %v976 = vadd.f32 %v796, %v975
      %v977 = vpop.f32.mrb[0].mxu0
      %v978 = vpop.f32.mrb[0].mxu0
      %v979 = vadd.f32 %v796, %v978
      %v980 = vpop.f32.mrb[0].mxu0
      %981 = vmatprep.mubr.bf16.mxu0 0
      %982 = vmatmul.mubr.bf16.gmra.mrb[0].mxu0 %v862
      %v983 = vpop.f32.mrb[0].mxu0
      %v984 = vadd.f32 %v796, %v983
      %v985 = vpop.f32.mrb[0].mxu0
      %v986 = vpop.f32.mrb[0].mxu0
      %v987 = vadd.f32 %v796, %v986
      %v988 = vpop.f32.mrb[0].mxu0
      %989 = vmatprep.mubr.bf16.mxu0 0
      %990 = vmatmul.mubr.bf16.gmra.mrb[0].mxu0 %v863
      %v991 = vpop.f32.mrb[0].mxu0
      %v992 = vadd.f32 %v796, %v991
      %v993 = vpop.f32.mrb[0].mxu0
      %v994 = vpop.f32.mrb[0].mxu0
      %v995 = vadd.f32 %v796, %v994
      %v996 = vpop.f32.mrb[0].mxu0
      %997 = vmatprep.mubr.bf16.mxu0 0
      %998 = vmatmul.mubr.bf16.gmra.mrb[0].mxu0 %v864
      %v999 = vpop.f32.mrb[0].mxu0
      %v1000 = vadd.f32 %v796, %v999
      %v1001 = vpop.f32.mrb[0].mxu0
      %v1002 = vpop.f32.mrb[0].mxu0
      %v1003 = vadd.f32 %v796, %v1002
      %v1004 = vpop.f32.mrb[0].mxu0
      %1005 = vmatprep.mubr.bf16.mxu0 0
      %1006 = vmatmul.mubr.bf16.gmra.mrb[0].mxu0 %v865
      %v1007 = vpop.f32.mrb[0].mxu0
      %v1008 = vadd.f32 %v796, %v1007
      %v1009 = vpop.f32.mrb[0].mxu0
      %v1010 = vpop.f32.mrb[0].mxu0
      %v1011 = vadd.f32 %v796, %v1010
      %v1012 = vpop.f32.mrb[0].mxu0
      %1013 = vmatprep.mubr.bf16.mxu0 0
      %1014 = vmatmul.mubr.bf16.gmra.mrb[0].mxu0 %v866
      %v1015 = vpop.f32.mrb[0].mxu0
      %v1016 = vadd.f32 %v796, %v1015
      %v1017 = vpop.f32.mrb[0].mxu0
      %v1018 = vpop.f32.mrb[0].mxu0
      %v1019 = vadd.f32 %v796, %v1018
      %v1020 = vpop.f32.mrb[0].mxu0
      %1021 = vmatprep.mubr.bf16.mxu0 0
      %1022 = vmatmul.mubr.bf16.gmra.mrb[0].mxu0 %v867
      %v1023 = vpop.f32.mrb[0].mxu0
      %v1024 = vadd.f32 %v796, %v1023
      %v1025 = vpop.f32.mrb[0].mxu0
      %v1026 = vpop.f32.mrb[0].mxu0
      %v1027 = vadd.f32 %v796, %v1026
      %v1028 = vpop.f32.mrb[0].mxu0
      %1029 = vmatprep.mubr.bf16.mxu0 0
      %1030 = vmatmul.mubr.bf16.gmra.mrb[0].mxu0 %v868
      %v1031 = vpop.f32.mrb[0].mxu0
      %v1032 = vadd.f32 %v796, %v1031
      %v1033 = vpop.f32.mrb[0].mxu0
      %v1034 = vpop.f32.mrb[0].mxu0
      %v1035 = vadd.f32 %v796, %v1034
      %v1036 = vpop.f32.mrb[0].mxu0
      %1037 = vmatprep.mubr.bf16.mxu0 0
      %1038 = vmatmul.mubr.bf16.gmra.mrb[0].mxu0 %v869
      %v1039 = vpop.f32.mrb[0].mxu0
      %v1040 = vadd.f32 %v796, %v1039
      %v1041 = vpop.f32.mrb[0].mxu0
      %v1042 = vpop.f32.mrb[0].mxu0
      %v1043 = vadd.f32 %v796, %v1042
      %v1044 = vpop.f32.mrb[0].mxu0
      %1045 = vmatprep.mubr.bf16.mxu0 0
      %1046 = vmatmul.mubr.bf16.gmra.mrb[0].mxu0 %v870
      %v1047 = vpop.f32.mrb[0].mxu0
      %v1048 = vadd.f32 %v796, %v1047
      %v1049 = vpop.f32.mrb[0].mxu0
      %v1050 = vpop.f32.mrb[0].mxu0
      %v1051 = vadd.f32 %v796, %v1050
      %v1052 = vpop.f32.mrb[0].mxu0
      %1053 = vmatprep.mubr.bf16.mxu0 0
      %1054 = vmatmul.mubr.bf16.gmra.mrb[0].mxu0 %v871
      %v1055 = vpop.f32.mrb[0].mxu0
      %v1056 = vadd.f32 %v796, %v1055
      %v1057 = vpop.f32.mrb[0].mxu0
      %v1058 = vpop.f32.mrb[0].mxu0
      %v1059 = vadd.f32 %v796, %v1058
      %v1060 = vpop.f32.mrb[0].mxu0
      %1061 = vmatprep.mubr.bf16.mxu0 0
      %1062 = vmatmul.mubr.bf16.gmra.mrb[0].mxu0 %v872
      %v1063 = vpop.f32.mrb[0].mxu0
      %v1064 = vadd.f32 %v796, %v1063
      %v1065 = vpop.f32.mrb[0].mxu0
      %v1066 = vpop.f32.mrb[0].mxu0
      %v1067 = vadd.f32 %v796, %v1066
      %v1068 = vpop.f32.mrb[0].mxu0
      %1069 = vmatprep.mubr.bf16.mxu0 0
      %1070 = vmatmul.mubr.bf16.gmra.mrb[0].mxu0 %v873
      %v1071 = vpop.f32.mrb[0].mxu0
      %v1072 = vadd.f32 %v796, %v1071
      %v1073 = vpop.f32.mrb[0].mxu0
      %v1074 = vpop.f32.mrb[0].mxu0
      %v1075 = vadd.f32 %v796, %v1074
      %v1076 = vpop.f32.mrb[0].mxu0
      %1077 = vmatprep.mubr.bf16.mxu0 0
      %1078 = vmatmul.mubr.bf16.gmra.mrb[0].mxu0 %v874
      %v1079 = vpop.f32.mrb[0].mxu0
      %v1080 = vadd.f32 %v796, %v1079
      %v1081 = vpop.f32.mrb[0].mxu0
      %v1082 = vpop.f32.mrb[0].mxu0
      %v1083 = vadd.f32 %v796, %v1082
      %v1084 = vpop.f32.mrb[0].mxu0
      %1085 = vmatprep.mubr.bf16.mxu0 0
      %1086 = vmatmul.mubr.bf16.gmra.mrb[0].mxu0 %v875
      %v1087 = vpop.f32.mrb[0].mxu0
      %v1088 = vadd.f32 %v796, %v1087
      %v1089 = vpop.f32.mrb[0].mxu0
      %v1090 = vpop.f32.mrb[0].mxu0
      %v1091 = vadd.f32 %v796, %v1090
      %v1092 = vpop.f32.mrb[0].mxu0
      %1093 = vmatprep.mubr.bf16.mxu0 0
      %1094 = vmatmul.mubr.bf16.gmra.mrb[0].mxu0 %v876
      %v1095 = vpop.f32.mrb[0].mxu0
      %v1096 = vadd.f32 %v796, %v1095
      %v1097 = vpop.f32.mrb[0].mxu0
      %v1098 = vpop.f32.mrb[0].mxu0
      %v1099 = vadd.f32 %v796, %v1098
      %v1100 = vpop.f32.mrb[0].mxu0
      %1101 = vdwg.mxu0
      %v1102 = vmax.f32 %v976, 0.0
      %v1103 = vmax.f32 %v979, 0.0
      %v1104 = vmax.f32 %v984, 0.0
      %v1105 = vmax.f32 %v987, 0.0
      %v1106 = vmax.f32 %v992, 0.0
      %v1107 = vmax.f32 %v995, 0.0
      %v1108 = vmax.f32 %v1000, 0.0
      %v1109 = vmax.f32 %v1003, 0.0
      %v1110 = vmax.f32 %v1008, 0.0
      %v1111 = vmax.f32 %v1011, 0.0
      %v1112 = vmax.f32 %v1016, 0.0
      %v1113 = vmax.f32 %v1019, 0.0
      %v1114 = vmax.f32 %v1024, 0.0
      %v1115 = vmax.f32 %v1027, 0.0
      %v1116 = vmax.f32 %v1032, 0.0
      %v1117 = vmax.f32 %v1035, 0.0
      %v1118 = vmax.f32 %v1040, 0.0
      %v1119 = vmax.f32 %v1043, 0.0
      %v1120 = vmax.f32 %v1048, 0.0
      %v1121 = vmax.f32 %v1051, 0.0
      %v1122 = vmax.f32 %v1056, 0.0
      %v1123 = vmax.f32 %v1059, 0.0
      %v1124 = vmax.f32 %v1064, 0.0
      %v1125 = vmax.f32 %v1067, 0.0
      %v1126 = vmax.f32 %v1072, 0.0
      %v1127 = vmax.f32 %v1075, 0.0
      %v1128 = vmax.f32 %v1080, 0.0
      %v1129 = vmax.f32 %v1083, 0.0
      %v1130 = vmax.f32 %v1088, 0.0
      %v1131 = vmax.f32 %v1091, 0.0
      %v1132 = vmax.f32 %v1096, 0.0
      %v1133 = vmax.f32 %v1099, 0.0
      %1134 = vst [vmem:[#allocation2] sm:$0xff] %v1102
      %1135 = vst [vmem:[#allocation2 + $0x8] sm:$0xff] %v1103
      %1136 = vst [vmem:[#allocation2 + $0x10] sm:$0xff] %v1104
      %1137 = vst [vmem:[#allocation2 + $0x18] sm:$0xff] %v1105
      %1138 = vst [vmem:[#allocation2 + $0x20] sm:$0xff] %v1106
      %1139 = vst [vmem:[#allocation2 + $0x28] sm:$0xff] %v1107
      %1140 = vst [vmem:[#allocation2 + $0x30] sm:$0xff] %v1108
      %1141 = vst [vmem:[#allocation2 + $0x38] sm:$0xff] %v1109
      %1142 = vst [vmem:[#allocation2 + $0x40] sm:$0xff] %v1110
      %1143 = vst [vmem:[#allocation2 + $0x48] sm:$0xff] %v1111
      %1144 = vst [vmem:[#allocation2 + $0x50] sm:$0xff] %v1112
      %1145 = vst [vmem:[#allocation2 + $0x58] sm:$0xff] %v1113
      %1146 = vst [vmem:[#allocation2 + $0x60] sm:$0xff] %v1114
      %1147 = vst [vmem:[#allocation2 + $0x68] sm:$0xff] %v1115
      %1148 = vst [vmem:[#allocation2 + $0x70] sm:$0xff] %v1116
      %1149 = vst [vmem:[#allocation2 + $0x78] sm:$0xff] %v1117
      %1150 = vst [vmem:[#allocation2 + $0x80] sm:$0xff] %v1118
      %1151 = vst [vmem:[#allocation2 + $0x88] sm:$0xff] %v1119
      %1152 = vst [vmem:[#allocation2 + $0x90] sm:$0xff] %v1120
      %1153 = vst [vmem:[#allocation2 + $0x98] sm:$0xff] %v1121
      %1154 = vst [vmem:[#allocation2 + $0xa0] sm:$0xff] %v1122
      %1155 = vst [vmem:[#allocation2 + $0xa8] sm:$0xff] %v1123
      %1156 = vst [vmem:[#allocation2 + $0xb0] sm:$0xff] %v1124
      %1157 = vst [vmem:[#allocation2 + $0xb8] sm:$0xff] %v1125
      %1158 = vst [vmem:[#allocation2 + $0xc0] sm:$0xff] %v1126
      %1159 = vst [vmem:[#allocation2 + $0xc8] sm:$0xff] %v1127
      %1160 = vst [vmem:[#allocation2 + $0xd0] sm:$0xff] %v1128
      %1161 = vst [vmem:[#allocation2 + $0xd8] sm:$0xff] %v1129
      %1162 = vst [vmem:[#allocation2 + $0xe0] sm:$0xff] %v1130
      %1163 = vst [vmem:[#allocation2 + $0xe8] sm:$0xff] %v1131
      %1164 = vst [vmem:[#allocation2 + $0xf0] sm:$0xff] %v1132
      %1165 = vst [vmem:[#allocation2 + $0xf8] sm:$0xff] %v1133
      %v1166 = vld [vmem:[#allocation2] sm:$0xff]
      %v1167 = vld [vmem:[#allocation2 + $0x8] sm:$0xff]
      %v1168 = vld [vmem:[#allocation2 + $0x10] sm:$0xff]
      %v1169 = vld [vmem:[#allocation2 + $0x18] sm:$0xff]
      %v1170 = vld [vmem:[#allocation2 + $0x20] sm:$0xff]
      %v1171 = vld [vmem:[#allocation2 + $0x28] sm:$0xff]
      %v1172 = vld [vmem:[#allocation2 + $0x30] sm:$0xff]
      %v1173 = vld [vmem:[#allocation2 + $0x38] sm:$0xff]
      %v1174 = vld [vmem:[#allocation2 + $0x40] sm:$0xff]
      %v1175 = vld [vmem:[#allocation2 + $0x48] sm:$0xff]
      %v1176 = vld [vmem:[#allocation2 + $0x50] sm:$0xff]
      %v1177 = vld [vmem:[#allocation2 + $0x58] sm:$0xff]
      %v1178 = vld [vmem:[#allocation2 + $0x60] sm:$0xff]
      %v1179 = vld [vmem:[#allocation2 + $0x68] sm:$0xff]
      %v1180 = vld [vmem:[#allocation2 + $0x70] sm:$0xff]
      %v1181 = vld [vmem:[#allocation2 + $0x78] sm:$0xff]
      %v1182 = vld [vmem:[#allocation2 + $0x80] sm:$0xff]
      %v1183 = vld [vmem:[#allocation2 + $0x88] sm:$0xff]
      %v1184 = vld [vmem:[#allocation2 + $0x90] sm:$0xff]
      %v1185 = vld [vmem:[#allocation2 + $0x98] sm:$0xff]
      %v1186 = vld [vmem:[#allocation2 + $0xa0] sm:$0xff]
      %v1187 = vld [vmem:[#allocation2 + $0xa8] sm:$0xff]
      %v1188 = vld [vmem:[#allocation2 + $0xb0] sm:$0xff]
      %v1189 = vld [vmem:[#allocation2 + $0xb8] sm:$0xff]
      %v1190 = vld [vmem:[#allocation2 + $0xc0] sm:$0xff]
      %v1191 = vld [vmem:[#allocation2 + $0xc8] sm:$0xff]
      %v1192 = vld [vmem:[#allocation2 + $0xd0] sm:$0xff]
      %v1193 = vld [vmem:[#allocation2 + $0xd8] sm:$0xff]
      %v1194 = vld [vmem:[#allocation2 + $0xe0] sm:$0xff]
      %v1195 = vld [vmem:[#allocation2 + $0xe8] sm:$0xff]
      %v1196 = vld [vmem:[#allocation2 + $0xf0] sm:$0xff]
      %v1197 = vld [vmem:[#allocation2 + $0xf8] sm:$0xff]
      %v1198 = vsel %vm680, 1, 0
      %v1199 = vsel %vm681, 1, 0
      %v1200 = vsel %vm682, 1, 0
      %v1201 = vsel %vm683, 1, 0
      %v1202 = vsel %vm684, 1, 0
      %v1203 = vsel %vm685, 1, 0
      %v1204 = vsel %vm686, 1, 0
      %v1205 = vsel %vm687, 1, 0
      %v1206 = vsel %vm688, 1, 0
      %v1207 = vsel %vm689, 1, 0
      %v1208 = vsel %vm690, 1, 0
      %v1209 = vsel %vm691, 1, 0
      %v1210 = vsel %vm692, 1, 0
      %v1211 = vsel %vm693, 1, 0
      %v1212 = vsel %vm694, 1, 0
      %v1213 = vsel %vm695, 1, 0
      %v1214 = vsel %vm696, 1, 0
      %v1215 = vsel %vm697, 1, 0
      %v1216 = vsel %vm698, 1, 0
      %v1217 = vsel %vm699, 1, 0
      %v1218 = vsel %vm700, 1, 0
      %v1219 = vsel %vm701, 1, 0
      %v1220 = vsel %vm702, 1, 0
      %v1221 = vsel %vm703, 1, 0
      %v1222 = vsel %vm704, 1, 0
      %v1223 = vsel %vm705, 1, 0
      %v1224 = vsel %vm706, 1, 0
      %v1225 = vsel %vm707, 1, 0
      %v1226 = vsel %vm708, 1, 0
      %v1227 = vsel %vm709, 1, 0
      %v1228 = vsel %vm710, 1, 0
      %v1229 = vsel %vm711, 1, 0
      %vm1230 = vcmp.eq.s32.totalorder %v1198, 1
      %vm1231 = vcmp.eq.s32.totalorder %v1199, 1
      %vm1232 = vcmp.eq.s32.totalorder %v1200, 1
      %vm1233 = vcmp.eq.s32.totalorder %v1201, 1
      %vm1234 = vcmp.eq.s32.totalorder %v1202, 1
      %vm1235 = vcmp.eq.s32.totalorder %v1203, 1
      %vm1236 = vcmp.eq.s32.totalorder %v1204, 1
      %vm1237 = vcmp.eq.s32.totalorder %v1205, 1
      %vm1238 = vcmp.eq.s32.totalorder %v1206, 1
      %vm1239 = vcmp.eq.s32.totalorder %v1207, 1
      %vm1240 = vcmp.eq.s32.totalorder %v1208, 1
      %vm1241 = vcmp.eq.s32.totalorder %v1209, 1
      %vm1242 = vcmp.eq.s32.totalorder %v1210, 1
      %vm1243 = vcmp.eq.s32.totalorder %v1211, 1
      %vm1244 = vcmp.eq.s32.totalorder %v1212, 1
      %vm1245 = vcmp.eq.s32.totalorder %v1213, 1
      %vm1246 = vcmp.eq.s32.totalorder %v1214, 1
      %vm1247 = vcmp.eq.s32.totalorder %v1215, 1
      %vm1248 = vcmp.eq.s32.totalorder %v1216, 1
      %vm1249 = vcmp.eq.s32.totalorder %v1217, 1
      %vm1250 = vcmp.eq.s32.totalorder %v1218, 1
      %vm1251 = vcmp.eq.s32.totalorder %v1219, 1
      %vm1252 = vcmp.eq.s32.totalorder %v1220, 1
      %vm1253 = vcmp.eq.s32.totalorder %v1221, 1
      %vm1254 = vcmp.eq.s32.totalorder %v1222, 1
      %vm1255 = vcmp.eq.s32.totalorder %v1223, 1
      %vm1256 = vcmp.eq.s32.totalorder %v1224, 1
      %vm1257 = vcmp.eq.s32.totalorder %v1225, 1
      %vm1258 = vcmp.eq.s32.totalorder %v1226, 1
      %vm1259 = vcmp.eq.s32.totalorder %v1227, 1
      %vm1260 = vcmp.eq.s32.totalorder %v1228, 1
      %vm1261 = vcmp.eq.s32.totalorder %v1229, 1
      %v1262 = vsel %vm1230, %v1196, 0.0
      %v1263 = vsel %vm1231, %v1197, 0.0
      %v1264 = vsel %vm1232, %v1166, 0.0
      %v1265 = vsel %vm1233, %v1167, 0.0
      %v1266 = vsel %vm1234, %v1168, 0.0
      %v1267 = vsel %vm1235, %v1169, 0.0
      %v1268 = vsel %vm1236, %v1170, 0.0
      %v1269 = vsel %vm1237, %v1171, 0.0
      %v1270 = vsel %vm1238, %v1172, 0.0
      %v1271 = vsel %vm1239, %v1173, 0.0
      %v1272 = vsel %vm1240, %v1174, 0.0
      %v1273 = vsel %vm1241, %v1175, 0.0
      %v1274 = vsel %vm1242, %v1176, 0.0
      %v1275 = vsel %vm1243, %v1177, 0.0
      %v1276 = vsel %vm1244, %v1178, 0.0
      %v1277 = vsel %vm1245, %v1179, 0.0
      %v1278 = vsel %vm1246, %v1180, 0.0
      %v1279 = vsel %vm1247, %v1181, 0.0
      %v1280 = vsel %vm1248, %v1182, 0.0
      %v1281 = vsel %vm1249, %v1183, 0.0
      %v1282 = vsel %vm1250, %v1184, 0.0
      %v1283 = vsel %vm1251, %v1185, 0.0
      %v1284 = vsel %vm1252, %v1186, 0.0
      %v1285 = vsel %vm1253, %v1187, 0.0
      %v1286 = vsel %vm1254, %v1188, 0.0
      %v1287 = vsel %vm1255, %v1189, 0.0
      %v1288 = vsel %vm1256, %v1190, 0.0
      %v1289 = vsel %vm1257, %v1191, 0.0
      %v1290 = vsel %vm1258, %v1192, 0.0
      %v1291 = vsel %vm1259, %v1193, 0.0
      %v1292 = vsel %vm1260, %v1194, 0.0
      %v1293 = vsel %vm1261, %v1195, 0.0
      %v1294 = vsel %vm712, 1, 0
      %v1295 = vsel %vm713, 1, 0
      %v1296 = vsel %vm714, 1, 0
      %v1297 = vsel %vm715, 1, 0
      %v1298 = vsel %vm716, 1, 0
      %v1299 = vsel %vm717, 1, 0
      %v1300 = vsel %vm718, 1, 0
      %v1301 = vsel %vm719, 1, 0
      %v1302 = vsel %vm720, 1, 0
      %v1303 = vsel %vm721, 1, 0
      %v1304 = vsel %vm722, 1, 0
      %v1305 = vsel %vm723, 1, 0
      %v1306 = vsel %vm724, 1, 0
      %v1307 = vsel %vm725, 1, 0
      %v1308 = vsel %vm726, 1, 0
      %v1309 = vsel %vm727, 1, 0
      %v1310 = vsel %vm728, 1, 0
      %v1311 = vsel %vm729, 1, 0
      %v1312 = vsel %vm730, 1, 0
      %v1313 = vsel %vm731, 1, 0
      %v1314 = vsel %vm732, 1, 0
      %v1315 = vsel %vm733, 1, 0
      %v1316 = vsel %vm734, 1, 0
      %v1317 = vsel %vm735, 1, 0
      %v1318 = vsel %vm736, 1, 0
      %v1319 = vsel %vm737, 1, 0
      %v1320 = vsel %vm738, 1, 0
      %v1321 = vsel %vm739, 1, 0
      %v1322 = vsel %vm740, 1, 0
      %v1323 = vsel %vm741, 1, 0
      %v1324 = vsel %vm742, 1, 0
      %v1325 = vsel %vm743, 1, 0
      %vm1326 = vcmp.eq.s32.totalorder %v1294, 1
      %vm1327 = vcmp.eq.s32.totalorder %v1295, 1
      %vm1328 = vcmp.eq.s32.totalorder %v1296, 1
      %vm1329 = vcmp.eq.s32.totalorder %v1297, 1
      %vm1330 = vcmp.eq.s32.totalorder %v1298, 1
      %vm1331 = vcmp.eq.s32.totalorder %v1299, 1
      %vm1332 = vcmp.eq.s32.totalorder %v1300, 1
      %vm1333 = vcmp.eq.s32.totalorder %v1301, 1
      %vm1334 = vcmp.eq.s32.totalorder %v1302, 1
      %vm1335 = vcmp.eq.s32.totalorder %v1303, 1
      %vm1336 = vcmp.eq.s32.totalorder %v1304, 1
      %vm1337 = vcmp.eq.s32.totalorder %v1305, 1
      %vm1338 = vcmp.eq.s32.totalorder %v1306, 1
      %vm1339 = vcmp.eq.s32.totalorder %v1307, 1
      %vm1340 = vcmp.eq.s32.totalorder %v1308, 1
      %vm1341 = vcmp.eq.s32.totalorder %v1309, 1
      %vm1342 = vcmp.eq.s32.totalorder %v1310, 1
      %vm1343 = vcmp.eq.s32.totalorder %v1311, 1
      %vm1344 = vcmp.eq.s32.totalorder %v1312, 1
      %vm1345 = vcmp.eq.s32.totalorder %v1313, 1
      %vm1346 = vcmp.eq.s32.totalorder %v1314, 1
      %vm1347 = vcmp.eq.s32.totalorder %v1315, 1
      %vm1348 = vcmp.eq.s32.totalorder %v1316, 1
      %vm1349 = vcmp.eq.s32.totalorder %v1317, 1
      %vm1350 = vcmp.eq.s32.totalorder %v1318, 1
      %vm1351 = vcmp.eq.s32.totalorder %v1319, 1
      %vm1352 = vcmp.eq.s32.totalorder %v1320, 1
      %vm1353 = vcmp.eq.s32.totalorder %v1321, 1
      %vm1354 = vcmp.eq.s32.totalorder %v1322, 1
      %vm1355 = vcmp.eq.s32.totalorder %v1323, 1
      %vm1356 = vcmp.eq.s32.totalorder %v1324, 1
      %vm1357 = vcmp.eq.s32.totalorder %v1325, 1
      %v1358 = vsel %vm1326, %v1168, 0.0
      %v1359 = vsel %vm1327, %v1169, 0.0
      %v1360 = vsel %vm1328, %v1170, 0.0
      %v1361 = vsel %vm1329, %v1171, 0.0
      %v1362 = vsel %vm1330, %v1172, 0.0
      %v1363 = vsel %vm1331, %v1173, 0.0
      %v1364 = vsel %vm1332, %v1174, 0.0
      %v1365 = vsel %vm1333, %v1175, 0.0
      %v1366 = vsel %vm1334, %v1176, 0.0
      %v1367 = vsel %vm1335, %v1177, 0.0
      %v1368 = vsel %vm1336, %v1178, 0.0
      %v1369 = vsel %vm1337, %v1179, 0.0
      %v1370 = vsel %vm1338, %v1180, 0.0
      %v1371 = vsel %vm1339, %v1181, 0.0
      %v1372 = vsel %vm1340, %v1182, 0.0
      %v1373 = vsel %vm1341, %v1183, 0.0
      %v1374 = vsel %vm1342, %v1184, 0.0
      %v1375 = vsel %vm1343, %v1185, 0.0
      %v1376 = vsel %vm1344, %v1186, 0.0
      %v1377 = vsel %vm1345, %v1187, 0.0
      %v1378 = vsel %vm1346, %v1188, 0.0
      %v1379 = vsel %vm1347, %v1189, 0.0
      %v1380 = vsel %vm1348, %v1190, 0.0
      %v1381 = vsel %vm1349, %v1191, 0.0
      %v1382 = vsel %vm1350, %v1192, 0.0
      %v1383 = vsel %vm1351, %v1193, 0.0
      %v1384 = vsel %vm1352, %v1194, 0.0
      %v1385 = vsel %vm1353, %v1195, 0.0
      %v1386 = vsel %vm1354, %v1196, 0.0
      %v1387 = vsel %vm1355, %v1197, 0.0
      %v1388 = vsel %vm1356, %v1166, 0.0
      %v1389 = vsel %vm1357, %v1167, 0.0
      %v1390 = vrot.slane %v1262, 7
      %v1391 = vrot.slane %v1263, 7
      %v1392 = vrot.slane %v1264, 7
      %v1393 = vrot.slane %v1265, 7
      %v1394 = vrot.slane %v1266, 7
      %v1395 = vrot.slane %v1267, 7
      %v1396 = vrot.slane %v1268, 7
      %v1397 = vrot.slane %v1269, 7
      %v1398 = vrot.slane %v1270, 7
      %v1399 = vrot.slane %v1271, 7
      %v1400 = vrot.slane %v1272, 7
      %v1401 = vrot.slane %v1273, 7
      %v1402 = vrot.slane %v1274, 7
      %v1403 = vrot.slane %v1275, 7
      %v1404 = vrot.slane %v1276, 7
      %v1405 = vrot.slane %v1277, 7
      %v1406 = vrot.slane %v1278, 7
      %v1407 = vrot.slane %v1279, 7
      %v1408 = vrot.slane %v1280, 7
      %v1409 = vrot.slane %v1281, 7
      %v1410 = vrot.slane %v1282, 7
      %v1411 = vrot.slane %v1283, 7
      %v1412 = vrot.slane %v1284, 7
      %v1413 = vrot.slane %v1285, 7
      %v1414 = vrot.slane %v1286, 7
      %v1415 = vrot.slane %v1287, 7
      %v1416 = vrot.slane %v1288, 7
      %v1417 = vrot.slane %v1289, 7
      %v1418 = vrot.slane %v1290, 7
      %v1419 = vrot.slane %v1291, 7
      %v1420 = vrot.slane %v1292, 7
      %v1421 = vrot.slane %v1293, 7
      %vm1422 = vcmp.lt.s32.totalorder %v200, 1
      %v1423 = vsel %vm1422, %v1420, %v1421
      %v1424 = vsel %vm1422, %v1419, %v1420
      %v1425 = vsel %vm1422, %v1418, %v1419
      %v1426 = vsel %vm1422, %v1417, %v1418
      %v1427 = vsel %vm1422, %v1416, %v1417
      %v1428 = vsel %vm1422, %v1415, %v1416
      %v1429 = vsel %vm1422, %v1414, %v1415
      %v1430 = vsel %vm1422, %v1413, %v1414
      %v1431 = vsel %vm1422, %v1412, %v1413
      %v1432 = vsel %vm1422, %v1411, %v1412
      %v1433 = vsel %vm1422, %v1410, %v1411
      %v1434 = vsel %vm1422, %v1409, %v1410
      %v1435 = vsel %vm1422, %v1408, %v1409
      %v1436 = vsel %vm1422, %v1407, %v1408
      %v1437 = vsel %vm1422, %v1406, %v1407
      %v1438 = vsel %vm1422, %v1405, %v1406
      %v1439 = vsel %vm1422, %v1404, %v1405
      %v1440 = vsel %vm1422, %v1403, %v1404
      %v1441 = vsel %vm1422, %v1402, %v1403
      %v1442 = vsel %vm1422, %v1401, %v1402
      %v1443 = vsel %vm1422, %v1400, %v1401
      %v1444 = vsel %vm1422, %v1399, %v1400
      %v1445 = vsel %vm1422, %v1398, %v1399
      %v1446 = vsel %vm1422, %v1397, %v1398
      %v1447 = vsel %vm1422, %v1396, %v1397
      %v1448 = vsel %vm1422, %v1395, %v1396
      %v1449 = vsel %vm1422, %v1394, %v1395
      %v1450 = vsel %vm1422, %v1393, %v1394
      %v1451 = vsel %vm1422, %v1392, %v1393
      %v1452 = vsel %vm1422, %v1391, %v1392
      %v1453 = vsel %vm1422, %v1390, %v1391
      %v1454 = vsel %vm1422, %v1421, %v1390
      %v1455 = vsel %vm616, 1, 0
      %v1456 = vsel %vm617, 1, 0
      %v1457 = vsel %vm618, 1, 0
      %v1458 = vsel %vm619, 1, 0
      %v1459 = vsel %vm620, 1, 0
      %v1460 = vsel %vm621, 1, 0
      %v1461 = vsel %vm622, 1, 0
      %v1462 = vsel %vm623, 1, 0
      %v1463 = vsel %vm624, 1, 0
      %v1464 = vsel %vm625, 1, 0
      %v1465 = vsel %vm626, 1, 0
      %v1466 = vsel %vm627, 1, 0
      %v1467 = vsel %vm628, 1, 0
      %v1468 = vsel %vm629, 1, 0
      %v1469 = vsel %vm630, 1, 0
      %v1470 = vsel %vm631, 1, 0
      %v1471 = vsel %vm632, 1, 0
      %v1472 = vsel %vm633, 1, 0
      %v1473 = vsel %vm634, 1, 0
      %v1474 = vsel %vm635, 1, 0
      %v1475 = vsel %vm636, 1, 0
      %v1476 = vsel %vm637, 1, 0
      %v1477 = vsel %vm638, 1, 0
      %v1478 = vsel %vm639, 1, 0
      %v1479 = vsel %vm640, 1, 0
      %v1480 = vsel %vm641, 1, 0
      %v1481 = vsel %vm642, 1, 0
      %v1482 = vsel %vm643, 1, 0
      %v1483 = vsel %vm644, 1, 0
      %v1484 = vsel %vm645, 1, 0
      %v1485 = vsel %vm646, 1, 0
      %v1486 = vsel %vm647, 1, 0
      %vm1487 = vcmp.eq.s32.totalorder %v1455, 1
      %vm1488 = vcmp.eq.s32.totalorder %v1456, 1
      %vm1489 = vcmp.eq.s32.totalorder %v1457, 1
      %vm1490 = vcmp.eq.s32.totalorder %v1458, 1
      %vm1491 = vcmp.eq.s32.totalorder %v1459, 1
      %vm1492 = vcmp.eq.s32.totalorder %v1460, 1
      %vm1493 = vcmp.eq.s32.totalorder %v1461, 1
      %vm1494 = vcmp.eq.s32.totalorder %v1462, 1
      %vm1495 = vcmp.eq.s32.totalorder %v1463, 1
      %vm1496 = vcmp.eq.s32.totalorder %v1464, 1
      %vm1497 = vcmp.eq.s32.totalorder %v1465, 1
      %vm1498 = vcmp.eq.s32.totalorder %v1466, 1
      %vm1499 = vcmp.eq.s32.totalorder %v1467, 1
      %vm1500 = vcmp.eq.s32.totalorder %v1468, 1
      %vm1501 = vcmp.eq.s32.totalorder %v1469, 1
      %vm1502 = vcmp.eq.s32.totalorder %v1470, 1
      %vm1503 = vcmp.eq.s32.totalorder %v1471, 1
      %vm1504 = vcmp.eq.s32.totalorder %v1472, 1
      %vm1505 = vcmp.eq.s32.totalorder %v1473, 1
      %vm1506 = vcmp.eq.s32.totalorder %v1474, 1
      %vm1507 = vcmp.eq.s32.totalorder %v1475, 1
      %vm1508 = vcmp.eq.s32.totalorder %v1476, 1
      %vm1509 = vcmp.eq.s32.totalorder %v1477, 1
      %vm1510 = vcmp.eq.s32.totalorder %v1478, 1
      %vm1511 = vcmp.eq.s32.totalorder %v1479, 1
      %vm1512 = vcmp.eq.s32.totalorder %v1480, 1
      %vm1513 = vcmp.eq.s32.totalorder %v1481, 1
      %vm1514 = vcmp.eq.s32.totalorder %v1482, 1
      %vm1515 = vcmp.eq.s32.totalorder %v1483, 1
      %vm1516 = vcmp.eq.s32.totalorder %v1484, 1
      %vm1517 = vcmp.eq.s32.totalorder %v1485, 1
      %vm1518 = vcmp.eq.s32.totalorder %v1486, 1
      %v1519 = vsel %vm1487, %v1454, 0.0
      %v1520 = vsel %vm1488, %v1453, 0.0
      %v1521 = vsel %vm1489, %v1452, 0.0
      %v1522 = vsel %vm1490, %v1451, 0.0
      %v1523 = vsel %vm1491, %v1450, 0.0
      %v1524 = vsel %vm1492, %v1449, 0.0
      %v1525 = vsel %vm1493, %v1448, 0.0
      %v1526 = vsel %vm1494, %v1447, 0.0
      %v1527 = vsel %vm1495, %v1446, 0.0
      %v1528 = vsel %vm1496, %v1445, 0.0
      %v1529 = vsel %vm1497, %v1444, 0.0
      %v1530 = vsel %vm1498, %v1443, 0.0
      %v1531 = vsel %vm1499, %v1442, 0.0
      %v1532 = vsel %vm1500, %v1441, 0.0
      %v1533 = vsel %vm1501, %v1440, 0.0
      %v1534 = vsel %vm1502, %v1439, 0.0
      %v1535 = vsel %vm1503, %v1438, 0.0
      %v1536 = vsel %vm1504, %v1437, 0.0
      %v1537 = vsel %vm1505, %v1436, 0.0
      %v1538 = vsel %vm1506, %v1435, 0.0
      %v1539 = vsel %vm1507, %v1434, 0.0
      %v1540 = vsel %vm1508, %v1433, 0.0
      %v1541 = vsel %vm1509, %v1432, 0.0
      %v1542 = vsel %vm1510, %v1431, 0.0
      %v1543 = vsel %vm1511, %v1430, 0.0
      %v1544 = vsel %vm1512, %v1429, 0.0
      %v1545 = vsel %vm1513, %v1428, 0.0
      %v1546 = vsel %vm1514, %v1427, 0.0
      %v1547 = vsel %vm1515, %v1426, 0.0
      %v1548 = vsel %vm1516, %v1425, 0.0
      %v1549 = vsel %vm1517, %v1424, 0.0
      %v1550 = vsel %vm1518, %v1423, 0.0
      %v1551 = vrot.slane %v1262, 1
      %v1552 = vrot.slane %v1263, 1
      %v1553 = vrot.slane %v1264, 1
      %v1554 = vrot.slane %v1265, 1
      %v1555 = vrot.slane %v1266, 1
      %v1556 = vrot.slane %v1267, 1
      %v1557 = vrot.slane %v1268, 1
      %v1558 = vrot.slane %v1269, 1
      %v1559 = vrot.slane %v1270, 1
      %v1560 = vrot.slane %v1271, 1
      %v1561 = vrot.slane %v1272, 1
      %v1562 = vrot.slane %v1273, 1
      %v1563 = vrot.slane %v1274, 1
      %v1564 = vrot.slane %v1275, 1
      %v1565 = vrot.slane %v1276, 1
      %v1566 = vrot.slane %v1277, 1
      %v1567 = vrot.slane %v1278, 1
      %v1568 = vrot.slane %v1279, 1
      %v1569 = vrot.slane %v1280, 1
      %v1570 = vrot.slane %v1281, 1
      %v1571 = vrot.slane %v1282, 1
      %v1572 = vrot.slane %v1283, 1
      %v1573 = vrot.slane %v1284, 1
      %v1574 = vrot.slane %v1285, 1
      %v1575 = vrot.slane %v1286, 1
      %v1576 = vrot.slane %v1287, 1
      %v1577 = vrot.slane %v1288, 1
      %v1578 = vrot.slane %v1289, 1
      %v1579 = vrot.slane %v1290, 1
      %v1580 = vrot.slane %v1291, 1
      %v1581 = vrot.slane %v1292, 1
      %v1582 = vrot.slane %v1293, 1
      %vm1583 = vcmp.lt.s32.totalorder %v200, 7
      %v1584 = vsel %vm1583, %v1581, %v1582
      %v1585 = vsel %vm1583, %v1580, %v1581
      %v1586 = vsel %vm1583, %v1579, %v1580
      %v1587 = vsel %vm1583, %v1578, %v1579
      %v1588 = vsel %vm1583, %v1577, %v1578
      %v1589 = vsel %vm1583, %v1576, %v1577
      %v1590 = vsel %vm1583, %v1575, %v1576
      %v1591 = vsel %vm1583, %v1574, %v1575
      %v1592 = vsel %vm1583, %v1573, %v1574
      %v1593 = vsel %vm1583, %v1572, %v1573
      %v1594 = vsel %vm1583, %v1571, %v1572
      %v1595 = vsel %vm1583, %v1570, %v1571
      %v1596 = vsel %vm1583, %v1569, %v1570
      %v1597 = vsel %vm1583, %v1568, %v1569
      %v1598 = vsel %vm1583, %v1567, %v1568
      %v1599 = vsel %vm1583, %v1566, %v1567
      %v1600 = vsel %vm1583, %v1565, %v1566
      %v1601 = vsel %vm1583, %v1564, %v1565
      %v1602 = vsel %vm1583, %v1563, %v1564
      %v1603 = vsel %vm1583, %v1562, %v1563
      %v1604 = vsel %vm1583, %v1561, %v1562
      %v1605 = vsel %vm1583, %v1560, %v1561
      %v1606 = vsel %vm1583, %v1559, %v1560
      %v1607 = vsel %vm1583, %v1558, %v1559
      %v1608 = vsel %vm1583, %v1557, %v1558
      %v1609 = vsel %vm1583, %v1556, %v1557
      %v1610 = vsel %vm1583, %v1555, %v1556
      %v1611 = vsel %vm1583, %v1554, %v1555
      %v1612 = vsel %vm1583, %v1553, %v1554
      %v1613 = vsel %vm1583, %v1552, %v1553
      %v1614 = vsel %vm1583, %v1551, %v1552
      %v1615 = vsel %vm1583, %v1582, %v1551
      %v1616 = vsel %vm648, 1, 0
      %v1617 = vsel %vm649, 1, 0
      %v1618 = vsel %vm650, 1, 0
      %v1619 = vsel %vm651, 1, 0
      %v1620 = vsel %vm652, 1, 0
      %v1621 = vsel %vm653, 1, 0
      %v1622 = vsel %vm654, 1, 0
      %v1623 = vsel %vm655, 1, 0
      %v1624 = vsel %vm656, 1, 0
      %v1625 = vsel %vm657, 1, 0
      %v1626 = vsel %vm658, 1, 0
      %v1627 = vsel %vm659, 1, 0
      %v1628 = vsel %vm660, 1, 0
      %v1629 = vsel %vm661, 1, 0
      %v1630 = vsel %vm662, 1, 0
      %v1631 = vsel %vm663, 1, 0
      %v1632 = vsel %vm664, 1, 0
      %v1633 = vsel %vm665, 1, 0
      %v1634 = vsel %vm666, 1, 0
      %v1635 = vsel %vm667, 1, 0
      %v1636 = vsel %vm668, 1, 0
      %v1637 = vsel %vm669, 1, 0
      %v1638 = vsel %vm670, 1, 0
      %v1639 = vsel %vm671, 1, 0
      %v1640 = vsel %vm672, 1, 0
      %v1641 = vsel %vm673, 1, 0
      %v1642 = vsel %vm674, 1, 0
      %v1643 = vsel %vm675, 1, 0
      %v1644 = vsel %vm676, 1, 0
      %v1645 = vsel %vm677, 1, 0
      %v1646 = vsel %vm678, 1, 0
      %v1647 = vsel %vm679, 1, 0
      %vm1648 = vcmp.eq.s32.totalorder %v1616, 1
      %vm1649 = vcmp.eq.s32.totalorder %v1617, 1
      %vm1650 = vcmp.eq.s32.totalorder %v1618, 1
      %vm1651 = vcmp.eq.s32.totalorder %v1619, 1
      %vm1652 = vcmp.eq.s32.totalorder %v1620, 1
      %vm1653 = vcmp.eq.s32.totalorder %v1621, 1
      %vm1654 = vcmp.eq.s32.totalorder %v1622, 1
      %vm1655 = vcmp.eq.s32.totalorder %v1623, 1
      %vm1656 = vcmp.eq.s32.totalorder %v1624, 1
      %vm1657 = vcmp.eq.s32.totalorder %v1625, 1
      %vm1658 = vcmp.eq.s32.totalorder %v1626, 1
      %vm1659 = vcmp.eq.s32.totalorder %v1627, 1
      %vm1660 = vcmp.eq.s32.totalorder %v1628, 1
      %vm1661 = vcmp.eq.s32.totalorder %v1629, 1
      %vm1662 = vcmp.eq.s32.totalorder %v1630, 1
      %vm1663 = vcmp.eq.s32.totalorder %v1631, 1
      %vm1664 = vcmp.eq.s32.totalorder %v1632, 1
      %vm1665 = vcmp.eq.s32.totalorder %v1633, 1
      %vm1666 = vcmp.eq.s32.totalorder %v1634, 1
      %vm1667 = vcmp.eq.s32.totalorder %v1635, 1
      %vm1668 = vcmp.eq.s32.totalorder %v1636, 1
      %vm1669 = vcmp.eq.s32.totalorder %v1637, 1
      %vm1670 = vcmp.eq.s32.totalorder %v1638, 1
      %vm1671 = vcmp.eq.s32.totalorder %v1639, 1
      %vm1672 = vcmp.eq.s32.totalorder %v1640, 1
      %vm1673 = vcmp.eq.s32.totalorder %v1641, 1
      %vm1674 = vcmp.eq.s32.totalorder %v1642, 1
      %vm1675 = vcmp.eq.s32.totalorder %v1643, 1
      %vm1676 = vcmp.eq.s32.totalorder %v1644, 1
      %vm1677 = vcmp.eq.s32.totalorder %v1645, 1
      %vm1678 = vcmp.eq.s32.totalorder %v1646, 1
      %vm1679 = vcmp.eq.s32.totalorder %v1647, 1
      %v1680 = vsel %vm1648, %v1614, 0.0
      %v1681 = vsel %vm1649, %v1613, 0.0
      %v1682 = vsel %vm1650, %v1612, 0.0
      %v1683 = vsel %vm1651, %v1611, 0.0
      %v1684 = vsel %vm1652, %v1610, 0.0
      %v1685 = vsel %vm1653, %v1609, 0.0
      %v1686 = vsel %vm1654, %v1608, 0.0
      %v1687 = vsel %vm1655, %v1607, 0.0
      %v1688 = vsel %vm1656, %v1606, 0.0
      %v1689 = vsel %vm1657, %v1605, 0.0
      %v1690 = vsel %vm1658, %v1604, 0.0
      %v1691 = vsel %vm1659, %v1603, 0.0
      %v1692 = vsel %vm1660, %v1602, 0.0
      %v1693 = vsel %vm1661, %v1601, 0.0
      %v1694 = vsel %vm1662, %v1600, 0.0
      %v1695 = vsel %vm1663, %v1599, 0.0
      %v1696 = vsel %vm1664, %v1598, 0.0
      %v1697 = vsel %vm1665, %v1597, 0.0
      %v1698 = vsel %vm1666, %v1596, 0.0
      %v1699 = vsel %vm1667, %v1595, 0.0
      %v1700 = vsel %vm1668, %v1594, 0.0
      %v1701 = vsel %vm1669, %v1593, 0.0
      %v1702 = vsel %vm1670, %v1592, 0.0
      %v1703 = vsel %vm1671, %v1591, 0.0
      %v1704 = vsel %vm1672, %v1590, 0.0
      %v1705 = vsel %vm1673, %v1589, 0.0
      %v1706 = vsel %vm1674, %v1588, 0.0
      %v1707 = vsel %vm1675, %v1587, 0.0
      %v1708 = vsel %vm1676, %v1586, 0.0
      %v1709 = vsel %vm1677, %v1585, 0.0
      %v1710 = vsel %vm1678, %v1584, 0.0
      %v1711 = vsel %vm1679, %v1615, 0.0
      %v1712 = vpack.c.bf16 %v1520, %v1519
      %v1713 = vpack.c.bf16 %v1522, %v1521
      %v1714 = vpack.c.bf16 %v1524, %v1523
      %v1715 = vpack.c.bf16 %v1526, %v1525
      %v1716 = vpack.c.bf16 %v1528, %v1527
      %v1717 = vpack.c.bf16 %v1530, %v1529
      %v1718 = vpack.c.bf16 %v1532, %v1531
      %v1719 = vpack.c.bf16 %v1534, %v1533
      %v1720 = vpack.c.bf16 %v1536, %v1535
      %v1721 = vpack.c.bf16 %v1538, %v1537
      %v1722 = vpack.c.bf16 %v1540, %v1539
      %v1723 = vpack.c.bf16 %v1542, %v1541
      %v1724 = vpack.c.bf16 %v1544, %v1543
      %v1725 = vpack.c.bf16 %v1546, %v1545
      %v1726 = vpack.c.bf16 %v1548, %v1547
      %v1727 = vpack.c.bf16 %v1550, %v1549
      %v1728 = vpack.c.bf16 %v1263, %v1262
      %v1729 = vpack.c.bf16 %v1265, %v1264
      %v1730 = vpack.c.bf16 %v1267, %v1266
      %v1731 = vpack.c.bf16 %v1269, %v1268
      %v1732 = vpack.c.bf16 %v1271, %v1270
      %v1733 = vpack.c.bf16 %v1273, %v1272
      %v1734 = vpack.c.bf16 %v1275, %v1274
      %v1735 = vpack.c.bf16 %v1277, %v1276
      %v1736 = vpack.c.bf16 %v1279, %v1278
      %v1737 = vpack.c.bf16 %v1281, %v1280
      %v1738 = vpack.c.bf16 %v1283, %v1282
      %v1739 = vpack.c.bf16 %v1285, %v1284
      %v1740 = vpack.c.bf16 %v1287, %v1286
      %v1741 = vpack.c.bf16 %v1289, %v1288
      %v1742 = vpack.c.bf16 %v1291, %v1290
      %v1743 = vpack.c.bf16 %v1293, %v1292
      %v1744 = vpack.c.bf16 %v1681, %v1680
      %v1745 = vpack.c.bf16 %v1683, %v1682
      %v1746 = vpack.c.bf16 %v1685, %v1684
      %v1747 = vpack.c.bf16 %v1687, %v1686
      %v1748 = vpack.c.bf16 %v1689, %v1688
      %v1749 = vpack.c.bf16 %v1691, %v1690
      %v1750 = vpack.c.bf16 %v1693, %v1692
      %v1751 = vpack.c.bf16 %v1695, %v1694
      %v1752 = vpack.c.bf16 %v1697, %v1696
      %v1753 = vpack.c.bf16 %v1699, %v1698
      %v1754 = vpack.c.bf16 %v1701, %v1700
      %v1755 = vpack.c.bf16 %v1703, %v1702
      %v1756 = vpack.c.bf16 %v1705, %v1704
      %v1757 = vpack.c.bf16 %v1707, %v1706
      %v1758 = vpack.c.bf16 %v1709, %v1708
      %v1759 = vpack.c.bf16 %v1711, %v1710
      %v1760 = vld [vmem:[%s2] sm:$0xf]
      %v1761 = vld [vmem:[%s2 + $0x4] sm:$0xf]
      %v1762 = vld [vmem:[%s2 + $0x8] sm:$0xf]
      %v1763 = vld [vmem:[%s2 + $0xc] sm:$0xf]
      %v1764 = vld [vmem:[%s2 + $0x10] sm:$0xf]
      %v1765 = vld [vmem:[%s2 + $0x14] sm:$0xf]
      %v1766 = vld [vmem:[%s2 + $0x18] sm:$0xf]
      %v1767 = vld [vmem:[%s2 + $0x1c] sm:$0xf]
      %v1768 = vld [vmem:[%s2 + $0x20] sm:$0xf]
      %v1769 = vld [vmem:[%s2 + $0x24] sm:$0xf]
      %v1770 = vld [vmem:[%s2 + $0x28] sm:$0xf]
      %v1771 = vld [vmem:[%s2 + $0x2c] sm:$0xf]
      %v1772 = vld [vmem:[%s2 + $0x30] sm:$0xf]
      %v1773 = vld [vmem:[%s2 + $0x34] sm:$0xf]
      %v1774 = vld [vmem:[%s2 + $0x38] sm:$0xf]
      %v1775 = vld [vmem:[%s2 + $0x3c] sm:$0xf]
      %v1776 = vld [vmem:[%s2 + $0x40] sm:$0xf]
      %v1777 = vld [vmem:[%s2 + $0x44] sm:$0xf]
      %v1778 = vld [vmem:[%s2 + $0x48] sm:$0xf]
      %v1779 = vld [vmem:[%s2 + $0x4c] sm:$0xf]
      %v1780 = vld [vmem:[%s2 + $0x50] sm:$0xf]
      %v1781 = vld [vmem:[%s2 + $0x54] sm:$0xf]
      %v1782 = vld [vmem:[%s2 + $0x58] sm:$0xf]
      %v1783 = vld [vmem:[%s2 + $0x5c] sm:$0xf]
      %v1784 = vld [vmem:[%s2 + $0x60] sm:$0xf]
      %v1785 = vld [vmem:[%s2 + $0x64] sm:$0xf]
      %v1786 = vld [vmem:[%s2 + $0x68] sm:$0xf]
      %v1787 = vld [vmem:[%s2 + $0x6c] sm:$0xf]
      %v1788 = vld [vmem:[%s2 + $0x70] sm:$0xf]
      %v1789 = vld [vmem:[%s2 + $0x74] sm:$0xf]
      %v1790 = vld [vmem:[%s2 + $0x78] sm:$0xf]
      %v1791 = vld [vmem:[%s2 + $0x7c] sm:$0xf]
      %v1792 = vld [vmem:[%s2 + $0x80] sm:$0xf]
      %v1793 = vld [vmem:[%s2 + $0x84] sm:$0xf]
      %v1794 = vld [vmem:[%s2 + $0x88] sm:$0xf]
      %v1795 = vld [vmem:[%s2 + $0x8c] sm:$0xf]
      %v1796 = vld [vmem:[%s2 + $0x90] sm:$0xf]
      %v1797 = vld [vmem:[%s2 + $0x94] sm:$0xf]
      %v1798 = vld [vmem:[%s2 + $0x98] sm:$0xf]
      %v1799 = vld [vmem:[%s2 + $0x9c] sm:$0xf]
      %v1800 = vld [vmem:[%s2 + $0xa0] sm:$0xf]
      %v1801 = vld [vmem:[%s2 + $0xa4] sm:$0xf]
      %v1802 = vld [vmem:[%s2 + $0xa8] sm:$0xf]
      %v1803 = vld [vmem:[%s2 + $0xac] sm:$0xf]
      %v1804 = vld [vmem:[%s2 + $0xb0] sm:$0xf]
      %v1805 = vld [vmem:[%s2 + $0xb4] sm:$0xf]
      %v1806 = vld [vmem:[%s2 + $0xb8] sm:$0xf]
      %v1807 = vld [vmem:[%s2 + $0xbc] sm:$0xf]
      %v1808 = vrot.slane %v1166, 7
      %v1809 = vrot.slane %v1167, 7
      %v1810 = vrot.slane %v1168, 7
      %v1811 = vrot.slane %v1169, 7
      %v1812 = vrot.slane %v1170, 7
      %v1813 = vrot.slane %v1171, 7
      %v1814 = vrot.slane %v1172, 7
      %v1815 = vrot.slane %v1173, 7
      %v1816 = vrot.slane %v1174, 7
      %v1817 = vrot.slane %v1175, 7
      %v1818 = vrot.slane %v1176, 7
      %v1819 = vrot.slane %v1177, 7
      %v1820 = vrot.slane %v1178, 7
      %v1821 = vrot.slane %v1179, 7
      %v1822 = vrot.slane %v1180, 7
      %v1823 = vrot.slane %v1181, 7
      %v1824 = vrot.slane %v1182, 7
      %v1825 = vrot.slane %v1183, 7
      %v1826 = vrot.slane %v1184, 7
      %v1827 = vrot.slane %v1185, 7
      %v1828 = vrot.slane %v1186, 7
      %v1829 = vrot.slane %v1187, 7
      %v1830 = vrot.slane %v1188, 7
      %v1831 = vrot.slane %v1189, 7
      %v1832 = vrot.slane %v1190, 7
      %v1833 = vrot.slane %v1191, 7
      %v1834 = vrot.slane %v1192, 7
      %v1835 = vrot.slane %v1193, 7
      %v1836 = vrot.slane %v1194, 7
      %v1837 = vrot.slane %v1195, 7
      %v1838 = vrot.slane %v1196, 7
      %v1839 = vrot.slane %v1197, 7
      %v1840 = vsel %vm1422, %v1838, %v1839
      %v1841 = vsel %vm1422, %v1837, %v1838
      %v1842 = vsel %vm1422, %v1836, %v1837
      %v1843 = vsel %vm1422, %v1835, %v1836
      %v1844 = vsel %vm1422, %v1834, %v1835
      %v1845 = vsel %vm1422, %v1833, %v1834
      %v1846 = vsel %vm1422, %v1832, %v1833
      %v1847 = vsel %vm1422, %v1831, %v1832
      %v1848 = vsel %vm1422, %v1830, %v1831
      %v1849 = vsel %vm1422, %v1829, %v1830
      %v1850 = vsel %vm1422, %v1828, %v1829
      %v1851 = vsel %vm1422, %v1827, %v1828
      %v1852 = vsel %vm1422, %v1826, %v1827
      %v1853 = vsel %vm1422, %v1825, %v1826
      %v1854 = vsel %vm1422, %v1824, %v1825
      %v1855 = vsel %vm1422, %v1823, %v1824
      %v1856 = vsel %vm1422, %v1822, %v1823
      %v1857 = vsel %vm1422, %v1821, %v1822
      %v1858 = vsel %vm1422, %v1820, %v1821
      %v1859 = vsel %vm1422, %v1819, %v1820
      %v1860 = vsel %vm1422, %v1818, %v1819
      %v1861 = vsel %vm1422, %v1817, %v1818
      %v1862 = vsel %vm1422, %v1816, %v1817
      %v1863 = vsel %vm1422, %v1815, %v1816
      %v1864 = vsel %vm1422, %v1814, %v1815
      %v1865 = vsel %vm1422, %v1813, %v1814
      %v1866 = vsel %vm1422, %v1812, %v1813
      %v1867 = vsel %vm1422, %v1811, %v1812
      %v1868 = vsel %vm1422, %v1810, %v1811
      %v1869 = vsel %vm1422, %v1809, %v1810
      %v1870 = vsel %vm1422, %v1808, %v1809
      %v1871 = vsel %vm1422, %v1839, %v1808
      %v1872 = vsel %vm1487, %v1871, 0.0
      %v1873 = vsel %vm1488, %v1870, 0.0
      %v1874 = vsel %vm1489, %v1869, 0.0
      %v1875 = vsel %vm1490, %v1868, 0.0
      %v1876 = vsel %vm1491, %v1867, 0.0
      %v1877 = vsel %vm1492, %v1866, 0.0
      %v1878 = vsel %vm1493, %v1865, 0.0
      %v1879 = vsel %vm1494, %v1864, 0.0
      %v1880 = vsel %vm1495, %v1863, 0.0
      %v1881 = vsel %vm1496, %v1862, 0.0
      %v1882 = vsel %vm1497, %v1861, 0.0
      %v1883 = vsel %vm1498, %v1860, 0.0
      %v1884 = vsel %vm1499, %v1859, 0.0
      %v1885 = vsel %vm1500, %v1858, 0.0
      %v1886 = vsel %vm1501, %v1857, 0.0
      %v1887 = vsel %vm1502, %v1856, 0.0
      %v1888 = vsel %vm1503, %v1855, 0.0
      %v1889 = vsel %vm1504, %v1854, 0.0
      %v1890 = vsel %vm1505, %v1853, 0.0
      %v1891 = vsel %vm1506, %v1852, 0.0
      %v1892 = vsel %vm1507, %v1851, 0.0
      %v1893 = vsel %vm1508, %v1850, 0.0
      %v1894 = vsel %vm1509, %v1849, 0.0
      %v1895 = vsel %vm1510, %v1848, 0.0
      %v1896 = vsel %vm1511, %v1847, 0.0
      %v1897 = vsel %vm1512, %v1846, 0.0
      %v1898 = vsel %vm1513, %v1845, 0.0
      %v1899 = vsel %vm1514, %v1844, 0.0
      %v1900 = vsel %vm1515, %v1843, 0.0
      %v1901 = vsel %vm1516, %v1842, 0.0
      %v1902 = vsel %vm1517, %v1841, 0.0
      %v1903 = vsel %vm1518, %v1840, 0.0
      %v1904 = vrot.slane %v1166, 1
      %v1905 = vrot.slane %v1167, 1
      %v1906 = vrot.slane %v1168, 1
      %v1907 = vrot.slane %v1169, 1
      %v1908 = vrot.slane %v1170, 1
      %v1909 = vrot.slane %v1171, 1
      %v1910 = vrot.slane %v1172, 1
      %v1911 = vrot.slane %v1173, 1
      %v1912 = vrot.slane %v1174, 1
      %v1913 = vrot.slane %v1175, 1
      %v1914 = vrot.slane %v1176, 1
      %v1915 = vrot.slane %v1177, 1
      %v1916 = vrot.slane %v1178, 1
      %v1917 = vrot.slane %v1179, 1
      %v1918 = vrot.slane %v1180, 1
      %v1919 = vrot.slane %v1181, 1
      %v1920 = vrot.slane %v1182, 1
      %v1921 = vrot.slane %v1183, 1
      %v1922 = vrot.slane %v1184, 1
      %v1923 = vrot.slane %v1185, 1
      %v1924 = vrot.slane %v1186, 1
      %v1925 = vrot.slane %v1187, 1
      %v1926 = vrot.slane %v1188, 1
      %v1927 = vrot.slane %v1189, 1
      %v1928 = vrot.slane %v1190, 1
      %v1929 = vrot.slane %v1191, 1
      %v1930 = vrot.slane %v1192, 1
      %v1931 = vrot.slane %v1193, 1
      %v1932 = vrot.slane %v1194, 1
      %v1933 = vrot.slane %v1195, 1
      %v1934 = vrot.slane %v1196, 1
      %v1935 = vrot.slane %v1197, 1
      %v1936 = vsel %vm1583, %v1934, %v1935
      %v1937 = vsel %vm1583, %v1933, %v1934
      %v1938 = vsel %vm1583, %v1932, %v1933
      %v1939 = vsel %vm1583, %v1931, %v1932
      %v1940 = vsel %vm1583, %v1930, %v1931
      %v1941 = vsel %vm1583, %v1929, %v1930
      %v1942 = vsel %vm1583, %v1928, %v1929
      %v1943 = vsel %vm1583, %v1927, %v1928
      %v1944 = vsel %vm1583, %v1926, %v1927
      %v1945 = vsel %vm1583, %v1925, %v1926
      %v1946 = vsel %vm1583, %v1924, %v1925
      %v1947 = vsel %vm1583, %v1923, %v1924
      %v1948 = vsel %vm1583, %v1922, %v1923
      %v1949 = vsel %vm1583, %v1921, %v1922
      %v1950 = vsel %vm1583, %v1920, %v1921
      %v1951 = vsel %vm1583, %v1919, %v1920
      %v1952 = vsel %vm1583, %v1918, %v1919
      %v1953 = vsel %vm1583, %v1917, %v1918
      %v1954 = vsel %vm1583, %v1916, %v1917
      %v1955 = vsel %vm1583, %v1915, %v1916
      %v1956 = vsel %vm1583, %v1914, %v1915
      %v1957 = vsel %vm1583, %v1913, %v1914
      %v1958 = vsel %vm1583, %v1912, %v1913
      %v1959 = vsel %vm1583, %v1911, %v1912
      %v1960 = vsel %vm1583, %v1910, %v1911
      %v1961 = vsel %vm1583, %v1909, %v1910
      %v1962 = vsel %vm1583, %v1908, %v1909
      %v1963 = vsel %vm1583, %v1907, %v1908
      %v1964 = vsel %vm1583, %v1906, %v1907
      %v1965 = vsel %vm1583, %v1905, %v1906
      %v1966 = vsel %vm1583, %v1904, %v1905
      %v1967 = vsel %vm1583, %v1935, %v1904
      %v1968 = vsel %vm1648, %v1966, 0.0
      %v1969 = vsel %vm1649, %v1965, 0.0
      %v1970 = vsel %vm1650, %v1964, 0.0
      %v1971 = vsel %vm1651, %v1963, 0.0
      %v1972 = vsel %vm1652, %v1962, 0.0
      %v1973 = vsel %vm1653, %v1961, 0.0
      %v1974 = vsel %vm1654, %v1960, 0.0
      %v1975 = vsel %vm1655, %v1959, 0.0
      %v1976 = vsel %vm1656, %v1958, 0.0
      %v1977 = vsel %vm1657, %v1957, 0.0
      %v1978 = vsel %vm1658, %v1956, 0.0
      %v1979 = vsel %vm1659, %v1955, 0.0
      %v1980 = vsel %vm1660, %v1954, 0.0
      %v1981 = vsel %vm1661, %v1953, 0.0
      %v1982 = vsel %vm1662, %v1952, 0.0
      %v1983 = vsel %vm1663, %v1951, 0.0
      %v1984 = vsel %vm1664, %v1950, 0.0
      %v1985 = vsel %vm1665, %v1949, 0.0
      %v1986 = vsel %vm1666, %v1948, 0.0
      %v1987 = vsel %vm1667, %v1947, 0.0
      %v1988 = vsel %vm1668, %v1946, 0.0
      %v1989 = vsel %vm1669, %v1945, 0.0
      %v1990 = vsel %vm1670, %v1944, 0.0
      %v1991 = vsel %vm1671, %v1943, 0.0
      %v1992 = vsel %vm1672, %v1942, 0.0
      %v1993 = vsel %vm1673, %v1941, 0.0
      %v1994 = vsel %vm1674, %v1940, 0.0
      %v1995 = vsel %vm1675, %v1939, 0.0
      %v1996 = vsel %vm1676, %v1938, 0.0
      %v1997 = vsel %vm1677, %v1937, 0.0
      %v1998 = vsel %vm1678, %v1936, 0.0
      %v1999 = vsel %vm1679, %v1967, 0.0
      %v2000 = vpack.c.bf16 %v1873, %v1872
      %v2001 = vpack.c.bf16 %v1875, %v1874
      %v2002 = vpack.c.bf16 %v1877, %v1876
      %v2003 = vpack.c.bf16 %v1879, %v1878
      %v2004 = vpack.c.bf16 %v1881, %v1880
      %v2005 = vpack.c.bf16 %v1883, %v1882
      %v2006 = vpack.c.bf16 %v1885, %v1884
      %v2007 = vpack.c.bf16 %v1887, %v1886
      %v2008 = vpack.c.bf16 %v1889, %v1888
      %v2009 = vpack.c.bf16 %v1891, %v1890
      %v2010 = vpack.c.bf16 %v1893, %v1892
      %v2011 = vpack.c.bf16 %v1895, %v1894
      %v2012 = vpack.c.bf16 %v1897, %v1896
      %v2013 = vpack.c.bf16 %v1899, %v1898
      %v2014 = vpack.c.bf16 %v1901, %v1900
      %v2015 = vpack.c.bf16 %v1903, %v1902
      %v2016 = vpack.c.bf16 %v1167, %v1166
      %v2017 = vpack.c.bf16 %v1169, %v1168
      %v2018 = vpack.c.bf16 %v1171, %v1170
      %v2019 = vpack.c.bf16 %v1173, %v1172
      %v2020 = vpack.c.bf16 %v1175, %v1174
      %v2021 = vpack.c.bf16 %v1177, %v1176
      %v2022 = vpack.c.bf16 %v1179, %v1178
      %v2023 = vpack.c.bf16 %v1181, %v1180
      %v2024 = vpack.c.bf16 %v1183, %v1182
      %v2025 = vpack.c.bf16 %v1185, %v1184
      %v2026 = vpack.c.bf16 %v1187, %v1186
      %v2027 = vpack.c.bf16 %v1189, %v1188
      %v2028 = vpack.c.bf16 %v1191, %v1190
      %v2029 = vpack.c.bf16 %v1193, %v1192
      %v2030 = vpack.c.bf16 %v1195, %v1194
      %v2031 = vpack.c.bf16 %v1197, %v1196
      %v2032 = vpack.c.bf16 %v1969, %v1968
      %v2033 = vpack.c.bf16 %v1971, %v1970
      %v2034 = vpack.c.bf16 %v1973, %v1972
      %v2035 = vpack.c.bf16 %v1975, %v1974
      %v2036 = vpack.c.bf16 %v1977, %v1976
      %v2037 = vpack.c.bf16 %v1979, %v1978
      %v2038 = vpack.c.bf16 %v1981, %v1980
      %v2039 = vpack.c.bf16 %v1983, %v1982
      %v2040 = vpack.c.bf16 %v1985, %v1984
      %v2041 = vpack.c.bf16 %v1987, %v1986
      %v2042 = vpack.c.bf16 %v1989, %v1988
      %v2043 = vpack.c.bf16 %v1991, %v1990
      %v2044 = vpack.c.bf16 %v1993, %v1992
      %v2045 = vpack.c.bf16 %v1995, %v1994
      %v2046 = vpack.c.bf16 %v1997, %v1996
      %v2047 = vpack.c.bf16 %v1999, %v1998
      %v2048 = vld [vmem:[%s2 + $0xc0] sm:$0xf]
      %v2049 = vld [vmem:[%s2 + $0xc4] sm:$0xf]
      %v2050 = vld [vmem:[%s2 + $0xc8] sm:$0xf]
      %v2051 = vld [vmem:[%s2 + $0xcc] sm:$0xf]
      %v2052 = vld [vmem:[%s2 + $0xd0] sm:$0xf]
      %v2053 = vld [vmem:[%s2 + $0xd4] sm:$0xf]
      %v2054 = vld [vmem:[%s2 + $0xd8] sm:$0xf]
      %v2055 = vld [vmem:[%s2 + $0xdc] sm:$0xf]
      %v2056 = vld [vmem:[%s2 + $0xe0] sm:$0xf]
      %v2057 = vld [vmem:[%s2 + $0xe4] sm:$0xf]
      %v2058 = vld [vmem:[%s2 + $0xe8] sm:$0xf]
      %v2059 = vld [vmem:[%s2 + $0xec] sm:$0xf]
      %v2060 = vld [vmem:[%s2 + $0xf0] sm:$0xf]
      %v2061 = vld [vmem:[%s2 + $0xf4] sm:$0xf]
      %v2062 = vld [vmem:[%s2 + $0xf8] sm:$0xf]
      %v2063 = vld [vmem:[%s2 + $0xfc] sm:$0xf]
      %v2064 = vld [vmem:[%s2 + $0x100] sm:$0xf]
      %v2065 = vld [vmem:[%s2 + $0x104] sm:$0xf]
      %v2066 = vld [vmem:[%s2 + $0x108] sm:$0xf]
      %v2067 = vld [vmem:[%s2 + $0x10c] sm:$0xf]
      %v2068 = vld [vmem:[%s2 + $0x110] sm:$0xf]
      %v2069 = vld [vmem:[%s2 + $0x114] sm:$0xf]
      %v2070 = vld [vmem:[%s2 + $0x118] sm:$0xf]
      %v2071 = vld [vmem:[%s2 + $0x11c] sm:$0xf]
      %v2072 = vld [vmem:[%s2 + $0x120] sm:$0xf]
      %v2073 = vld [vmem:[%s2 + $0x124] sm:$0xf]
      %v2074 = vld [vmem:[%s2 + $0x128] sm:$0xf]
      %v2075 = vld [vmem:[%s2 + $0x12c] sm:$0xf]
      %v2076 = vld [vmem:[%s2 + $0x130] sm:$0xf]
      %v2077 = vld [vmem:[%s2 + $0x134] sm:$0xf]
      %v2078 = vld [vmem:[%s2 + $0x138] sm:$0xf]
      %v2079 = vld [vmem:[%s2 + $0x13c] sm:$0xf]
      %v2080 = vld [vmem:[%s2 + $0x140] sm:$0xf]
      %v2081 = vld [vmem:[%s2 + $0x144] sm:$0xf]
      %v2082 = vld [vmem:[%s2 + $0x148] sm:$0xf]
      %v2083 = vld [vmem:[%s2 + $0x14c] sm:$0xf]
      %v2084 = vld [vmem:[%s2 + $0x150] sm:$0xf]
      %v2085 = vld [vmem:[%s2 + $0x154] sm:$0xf]
      %v2086 = vld [vmem:[%s2 + $0x158] sm:$0xf]
      %v2087 = vld [vmem:[%s2 + $0x15c] sm:$0xf]
      %v2088 = vld [vmem:[%s2 + $0x160] sm:$0xf]
      %v2089 = vld [vmem:[%s2 + $0x164] sm:$0xf]
      %v2090 = vld [vmem:[%s2 + $0x168] sm:$0xf]
      %v2091 = vld [vmem:[%s2 + $0x16c] sm:$0xf]
      %v2092 = vld [vmem:[%s2 + $0x170] sm:$0xf]
      %v2093 = vld [vmem:[%s2 + $0x174] sm:$0xf]
      %v2094 = vld [vmem:[%s2 + $0x178] sm:$0xf]
      %v2095 = vld [vmem:[%s2 + $0x17c] sm:$0xf]
      %v2144 = vunpack.c.l.b16 %v2048
      %v2145 = vunpack.c.l.b16 %v2049
      %v2146 = vunpack.c.l.b16 %v2050
      %v2147 = vunpack.c.l.b16 %v2051
      %v2148 = vunpack.c.l.b16 %v2052
      %v2149 = vunpack.c.l.b16 %v2053
      %v2150 = vunpack.c.l.b16 %v2054
      %v2151 = vunpack.c.l.b16 %v2055
      %v2152 = vunpack.c.l.b16 %v2056
      %v2153 = vunpack.c.l.b16 %v2057
      %v2154 = vunpack.c.l.b16 %v2058
      %v2155 = vunpack.c.l.b16 %v2059
      %v2156 = vunpack.c.l.b16 %v2060
      %v2157 = vunpack.c.l.b16 %v2061
      %v2158 = vunpack.c.l.b16 %v2062
      %v2159 = vunpack.c.l.b16 %v2063
      %v2160 = vunpack.c.l.b16 %v2064
      %v2161 = vunpack.c.l.b16 %v2065
      %v2162 = vunpack.c.l.b16 %v2066
      %v2163 = vunpack.c.l.b16 %v2067
      %v2164 = vunpack.c.l.b16 %v2068
      %v2165 = vunpack.c.l.b16 %v2069
      %v2166 = vunpack.c.l.b16 %v2070
      %v2167 = vunpack.c.l.b16 %v2071
      %v2168 = vunpack.c.l.b16 %v2072
      %v2169 = vunpack.c.l.b16 %v2073
      %v2170 = vunpack.c.l.b16 %v2074
      %v2171 = vunpack.c.l.b16 %v2075
      %v2172 = vunpack.c.l.b16 %v2076
      %v2173 = vunpack.c.l.b16 %v2077
      %v2174 = vunpack.c.l.b16 %v2078
      %v2175 = vunpack.c.l.b16 %v2079
      %v2176 = vunpack.c.l.b16 %v2080
      %v2177 = vunpack.c.l.b16 %v2081
      %v2178 = vunpack.c.l.b16 %v2082
      %v2179 = vunpack.c.l.b16 %v2083
      %v2180 = vunpack.c.l.b16 %v2084
      %v2181 = vunpack.c.l.b16 %v2085
      %v2182 = vunpack.c.l.b16 %v2086
      %v2183 = vunpack.c.l.b16 %v2087
      %v2184 = vunpack.c.l.b16 %v2088
      %v2185 = vunpack.c.l.b16 %v2089
      %v2186 = vunpack.c.l.b16 %v2090
      %v2187 = vunpack.c.l.b16 %v2091
      %v2188 = vunpack.c.l.b16 %v2092
      %v2189 = vunpack.c.l.b16 %v2093
      %v2190 = vunpack.c.l.b16 %v2094
      %v2191 = vunpack.c.l.b16 %v2095
      %v2192 = vpack.c.b16 %v2145, %v2144
      %v2193 = vpack.c.b16 %v2147, %v2146
      %v2194 = vpack.c.b16 %v2149, %v2148
      %v2195 = vpack.c.b16 %v2151, %v2150
      %v2196 = vpack.c.b16 %v2153, %v2152
      %v2197 = vpack.c.b16 %v2155, %v2154
      %v2198 = vpack.c.b16 %v2157, %v2156
      %v2199 = vpack.c.b16 %v2159, %v2158
      %v2200 = vpack.c.b16 %v2161, %v2160
      %v2201 = vpack.c.b16 %v2163, %v2162
      %v2202 = vpack.c.b16 %v2165, %v2164
      %v2203 = vpack.c.b16 %v2167, %v2166
      %v2204 = vpack.c.b16 %v2169, %v2168
      %v2205 = vpack.c.b16 %v2171, %v2170
      %v2206 = vpack.c.b16 %v2173, %v2172
      %v2207 = vpack.c.b16 %v2175, %v2174
      %v2208 = vpack.c.b16 %v2177, %v2176
      %v2209 = vpack.c.b16 %v2179, %v2178
      %v2210 = vpack.c.b16 %v2181, %v2180
      %v2211 = vpack.c.b16 %v2183, %v2182
      %v2212 = vpack.c.b16 %v2185, %v2184
      %v2213 = vpack.c.b16 %v2187, %v2186
      %v2214 = vpack.c.b16 %v2189, %v2188
      %v2215 = vpack.c.b16 %v2191, %v2190
      %2240 = vmatprep.subr.bf16.mxu0 0
      %2241 = vmatpush1.bf16.msra.mxu0 %v2192
      %2242 = vmatprep.subr.bf16.mxu0 0
      %2243 = vmatpush1.bf16.msra.mxu0 %v2193
      %2244 = vmatprep.subr.bf16.mxu0 0
      %2245 = vmatpush1.bf16.msra.mxu0 %v2194
      %2246 = vmatprep.subr.bf16.mxu0 0
      %2247 = vmatpush1.bf16.msra.mxu0 %v2195
      %2248 = vmatprep.subr.bf16.mxu0 0
      %2249 = vmatpush1.bf16.msra.mxu0 %v2196
      %2250 = vmatprep.subr.bf16.mxu0 0
      %2251 = vmatpush1.bf16.msra.mxu0 %v2197
      %2252 = vmatprep.subr.bf16.mxu0 0
      %2253 = vmatpush1.bf16.msra.mxu0 %v2198
      %2254 = vmatprep.subr.bf16.mxu0 0
      %2255 = vmatpush1.bf16.msra.mxu0 %v2199
      %2256 = vmatprep.subr.bf16.mxu0 0
      %2257 = vmatpush1.bf16.msra.mxu0 %v2200
      %2258 = vmatprep.subr.bf16.mxu0 0
      %2259 = vmatpush1.bf16.msra.mxu0 %v2201
      %2260 = vmatprep.subr.bf16.mxu0 0
      %2261 = vmatpush1.bf16.msra.mxu0 %v2202
      %2262 = vmatprep.subr.bf16.mxu0 0
      %2263 = vmatpush1.bf16.msra.mxu0 %v2203
      %2264 = vmatprep.subr.bf16.mxu0 0
      %2265 = vmatpush1.bf16.msra.mxu0 %v2204
      %2266 = vmatprep.subr.bf16.mxu0 0
      %2267 = vmatpush1.bf16.msra.mxu0 %v2205
      %2268 = vmatprep.subr.bf16.mxu0 0
      %2269 = vmatpush1.bf16.msra.mxu0 %v2206
      %2270 = vmatprep.subr.bf16.mxu0 0
      %2271 = vmatpush1.bf16.msra.mxu0 %v2207
      %2272 = vmatprep.mubr.bf16.mxu0 %v2016
      %2273 = vmatmul.mubr.bf16.gmra.mrb[0].mxu0 %v2000
      %v2274 = vpop.f32.mrb[0].mxu0
      %v2275 = vadd.f32 0.0, %v2274
      %v2276 = vpop.f32.mrb[0].mxu0
      %v2277 = vpop.f32.mrb[0].mxu0
      %v2278 = vadd.f32 0.0, %v2277
      %v2279 = vpop.f32.mrb[0].mxu0
      %2280 = vmatprep.mubr.bf16.mxu0 %v2017
      %2281 = vmatmul.mubr.bf16.gmra.mrb[0].mxu0 %v2001
      %v2282 = vpop.f32.mrb[0].mxu0
      %v2283 = vadd.f32 0.0, %v2282
      %v2284 = vpop.f32.mrb[0].mxu0
      %v2285 = vpop.f32.mrb[0].mxu0
      %v2286 = vadd.f32 0.0, %v2285
      %v2287 = vpop.f32.mrb[0].mxu0
      %2288 = vmatprep.mubr.bf16.mxu0 %v2018
      %2289 = vmatmul.mubr.bf16.gmra.mrb[0].mxu0 %v2002
      %v2290 = vpop.f32.mrb[0].mxu0
      %v2291 = vadd.f32 0.0, %v2290
      %v2292 = vpop.f32.mrb[0].mxu0
      %v2293 = vpop.f32.mrb[0].mxu0
      %v2294 = vadd.f32 0.0, %v2293
      %v2295 = vpop.f32.mrb[0].mxu0
      %2296 = vmatprep.mubr.bf16.mxu0 %v2019
      %2297 = vmatmul.mubr.bf16.gmra.mrb[0].mxu0 %v2003
      %v2298 = vpop.f32.mrb[0].mxu0
      %v2299 = vadd.f32 0.0, %v2298
      %v2300 = vpop.f32.mrb[0].mxu0
      %v2301 = vpop.f32.mrb[0].mxu0
      %v2302 = vadd.f32 0.0, %v2301
      %v2303 = vpop.f32.mrb[0].mxu0
      %2304 = vmatprep.mubr.bf16.mxu0 %v2020
      %2305 = vmatmul.mubr.bf16.gmra.mrb[0].mxu0 %v2004
      %v2306 = vpop.f32.mrb[0].mxu0
      %v2307 = vadd.f32 0.0, %v2306
      %v2308 = vpop.f32.mrb[0].mxu0
      %v2309 = vpop.f32.mrb[0].mxu0
      %v2310 = vadd.f32 0.0, %v2309
      %v2311 = vpop.f32.mrb[0].mxu0
      %2312 = vmatprep.mubr.bf16.mxu0 %v2021
      %2313 = vmatmul.mubr.bf16.gmra.mrb[0].mxu0 %v2005
      %v2314 = vpop.f32.mrb[0].mxu0
      %v2315 = vadd.f32 0.0, %v2314
      %v2316 = vpop.f32.mrb[0].mxu0
      %v2317 = vpop.f32.mrb[0].mxu0
      %v2318 = vadd.f32 0.0, %v2317
      %v2319 = vpop.f32.mrb[0].mxu0
      %2320 = vmatprep.mubr.bf16.mxu0 %v2022
      %2321 = vmatmul.mubr.bf16.gmra.mrb[0].mxu0 %v2006
      %v2322 = vpop.f32.mrb[0].mxu0
      %v2323 = vadd.f32 0.0, %v2322
      %v2324 = vpop.f32.mrb[0].mxu0
      %v2325 = vpop.f32.mrb[0].mxu0
      %v2326 = vadd.f32 0.0, %v2325
      %v2327 = vpop.f32.mrb[0].mxu0
      %2328 = vmatprep.mubr.bf16.mxu0 %v2023
      %2329 = vmatmul.mubr.bf16.gmra.mrb[0].mxu0 %v2007
      %v2330 = vpop.f32.mrb[0].mxu0
      %v2331 = vadd.f32 0.0, %v2330
      %v2332 = vpop.f32.mrb[0].mxu0
      %v2333 = vpop.f32.mrb[0].mxu0
      %v2334 = vadd.f32 0.0, %v2333
      %v2335 = vpop.f32.mrb[0].mxu0
      %2336 = vmatprep.mubr.bf16.mxu0 %v2024
      %2337 = vmatmul.mubr.bf16.gmra.mrb[0].mxu0 %v2008
      %v2338 = vpop.f32.mrb[0].mxu0
      %v2339 = vadd.f32 0.0, %v2338
      %v2340 = vpop.f32.mrb[0].mxu0
      %v2341 = vpop.f32.mrb[0].mxu0
      %v2342 = vadd.f32 0.0, %v2341
      %v2343 = vpop.f32.mrb[0].mxu0
      %2344 = vmatprep.mubr.bf16.mxu0 %v2025
      %2345 = vmatmul.mubr.bf16.gmra.mrb[0].mxu0 %v2009
      %v2346 = vpop.f32.mrb[0].mxu0
      %v2347 = vadd.f32 0.0, %v2346
      %v2348 = vpop.f32.mrb[0].mxu0
      %v2349 = vpop.f32.mrb[0].mxu0
      %v2350 = vadd.f32 0.0, %v2349
      %v2351 = vpop.f32.mrb[0].mxu0
      %2352 = vmatprep.mubr.bf16.mxu0 %v2026
      %2353 = vmatmul.mubr.bf16.gmra.mrb[0].mxu0 %v2010
      %v2354 = vpop.f32.mrb[0].mxu0
      %v2355 = vadd.f32 0.0, %v2354
      %v2356 = vpop.f32.mrb[0].mxu0
      %v2357 = vpop.f32.mrb[0].mxu0
      %v2358 = vadd.f32 0.0, %v2357
      %v2359 = vpop.f32.mrb[0].mxu0
      %2360 = vmatprep.mubr.bf16.mxu0 %v2027
      %2361 = vmatmul.mubr.bf16.gmra.mrb[0].mxu0 %v2011
      %v2362 = vpop.f32.mrb[0].mxu0
      %v2363 = vadd.f32 0.0, %v2362
      %v2364 = vpop.f32.mrb[0].mxu0
      %v2365 = vpop.f32.mrb[0].mxu0
      %v2366 = vadd.f32 0.0, %v2365
      %v2367 = vpop.f32.mrb[0].mxu0
      %2368 = vmatprep.mubr.bf16.mxu0 %v2028
      %2369 = vmatmul.mubr.bf16.gmra.mrb[0].mxu0 %v2012
      %v2370 = vpop.f32.mrb[0].mxu0
      %v2371 = vadd.f32 0.0, %v2370
      %v2372 = vpop.f32.mrb[0].mxu0
      %v2373 = vpop.f32.mrb[0].mxu0
      %v2374 = vadd.f32 0.0, %v2373
      %v2375 = vpop.f32.mrb[0].mxu0
      %2376 = vmatprep.mubr.bf16.mxu0 %v2029
      %2377 = vmatmul.mubr.bf16.gmra.mrb[0].mxu0 %v2013
      %v2378 = vpop.f32.mrb[0].mxu0
      %v2379 = vadd.f32 0.0, %v2378
      %v2380 = vpop.f32.mrb[0].mxu0
      %v2381 = vpop.f32.mrb[0].mxu0
      %v2382 = vadd.f32 0.0, %v2381
      %v2383 = vpop.f32.mrb[0].mxu0
      %2384 = vmatprep.mubr.bf16.mxu0 %v2030
      %2385 = vmatmul.mubr.bf16.gmra.mrb[0].mxu0 %v2014
      %v2386 = vpop.f32.mrb[0].mxu0
      %v2387 = vadd.f32 0.0, %v2386
      %v2388 = vpop.f32.mrb[0].mxu0
      %v2389 = vpop.f32.mrb[0].mxu0
      %v2390 = vadd.f32 0.0, %v2389
      %v2391 = vpop.f32.mrb[0].mxu0
      %2392 = vmatprep.mubr.bf16.mxu0 %v2031
      %2393 = vmatmul.mubr.bf16.gmra.mrb[0].mxu0 %v2015
      %v2394 = vpop.f32.mrb[0].mxu0
      %v2395 = vadd.f32 0.0, %v2394
      %v2396 = vpop.f32.mrb[0].mxu0
      %v2397 = vpop.f32.mrb[0].mxu0
      %v2398 = vadd.f32 0.0, %v2397
      %v2399 = vpop.f32.mrb[0].mxu0
      %2400 = vdwg.mxu0
      %2401 = vmatprep.subr.bf16.mxu0 0
      %2402 = vmatpush1.bf16.msra.mxu0 %v2208
      %2403 = vmatprep.subr.bf16.mxu0 0
      %2404 = vmatpush1.bf16.msra.mxu0 %v2209
      %2405 = vmatprep.subr.bf16.mxu0 0
      %2406 = vmatpush1.bf16.msra.mxu0 %v2210
      %2407 = vmatprep.subr.bf16.mxu0 0
      %2408 = vmatpush1.bf16.msra.mxu0 %v2211
      %2409 = vmatprep.subr.bf16.mxu0 0
      %2410 = vmatpush1.bf16.msra.mxu0 %v2212
      %2411 = vmatprep.subr.bf16.mxu0 0
      %2412 = vmatpush1.bf16.msra.mxu0 %v2213
      %2413 = vmatprep.subr.bf16.mxu0 0
      %2414 = vmatpush1.bf16.msra.mxu0 %v2214
      %2415 = vmatprep.subr.bf16.mxu0 0
      %2416 = vmatpush1.bf16.msra.mxu0 %v2215
      %2417 = vmatprep.subr.bf16.mxu0 0
      %2418 = vmatpush1.bf16.msra.mxu0 0
      %2419 = vmatprep.subr.bf16.mxu0 0
      %2420 = vmatpush1.bf16.msra.mxu0 0
      %2421 = vmatprep.subr.bf16.mxu0 0
      %2422 = vmatpush1.bf16.msra.mxu0 0
      %2423 = vmatprep.subr.bf16.mxu0 0
      %2424 = vmatpush1.bf16.msra.mxu0 0
      %2425 = vmatprep.subr.bf16.mxu0 0
      %2426 = vmatpush1.bf16.msra.mxu0 0
      %2427 = vmatprep.subr.bf16.mxu0 0
      %2428 = vmatpush1.bf16.msra.mxu0 0
      %2429 = vmatprep.subr.bf16.mxu0 0
      %2430 = vmatpush1.bf16.msra.mxu0 0
      %2431 = vmatprep.subr.bf16.mxu0 0
      %2432 = vmatpush1.bf16.msra.mxu0 0
      %2433 = vmatprep.mubr.bf16.mxu0 0
      %2434 = vmatmul.mubr.bf16.gmra.mrb[0].mxu0 %v2032
      %v2435 = vpop.f32.mrb[0].mxu0
      %v2436 = vadd.f32 %v2275, %v2435
      %v2437 = vpop.f32.mrb[0].mxu0
      %v2438 = vpop.f32.mrb[0].mxu0
      %v2439 = vadd.f32 %v2278, %v2438
      %v2440 = vpop.f32.mrb[0].mxu0
      %2441 = vmatprep.mubr.bf16.mxu0 0
      %2442 = vmatmul.mubr.bf16.gmra.mrb[0].mxu0 %v2033
      %v2443 = vpop.f32.mrb[0].mxu0
      %v2444 = vadd.f32 %v2283, %v2443
      %v2445 = vpop.f32.mrb[0].mxu0
      %v2446 = vpop.f32.mrb[0].mxu0
      %v2447 = vadd.f32 %v2286, %v2446
      %v2448 = vpop.f32.mrb[0].mxu0
      %2449 = vmatprep.mubr.bf16.mxu0 0
      %2450 = vmatmul.mubr.bf16.gmra.mrb[0].mxu0 %v2034
      %v2451 = vpop.f32.mrb[0].mxu0
      %v2452 = vadd.f32 %v2291, %v2451
      %v2453 = vpop.f32.mrb[0].mxu0
      %v2454 = vpop.f32.mrb[0].mxu0
      %v2455 = vadd.f32 %v2294, %v2454
      %v2456 = vpop.f32.mrb[0].mxu0
      %2457 = vmatprep.mubr.bf16.mxu0 0
      %2458 = vmatmul.mubr.bf16.gmra.mrb[0].mxu0 %v2035
      %v2459 = vpop.f32.mrb[0].mxu0
      %v2460 = vadd.f32 %v2299, %v2459
      %v2461 = vpop.f32.mrb[0].mxu0
      %v2462 = vpop.f32.mrb[0].mxu0
      %v2463 = vadd.f32 %v2302, %v2462
      %v2464 = vpop.f32.mrb[0].mxu0
      %2465 = vmatprep.mubr.bf16.mxu0 0
      %2466 = vmatmul.mubr.bf16.gmra.mrb[0].mxu0 %v2036
      %v2467 = vpop.f32.mrb[0].mxu0
      %v2468 = vadd.f32 %v2307, %v2467
      %v2469 = vpop.f32.mrb[0].mxu0
      %v2470 = vpop.f32.mrb[0].mxu0
      %v2471 = vadd.f32 %v2310, %v2470
      %v2472 = vpop.f32.mrb[0].mxu0
      %2473 = vmatprep.mubr.bf16.mxu0 0
      %2474 = vmatmul.mubr.bf16.gmra.mrb[0].mxu0 %v2037
      %v2475 = vpop.f32.mrb[0].mxu0
      %v2476 = vadd.f32 %v2315, %v2475
      %v2477 = vpop.f32.mrb[0].mxu0
      %v2478 = vpop.f32.mrb[0].mxu0
      %v2479 = vadd.f32 %v2318, %v2478
      %v2480 = vpop.f32.mrb[0].mxu0
      %2481 = vmatprep.mubr.bf16.mxu0 0
      %2482 = vmatmul.mubr.bf16.gmra.mrb[0].mxu0 %v2038
      %v2483 = vpop.f32.mrb[0].mxu0
      %v2484 = vadd.f32 %v2323, %v2483
      %v2485 = vpop.f32.mrb[0].mxu0
      %v2486 = vpop.f32.mrb[0].mxu0
      %v2487 = vadd.f32 %v2326, %v2486
      %v2488 = vpop.f32.mrb[0].mxu0
      %2489 = vmatprep.mubr.bf16.mxu0 0
      %2490 = vmatmul.mubr.bf16.gmra.mrb[0].mxu0 %v2039
      %v2491 = vpop.f32.mrb[0].mxu0
      %v2492 = vadd.f32 %v2331, %v2491
      %v2493 = vpop.f32.mrb[0].mxu0
      %v2494 = vpop.f32.mrb[0].mxu0
      %v2495 = vadd.f32 %v2334, %v2494
      %v2496 = vpop.f32.mrb[0].mxu0
      %2497 = vmatprep.mubr.bf16.mxu0 0
      %2498 = vmatmul.mubr.bf16.gmra.mrb[0].mxu0 %v2040
      %v2499 = vpop.f32.mrb[0].mxu0
      %v2500 = vadd.f32 %v2339, %v2499
      %v2501 = vpop.f32.mrb[0].mxu0
      %v2502 = vpop.f32.mrb[0].mxu0
      %v2503 = vadd.f32 %v2342, %v2502
      %v2504 = vpop.f32.mrb[0].mxu0
      %2505 = vmatprep.mubr.bf16.mxu0 0
      %2506 = vmatmul.mubr.bf16.gmra.mrb[0].mxu0 %v2041
      %v2507 = vpop.f32.mrb[0].mxu0
      %v2508 = vadd.f32 %v2347, %v2507
      %v2509 = vpop.f32.mrb[0].mxu0
      %v2510 = vpop.f32.mrb[0].mxu0
      %v2511 = vadd.f32 %v2350, %v2510
      %v2512 = vpop.f32.mrb[0].mxu0
      %2513 = vmatprep.mubr.bf16.mxu0 0
      %2514 = vmatmul.mubr.bf16.gmra.mrb[0].mxu0 %v2042
      %v2515 = vpop.f32.mrb[0].mxu0
      %v2516 = vadd.f32 %v2355, %v2515
      %v2517 = vpop.f32.mrb[0].mxu0
      %v2518 = vpop.f32.mrb[0].mxu0
      %v2519 = vadd.f32 %v2358, %v2518
      %v2520 = vpop.f32.mrb[0].mxu0
      %2521 = vmatprep.mubr.bf16.mxu0 0
      %2522 = vmatmul.mubr.bf16.gmra.mrb[0].mxu0 %v2043
      %v2523 = vpop.f32.mrb[0].mxu0
      %v2524 = vadd.f32 %v2363, %v2523
      %v2525 = vpop.f32.mrb[0].mxu0
      %v2526 = vpop.f32.mrb[0].mxu0
      %v2527 = vadd.f32 %v2366, %v2526
      %v2528 = vpop.f32.mrb[0].mxu0
      %2529 = vmatprep.mubr.bf16.mxu0 0
      %2530 = vmatmul.mubr.bf16.gmra.mrb[0].mxu0 %v2044
      %v2531 = vpop.f32.mrb[0].mxu0
      %v2532 = vadd.f32 %v2371, %v2531
      %v2533 = vpop.f32.mrb[0].mxu0
      %v2534 = vpop.f32.mrb[0].mxu0
      %v2535 = vadd.f32 %v2374, %v2534
      %v2536 = vpop.f32.mrb[0].mxu0
      %2537 = vmatprep.mubr.bf16.mxu0 0
      %2538 = vmatmul.mubr.bf16.gmra.mrb[0].mxu0 %v2045
      %v2539 = vpop.f32.mrb[0].mxu0
      %v2540 = vadd.f32 %v2379, %v2539
      %v2541 = vpop.f32.mrb[0].mxu0
      %v2542 = vpop.f32.mrb[0].mxu0
      %v2543 = vadd.f32 %v2382, %v2542
      %v2544 = vpop.f32.mrb[0].mxu0
      %2545 = vmatprep.mubr.bf16.mxu0 0
      %2546 = vmatmul.mubr.bf16.gmra.mrb[0].mxu0 %v2046
      %v2547 = vpop.f32.mrb[0].mxu0
      %v2548 = vadd.f32 %v2387, %v2547
      %v2549 = vpop.f32.mrb[0].mxu0
      %v2550 = vpop.f32.mrb[0].mxu0
      %v2551 = vadd.f32 %v2390, %v2550
      %v2552 = vpop.f32.mrb[0].mxu0
      %2553 = vmatprep.mubr.bf16.mxu0 0
      %2554 = vmatmul.mubr.bf16.gmra.mrb[0].mxu0 %v2047
      %v2555 = vpop.f32.mrb[0].mxu0
      %v2556 = vadd.f32 %v2395, %v2555
      %v2557 = vpop.f32.mrb[0].mxu0
      %v2558 = vpop.f32.mrb[0].mxu0
      %v2559 = vadd.f32 %v2398, %v2558
      %v2560 = vpop.f32.mrb[0].mxu0
      %2561 = vdwg.mxu0
      %v2610 = vunpack.c.l.b16 %v1760
      %v2611 = vunpack.c.l.b16 %v1761
      %v2612 = vunpack.c.l.b16 %v1762
      %v2613 = vunpack.c.l.b16 %v1763
      %v2614 = vunpack.c.l.b16 %v1764
      %v2615 = vunpack.c.l.b16 %v1765
      %v2616 = vunpack.c.l.b16 %v1766
      %v2617 = vunpack.c.l.b16 %v1767
      %v2618 = vunpack.c.l.b16 %v1768
      %v2619 = vunpack.c.l.b16 %v1769
      %v2620 = vunpack.c.l.b16 %v1770
      %v2621 = vunpack.c.l.b16 %v1771
      %v2622 = vunpack.c.l.b16 %v1772
      %v2623 = vunpack.c.l.b16 %v1773
      %v2624 = vunpack.c.l.b16 %v1774
      %v2625 = vunpack.c.l.b16 %v1775
      %v2626 = vunpack.c.l.b16 %v1776
      %v2627 = vunpack.c.l.b16 %v1777
      %v2628 = vunpack.c.l.b16 %v1778
      %v2629 = vunpack.c.l.b16 %v1779
      %v2630 = vunpack.c.l.b16 %v1780
      %v2631 = vunpack.c.l.b16 %v1781
      %v2632 = vunpack.c.l.b16 %v1782
      %v2633 = vunpack.c.l.b16 %v1783
      %v2634 = vunpack.c.l.b16 %v1784
      %v2635 = vunpack.c.l.b16 %v1785
      %v2636 = vunpack.c.l.b16 %v1786
      %v2637 = vunpack.c.l.b16 %v1787
      %v2638 = vunpack.c.l.b16 %v1788
      %v2639 = vunpack.c.l.b16 %v1789
      %v2640 = vunpack.c.l.b16 %v1790
      %v2641 = vunpack.c.l.b16 %v1791
      %v2642 = vunpack.c.l.b16 %v1792
      %v2643 = vunpack.c.l.b16 %v1793
      %v2644 = vunpack.c.l.b16 %v1794
      %v2645 = vunpack.c.l.b16 %v1795
      %v2646 = vunpack.c.l.b16 %v1796
      %v2647 = vunpack.c.l.b16 %v1797
      %v2648 = vunpack.c.l.b16 %v1798
      %v2649 = vunpack.c.l.b16 %v1799
      %v2650 = vunpack.c.l.b16 %v1800
      %v2651 = vunpack.c.l.b16 %v1801
      %v2652 = vunpack.c.l.b16 %v1802
      %v2653 = vunpack.c.l.b16 %v1803
      %v2654 = vunpack.c.l.b16 %v1804
      %v2655 = vunpack.c.l.b16 %v1805
      %v2656 = vunpack.c.l.b16 %v1806
      %v2657 = vunpack.c.l.b16 %v1807
      %v2658 = vpack.c.b16 %v2611, %v2610
      %v2659 = vpack.c.b16 %v2613, %v2612
      %v2660 = vpack.c.b16 %v2615, %v2614
      %v2661 = vpack.c.b16 %v2617, %v2616
      %v2662 = vpack.c.b16 %v2619, %v2618
      %v2663 = vpack.c.b16 %v2621, %v2620
      %v2664 = vpack.c.b16 %v2623, %v2622
      %v2665 = vpack.c.b16 %v2625, %v2624
      %v2666 = vpack.c.b16 %v2627, %v2626
      %v2667 = vpack.c.b16 %v2629, %v2628
      %v2668 = vpack.c.b16 %v2631, %v2630
      %v2669 = vpack.c.b16 %v2633, %v2632
      %v2670 = vpack.c.b16 %v2635, %v2634
      %v2671 = vpack.c.b16 %v2637, %v2636
      %v2672 = vpack.c.b16 %v2639, %v2638
      %v2673 = vpack.c.b16 %v2641, %v2640
      %v2674 = vpack.c.b16 %v2643, %v2642
      %v2675 = vpack.c.b16 %v2645, %v2644
      %v2676 = vpack.c.b16 %v2647, %v2646
      %v2677 = vpack.c.b16 %v2649, %v2648
      %v2678 = vpack.c.b16 %v2651, %v2650
      %v2679 = vpack.c.b16 %v2653, %v2652
      %v2680 = vpack.c.b16 %v2655, %v2654
      %v2681 = vpack.c.b16 %v2657, %v2656
      %2706 = vmatprep.subr.bf16.mxu0 0
      %2707 = vmatpush1.bf16.msra.mxu0 %v2658
      %2708 = vmatprep.subr.bf16.mxu0 0
      %2709 = vmatpush1.bf16.msra.mxu0 %v2659
      %2710 = vmatprep.subr.bf16.mxu0 0
      %2711 = vmatpush1.bf16.msra.mxu0 %v2660
      %2712 = vmatprep.subr.bf16.mxu0 0
      %2713 = vmatpush1.bf16.msra.mxu0 %v2661
      %2714 = vmatprep.subr.bf16.mxu0 0
      %2715 = vmatpush1.bf16.msra.mxu0 %v2662
      %2716 = vmatprep.subr.bf16.mxu0 0
      %2717 = vmatpush1.bf16.msra.mxu0 %v2663
      %2718 = vmatprep.subr.bf16.mxu0 0
      %2719 = vmatpush1.bf16.msra.mxu0 %v2664
      %2720 = vmatprep.subr.bf16.mxu0 0
      %2721 = vmatpush1.bf16.msra.mxu0 %v2665
      %2722 = vmatprep.subr.bf16.mxu0 0
      %2723 = vmatpush1.bf16.msra.mxu0 %v2666
      %2724 = vmatprep.subr.bf16.mxu0 0
      %2725 = vmatpush1.bf16.msra.mxu0 %v2667
      %2726 = vmatprep.subr.bf16.mxu0 0
      %2727 = vmatpush1.bf16.msra.mxu0 %v2668
      %2728 = vmatprep.subr.bf16.mxu0 0
      %2729 = vmatpush1.bf16.msra.mxu0 %v2669
      %2730 = vmatprep.subr.bf16.mxu0 0
      %2731 = vmatpush1.bf16.msra.mxu0 %v2670
      %2732 = vmatprep.subr.bf16.mxu0 0
      %2733 = vmatpush1.bf16.msra.mxu0 %v2671
      %2734 = vmatprep.subr.bf16.mxu0 0
      %2735 = vmatpush1.bf16.msra.mxu0 %v2672
      %2736 = vmatprep.subr.bf16.mxu0 0
      %2737 = vmatpush1.bf16.msra.mxu0 %v2673
      %2738 = vmatprep.mubr.bf16.mxu0 %v1728
      %2739 = vmatmul.mubr.bf16.gmra.mrb[0].mxu0 %v1712
      %v2740 = vpop.f32.mrb[0].mxu0
      %v2741 = vadd.f32 %v2436, %v2740
      %v2742 = vpop.f32.mrb[0].mxu0
      %v2743 = vpop.f32.mrb[0].mxu0
      %v2744 = vadd.f32 %v2439, %v2743
      %v2745 = vpop.f32.mrb[0].mxu0
      %2746 = vmatprep.mubr.bf16.mxu0 %v1729
      %2747 = vmatmul.mubr.bf16.gmra.mrb[0].mxu0 %v1713
      %v2748 = vpop.f32.mrb[0].mxu0
      %v2749 = vadd.f32 %v2444, %v2748
      %v2750 = vpop.f32.mrb[0].mxu0
      %v2751 = vpop.f32.mrb[0].mxu0
      %v2752 = vadd.f32 %v2447, %v2751
      %v2753 = vpop.f32.mrb[0].mxu0
      %2754 = vmatprep.mubr.bf16.mxu0 %v1730
      %2755 = vmatmul.mubr.bf16.gmra.mrb[0].mxu0 %v1714
      %v2756 = vpop.f32.mrb[0].mxu0
      %v2757 = vadd.f32 %v2452, %v2756
      %v2758 = vpop.f32.mrb[0].mxu0
      %v2759 = vpop.f32.mrb[0].mxu0
      %v2760 = vadd.f32 %v2455, %v2759
      %v2761 = vpop.f32.mrb[0].mxu0
      %2762 = vmatprep.mubr.bf16.mxu0 %v1731
      %2763 = vmatmul.mubr.bf16.gmra.mrb[0].mxu0 %v1715
      %v2764 = vpop.f32.mrb[0].mxu0
      %v2765 = vadd.f32 %v2460, %v2764
      %v2766 = vpop.f32.mrb[0].mxu0
      %v2767 = vpop.f32.mrb[0].mxu0
      %v2768 = vadd.f32 %v2463, %v2767
      %v2769 = vpop.f32.mrb[0].mxu0
      %2770 = vmatprep.mubr.bf16.mxu0 %v1732
      %2771 = vmatmul.mubr.bf16.gmra.mrb[0].mxu0 %v1716
      %v2772 = vpop.f32.mrb[0].mxu0
      %v2773 = vadd.f32 %v2468, %v2772
      %v2774 = vpop.f32.mrb[0].mxu0
      %v2775 = vpop.f32.mrb[0].mxu0
      %v2776 = vadd.f32 %v2471, %v2775
      %v2777 = vpop.f32.mrb[0].mxu0
      %2778 = vmatprep.mubr.bf16.mxu0 %v1733
      %2779 = vmatmul.mubr.bf16.gmra.mrb[0].mxu0 %v1717
      %v2780 = vpop.f32.mrb[0].mxu0
      %v2781 = vadd.f32 %v2476, %v2780
      %v2782 = vpop.f32.mrb[0].mxu0
      %v2783 = vpop.f32.mrb[0].mxu0
      %v2784 = vadd.f32 %v2479, %v2783
      %v2785 = vpop.f32.mrb[0].mxu0
      %2786 = vmatprep.mubr.bf16.mxu0 %v1734
      %2787 = vmatmul.mubr.bf16.gmra.mrb[0].mxu0 %v1718
      %v2788 = vpop.f32.mrb[0].mxu0
      %v2789 = vadd.f32 %v2484, %v2788
      %v2790 = vpop.f32.mrb[0].mxu0
      %v2791 = vpop.f32.mrb[0].mxu0
      %v2792 = vadd.f32 %v2487, %v2791
      %v2793 = vpop.f32.mrb[0].mxu0
      %2794 = vmatprep.mubr.bf16.mxu0 %v1735
      %2795 = vmatmul.mubr.bf16.gmra.mrb[0].mxu0 %v1719
      %v2796 = vpop.f32.mrb[0].mxu0
      %v2797 = vadd.f32 %v2492, %v2796
      %v2798 = vpop.f32.mrb[0].mxu0
      %v2799 = vpop.f32.mrb[0].mxu0
      %v2800 = vadd.f32 %v2495, %v2799
      %v2801 = vpop.f32.mrb[0].mxu0
      %2802 = vmatprep.mubr.bf16.mxu0 %v1736
      %2803 = vmatmul.mubr.bf16.gmra.mrb[0].mxu0 %v1720
      %v2804 = vpop.f32.mrb[0].mxu0
      %v2805 = vadd.f32 %v2500, %v2804
      %v2806 = vpop.f32.mrb[0].mxu0
      %v2807 = vpop.f32.mrb[0].mxu0
      %v2808 = vadd.f32 %v2503, %v2807
      %v2809 = vpop.f32.mrb[0].mxu0
      %2810 = vmatprep.mubr.bf16.mxu0 %v1737
      %2811 = vmatmul.mubr.bf16.gmra.mrb[0].mxu0 %v1721
      %v2812 = vpop.f32.mrb[0].mxu0
      %v2813 = vadd.f32 %v2508, %v2812
      %v2814 = vpop.f32.mrb[0].mxu0
      %v2815 = vpop.f32.mrb[0].mxu0
      %v2816 = vadd.f32 %v2511, %v2815
      %v2817 = vpop.f32.mrb[0].mxu0
      %2818 = vmatprep.mubr.bf16.mxu0 %v1738
      %2819 = vmatmul.mubr.bf16.gmra.mrb[0].mxu0 %v1722
      %v2820 = vpop.f32.mrb[0].mxu0
      %v2821 = vadd.f32 %v2516, %v2820
      %v2822 = vpop.f32.mrb[0].mxu0
      %v2823 = vpop.f32.mrb[0].mxu0
      %v2824 = vadd.f32 %v2519, %v2823
      %v2825 = vpop.f32.mrb[0].mxu0
      %2826 = vmatprep.mubr.bf16.mxu0 %v1739
      %2827 = vmatmul.mubr.bf16.gmra.mrb[0].mxu0 %v1723
      %v2828 = vpop.f32.mrb[0].mxu0
      %v2829 = vadd.f32 %v2524, %v2828
      %v2830 = vpop.f32.mrb[0].mxu0
      %v2831 = vpop.f32.mrb[0].mxu0
      %v2832 = vadd.f32 %v2527, %v2831
      %v2833 = vpop.f32.mrb[0].mxu0
      %2834 = vmatprep.mubr.bf16.mxu0 %v1740
      %2835 = vmatmul.mubr.bf16.gmra.mrb[0].mxu0 %v1724
      %v2836 = vpop.f32.mrb[0].mxu0
      %v2837 = vadd.f32 %v2532, %v2836
      %v2838 = vpop.f32.mrb[0].mxu0
      %v2839 = vpop.f32.mrb[0].mxu0
      %v2840 = vadd.f32 %v2535, %v2839
      %v2841 = vpop.f32.mrb[0].mxu0
      %2842 = vmatprep.mubr.bf16.mxu0 %v1741
      %2843 = vmatmul.mubr.bf16.gmra.mrb[0].mxu0 %v1725
      %v2844 = vpop.f32.mrb[0].mxu0
      %v2845 = vadd.f32 %v2540, %v2844
      %v2846 = vpop.f32.mrb[0].mxu0
      %v2847 = vpop.f32.mrb[0].mxu0
      %v2848 = vadd.f32 %v2543, %v2847
      %v2849 = vpop.f32.mrb[0].mxu0
      %2850 = vmatprep.mubr.bf16.mxu0 %v1742
      %2851 = vmatmul.mubr.bf16.gmra.mrb[0].mxu0 %v1726
      %v2852 = vpop.f32.mrb[0].mxu0
      %v2853 = vadd.f32 %v2548, %v2852
      %v2854 = vpop.f32.mrb[0].mxu0
      %v2855 = vpop.f32.mrb[0].mxu0
      %v2856 = vadd.f32 %v2551, %v2855
      %v2857 = vpop.f32.mrb[0].mxu0
      %2858 = vmatprep.mubr.bf16.mxu0 %v1743
      %2859 = vmatmul.mubr.bf16.gmra.mrb[0].mxu0 %v1727
      %v2860 = vpop.f32.mrb[0].mxu0
      %v2861 = vadd.f32 %v2556, %v2860
      %v2862 = vpop.f32.mrb[0].mxu0
      %v2863 = vpop.f32.mrb[0].mxu0
      %v2864 = vadd.f32 %v2559, %v2863
      %v2865 = vpop.f32.mrb[0].mxu0
      %2866 = vdwg.mxu0
      %2867 = vmatprep.subr.bf16.mxu0 0
      %2868 = vmatpush1.bf16.msra.mxu0 %v2674
      %2869 = vmatprep.subr.bf16.mxu0 0
      %2870 = vmatpush1.bf16.msra.mxu0 %v2675
      %2871 = vmatprep.subr.bf16.mxu0 0
      %2872 = vmatpush1.bf16.msra.mxu0 %v2676
      %2873 = vmatprep.subr.bf16.mxu0 0
      %2874 = vmatpush1.bf16.msra.mxu0 %v2677
      %2875 = vmatprep.subr.bf16.mxu0 0
      %2876 = vmatpush1.bf16.msra.mxu0 %v2678
      %2877 = vmatprep.subr.bf16.mxu0 0
      %2878 = vmatpush1.bf16.msra.mxu0 %v2679
      %2879 = vmatprep.subr.bf16.mxu0 0
      %2880 = vmatpush1.bf16.msra.mxu0 %v2680
      %2881 = vmatprep.subr.bf16.mxu0 0
      %2882 = vmatpush1.bf16.msra.mxu0 %v2681
      %2883 = vmatprep.subr.bf16.mxu0 0
      %2884 = vmatpush1.bf16.msra.mxu0 0
      %2885 = vmatprep.subr.bf16.mxu0 0
      %2886 = vmatpush1.bf16.msra.mxu0 0
      %2887 = vmatprep.subr.bf16.mxu0 0
      %2888 = vmatpush1.bf16.msra.mxu0 0
      %2889 = vmatprep.subr.bf16.mxu0 0
      %2890 = vmatpush1.bf16.msra.mxu0 0
      %2891 = vmatprep.subr.bf16.mxu0 0
      %2892 = vmatpush1.bf16.msra.mxu0 0
      %2893 = vmatprep.subr.bf16.mxu0 0
      %2894 = vmatpush1.bf16.msra.mxu0 0
      %2895 = vmatprep.subr.bf16.mxu0 0
      %2896 = vmatpush1.bf16.msra.mxu0 0
      %2897 = vmatprep.subr.bf16.mxu0 0
      %2898 = vmatpush1.bf16.msra.mxu0 0
      %2899 = vmatprep.mubr.bf16.mxu0 0
      %2900 = vmatmul.mubr.bf16.gmra.mrb[0].mxu0 %v1744
      %v2901 = vpop.f32.mrb[0].mxu0
      %v2902 = vadd.f32 %v2741, %v2901
      %v2903 = vpop.f32.mrb[0].mxu0
      %v2904 = vpop.f32.mrb[0].mxu0
      %v2905 = vadd.f32 %v2744, %v2904
      %v2906 = vpop.f32.mrb[0].mxu0
      %2907 = vmatprep.mubr.bf16.mxu0 0
      %2908 = vmatmul.mubr.bf16.gmra.mrb[0].mxu0 %v1745
      %v2909 = vpop.f32.mrb[0].mxu0
      %v2910 = vadd.f32 %v2749, %v2909
      %v2911 = vpop.f32.mrb[0].mxu0
      %v2912 = vpop.f32.mrb[0].mxu0
      %v2913 = vadd.f32 %v2752, %v2912
      %v2914 = vpop.f32.mrb[0].mxu0
      %2915 = vmatprep.mubr.bf16.mxu0 0
      %2916 = vmatmul.mubr.bf16.gmra.mrb[0].mxu0 %v1746
      %v2917 = vpop.f32.mrb[0].mxu0
      %v2918 = vadd.f32 %v2757, %v2917
      %v2919 = vpop.f32.mrb[0].mxu0
      %v2920 = vpop.f32.mrb[0].mxu0
      %v2921 = vadd.f32 %v2760, %v2920
      %v2922 = vpop.f32.mrb[0].mxu0
      %2923 = vmatprep.mubr.bf16.mxu0 0
      %2924 = vmatmul.mubr.bf16.gmra.mrb[0].mxu0 %v1747
      %v2925 = vpop.f32.mrb[0].mxu0
      %v2926 = vadd.f32 %v2765, %v2925
      %v2927 = vpop.f32.mrb[0].mxu0
      %v2928 = vpop.f32.mrb[0].mxu0
      %v2929 = vadd.f32 %v2768, %v2928
      %v2930 = vpop.f32.mrb[0].mxu0
      %2931 = vmatprep.mubr.bf16.mxu0 0
      %2932 = vmatmul.mubr.bf16.gmra.mrb[0].mxu0 %v1748
      %v2933 = vpop.f32.mrb[0].mxu0
      %v2934 = vadd.f32 %v2773, %v2933
      %v2935 = vpop.f32.mrb[0].mxu0
      %v2936 = vpop.f32.mrb[0].mxu0
      %v2937 = vadd.f32 %v2776, %v2936
      %v2938 = vpop.f32.mrb[0].mxu0
      %2939 = vmatprep.mubr.bf16.mxu0 0
      %2940 = vmatmul.mubr.bf16.gmra.mrb[0].mxu0 %v1749
      %v2941 = vpop.f32.mrb[0].mxu0
      %v2942 = vadd.f32 %v2781, %v2941
      %v2943 = vpop.f32.mrb[0].mxu0
      %v2944 = vpop.f32.mrb[0].mxu0
      %v2945 = vadd.f32 %v2784, %v2944
      %v2946 = vpop.f32.mrb[0].mxu0
      %2947 = vmatprep.mubr.bf16.mxu0 0
      %2948 = vmatmul.mubr.bf16.gmra.mrb[0].mxu0 %v1750
      %v2949 = vpop.f32.mrb[0].mxu0
      %v2950 = vadd.f32 %v2789, %v2949
      %v2951 = vpop.f32.mrb[0].mxu0
      %v2952 = vpop.f32.mrb[0].mxu0
      %v2953 = vadd.f32 %v2792, %v2952
      %v2954 = vpop.f32.mrb[0].mxu0
      %2955 = vmatprep.mubr.bf16.mxu0 0
      %2956 = vmatmul.mubr.bf16.gmra.mrb[0].mxu0 %v1751
      %v2957 = vpop.f32.mrb[0].mxu0
      %v2958 = vadd.f32 %v2797, %v2957
      %v2959 = vpop.f32.mrb[0].mxu0
      %v2960 = vpop.f32.mrb[0].mxu0
      %v2961 = vadd.f32 %v2800, %v2960
      %v2962 = vpop.f32.mrb[0].mxu0
      %2963 = vmatprep.mubr.bf16.mxu0 0
      %2964 = vmatmul.mubr.bf16.gmra.mrb[0].mxu0 %v1752
      %v2965 = vpop.f32.mrb[0].mxu0
      %v2966 = vadd.f32 %v2805, %v2965
      %v2967 = vpop.f32.mrb[0].mxu0
      %v2968 = vpop.f32.mrb[0].mxu0
      %v2969 = vadd.f32 %v2808, %v2968
      %v2970 = vpop.f32.mrb[0].mxu0
      %2971 = vmatprep.mubr.bf16.mxu0 0
      %2972 = vmatmul.mubr.bf16.gmra.mrb[0].mxu0 %v1753
      %v2973 = vpop.f32.mrb[0].mxu0
      %v2974 = vadd.f32 %v2813, %v2973
      %v2975 = vpop.f32.mrb[0].mxu0
      %v2976 = vpop.f32.mrb[0].mxu0
      %v2977 = vadd.f32 %v2816, %v2976
      %v2978 = vpop.f32.mrb[0].mxu0
      %2979 = vmatprep.mubr.bf16.mxu0 0
      %2980 = vmatmul.mubr.bf16.gmra.mrb[0].mxu0 %v1754
      %v2981 = vpop.f32.mrb[0].mxu0
      %v2982 = vadd.f32 %v2821, %v2981
      %v2983 = vpop.f32.mrb[0].mxu0
      %v2984 = vpop.f32.mrb[0].mxu0
      %v2985 = vadd.f32 %v2824, %v2984
      %v2986 = vpop.f32.mrb[0].mxu0
      %2987 = vmatprep.mubr.bf16.mxu0 0
      %2988 = vmatmul.mubr.bf16.gmra.mrb[0].mxu0 %v1755
      %v2989 = vpop.f32.mrb[0].mxu0
      %v2990 = vadd.f32 %v2829, %v2989
      %v2991 = vpop.f32.mrb[0].mxu0
      %v2992 = vpop.f32.mrb[0].mxu0
      %v2993 = vadd.f32 %v2832, %v2992
      %v2994 = vpop.f32.mrb[0].mxu0
      %2995 = vmatprep.mubr.bf16.mxu0 0
      %2996 = vmatmul.mubr.bf16.gmra.mrb[0].mxu0 %v1756
      %v2997 = vpop.f32.mrb[0].mxu0
      %v2998 = vadd.f32 %v2837, %v2997
      %v2999 = vpop.f32.mrb[0].mxu0
      %v3000 = vpop.f32.mrb[0].mxu0
      %v3001 = vadd.f32 %v2840, %v3000
      %v3002 = vpop.f32.mrb[0].mxu0
      %3003 = vmatprep.mubr.bf16.mxu0 0
      %3004 = vmatmul.mubr.bf16.gmra.mrb[0].mxu0 %v1757
      %v3005 = vpop.f32.mrb[0].mxu0
      %v3006 = vadd.f32 %v2845, %v3005
      %v3007 = vpop.f32.mrb[0].mxu0
      %v3008 = vpop.f32.mrb[0].mxu0
      %v3009 = vadd.f32 %v2848, %v3008
      %v3010 = vpop.f32.mrb[0].mxu0
      %3011 = vmatprep.mubr.bf16.mxu0 0
      %3012 = vmatmul.mubr.bf16.gmra.mrb[0].mxu0 %v1758
      %v3013 = vpop.f32.mrb[0].mxu0
      %v3014 = vadd.f32 %v2853, %v3013
      %v3015 = vpop.f32.mrb[0].mxu0
      %v3016 = vpop.f32.mrb[0].mxu0
      %v3017 = vadd.f32 %v2856, %v3016
      %v3018 = vpop.f32.mrb[0].mxu0
      %3019 = vmatprep.mubr.bf16.mxu0 0
      %3020 = vmatmul.mubr.bf16.gmra.mrb[0].mxu0 %v1759
      %v3021 = vpop.f32.mrb[0].mxu0
      %v3022 = vadd.f32 %v2861, %v3021
      %v3023 = vpop.f32.mrb[0].mxu0
      %v3024 = vpop.f32.mrb[0].mxu0
      %v3025 = vadd.f32 %v2864, %v3024
      %v3026 = vpop.f32.mrb[0].mxu0
      %3027 = vdwg.mxu0
      %v3028 = vrot.slane %v1358, 7
      %v3029 = vrot.slane %v1359, 7
      %v3030 = vrot.slane %v1360, 7
      %v3031 = vrot.slane %v1361, 7
      %v3032 = vrot.slane %v1362, 7
      %v3033 = vrot.slane %v1363, 7
      %v3034 = vrot.slane %v1364, 7
      %v3035 = vrot.slane %v1365, 7
      %v3036 = vrot.slane %v1366, 7
      %v3037 = vrot.slane %v1367, 7
      %v3038 = vrot.slane %v1368, 7
      %v3039 = vrot.slane %v1369, 7
      %v3040 = vrot.slane %v1370, 7
      %v3041 = vrot.slane %v1371, 7
      %v3042 = vrot.slane %v1372, 7
      %v3043 = vrot.slane %v1373, 7
      %v3044 = vrot.slane %v1374, 7
      %v3045 = vrot.slane %v1375, 7
      %v3046 = vrot.slane %v1376, 7
      %v3047 = vrot.slane %v1377, 7
      %v3048 = vrot.slane %v1378, 7
      %v3049 = vrot.slane %v1379, 7
      %v3050 = vrot.slane %v1380, 7
      %v3051 = vrot.slane %v1381, 7
      %v3052 = vrot.slane %v1382, 7
      %v3053 = vrot.slane %v1383, 7
      %v3054 = vrot.slane %v1384, 7
      %v3055 = vrot.slane %v1385, 7
      %v3056 = vrot.slane %v1386, 7
      %v3057 = vrot.slane %v1387, 7
      %v3058 = vrot.slane %v1388, 7
      %v3059 = vrot.slane %v1389, 7
      %v3060 = vsel %vm1422, %v3058, %v3059
      %v3061 = vsel %vm1422, %v3057, %v3058
      %v3062 = vsel %vm1422, %v3056, %v3057
      %v3063 = vsel %vm1422, %v3055, %v3056
      %v3064 = vsel %vm1422, %v3054, %v3055
      %v3065 = vsel %vm1422, %v3053, %v3054
      %v3066 = vsel %vm1422, %v3052, %v3053
      %v3067 = vsel %vm1422, %v3051, %v3052
      %v3068 = vsel %vm1422, %v3050, %v3051
      %v3069 = vsel %vm1422, %v3049, %v3050
      %v3070 = vsel %vm1422, %v3048, %v3049
      %v3071 = vsel %vm1422, %v3047, %v3048
      %v3072 = vsel %vm1422, %v3046, %v3047
      %v3073 = vsel %vm1422, %v3045, %v3046
      %v3074 = vsel %vm1422, %v3044, %v3045
      %v3075 = vsel %vm1422, %v3043, %v3044
      %v3076 = vsel %vm1422, %v3042, %v3043
      %v3077 = vsel %vm1422, %v3041, %v3042
      %v3078 = vsel %vm1422, %v3040, %v3041
      %v3079 = vsel %vm1422, %v3039, %v3040
      %v3080 = vsel %vm1422, %v3038, %v3039
      %v3081 = vsel %vm1422, %v3037, %v3038
      %v3082 = vsel %vm1422, %v3036, %v3037
      %v3083 = vsel %vm1422, %v3035, %v3036
      %v3084 = vsel %vm1422, %v3034, %v3035
      %v3085 = vsel %vm1422, %v3033, %v3034
      %v3086 = vsel %vm1422, %v3032, %v3033
      %v3087 = vsel %vm1422, %v3031, %v3032
      %v3088 = vsel %vm1422, %v3030, %v3031
      %v3089 = vsel %vm1422, %v3029, %v3030
      %v3090 = vsel %vm1422, %v3028, %v3029
      %v3091 = vsel %vm1422, %v3059, %v3028
      %v3092 = vsel %vm1487, %v3091, 0.0
      %v3093 = vsel %vm1488, %v3090, 0.0
      %v3094 = vsel %vm1489, %v3089, 0.0
      %v3095 = vsel %vm1490, %v3088, 0.0
      %v3096 = vsel %vm1491, %v3087, 0.0
      %v3097 = vsel %vm1492, %v3086, 0.0
      %v3098 = vsel %vm1493, %v3085, 0.0
      %v3099 = vsel %vm1494, %v3084, 0.0
      %v3100 = vsel %vm1495, %v3083, 0.0
      %v3101 = vsel %vm1496, %v3082, 0.0
      %v3102 = vsel %vm1497, %v3081, 0.0
      %v3103 = vsel %vm1498, %v3080, 0.0
      %v3104 = vsel %vm1499, %v3079, 0.0
      %v3105 = vsel %vm1500, %v3078, 0.0
      %v3106 = vsel %vm1501, %v3077, 0.0
      %v3107 = vsel %vm1502, %v3076, 0.0
      %v3108 = vsel %vm1503, %v3075, 0.0
      %v3109 = vsel %vm1504, %v3074, 0.0
      %v3110 = vsel %vm1505, %v3073, 0.0
      %v3111 = vsel %vm1506, %v3072, 0.0
      %v3112 = vsel %vm1507, %v3071, 0.0
      %v3113 = vsel %vm1508, %v3070, 0.0
      %v3114 = vsel %vm1509, %v3069, 0.0
      %v3115 = vsel %vm1510, %v3068, 0.0
      %v3116 = vsel %vm1511, %v3067, 0.0
      %v3117 = vsel %vm1512, %v3066, 0.0
      %v3118 = vsel %vm1513, %v3065, 0.0
      %v3119 = vsel %vm1514, %v3064, 0.0
      %v3120 = vsel %vm1515, %v3063, 0.0
      %v3121 = vsel %vm1516, %v3062, 0.0
      %v3122 = vsel %vm1517, %v3061, 0.0
      %v3123 = vsel %vm1518, %v3060, 0.0
      %v3124 = vrot.slane %v1358, 1
      %v3125 = vrot.slane %v1359, 1
      %v3126 = vrot.slane %v1360, 1
      %v3127 = vrot.slane %v1361, 1
      %v3128 = vrot.slane %v1362, 1
      %v3129 = vrot.slane %v1363, 1
      %v3130 = vrot.slane %v1364, 1
      %v3131 = vrot.slane %v1365, 1
      %v3132 = vrot.slane %v1366, 1
      %v3133 = vrot.slane %v1367, 1
      %v3134 = vrot.slane %v1368, 1
      %v3135 = vrot.slane %v1369, 1
      %v3136 = vrot.slane %v1370, 1
      %v3137 = vrot.slane %v1371, 1
      %v3138 = vrot.slane %v1372, 1
      %v3139 = vrot.slane %v1373, 1
      %v3140 = vrot.slane %v1374, 1
      %v3141 = vrot.slane %v1375, 1
      %v3142 = vrot.slane %v1376, 1
      %v3143 = vrot.slane %v1377, 1
      %v3144 = vrot.slane %v1378, 1
      %v3145 = vrot.slane %v1379, 1
      %v3146 = vrot.slane %v1380, 1
      %v3147 = vrot.slane %v1381, 1
      %v3148 = vrot.slane %v1382, 1
      %v3149 = vrot.slane %v1383, 1
      %v3150 = vrot.slane %v1384, 1
      %v3151 = vrot.slane %v1385, 1
      %v3152 = vrot.slane %v1386, 1
      %v3153 = vrot.slane %v1387, 1
      %v3154 = vrot.slane %v1388, 1
      %v3155 = vrot.slane %v1389, 1
      %v3156 = vsel %vm1583, %v3154, %v3155
      %v3157 = vsel %vm1583, %v3153, %v3154
      %v3158 = vsel %vm1583, %v3152, %v3153
      %v3159 = vsel %vm1583, %v3151, %v3152
      %v3160 = vsel %vm1583, %v3150, %v3151
      %v3161 = vsel %vm1583, %v3149, %v3150
      %v3162 = vsel %vm1583, %v3148, %v3149
      %v3163 = vsel %vm1583, %v3147, %v3148
      %v3164 = vsel %vm1583, %v3146, %v3147
      %v3165 = vsel %vm1583, %v3145, %v3146
      %v3166 = vsel %vm1583, %v3144, %v3145
      %v3167 = vsel %vm1583, %v3143, %v3144
      %v3168 = vsel %vm1583, %v3142, %v3143
      %v3169 = vsel %vm1583, %v3141, %v3142
      %v3170 = vsel %vm1583, %v3140, %v3141
      %v3171 = vsel %vm1583, %v3139, %v3140
      %v3172 = vsel %vm1583, %v3138, %v3139
      %v3173 = vsel %vm1583, %v3137, %v3138
      %v3174 = vsel %vm1583, %v3136, %v3137
      %v3175 = vsel %vm1583, %v3135, %v3136
      %v3176 = vsel %vm1583, %v3134, %v3135
      %v3177 = vsel %vm1583, %v3133, %v3134
      %v3178 = vsel %vm1583, %v3132, %v3133
      %v3179 = vsel %vm1583, %v3131, %v3132
      %v3180 = vsel %vm1583, %v3130, %v3131
      %v3181 = vsel %vm1583, %v3129, %v3130
      %v3182 = vsel %vm1583, %v3128, %v3129
      %v3183 = vsel %vm1583, %v3127, %v3128
      %v3184 = vsel %vm1583, %v3126, %v3127
      %v3185 = vsel %vm1583, %v3125, %v3126
      %v3186 = vsel %vm1583, %v3124, %v3125
      %v3187 = vsel %vm1583, %v3155, %v3124
      %v3188 = vsel %vm1648, %v3186, 0.0
      %v3189 = vsel %vm1649, %v3185, 0.0
      %v3190 = vsel %vm1650, %v3184, 0.0
      %v3191 = vsel %vm1651, %v3183, 0.0
      %v3192 = vsel %vm1652, %v3182, 0.0
      %v3193 = vsel %vm1653, %v3181, 0.0
      %v3194 = vsel %vm1654, %v3180, 0.0
      %v3195 = vsel %vm1655, %v3179, 0.0
      %v3196 = vsel %vm1656, %v3178, 0.0
      %v3197 = vsel %vm1657, %v3177, 0.0
      %v3198 = vsel %vm1658, %v3176, 0.0
      %v3199 = vsel %vm1659, %v3175, 0.0
      %v3200 = vsel %vm1660, %v3174, 0.0
      %v3201 = vsel %vm1661, %v3173, 0.0
      %v3202 = vsel %vm1662, %v3172, 0.0
      %v3203 = vsel %vm1663, %v3171, 0.0
      %v3204 = vsel %vm1664, %v3170, 0.0
      %v3205 = vsel %vm1665, %v3169, 0.0
      %v3206 = vsel %vm1666, %v3168, 0.0
      %v3207 = vsel %vm1667, %v3167, 0.0
      %v3208 = vsel %vm1668, %v3166, 0.0
      %v3209 = vsel %vm1669, %v3165, 0.0
      %v3210 = vsel %vm1670, %v3164, 0.0
      %v3211 = vsel %vm1671, %v3163, 0.0
      %v3212 = vsel %vm1672, %v3162, 0.0
      %v3213 = vsel %vm1673, %v3161, 0.0
      %v3214 = vsel %vm1674, %v3160, 0.0
      %v3215 = vsel %vm1675, %v3159, 0.0
      %v3216 = vsel %vm1676, %v3158, 0.0
      %v3217 = vsel %vm1677, %v3157, 0.0
      %v3218 = vsel %vm1678, %v3156, 0.0
      %v3219 = vsel %vm1679, %v3187, 0.0
      %v3220 = vpack.c.bf16 %v3093, %v3092
      %v3221 = vpack.c.bf16 %v3095, %v3094
      %v3222 = vpack.c.bf16 %v3097, %v3096
      %v3223 = vpack.c.bf16 %v3099, %v3098
      %v3224 = vpack.c.bf16 %v3101, %v3100
      %v3225 = vpack.c.bf16 %v3103, %v3102
      %v3226 = vpack.c.bf16 %v3105, %v3104
      %v3227 = vpack.c.bf16 %v3107, %v3106
      %v3228 = vpack.c.bf16 %v3109, %v3108
      %v3229 = vpack.c.bf16 %v3111, %v3110
      %v3230 = vpack.c.bf16 %v3113, %v3112
      %v3231 = vpack.c.bf16 %v3115, %v3114
      %v3232 = vpack.c.bf16 %v3117, %v3116
      %v3233 = vpack.c.bf16 %v3119, %v3118
      %v3234 = vpack.c.bf16 %v3121, %v3120
      %v3235 = vpack.c.bf16 %v3123, %v3122
      %v3236 = vpack.c.bf16 %v1359, %v1358
      %v3237 = vpack.c.bf16 %v1361, %v1360
      %v3238 = vpack.c.bf16 %v1363, %v1362
      %v3239 = vpack.c.bf16 %v1365, %v1364
      %v3240 = vpack.c.bf16 %v1367, %v1366
      %v3241 = vpack.c.bf16 %v1369, %v1368
      %v3242 = vpack.c.bf16 %v1371, %v1370
      %v3243 = vpack.c.bf16 %v1373, %v1372
      %v3244 = vpack.c.bf16 %v1375, %v1374
      %v3245 = vpack.c.bf16 %v1377, %v1376
      %v3246 = vpack.c.bf16 %v1379, %v1378
      %v3247 = vpack.c.bf16 %v1381, %v1380
      %v3248 = vpack.c.bf16 %v1383, %v1382
      %v3249 = vpack.c.bf16 %v1385, %v1384
      %v3250 = vpack.c.bf16 %v1387, %v1386
      %v3251 = vpack.c.bf16 %v1389, %v1388
      %v3252 = vpack.c.bf16 %v3189, %v3188
      %v3253 = vpack.c.bf16 %v3191, %v3190
      %v3254 = vpack.c.bf16 %v3193, %v3192
      %v3255 = vpack.c.bf16 %v3195, %v3194
      %v3256 = vpack.c.bf16 %v3197, %v3196
      %v3257 = vpack.c.bf16 %v3199, %v3198
      %v3258 = vpack.c.bf16 %v3201, %v3200
      %v3259 = vpack.c.bf16 %v3203, %v3202
      %v3260 = vpack.c.bf16 %v3205, %v3204
      %v3261 = vpack.c.bf16 %v3207, %v3206
      %v3262 = vpack.c.bf16 %v3209, %v3208
      %v3263 = vpack.c.bf16 %v3211, %v3210
      %v3264 = vpack.c.bf16 %v3213, %v3212
      %v3265 = vpack.c.bf16 %v3215, %v3214
      %v3266 = vpack.c.bf16 %v3217, %v3216
      %v3267 = vpack.c.bf16 %v3219, %v3218
      %v3268 = vld [vmem:[%s2 + $0x180] sm:$0xf]
      %v3269 = vld [vmem:[%s2 + $0x184] sm:$0xf]
      %v3270 = vld [vmem:[%s2 + $0x188] sm:$0xf]
      %v3271 = vld [vmem:[%s2 + $0x18c] sm:$0xf]
      %v3272 = vld [vmem:[%s2 + $0x190] sm:$0xf]
      %v3273 = vld [vmem:[%s2 + $0x194] sm:$0xf]
      %v3274 = vld [vmem:[%s2 + $0x198] sm:$0xf]
      %v3275 = vld [vmem:[%s2 + $0x19c] sm:$0xf]
      %v3276 = vld [vmem:[%s2 + $0x1a0] sm:$0xf]
      %v3277 = vld [vmem:[%s2 + $0x1a4] sm:$0xf]
      %v3278 = vld [vmem:[%s2 + $0x1a8] sm:$0xf]
      %v3279 = vld [vmem:[%s2 + $0x1ac] sm:$0xf]
      %v3280 = vld [vmem:[%s2 + $0x1b0] sm:$0xf]
      %v3281 = vld [vmem:[%s2 + $0x1b4] sm:$0xf]
      %v3282 = vld [vmem:[%s2 + $0x1b8] sm:$0xf]
      %v3283 = vld [vmem:[%s2 + $0x1bc] sm:$0xf]
      %v3284 = vld [vmem:[%s2 + $0x1c0] sm:$0xf]
      %v3285 = vld [vmem:[%s2 + $0x1c4] sm:$0xf]
      %v3286 = vld [vmem:[%s2 + $0x1c8] sm:$0xf]
      %v3287 = vld [vmem:[%s2 + $0x1cc] sm:$0xf]
      %v3288 = vld [vmem:[%s2 + $0x1d0] sm:$0xf]
      %v3289 = vld [vmem:[%s2 + $0x1d4] sm:$0xf]
      %v3290 = vld [vmem:[%s2 + $0x1d8] sm:$0xf]
      %v3291 = vld [vmem:[%s2 + $0x1dc] sm:$0xf]
      %v3292 = vld [vmem:[%s2 + $0x1e0] sm:$0xf]
      %v3293 = vld [vmem:[%s2 + $0x1e4] sm:$0xf]
      %v3294 = vld [vmem:[%s2 + $0x1e8] sm:$0xf]
      %v3295 = vld [vmem:[%s2 + $0x1ec] sm:$0xf]
      %v3296 = vld [vmem:[%s2 + $0x1f0] sm:$0xf]
      %v3297 = vld [vmem:[%s2 + $0x1f4] sm:$0xf]
      %v3298 = vld [vmem:[%s2 + $0x1f8] sm:$0xf]
      %v3299 = vld [vmem:[%s2 + $0x1fc] sm:$0xf]
      %v3300 = vld [vmem:[%s2 + $0x200] sm:$0xf]
      %v3301 = vld [vmem:[%s2 + $0x204] sm:$0xf]
      %v3302 = vld [vmem:[%s2 + $0x208] sm:$0xf]
      %v3303 = vld [vmem:[%s2 + $0x20c] sm:$0xf]
      %v3304 = vld [vmem:[%s2 + $0x210] sm:$0xf]
      %v3305 = vld [vmem:[%s2 + $0x214] sm:$0xf]
      %v3306 = vld [vmem:[%s2 + $0x218] sm:$0xf]
      %v3307 = vld [vmem:[%s2 + $0x21c] sm:$0xf]
      %v3308 = vld [vmem:[%s2 + $0x220] sm:$0xf]
      %v3309 = vld [vmem:[%s2 + $0x224] sm:$0xf]
      %v3310 = vld [vmem:[%s2 + $0x228] sm:$0xf]
      %v3311 = vld [vmem:[%s2 + $0x22c] sm:$0xf]
      %v3312 = vld [vmem:[%s2 + $0x230] sm:$0xf]
      %v3313 = vld [vmem:[%s2 + $0x234] sm:$0xf]
      %v3314 = vld [vmem:[%s2 + $0x238] sm:$0xf]
      %v3315 = vld [vmem:[%s2 + $0x23c] sm:$0xf]
      %v3364 = vunpack.c.l.b16 %v3268
      %v3365 = vunpack.c.l.b16 %v3269
      %v3366 = vunpack.c.l.b16 %v3270
      %v3367 = vunpack.c.l.b16 %v3271
      %v3368 = vunpack.c.l.b16 %v3272
      %v3369 = vunpack.c.l.b16 %v3273
      %v3370 = vunpack.c.l.b16 %v3274
      %v3371 = vunpack.c.l.b16 %v3275
      %v3372 = vunpack.c.l.b16 %v3276
      %v3373 = vunpack.c.l.b16 %v3277
      %v3374 = vunpack.c.l.b16 %v3278
      %v3375 = vunpack.c.l.b16 %v3279
      %v3376 = vunpack.c.l.b16 %v3280
      %v3377 = vunpack.c.l.b16 %v3281
      %v3378 = vunpack.c.l.b16 %v3282
      %v3379 = vunpack.c.l.b16 %v3283
      %v3380 = vunpack.c.l.b16 %v3284
      %v3381 = vunpack.c.l.b16 %v3285
      %v3382 = vunpack.c.l.b16 %v3286
      %v3383 = vunpack.c.l.b16 %v3287
      %v3384 = vunpack.c.l.b16 %v3288
      %v3385 = vunpack.c.l.b16 %v3289
      %v3386 = vunpack.c.l.b16 %v3290
      %v3387 = vunpack.c.l.b16 %v3291
      %v3388 = vunpack.c.l.b16 %v3292
      %v3389 = vunpack.c.l.b16 %v3293
      %v3390 = vunpack.c.l.b16 %v3294
      %v3391 = vunpack.c.l.b16 %v3295
      %v3392 = vunpack.c.l.b16 %v3296
      %v3393 = vunpack.c.l.b16 %v3297
      %v3394 = vunpack.c.l.b16 %v3298
      %v3395 = vunpack.c.l.b16 %v3299
      %v3396 = vunpack.c.l.b16 %v3300
      %v3397 = vunpack.c.l.b16 %v3301
      %v3398 = vunpack.c.l.b16 %v3302
      %v3399 = vunpack.c.l.b16 %v3303
      %v3400 = vunpack.c.l.b16 %v3304
      %v3401 = vunpack.c.l.b16 %v3305
      %v3402 = vunpack.c.l.b16 %v3306
      %v3403 = vunpack.c.l.b16 %v3307
      %v3404 = vunpack.c.l.b16 %v3308
      %v3405 = vunpack.c.l.b16 %v3309
      %v3406 = vunpack.c.l.b16 %v3310
      %v3407 = vunpack.c.l.b16 %v3311
      %v3408 = vunpack.c.l.b16 %v3312
      %v3409 = vunpack.c.l.b16 %v3313
      %v3410 = vunpack.c.l.b16 %v3314
      %v3411 = vunpack.c.l.b16 %v3315
      %v3412 = vpack.c.b16 %v3365, %v3364
      %v3413 = vpack.c.b16 %v3367, %v3366
      %v3414 = vpack.c.b16 %v3369, %v3368
      %v3415 = vpack.c.b16 %v3371, %v3370
      %v3416 = vpack.c.b16 %v3373, %v3372
      %v3417 = vpack.c.b16 %v3375, %v3374
      %v3418 = vpack.c.b16 %v3377, %v3376
      %v3419 = vpack.c.b16 %v3379, %v3378
      %v3420 = vpack.c.b16 %v3381, %v3380
      %v3421 = vpack.c.b16 %v3383, %v3382
      %v3422 = vpack.c.b16 %v3385, %v3384
      %v3423 = vpack.c.b16 %v3387, %v3386
      %v3424 = vpack.c.b16 %v3389, %v3388
      %v3425 = vpack.c.b16 %v3391, %v3390
      %v3426 = vpack.c.b16 %v3393, %v3392
      %v3427 = vpack.c.b16 %v3395, %v3394
      %v3428 = vpack.c.b16 %v3397, %v3396
      %v3429 = vpack.c.b16 %v3399, %v3398
      %v3430 = vpack.c.b16 %v3401, %v3400
      %v3431 = vpack.c.b16 %v3403, %v3402
      %v3432 = vpack.c.b16 %v3405, %v3404
      %v3433 = vpack.c.b16 %v3407, %v3406
      %v3434 = vpack.c.b16 %v3409, %v3408
      %v3435 = vpack.c.b16 %v3411, %v3410
      %3460 = vmatprep.subr.bf16.mxu0 0
      %3461 = vmatpush1.bf16.msra.mxu0 %v3412
      %3462 = vmatprep.subr.bf16.mxu0 0
      %3463 = vmatpush1.bf16.msra.mxu0 %v3413
      %3464 = vmatprep.subr.bf16.mxu0 0
      %3465 = vmatpush1.bf16.msra.mxu0 %v3414
      %3466 = vmatprep.subr.bf16.mxu0 0
      %3467 = vmatpush1.bf16.msra.mxu0 %v3415
      %3468 = vmatprep.subr.bf16.mxu0 0
      %3469 = vmatpush1.bf16.msra.mxu0 %v3416
      %3470 = vmatprep.subr.bf16.mxu0 0
      %3471 = vmatpush1.bf16.msra.mxu0 %v3417
      %3472 = vmatprep.subr.bf16.mxu0 0
      %3473 = vmatpush1.bf16.msra.mxu0 %v3418
      %3474 = vmatprep.subr.bf16.mxu0 0
      %3475 = vmatpush1.bf16.msra.mxu0 %v3419
      %3476 = vmatprep.subr.bf16.mxu0 0
      %3477 = vmatpush1.bf16.msra.mxu0 %v3420
      %3478 = vmatprep.subr.bf16.mxu0 0
      %3479 = vmatpush1.bf16.msra.mxu0 %v3421
      %3480 = vmatprep.subr.bf16.mxu0 0
      %3481 = vmatpush1.bf16.msra.mxu0 %v3422
      %3482 = vmatprep.subr.bf16.mxu0 0
      %3483 = vmatpush1.bf16.msra.mxu0 %v3423
      %3484 = vmatprep.subr.bf16.mxu0 0
      %3485 = vmatpush1.bf16.msra.mxu0 %v3424
      %3486 = vmatprep.subr.bf16.mxu0 0
      %3487 = vmatpush1.bf16.msra.mxu0 %v3425
      %3488 = vmatprep.subr.bf16.mxu0 0
      %3489 = vmatpush1.bf16.msra.mxu0 %v3426
      %3490 = vmatprep.subr.bf16.mxu0 0
      %3491 = vmatpush1.bf16.msra.mxu0 %v3427
      %3492 = vmatprep.mubr.bf16.mxu0 %v3236
      %3493 = vmatmul.mubr.bf16.gmra.mrb[0].mxu0 %v3220
      %v3494 = vpop.f32.mrb[0].mxu0
      %v3495 = vadd.f32 0.0, %v3494
      %v3496 = vpop.f32.mrb[0].mxu0
      %v3497 = vpop.f32.mrb[0].mxu0
      %v3498 = vadd.f32 0.0, %v3497
      %v3499 = vpop.f32.mrb[0].mxu0
      %3500 = vmatprep.mubr.bf16.mxu0 %v3237
      %3501 = vmatmul.mubr.bf16.gmra.mrb[0].mxu0 %v3221
      %v3502 = vpop.f32.mrb[0].mxu0
      %v3503 = vadd.f32 0.0, %v3502
      %v3504 = vpop.f32.mrb[0].mxu0
      %v3505 = vpop.f32.mrb[0].mxu0
      %v3506 = vadd.f32 0.0, %v3505
      %v3507 = vpop.f32.mrb[0].mxu0
      %3508 = vmatprep.mubr.bf16.mxu0 %v3238
      %3509 = vmatmul.mubr.bf16.gmra.mrb[0].mxu0 %v3222
      %v3510 = vpop.f32.mrb[0].mxu0
      %v3511 = vadd.f32 0.0, %v3510
      %v3512 = vpop.f32.mrb[0].mxu0
      %v3513 = vpop.f32.mrb[0].mxu0
      %v3514 = vadd.f32 0.0, %v3513
      %v3515 = vpop.f32.mrb[0].mxu0
      %3516 = vmatprep.mubr.bf16.mxu0 %v3239
      %3517 = vmatmul.mubr.bf16.gmra.mrb[0].mxu0 %v3223
      %v3518 = vpop.f32.mrb[0].mxu0
      %v3519 = vadd.f32 0.0, %v3518
      %v3520 = vpop.f32.mrb[0].mxu0
      %v3521 = vpop.f32.mrb[0].mxu0
      %v3522 = vadd.f32 0.0, %v3521
      %v3523 = vpop.f32.mrb[0].mxu0
      %3524 = vmatprep.mubr.bf16.mxu0 %v3240
      %3525 = vmatmul.mubr.bf16.gmra.mrb[0].mxu0 %v3224
      %v3526 = vpop.f32.mrb[0].mxu0
      %v3527 = vadd.f32 0.0, %v3526
      %v3528 = vpop.f32.mrb[0].mxu0
      %v3529 = vpop.f32.mrb[0].mxu0
      %v3530 = vadd.f32 0.0, %v3529
      %v3531 = vpop.f32.mrb[0].mxu0
      %3532 = vmatprep.mubr.bf16.mxu0 %v3241
      %3533 = vmatmul.mubr.bf16.gmra.mrb[0].mxu0 %v3225
      %v3534 = vpop.f32.mrb[0].mxu0
      %v3535 = vadd.f32 0.0, %v3534
      %v3536 = vpop.f32.mrb[0].mxu0
      %v3537 = vpop.f32.mrb[0].mxu0
      %v3538 = vadd.f32 0.0, %v3537
      %v3539 = vpop.f32.mrb[0].mxu0
      %3540 = vmatprep.mubr.bf16.mxu0 %v3242
      %3541 = vmatmul.mubr.bf16.gmra.mrb[0].mxu0 %v3226
      %v3542 = vpop.f32.mrb[0].mxu0
      %v3543 = vadd.f32 0.0, %v3542
      %v3544 = vpop.f32.mrb[0].mxu0
      %v3545 = vpop.f32.mrb[0].mxu0
      %v3546 = vadd.f32 0.0, %v3545
      %v3547 = vpop.f32.mrb[0].mxu0
      %3548 = vmatprep.mubr.bf16.mxu0 %v3243
      %3549 = vmatmul.mubr.bf16.gmra.mrb[0].mxu0 %v3227
      %v3550 = vpop.f32.mrb[0].mxu0
      %v3551 = vadd.f32 0.0, %v3550
      %v3552 = vpop.f32.mrb[0].mxu0
      %v3553 = vpop.f32.mrb[0].mxu0
      %v3554 = vadd.f32 0.0, %v3553
      %v3555 = vpop.f32.mrb[0].mxu0
      %3556 = vmatprep.mubr.bf16.mxu0 %v3244
      %3557 = vmatmul.mubr.bf16.gmra.mrb[0].mxu0 %v3228
      %v3558 = vpop.f32.mrb[0].mxu0
      %v3559 = vadd.f32 0.0, %v3558
      %v3560 = vpop.f32.mrb[0].mxu0
      %v3561 = vpop.f32.mrb[0].mxu0
      %v3562 = vadd.f32 0.0, %v3561
      %v3563 = vpop.f32.mrb[0].mxu0
      %3564 = vmatprep.mubr.bf16.mxu0 %v3245
      %3565 = vmatmul.mubr.bf16.gmra.mrb[0].mxu0 %v3229
      %v3566 = vpop.f32.mrb[0].mxu0
      %v3567 = vadd.f32 0.0, %v3566
      %v3568 = vpop.f32.mrb[0].mxu0
      %v3569 = vpop.f32.mrb[0].mxu0
      %v3570 = vadd.f32 0.0, %v3569
      %v3571 = vpop.f32.mrb[0].mxu0
      %3572 = vmatprep.mubr.bf16.mxu0 %v3246
      %3573 = vmatmul.mubr.bf16.gmra.mrb[0].mxu0 %v3230
      %v3574 = vpop.f32.mrb[0].mxu0
      %v3575 = vadd.f32 0.0, %v3574
      %v3576 = vpop.f32.mrb[0].mxu0
      %v3577 = vpop.f32.mrb[0].mxu0
      %v3578 = vadd.f32 0.0, %v3577
      %v3579 = vpop.f32.mrb[0].mxu0
      %3580 = vmatprep.mubr.bf16.mxu0 %v3247
      %3581 = vmatmul.mubr.bf16.gmra.mrb[0].mxu0 %v3231
      %v3582 = vpop.f32.mrb[0].mxu0
      %v3583 = vadd.f32 0.0, %v3582
      %v3584 = vpop.f32.mrb[0].mxu0
      %v3585 = vpop.f32.mrb[0].mxu0
      %v3586 = vadd.f32 0.0, %v3585
      %v3587 = vpop.f32.mrb[0].mxu0
      %3588 = vmatprep.mubr.bf16.mxu0 %v3248
      %3589 = vmatmul.mubr.bf16.gmra.mrb[0].mxu0 %v3232
      %v3590 = vpop.f32.mrb[0].mxu0
      %v3591 = vadd.f32 0.0, %v3590
      %v3592 = vpop.f32.mrb[0].mxu0
      %v3593 = vpop.f32.mrb[0].mxu0
      %v3594 = vadd.f32 0.0, %v3593
      %v3595 = vpop.f32.mrb[0].mxu0
      %3596 = vmatprep.mubr.bf16.mxu0 %v3249
      %3597 = vmatmul.mubr.bf16.gmra.mrb[0].mxu0 %v3233
      %v3598 = vpop.f32.mrb[0].mxu0
      %v3599 = vadd.f32 0.0, %v3598
      %v3600 = vpop.f32.mrb[0].mxu0
      %v3601 = vpop.f32.mrb[0].mxu0
      %v3602 = vadd.f32 0.0, %v3601
      %v3603 = vpop.f32.mrb[0].mxu0
      %3604 = vmatprep.mubr.bf16.mxu0 %v3250
      %3605 = vmatmul.mubr.bf16.gmra.mrb[0].mxu0 %v3234
      %v3606 = vpop.f32.mrb[0].mxu0
      %v3607 = vadd.f32 0.0, %v3606
      %v3608 = vpop.f32.mrb[0].mxu0
      %v3609 = vpop.f32.mrb[0].mxu0
      %v3610 = vadd.f32 0.0, %v3609
      %v3611 = vpop.f32.mrb[0].mxu0
      %3612 = vmatprep.mubr.bf16.mxu0 %v3251
      %3613 = vmatmul.mubr.bf16.gmra.mrb[0].mxu0 %v3235
      %v3614 = vpop.f32.mrb[0].mxu0
      %v3615 = vadd.f32 0.0, %v3614
      %v3616 = vpop.f32.mrb[0].mxu0
      %v3617 = vpop.f32.mrb[0].mxu0
      %v3618 = vadd.f32 0.0, %v3617
      %v3619 = vpop.f32.mrb[0].mxu0
      %3620 = vdwg.mxu0
      %3621 = vmatprep.subr.bf16.mxu0 0
      %3622 = vmatpush1.bf16.msra.mxu0 %v3428
      %3623 = vmatprep.subr.bf16.mxu0 0
      %3624 = vmatpush1.bf16.msra.mxu0 %v3429
      %3625 = vmatprep.subr.bf16.mxu0 0
      %3626 = vmatpush1.bf16.msra.mxu0 %v3430
      %3627 = vmatprep.subr.bf16.mxu0 0
      %3628 = vmatpush1.bf16.msra.mxu0 %v3431
      %3629 = vmatprep.subr.bf16.mxu0 0
      %3630 = vmatpush1.bf16.msra.mxu0 %v3432
      %3631 = vmatprep.subr.bf16.mxu0 0
      %3632 = vmatpush1.bf16.msra.mxu0 %v3433
      %3633 = vmatprep.subr.bf16.mxu0 0
      %3634 = vmatpush1.bf16.msra.mxu0 %v3434
      %3635 = vmatprep.subr.bf16.mxu0 0
      %3636 = vmatpush1.bf16.msra.mxu0 %v3435
      %3637 = vmatprep.subr.bf16.mxu0 0
      %3638 = vmatpush1.bf16.msra.mxu0 0
      %3639 = vmatprep.subr.bf16.mxu0 0
      %3640 = vmatpush1.bf16.msra.mxu0 0
      %3641 = vmatprep.subr.bf16.mxu0 0
      %3642 = vmatpush1.bf16.msra.mxu0 0
      %3643 = vmatprep.subr.bf16.mxu0 0
      %3644 = vmatpush1.bf16.msra.mxu0 0
      %3645 = vmatprep.subr.bf16.mxu0 0
      %3646 = vmatpush1.bf16.msra.mxu0 0
      %3647 = vmatprep.subr.bf16.mxu0 0
      %3648 = vmatpush1.bf16.msra.mxu0 0
      %3649 = vmatprep.subr.bf16.mxu0 0
      %3650 = vmatpush1.bf16.msra.mxu0 0
      %3651 = vmatprep.subr.bf16.mxu0 0
      %3652 = vmatpush1.bf16.msra.mxu0 0
      %3653 = vmatprep.mubr.bf16.mxu0 0
      %3654 = vmatmul.mubr.bf16.gmra.mrb[0].mxu0 %v3252
      %v3655 = vpop.f32.mrb[0].mxu0
      %v3656 = vadd.f32 %v3495, %v3655
      %v3657 = vpop.f32.mrb[0].mxu0
      %v3658 = vpop.f32.mrb[0].mxu0
      %v3659 = vadd.f32 %v3498, %v3658
      %v3660 = vpop.f32.mrb[0].mxu0
      %3661 = vmatprep.mubr.bf16.mxu0 0
      %3662 = vmatmul.mubr.bf16.gmra.mrb[0].mxu0 %v3253
      %v3663 = vpop.f32.mrb[0].mxu0
      %v3664 = vadd.f32 %v3503, %v3663
      %v3665 = vpop.f32.mrb[0].mxu0
      %v3666 = vpop.f32.mrb[0].mxu0
      %v3667 = vadd.f32 %v3506, %v3666
      %v3668 = vpop.f32.mrb[0].mxu0
      %3669 = vmatprep.mubr.bf16.mxu0 0
      %3670 = vmatmul.mubr.bf16.gmra.mrb[0].mxu0 %v3254
      %v3671 = vpop.f32.mrb[0].mxu0
      %v3672 = vadd.f32 %v3511, %v3671
      %v3673 = vpop.f32.mrb[0].mxu0
      %v3674 = vpop.f32.mrb[0].mxu0
      %v3675 = vadd.f32 %v3514, %v3674
      %v3676 = vpop.f32.mrb[0].mxu0
      %3677 = vmatprep.mubr.bf16.mxu0 0
      %3678 = vmatmul.mubr.bf16.gmra.mrb[0].mxu0 %v3255
      %v3679 = vpop.f32.mrb[0].mxu0
      %v3680 = vadd.f32 %v3519, %v3679
      %v3681 = vpop.f32.mrb[0].mxu0
      %v3682 = vpop.f32.mrb[0].mxu0
      %v3683 = vadd.f32 %v3522, %v3682
      %v3684 = vpop.f32.mrb[0].mxu0
      %3685 = vmatprep.mubr.bf16.mxu0 0
      %3686 = vmatmul.mubr.bf16.gmra.mrb[0].mxu0 %v3256
      %v3687 = vpop.f32.mrb[0].mxu0
      %v3688 = vadd.f32 %v3527, %v3687
      %v3689 = vpop.f32.mrb[0].mxu0
      %v3690 = vpop.f32.mrb[0].mxu0
      %v3691 = vadd.f32 %v3530, %v3690
      %v3692 = vpop.f32.mrb[0].mxu0
      %3693 = vmatprep.mubr.bf16.mxu0 0
      %3694 = vmatmul.mubr.bf16.gmra.mrb[0].mxu0 %v3257
      %v3695 = vpop.f32.mrb[0].mxu0
      %v3696 = vadd.f32 %v3535, %v3695
      %v3697 = vpop.f32.mrb[0].mxu0
      %v3698 = vpop.f32.mrb[0].mxu0
      %v3699 = vadd.f32 %v3538, %v3698
      %v3700 = vpop.f32.mrb[0].mxu0
      %3701 = vmatprep.mubr.bf16.mxu0 0
      %3702 = vmatmul.mubr.bf16.gmra.mrb[0].mxu0 %v3258
      %v3703 = vpop.f32.mrb[0].mxu0
      %v3704 = vadd.f32 %v3543, %v3703
      %v3705 = vpop.f32.mrb[0].mxu0
      %v3706 = vpop.f32.mrb[0].mxu0
      %v3707 = vadd.f32 %v3546, %v3706
      %v3708 = vpop.f32.mrb[0].mxu0
      %3709 = vmatprep.mubr.bf16.mxu0 0
      %3710 = vmatmul.mubr.bf16.gmra.mrb[0].mxu0 %v3259
      %v3711 = vpop.f32.mrb[0].mxu0
      %v3712 = vadd.f32 %v3551, %v3711
      %v3713 = vpop.f32.mrb[0].mxu0
      %v3714 = vpop.f32.mrb[0].mxu0
      %v3715 = vadd.f32 %v3554, %v3714
      %v3716 = vpop.f32.mrb[0].mxu0
      %3717 = vmatprep.mubr.bf16.mxu0 0
      %3718 = vmatmul.mubr.bf16.gmra.mrb[0].mxu0 %v3260
      %v3719 = vpop.f32.mrb[0].mxu0
      %v3720 = vadd.f32 %v3559, %v3719
      %v3721 = vpop.f32.mrb[0].mxu0
      %v3722 = vpop.f32.mrb[0].mxu0
      %v3723 = vadd.f32 %v3562, %v3722
      %v3724 = vpop.f32.mrb[0].mxu0
      %3725 = vmatprep.mubr.bf16.mxu0 0
      %3726 = vmatmul.mubr.bf16.gmra.mrb[0].mxu0 %v3261
      %v3727 = vpop.f32.mrb[0].mxu0
      %v3728 = vadd.f32 %v3567, %v3727
      %v3729 = vpop.f32.mrb[0].mxu0
      %v3730 = vpop.f32.mrb[0].mxu0
      %v3731 = vadd.f32 %v3570, %v3730
      %v3732 = vpop.f32.mrb[0].mxu0
      %3733 = vmatprep.mubr.bf16.mxu0 0
      %3734 = vmatmul.mubr.bf16.gmra.mrb[0].mxu0 %v3262
      %v3735 = vpop.f32.mrb[0].mxu0
      %v3736 = vadd.f32 %v3575, %v3735
      %v3737 = vpop.f32.mrb[0].mxu0
      %v3738 = vpop.f32.mrb[0].mxu0
      %v3739 = vadd.f32 %v3578, %v3738
      %v3740 = vpop.f32.mrb[0].mxu0
      %3741 = vmatprep.mubr.bf16.mxu0 0
      %3742 = vmatmul.mubr.bf16.gmra.mrb[0].mxu0 %v3263
      %v3743 = vpop.f32.mrb[0].mxu0
      %v3744 = vadd.f32 %v3583, %v3743
      %v3745 = vpop.f32.mrb[0].mxu0
      %v3746 = vpop.f32.mrb[0].mxu0
      %v3747 = vadd.f32 %v3586, %v3746
      %v3748 = vpop.f32.mrb[0].mxu0
      %3749 = vmatprep.mubr.bf16.mxu0 0
      %3750 = vmatmul.mubr.bf16.gmra.mrb[0].mxu0 %v3264
      %v3751 = vpop.f32.mrb[0].mxu0
      %v3752 = vadd.f32 %v3591, %v3751
      %v3753 = vpop.f32.mrb[0].mxu0
      %v3754 = vpop.f32.mrb[0].mxu0
      %v3755 = vadd.f32 %v3594, %v3754
      %v3756 = vpop.f32.mrb[0].mxu0
      %3757 = vmatprep.mubr.bf16.mxu0 0
      %3758 = vmatmul.mubr.bf16.gmra.mrb[0].mxu0 %v3265
      %v3759 = vpop.f32.mrb[0].mxu0
      %v3760 = vadd.f32 %v3599, %v3759
      %v3761 = vpop.f32.mrb[0].mxu0
      %v3762 = vpop.f32.mrb[0].mxu0
      %v3763 = vadd.f32 %v3602, %v3762
      %v3764 = vpop.f32.mrb[0].mxu0
      %3765 = vmatprep.mubr.bf16.mxu0 0
      %3766 = vmatmul.mubr.bf16.gmra.mrb[0].mxu0 %v3266
      %v3767 = vpop.f32.mrb[0].mxu0
      %v3768 = vadd.f32 %v3607, %v3767
      %v3769 = vpop.f32.mrb[0].mxu0
      %v3770 = vpop.f32.mrb[0].mxu0
      %v3771 = vadd.f32 %v3610, %v3770
      %v3772 = vpop.f32.mrb[0].mxu0
      %3773 = vmatprep.mubr.bf16.mxu0 0
      %3774 = vmatmul.mubr.bf16.gmra.mrb[0].mxu0 %v3267
      %v3775 = vpop.f32.mrb[0].mxu0
      %v3776 = vadd.f32 %v3615, %v3775
      %v3777 = vpop.f32.mrb[0].mxu0
      %v3778 = vpop.f32.mrb[0].mxu0
      %v3779 = vadd.f32 %v3618, %v3778
      %v3780 = vpop.f32.mrb[0].mxu0
      %3781 = vdwg.mxu0
      %v3782 = vadd.f32 %v2902, %v3656
      %v3783 = vadd.f32 %v2905, %v3659
      %v3784 = vadd.f32 %v2910, %v3664
      %v3785 = vadd.f32 %v2913, %v3667
      %v3786 = vadd.f32 %v2918, %v3672
      %v3787 = vadd.f32 %v2921, %v3675
      %v3788 = vadd.f32 %v2926, %v3680
      %v3789 = vadd.f32 %v2929, %v3683
      %v3790 = vadd.f32 %v2934, %v3688
      %v3791 = vadd.f32 %v2937, %v3691
      %v3792 = vadd.f32 %v2942, %v3696
      %v3793 = vadd.f32 %v2945, %v3699
      %v3794 = vadd.f32 %v2950, %v3704
      %v3795 = vadd.f32 %v2953, %v3707
      %v3796 = vadd.f32 %v2958, %v3712
      %v3797 = vadd.f32 %v2961, %v3715
      %v3798 = vadd.f32 %v2966, %v3720
      %v3799 = vadd.f32 %v2969, %v3723
      %v3800 = vadd.f32 %v2974, %v3728
      %v3801 = vadd.f32 %v2977, %v3731
      %v3802 = vadd.f32 %v2982, %v3736
      %v3803 = vadd.f32 %v2985, %v3739
      %v3804 = vadd.f32 %v2990, %v3744
      %v3805 = vadd.f32 %v2993, %v3747
      %v3806 = vadd.f32 %v2998, %v3752
      %v3807 = vadd.f32 %v3001, %v3755
      %v3808 = vadd.f32 %v3006, %v3760
      %v3809 = vadd.f32 %v3009, %v3763
      %v3810 = vadd.f32 %v3014, %v3768
      %v3811 = vadd.f32 %v3017, %v3771
      %v3812 = vadd.f32 %v3022, %v3776
      %v3813 = vadd.f32 %v3025, %v3779
      %v3814 = vld [vmem:[%s3 + $0x1] sm:$0x1]
      %v3815 = vlaneseq
      %v3816 = vshrl.u32 %v3815, 7
      %v3817 = vsub.s32 0, %v3816
      %v3818 = vrot.slane %v3814, %v3817
      %v3819 = vadd.f32 %v3782, %v3818
      %v3820 = vadd.f32 %v3783, %v3818
      %v3821 = vadd.f32 %v3784, %v3818
      %v3822 = vadd.f32 %v3785, %v3818
      %v3823 = vadd.f32 %v3786, %v3818
      %v3824 = vadd.f32 %v3787, %v3818
      %v3825 = vadd.f32 %v3788, %v3818
      %v3826 = vadd.f32 %v3789, %v3818
      %v3827 = vadd.f32 %v3790, %v3818
      %v3828 = vadd.f32 %v3791, %v3818
      %v3829 = vadd.f32 %v3792, %v3818
      %v3830 = vadd.f32 %v3793, %v3818
      %v3831 = vadd.f32 %v3794, %v3818
      %v3832 = vadd.f32 %v3795, %v3818
      %v3833 = vadd.f32 %v3796, %v3818
      %v3834 = vadd.f32 %v3797, %v3818
      %v3835 = vadd.f32 %v3798, %v3818
      %v3836 = vadd.f32 %v3799, %v3818
      %v3837 = vadd.f32 %v3800, %v3818
      %v3838 = vadd.f32 %v3801, %v3818
      %v3839 = vadd.f32 %v3802, %v3818
      %v3840 = vadd.f32 %v3803, %v3818
      %v3841 = vadd.f32 %v3804, %v3818
      %v3842 = vadd.f32 %v3805, %v3818
      %v3843 = vadd.f32 %v3806, %v3818
      %v3844 = vadd.f32 %v3807, %v3818
      %v3845 = vadd.f32 %v3808, %v3818
      %v3846 = vadd.f32 %v3809, %v3818
      %v3847 = vadd.f32 %v3810, %v3818
      %v3848 = vadd.f32 %v3811, %v3818
      %v3849 = vadd.f32 %v3812, %v3818
      %v3850 = vadd.f32 %v3813, %v3818
      %v3851 = vmax.f32 %v3819, 0.0
      %v3852 = vmax.f32 %v3820, 0.0
      %v3853 = vmax.f32 %v3821, 0.0
      %v3854 = vmax.f32 %v3822, 0.0
      %v3855 = vmax.f32 %v3823, 0.0
      %v3856 = vmax.f32 %v3824, 0.0
      %v3857 = vmax.f32 %v3825, 0.0
      %v3858 = vmax.f32 %v3826, 0.0
      %v3859 = vmax.f32 %v3827, 0.0
      %v3860 = vmax.f32 %v3828, 0.0
      %v3861 = vmax.f32 %v3829, 0.0
      %v3862 = vmax.f32 %v3830, 0.0
      %v3863 = vmax.f32 %v3831, 0.0
      %v3864 = vmax.f32 %v3832, 0.0
      %v3865 = vmax.f32 %v3833, 0.0
      %v3866 = vmax.f32 %v3834, 0.0
      %v3867 = vmax.f32 %v3835, 0.0
      %v3868 = vmax.f32 %v3836, 0.0
      %v3869 = vmax.f32 %v3837, 0.0
      %v3870 = vmax.f32 %v3838, 0.0
      %v3871 = vmax.f32 %v3839, 0.0
      %v3872 = vmax.f32 %v3840, 0.0
      %v3873 = vmax.f32 %v3841, 0.0
      %v3874 = vmax.f32 %v3842, 0.0
      %v3875 = vmax.f32 %v3843, 0.0
      %v3876 = vmax.f32 %v3844, 0.0
      %v3877 = vmax.f32 %v3845, 0.0
      %v3878 = vmax.f32 %v3846, 0.0
      %v3879 = vmax.f32 %v3847, 0.0
      %v3880 = vmax.f32 %v3848, 0.0
      %v3881 = vmax.f32 %v3849, 0.0
      %v3882 = vmax.f32 %v3850, 0.0
      %3883 = vst [vmem:[#allocation2] sm:$0xff] %v3851
      %3884 = vst [vmem:[#allocation2 + $0x8] sm:$0xff] %v3852
      %3885 = vst [vmem:[#allocation2 + $0x10] sm:$0xff] %v3853
      %3886 = vst [vmem:[#allocation2 + $0x18] sm:$0xff] %v3854
      %3887 = vst [vmem:[#allocation2 + $0x20] sm:$0xff] %v3855
      %3888 = vst [vmem:[#allocation2 + $0x28] sm:$0xff] %v3856
      %3889 = vst [vmem:[#allocation2 + $0x30] sm:$0xff] %v3857
      %3890 = vst [vmem:[#allocation2 + $0x38] sm:$0xff] %v3858
      %3891 = vst [vmem:[#allocation2 + $0x40] sm:$0xff] %v3859
      %3892 = vst [vmem:[#allocation2 + $0x48] sm:$0xff] %v3860
      %3893 = vst [vmem:[#allocation2 + $0x50] sm:$0xff] %v3861
      %3894 = vst [vmem:[#allocation2 + $0x58] sm:$0xff] %v3862
      %3895 = vst [vmem:[#allocation2 + $0x60] sm:$0xff] %v3863
      %3896 = vst [vmem:[#allocation2 + $0x68] sm:$0xff] %v3864
      %3897 = vst [vmem:[#allocation2 + $0x70] sm:$0xff] %v3865
      %3898 = vst [vmem:[#allocation2 + $0x78] sm:$0xff] %v3866
      %3899 = vst [vmem:[#allocation2 + $0x80] sm:$0xff] %v3867
      %3900 = vst [vmem:[#allocation2 + $0x88] sm:$0xff] %v3868
      %3901 = vst [vmem:[#allocation2 + $0x90] sm:$0xff] %v3869
      %3902 = vst [vmem:[#allocation2 + $0x98] sm:$0xff] %v3870
      %3903 = vst [vmem:[#allocation2 + $0xa0] sm:$0xff] %v3871
      %3904 = vst [vmem:[#allocation2 + $0xa8] sm:$0xff] %v3872
      %3905 = vst [vmem:[#allocation2 + $0xb0] sm:$0xff] %v3873
      %3906 = vst [vmem:[#allocation2 + $0xb8] sm:$0xff] %v3874
      %3907 = vst [vmem:[#allocation2 + $0xc0] sm:$0xff] %v3875
      %3908 = vst [vmem:[#allocation2 + $0xc8] sm:$0xff] %v3876
      %3909 = vst [vmem:[#allocation2 + $0xd0] sm:$0xff] %v3877
      %3910 = vst [vmem:[#allocation2 + $0xd8] sm:$0xff] %v3878
      %3911 = vst [vmem:[#allocation2 + $0xe0] sm:$0xff] %v3879
      %3912 = vst [vmem:[#allocation2 + $0xe8] sm:$0xff] %v3880
      %3913 = vst [vmem:[#allocation2 + $0xf0] sm:$0xff] %v3881
      %3914 = vst [vmem:[#allocation2 + $0xf8] sm:$0xff] %v3882
      %v3915 = vld [vmem:[#allocation2] sm:$0xff]
      %v3916 = vld [vmem:[#allocation2 + $0x8] sm:$0xff]
      %v3917 = vld [vmem:[#allocation2 + $0x10] sm:$0xff]
      %v3918 = vld [vmem:[#allocation2 + $0x18] sm:$0xff]
      %v3919 = vld [vmem:[#allocation2 + $0x20] sm:$0xff]
      %v3920 = vld [vmem:[#allocation2 + $0x28] sm:$0xff]
      %v3921 = vld [vmem:[#allocation2 + $0x30] sm:$0xff]
      %v3922 = vld [vmem:[#allocation2 + $0x38] sm:$0xff]
      %v3923 = vld [vmem:[#allocation2 + $0x40] sm:$0xff]
      %v3924 = vld [vmem:[#allocation2 + $0x48] sm:$0xff]
      %v3925 = vld [vmem:[#allocation2 + $0x50] sm:$0xff]
      %v3926 = vld [vmem:[#allocation2 + $0x58] sm:$0xff]
      %v3927 = vld [vmem:[#allocation2 + $0x60] sm:$0xff]
      %v3928 = vld [vmem:[#allocation2 + $0x68] sm:$0xff]
      %v3929 = vld [vmem:[#allocation2 + $0x70] sm:$0xff]
      %v3930 = vld [vmem:[#allocation2 + $0x78] sm:$0xff]
      %v3931 = vld [vmem:[#allocation2 + $0x80] sm:$0xff]
      %v3932 = vld [vmem:[#allocation2 + $0x88] sm:$0xff]
      %v3933 = vld [vmem:[#allocation2 + $0x90] sm:$0xff]
      %v3934 = vld [vmem:[#allocation2 + $0x98] sm:$0xff]
      %v3935 = vld [vmem:[#allocation2 + $0xa0] sm:$0xff]
      %v3936 = vld [vmem:[#allocation2 + $0xa8] sm:$0xff]
      %v3937 = vld [vmem:[#allocation2 + $0xb0] sm:$0xff]
      %v3938 = vld [vmem:[#allocation2 + $0xb8] sm:$0xff]
      %v3939 = vld [vmem:[#allocation2 + $0xc0] sm:$0xff]
      %v3940 = vld [vmem:[#allocation2 + $0xc8] sm:$0xff]
      %v3941 = vld [vmem:[#allocation2 + $0xd0] sm:$0xff]
      %v3942 = vld [vmem:[#allocation2 + $0xd8] sm:$0xff]
      %v3943 = vld [vmem:[#allocation2 + $0xe0] sm:$0xff]
      %v3944 = vld [vmem:[#allocation2 + $0xe8] sm:$0xff]
      %v3945 = vld [vmem:[#allocation2 + $0xf0] sm:$0xff]
      %v3946 = vld [vmem:[#allocation2 + $0xf8] sm:$0xff]
      %v3947 = vsel %vm1230, %v3945, 0.0
      %v3948 = vsel %vm1231, %v3946, 0.0
      %v3949 = vsel %vm1232, %v3915, 0.0
      %v3950 = vsel %vm1233, %v3916, 0.0
      %v3951 = vsel %vm1234, %v3917, 0.0
      %v3952 = vsel %vm1235, %v3918, 0.0
      %v3953 = vsel %vm1236, %v3919, 0.0
      %v3954 = vsel %vm1237, %v3920, 0.0
      %v3955 = vsel %vm1238, %v3921, 0.0
      %v3956 = vsel %vm1239, %v3922, 0.0
      %v3957 = vsel %vm1240, %v3923, 0.0
      %v3958 = vsel %vm1241, %v3924, 0.0
      %v3959 = vsel %vm1242, %v3925, 0.0
      %v3960 = vsel %vm1243, %v3926, 0.0
      %v3961 = vsel %vm1244, %v3927, 0.0
      %v3962 = vsel %vm1245, %v3928, 0.0
      %v3963 = vsel %vm1246, %v3929, 0.0
      %v3964 = vsel %vm1247, %v3930, 0.0
      %v3965 = vsel %vm1248, %v3931, 0.0
      %v3966 = vsel %vm1249, %v3932, 0.0
      %v3967 = vsel %vm1250, %v3933, 0.0
      %v3968 = vsel %vm1251, %v3934, 0.0
      %v3969 = vsel %vm1252, %v3935, 0.0
      %v3970 = vsel %vm1253, %v3936, 0.0
      %v3971 = vsel %vm1254, %v3937, 0.0
      %v3972 = vsel %vm1255, %v3938, 0.0
      %v3973 = vsel %vm1256, %v3939, 0.0
      %v3974 = vsel %vm1257, %v3940, 0.0
      %v3975 = vsel %vm1258, %v3941, 0.0
      %v3976 = vsel %vm1259, %v3942, 0.0
      %v3977 = vsel %vm1260, %v3943, 0.0
      %v3978 = vsel %vm1261, %v3944, 0.0
      %v3979 = vsel %vm1326, %v3917, 0.0
      %v3980 = vsel %vm1327, %v3918, 0.0
      %v3981 = vsel %vm1328, %v3919, 0.0
      %v3982 = vsel %vm1329, %v3920, 0.0
      %v3983 = vsel %vm1330, %v3921, 0.0
      %v3984 = vsel %vm1331, %v3922, 0.0
      %v3985 = vsel %vm1332, %v3923, 0.0
      %v3986 = vsel %vm1333, %v3924, 0.0
      %v3987 = vsel %vm1334, %v3925, 0.0
      %v3988 = vsel %vm1335, %v3926, 0.0
      %v3989 = vsel %vm1336, %v3927, 0.0
      %v3990 = vsel %vm1337, %v3928, 0.0
      %v3991 = vsel %vm1338, %v3929, 0.0
      %v3992 = vsel %vm1339, %v3930, 0.0
      %v3993 = vsel %vm1340, %v3931, 0.0
      %v3994 = vsel %vm1341, %v3932, 0.0
      %v3995 = vsel %vm1342, %v3933, 0.0
      %v3996 = vsel %vm1343, %v3934, 0.0
      %v3997 = vsel %vm1344, %v3935, 0.0
      %v3998 = vsel %vm1345, %v3936, 0.0
      %v3999 = vsel %vm1346, %v3937, 0.0
      %v4000 = vsel %vm1347, %v3938, 0.0
      %v4001 = vsel %vm1348, %v3939, 0.0
      %v4002 = vsel %vm1349, %v3940, 0.0
      %v4003 = vsel %vm1350, %v3941, 0.0
      %v4004 = vsel %vm1351, %v3942, 0.0
      %v4005 = vsel %vm1352, %v3943, 0.0
      %v4006 = vsel %vm1353, %v3944, 0.0
      %v4007 = vsel %vm1354, %v3945, 0.0
      %v4008 = vsel %vm1355, %v3946, 0.0
      %v4009 = vsel %vm1356, %v3915, 0.0
      %v4010 = vsel %vm1357, %v3916, 0.0
      %v4011 = vrot.slane %v3947, 7
      %v4012 = vrot.slane %v3948, 7
      %v4013 = vrot.slane %v3949, 7
      %v4014 = vrot.slane %v3950, 7
      %v4015 = vrot.slane %v3951, 7
      %v4016 = vrot.slane %v3952, 7
      %v4017 = vrot.slane %v3953, 7
      %v4018 = vrot.slane %v3954, 7
      %v4019 = vrot.slane %v3955, 7
      %v4020 = vrot.slane %v3956, 7
      %v4021 = vrot.slane %v3957, 7
      %v4022 = vrot.slane %v3958, 7
      %v4023 = vrot.slane %v3959, 7
      %v4024 = vrot.slane %v3960, 7
      %v4025 = vrot.slane %v3961, 7
      %v4026 = vrot.slane %v3962, 7
      %v4027 = vrot.slane %v3963, 7
      %v4028 = vrot.slane %v3964, 7
      %v4029 = vrot.slane %v3965, 7
      %v4030 = vrot.slane %v3966, 7
      %v4031 = vrot.slane %v3967, 7
      %v4032 = vrot.slane %v3968, 7
      %v4033 = vrot.slane %v3969, 7
      %v4034 = vrot.slane %v3970, 7
      %v4035 = vrot.slane %v3971, 7
      %v4036 = vrot.slane %v3972, 7
      %v4037 = vrot.slane %v3973, 7
      %v4038 = vrot.slane %v3974, 7
      %v4039 = vrot.slane %v3975, 7
      %v4040 = vrot.slane %v3976, 7
      %v4041 = vrot.slane %v3977, 7
      %v4042 = vrot.slane %v3978, 7
      %v4043 = vsel %vm1422, %v4041, %v4042
      %v4044 = vsel %vm1422, %v4040, %v4041
      %v4045 = vsel %vm1422, %v4039, %v4040
      %v4046 = vsel %vm1422, %v4038, %v4039
      %v4047 = vsel %vm1422, %v4037, %v4038
      %v4048 = vsel %vm1422, %v4036, %v4037
      %v4049 = vsel %vm1422, %v4035, %v4036
      %v4050 = vsel %vm1422, %v4034, %v4035
      %v4051 = vsel %vm1422, %v4033, %v4034
      %v4052 = vsel %vm1422, %v4032, %v4033
      %v4053 = vsel %vm1422, %v4031, %v4032
      %v4054 = vsel %vm1422, %v4030, %v4031
      %v4055 = vsel %vm1422, %v4029, %v4030
      %v4056 = vsel %vm1422, %v4028, %v4029
      %v4057 = vsel %vm1422, %v4027, %v4028
      %v4058 = vsel %vm1422, %v4026, %v4027
      %v4059 = vsel %vm1422, %v4025, %v4026
      %v4060 = vsel %vm1422, %v4024, %v4025
      %v4061 = vsel %vm1422, %v4023, %v4024
      %v4062 = vsel %vm1422, %v4022, %v4023
      %v4063 = vsel %vm1422, %v4021, %v4022
      %v4064 = vsel %vm1422, %v4020, %v4021
      %v4065 = vsel %vm1422, %v4019, %v4020
      %v4066 = vsel %vm1422, %v4018, %v4019
      %v4067 = vsel %vm1422, %v4017, %v4018
      %v4068 = vsel %vm1422, %v4016, %v4017
      %v4069 = vsel %vm1422, %v4015, %v4016
      %v4070 = vsel %vm1422, %v4014, %v4015
      %v4071 = vsel %vm1422, %v4013, %v4014
      %v4072 = vsel %vm1422, %v4012, %v4013
      %v4073 = vsel %vm1422, %v4011, %v4012
      %v4074 = vsel %vm1422, %v4042, %v4011
      %v4075 = vsel %vm1487, %v4074, 0.0
      %v4076 = vsel %vm1488, %v4073, 0.0
      %v4077 = vsel %vm1489, %v4072, 0.0
      %v4078 = vsel %vm1490, %v4071, 0.0
      %v4079 = vsel %vm1491, %v4070, 0.0
      %v4080 = vsel %vm1492, %v4069, 0.0
      %v4081 = vsel %vm1493, %v4068, 0.0
      %v4082 = vsel %vm1494, %v4067, 0.0
      %v4083 = vsel %vm1495, %v4066, 0.0
      %v4084 = vsel %vm1496, %v4065, 0.0
      %v4085 = vsel %vm1497, %v4064, 0.0
      %v4086 = vsel %vm1498, %v4063, 0.0
      %v4087 = vsel %vm1499, %v4062, 0.0
      %v4088 = vsel %vm1500, %v4061, 0.0
      %v4089 = vsel %vm1501, %v4060, 0.0
      %v4090 = vsel %vm1502, %v4059, 0.0
      %v4091 = vsel %vm1503, %v4058, 0.0
      %v4092 = vsel %vm1504, %v4057, 0.0
      %v4093 = vsel %vm1505, %v4056, 0.0
      %v4094 = vsel %vm1506, %v4055, 0.0
      %v4095 = vsel %vm1507, %v4054, 0.0
      %v4096 = vsel %vm1508, %v4053, 0.0
      %v4097 = vsel %vm1509, %v4052, 0.0
      %v4098 = vsel %vm1510, %v4051, 0.0
      %v4099 = vsel %vm1511, %v4050, 0.0
      %v4100 = vsel %vm1512, %v4049, 0.0
      %v4101 = vsel %vm1513, %v4048, 0.0
      %v4102 = vsel %vm1514, %v4047, 0.0
      %v4103 = vsel %vm1515, %v4046, 0.0
      %v4104 = vsel %vm1516, %v4045, 0.0
      %v4105 = vsel %vm1517, %v4044, 0.0
      %v4106 = vsel %vm1518, %v4043, 0.0
      %v4107 = vrot.slane %v3947, 1
      %v4108 = vrot.slane %v3948, 1
      %v4109 = vrot.slane %v3949, 1
      %v4110 = vrot.slane %v3950, 1
      %v4111 = vrot.slane %v3951, 1
      %v4112 = vrot.slane %v3952, 1
      %v4113 = vrot.slane %v3953, 1
      %v4114 = vrot.slane %v3954, 1
      %v4115 = vrot.slane %v3955, 1
      %v4116 = vrot.slane %v3956, 1
      %v4117 = vrot.slane %v3957, 1
      %v4118 = vrot.slane %v3958, 1
      %v4119 = vrot.slane %v3959, 1
      %v4120 = vrot.slane %v3960, 1
      %v4121 = vrot.slane %v3961, 1
      %v4122 = vrot.slane %v3962, 1
      %v4123 = vrot.slane %v3963, 1
      %v4124 = vrot.slane %v3964, 1
      %v4125 = vrot.slane %v3965, 1
      %v4126 = vrot.slane %v3966, 1
      %v4127 = vrot.slane %v3967, 1
      %v4128 = vrot.slane %v3968, 1
      %v4129 = vrot.slane %v3969, 1
      %v4130 = vrot.slane %v3970, 1
      %v4131 = vrot.slane %v3971, 1
      %v4132 = vrot.slane %v3972, 1
      %v4133 = vrot.slane %v3973, 1
      %v4134 = vrot.slane %v3974, 1
      %v4135 = vrot.slane %v3975, 1
      %v4136 = vrot.slane %v3976, 1
      %v4137 = vrot.slane %v3977, 1
      %v4138 = vrot.slane %v3978, 1
      %v4139 = vsel %vm1583, %v4137, %v4138
      %v4140 = vsel %vm1583, %v4136, %v4137
      %v4141 = vsel %vm1583, %v4135, %v4136
      %v4142 = vsel %vm1583, %v4134, %v4135
      %v4143 = vsel %vm1583, %v4133, %v4134
      %v4144 = vsel %vm1583, %v4132, %v4133
      %v4145 = vsel %vm1583, %v4131, %v4132
      %v4146 = vsel %vm1583, %v4130, %v4131
      %v4147 = vsel %vm1583, %v4129, %v4130
      %v4148 = vsel %vm1583, %v4128, %v4129
      %v4149 = vsel %vm1583, %v4127, %v4128
      %v4150 = vsel %vm1583, %v4126, %v4127
      %v4151 = vsel %vm1583, %v4125, %v4126
      %v4152 = vsel %vm1583, %v4124, %v4125
      %v4153 = vsel %vm1583, %v4123, %v4124
      %v4154 = vsel %vm1583, %v4122, %v4123
      %v4155 = vsel %vm1583, %v4121, %v4122
      %v4156 = vsel %vm1583, %v4120, %v4121
      %v4157 = vsel %vm1583, %v4119, %v4120
      %v4158 = vsel %vm1583, %v4118, %v4119
      %v4159 = vsel %vm1583, %v4117, %v4118
      %v4160 = vsel %vm1583, %v4116, %v4117
      %v4161 = vsel %vm1583, %v4115, %v4116
      %v4162 = vsel %vm1583, %v4114, %v4115
      %v4163 = vsel %vm1583, %v4113, %v4114
      %v4164 = vsel %vm1583, %v4112, %v4113
      %v4165 = vsel %vm1583, %v4111, %v4112
      %v4166 = vsel %vm1583, %v4110, %v4111
      %v4167 = vsel %vm1583, %v4109, %v4110
      %v4168 = vsel %vm1583, %v4108, %v4109
      %v4169 = vsel %vm1583, %v4107, %v4108
      %v4170 = vsel %vm1583, %v4138, %v4107
      %v4171 = vsel %vm1648, %v4169, 0.0
      %v4172 = vsel %vm1649, %v4168, 0.0
      %v4173 = vsel %vm1650, %v4167, 0.0
      %v4174 = vsel %vm1651, %v4166, 0.0
      %v4175 = vsel %vm1652, %v4165, 0.0
      %v4176 = vsel %vm1653, %v4164, 0.0
      %v4177 = vsel %vm1654, %v4163, 0.0
      %v4178 = vsel %vm1655, %v4162, 0.0
      %v4179 = vsel %vm1656, %v4161, 0.0
      %v4180 = vsel %vm1657, %v4160, 0.0
      %v4181 = vsel %vm1658, %v4159, 0.0
      %v4182 = vsel %vm1659, %v4158, 0.0
      %v4183 = vsel %vm1660, %v4157, 0.0
      %v4184 = vsel %vm1661, %v4156, 0.0
      %v4185 = vsel %vm1662, %v4155, 0.0
      %v4186 = vsel %vm1663, %v4154, 0.0
      %v4187 = vsel %vm1664, %v4153, 0.0
      %v4188 = vsel %vm1665, %v4152, 0.0
      %v4189 = vsel %vm1666, %v4151, 0.0
      %v4190 = vsel %vm1667, %v4150, 0.0
      %v4191 = vsel %vm1668, %v4149, 0.0
      %v4192 = vsel %vm1669, %v4148, 0.0
      %v4193 = vsel %vm1670, %v4147, 0.0
      %v4194 = vsel %vm1671, %v4146, 0.0
      %v4195 = vsel %vm1672, %v4145, 0.0
      %v4196 = vsel %vm1673, %v4144, 0.0
      %v4197 = vsel %vm1674, %v4143, 0.0
      %v4198 = vsel %vm1675, %v4142, 0.0
      %v4199 = vsel %vm1676, %v4141, 0.0
      %v4200 = vsel %vm1677, %v4140, 0.0
      %v4201 = vsel %vm1678, %v4139, 0.0
      %v4202 = vsel %vm1679, %v4170, 0.0
      %v4203 = vpack.c.bf16 %v4076, %v4075
      %v4204 = vpack.c.bf16 %v4078, %v4077
      %v4205 = vpack.c.bf16 %v4080, %v4079
      %v4206 = vpack.c.bf16 %v4082, %v4081
      %v4207 = vpack.c.bf16 %v4084, %v4083
      %v4208 = vpack.c.bf16 %v4086, %v4085
      %v4209 = vpack.c.bf16 %v4088, %v4087
      %v4210 = vpack.c.bf16 %v4090, %v4089
      %v4211 = vpack.c.bf16 %v4092, %v4091
      %v4212 = vpack.c.bf16 %v4094, %v4093
      %v4213 = vpack.c.bf16 %v4096, %v4095
      %v4214 = vpack.c.bf16 %v4098, %v4097
      %v4215 = vpack.c.bf16 %v4100, %v4099
      %v4216 = vpack.c.bf16 %v4102, %v4101
      %v4217 = vpack.c.bf16 %v4104, %v4103
      %v4218 = vpack.c.bf16 %v4106, %v4105
      %v4219 = vpack.c.bf16 %v3948, %v3947
      %v4220 = vpack.c.bf16 %v3950, %v3949
      %v4221 = vpack.c.bf16 %v3952, %v3951
      %v4222 = vpack.c.bf16 %v3954, %v3953
      %v4223 = vpack.c.bf16 %v3956, %v3955
      %v4224 = vpack.c.bf16 %v3958, %v3957
      %v4225 = vpack.c.bf16 %v3960, %v3959
      %v4226 = vpack.c.bf16 %v3962, %v3961
      %v4227 = vpack.c.bf16 %v3964, %v3963
      %v4228 = vpack.c.bf16 %v3966, %v3965
      %v4229 = vpack.c.bf16 %v3968, %v3967
      %v4230 = vpack.c.bf16 %v3970, %v3969
      %v4231 = vpack.c.bf16 %v3972, %v3971
      %v4232 = vpack.c.bf16 %v3974, %v3973
      %v4233 = vpack.c.bf16 %v3976, %v3975
      %v4234 = vpack.c.bf16 %v3978, %v3977
      %v4235 = vpack.c.bf16 %v4172, %v4171
      %v4236 = vpack.c.bf16 %v4174, %v4173
      %v4237 = vpack.c.bf16 %v4176, %v4175
      %v4238 = vpack.c.bf16 %v4178, %v4177
      %v4239 = vpack.c.bf16 %v4180, %v4179
      %v4240 = vpack.c.bf16 %v4182, %v4181
      %v4241 = vpack.c.bf16 %v4184, %v4183
      %v4242 = vpack.c.bf16 %v4186, %v4185
      %v4243 = vpack.c.bf16 %v4188, %v4187
      %v4244 = vpack.c.bf16 %v4190, %v4189
      %v4245 = vpack.c.bf16 %v4192, %v4191
      %v4246 = vpack.c.bf16 %v4194, %v4193
      %v4247 = vpack.c.bf16 %v4196, %v4195
      %v4248 = vpack.c.bf16 %v4198, %v4197
      %v4249 = vpack.c.bf16 %v4200, %v4199
      %v4250 = vpack.c.bf16 %v4202, %v4201
      %s4251 = scalar_lea.vmem %s2, 576
      %v4252 = vld [vmem:[%s4251] sm:$0xf]
      %v4253 = vld [vmem:[%s4251 + $0x4] sm:$0xf]
      %v4254 = vld [vmem:[%s4251 + $0x8] sm:$0xf]
      %v4255 = vld [vmem:[%s4251 + $0xc] sm:$0xf]
      %v4256 = vld [vmem:[%s4251 + $0x10] sm:$0xf]
      %v4257 = vld [vmem:[%s4251 + $0x14] sm:$0xf]
      %v4258 = vld [vmem:[%s4251 + $0x18] sm:$0xf]
      %v4259 = vld [vmem:[%s4251 + $0x1c] sm:$0xf]
      %v4260 = vld [vmem:[%s4251 + $0x20] sm:$0xf]
      %v4261 = vld [vmem:[%s4251 + $0x24] sm:$0xf]
      %v4262 = vld [vmem:[%s4251 + $0x28] sm:$0xf]
      %v4263 = vld [vmem:[%s4251 + $0x2c] sm:$0xf]
      %v4264 = vld [vmem:[%s4251 + $0x30] sm:$0xf]
      %v4265 = vld [vmem:[%s4251 + $0x34] sm:$0xf]
      %v4266 = vld [vmem:[%s4251 + $0x38] sm:$0xf]
      %v4267 = vld [vmem:[%s4251 + $0x3c] sm:$0xf]
      %v4268 = vld [vmem:[%s4251 + $0x40] sm:$0xf]
      %v4269 = vld [vmem:[%s4251 + $0x44] sm:$0xf]
      %v4270 = vld [vmem:[%s4251 + $0x48] sm:$0xf]
      %v4271 = vld [vmem:[%s4251 + $0x4c] sm:$0xf]
      %v4272 = vld [vmem:[%s4251 + $0x50] sm:$0xf]
      %v4273 = vld [vmem:[%s4251 + $0x54] sm:$0xf]
      %v4274 = vld [vmem:[%s4251 + $0x58] sm:$0xf]
      %v4275 = vld [vmem:[%s4251 + $0x5c] sm:$0xf]
      %v4276 = vld [vmem:[%s4251 + $0x60] sm:$0xf]
      %v4277 = vld [vmem:[%s4251 + $0x64] sm:$0xf]
      %v4278 = vld [vmem:[%s4251 + $0x68] sm:$0xf]
      %v4279 = vld [vmem:[%s4251 + $0x6c] sm:$0xf]
      %v4280 = vld [vmem:[%s4251 + $0x70] sm:$0xf]
      %v4281 = vld [vmem:[%s4251 + $0x74] sm:$0xf]
      %v4282 = vld [vmem:[%s4251 + $0x78] sm:$0xf]
      %v4283 = vld [vmem:[%s4251 + $0x7c] sm:$0xf]
      %v4284 = vld [vmem:[%s4251 + $0x80] sm:$0xf]
      %v4285 = vld [vmem:[%s4251 + $0x84] sm:$0xf]
      %v4286 = vld [vmem:[%s4251 + $0x88] sm:$0xf]
      %v4287 = vld [vmem:[%s4251 + $0x8c] sm:$0xf]
      %v4288 = vld [vmem:[%s4251 + $0x90] sm:$0xf]
      %v4289 = vld [vmem:[%s4251 + $0x94] sm:$0xf]
      %v4290 = vld [vmem:[%s4251 + $0x98] sm:$0xf]
      %v4291 = vld [vmem:[%s4251 + $0x9c] sm:$0xf]
      %v4292 = vld [vmem:[%s4251 + $0xa0] sm:$0xf]
      %v4293 = vld [vmem:[%s4251 + $0xa4] sm:$0xf]
      %v4294 = vld [vmem:[%s4251 + $0xa8] sm:$0xf]
      %v4295 = vld [vmem:[%s4251 + $0xac] sm:$0xf]
      %v4296 = vld [vmem:[%s4251 + $0xb0] sm:$0xf]
      %v4297 = vld [vmem:[%s4251 + $0xb4] sm:$0xf]
      %v4298 = vld [vmem:[%s4251 + $0xb8] sm:$0xf]
      %v4299 = vld [vmem:[%s4251 + $0xbc] sm:$0xf]
      %v4300 = vrot.slane %v3915, 7
      %v4301 = vrot.slane %v3916, 7
      %v4302 = vrot.slane %v3917, 7
      %v4303 = vrot.slane %v3918, 7
      %v4304 = vrot.slane %v3919, 7
      %v4305 = vrot.slane %v3920, 7
      %v4306 = vrot.slane %v3921, 7
      %v4307 = vrot.slane %v3922, 7
      %v4308 = vrot.slane %v3923, 7
      %v4309 = vrot.slane %v3924, 7
      %v4310 = vrot.slane %v3925, 7
      %v4311 = vrot.slane %v3926, 7
      %v4312 = vrot.slane %v3927, 7
      %v4313 = vrot.slane %v3928, 7
      %v4314 = vrot.slane %v3929, 7
      %v4315 = vrot.slane %v3930, 7
      %v4316 = vrot.slane %v3931, 7
      %v4317 = vrot.slane %v3932, 7
      %v4318 = vrot.slane %v3933, 7
      %v4319 = vrot.slane %v3934, 7
      %v4320 = vrot.slane %v3935, 7
      %v4321 = vrot.slane %v3936, 7
      %v4322 = vrot.slane %v3937, 7
      %v4323 = vrot.slane %v3938, 7
      %v4324 = vrot.slane %v3939, 7
      %v4325 = vrot.slane %v3940, 7
      %v4326 = vrot.slane %v3941, 7
      %v4327 = vrot.slane %v3942, 7
      %v4328 = vrot.slane %v3943, 7
      %v4329 = vrot.slane %v3944, 7
      %v4330 = vrot.slane %v3945, 7
      %v4331 = vrot.slane %v3946, 7
      %v4332 = vsel %vm1422, %v4330, %v4331
      %v4333 = vsel %vm1422, %v4329, %v4330
      %v4334 = vsel %vm1422, %v4328, %v4329
      %v4335 = vsel %vm1422, %v4327, %v4328
      %v4336 = vsel %vm1422, %v4326, %v4327
      %v4337 = vsel %vm1422, %v4325, %v4326
      %v4338 = vsel %vm1422, %v4324, %v4325
      %v4339 = vsel %vm1422, %v4323, %v4324
      %v4340 = vsel %vm1422, %v4322, %v4323
      %v4341 = vsel %vm1422, %v4321, %v4322
      %v4342 = vsel %vm1422, %v4320, %v4321
      %v4343 = vsel %vm1422, %v4319, %v4320
      %v4344 = vsel %vm1422, %v4318, %v4319
      %v4345 = vsel %vm1422, %v4317, %v4318
      %v4346 = vsel %vm1422, %v4316, %v4317
      %v4347 = vsel %vm1422, %v4315, %v4316
      %v4348 = vsel %vm1422, %v4314, %v4315
      %v4349 = vsel %vm1422, %v4313, %v4314
      %v4350 = vsel %vm1422, %v4312, %v4313
      %v4351 = vsel %vm1422, %v4311, %v4312
      %v4352 = vsel %vm1422, %v4310, %v4311
      %v4353 = vsel %vm1422, %v4309, %v4310
      %v4354 = vsel %vm1422, %v4308, %v4309
      %v4355 = vsel %vm1422, %v4307, %v4308
      %v4356 = vsel %vm1422, %v4306, %v4307
      %v4357 = vsel %vm1422, %v4305, %v4306
      %v4358 = vsel %vm1422, %v4304, %v4305
      %v4359 = vsel %vm1422, %v4303, %v4304
      %v4360 = vsel %vm1422, %v4302, %v4303
      %v4361 = vsel %vm1422, %v4301, %v4302
      %v4362 = vsel %vm1422, %v4300, %v4301
      %v4363 = vsel %vm1422, %v4331, %v4300
      %v4364 = vsel %vm1487, %v4363, 0.0
      %v4365 = vsel %vm1488, %v4362, 0.0
      %v4366 = vsel %vm1489, %v4361, 0.0
      %v4367 = vsel %vm1490, %v4360, 0.0
      %v4368 = vsel %vm1491, %v4359, 0.0
      %v4369 = vsel %vm1492, %v4358, 0.0
      %v4370 = vsel %vm1493, %v4357, 0.0
      %v4371 = vsel %vm1494, %v4356, 0.0
      %v4372 = vsel %vm1495, %v4355, 0.0
      %v4373 = vsel %vm1496, %v4354, 0.0
      %v4374 = vsel %vm1497, %v4353, 0.0
      %v4375 = vsel %vm1498, %v4352, 0.0
      %v4376 = vsel %vm1499, %v4351, 0.0
      %v4377 = vsel %vm1500, %v4350, 0.0
      %v4378 = vsel %vm1501, %v4349, 0.0
      %v4379 = vsel %vm1502, %v4348, 0.0
      %v4380 = vsel %vm1503, %v4347, 0.0
      %v4381 = vsel %vm1504, %v4346, 0.0
      %v4382 = vsel %vm1505, %v4345, 0.0
      %v4383 = vsel %vm1506, %v4344, 0.0
      %v4384 = vsel %vm1507, %v4343, 0.0
      %v4385 = vsel %vm1508, %v4342, 0.0
      %v4386 = vsel %vm1509, %v4341, 0.0
      %v4387 = vsel %vm1510, %v4340, 0.0
      %v4388 = vsel %vm1511, %v4339, 0.0
      %v4389 = vsel %vm1512, %v4338, 0.0
      %v4390 = vsel %vm1513, %v4337, 0.0
      %v4391 = vsel %vm1514, %v4336, 0.0
      %v4392 = vsel %vm1515, %v4335, 0.0
      %v4393 = vsel %vm1516, %v4334, 0.0
      %v4394 = vsel %vm1517, %v4333, 0.0
      %v4395 = vsel %vm1518, %v4332, 0.0
      %v4396 = vrot.slane %v3915, 1
      %v4397 = vrot.slane %v3916, 1
      %v4398 = vrot.slane %v3917, 1
      %v4399 = vrot.slane %v3918, 1
      %v4400 = vrot.slane %v3919, 1
      %v4401 = vrot.slane %v3920, 1
      %v4402 = vrot.slane %v3921, 1
      %v4403 = vrot.slane %v3922, 1
      %v4404 = vrot.slane %v3923, 1
      %v4405 = vrot.slane %v3924, 1
      %v4406 = vrot.slane %v3925, 1
      %v4407 = vrot.slane %v3926, 1
      %v4408 = vrot.slane %v3927, 1
      %v4409 = vrot.slane %v3928, 1
      %v4410 = vrot.slane %v3929, 1
      %v4411 = vrot.slane %v3930, 1
      %v4412 = vrot.slane %v3931, 1
      %v4413 = vrot.slane %v3932, 1
      %v4414 = vrot.slane %v3933, 1
      %v4415 = vrot.slane %v3934, 1
      %v4416 = vrot.slane %v3935, 1
      %v4417 = vrot.slane %v3936, 1
      %v4418 = vrot.slane %v3937, 1
      %v4419 = vrot.slane %v3938, 1
      %v4420 = vrot.slane %v3939, 1
      %v4421 = vrot.slane %v3940, 1
      %v4422 = vrot.slane %v3941, 1
      %v4423 = vrot.slane %v3942, 1
      %v4424 = vrot.slane %v3943, 1
      %v4425 = vrot.slane %v3944, 1
      %v4426 = vrot.slane %v3945, 1
      %v4427 = vrot.slane %v3946, 1
      %v4428 = vsel %vm1583, %v4426, %v4427
      %v4429 = vsel %vm1583, %v4425, %v4426
      %v4430 = vsel %vm1583, %v4424, %v4425
      %v4431 = vsel %vm1583, %v4423, %v4424
      %v4432 = vsel %vm1583, %v4422, %v4423
      %v4433 = vsel %vm1583, %v4421, %v4422
      %v4434 = vsel %vm1583, %v4420, %v4421
      %v4435 = vsel %vm1583, %v4419, %v4420
      %v4436 = vsel %vm1583, %v4418, %v4419
      %v4437 = vsel %vm1583, %v4417, %v4418
      %v4438 = vsel %vm1583, %v4416, %v4417
      %v4439 = vsel %vm1583, %v4415, %v4416
      %v4440 = vsel %vm1583, %v4414, %v4415
      %v4441 = vsel %vm1583, %v4413, %v4414
      %v4442 = vsel %vm1583, %v4412, %v4413
      %v4443 = vsel %vm1583, %v4411, %v4412
      %v4444 = vsel %vm1583, %v4410, %v4411
      %v4445 = vsel %vm1583, %v4409, %v4410
      %v4446 = vsel %vm1583, %v4408, %v4409
      %v4447 = vsel %vm1583, %v4407, %v4408
      %v4448 = vsel %vm1583, %v4406, %v4407
      %v4449 = vsel %vm1583, %v4405, %v4406
      %v4450 = vsel %vm1583, %v4404, %v4405
      %v4451 = vsel %vm1583, %v4403, %v4404
      %v4452 = vsel %vm1583, %v4402, %v4403
      %v4453 = vsel %vm1583, %v4401, %v4402
      %v4454 = vsel %vm1583, %v4400, %v4401
      %v4455 = vsel %vm1583, %v4399, %v4400
      %v4456 = vsel %vm1583, %v4398, %v4399
      %v4457 = vsel %vm1583, %v4397, %v4398
      %v4458 = vsel %vm1583, %v4396, %v4397
      %v4459 = vsel %vm1583, %v4427, %v4396
      %v4460 = vsel %vm1648, %v4458, 0.0
      %v4461 = vsel %vm1649, %v4457, 0.0
      %v4462 = vsel %vm1650, %v4456, 0.0
      %v4463 = vsel %vm1651, %v4455, 0.0
      %v4464 = vsel %vm1652, %v4454, 0.0
      %v4465 = vsel %vm1653, %v4453, 0.0
      %v4466 = vsel %vm1654, %v4452, 0.0
      %v4467 = vsel %vm1655, %v4451, 0.0
      %v4468 = vsel %vm1656, %v4450, 0.0
      %v4469 = vsel %vm1657, %v4449, 0.0
      %v4470 = vsel %vm1658, %v4448, 0.0
      %v4471 = vsel %vm1659, %v4447, 0.0
      %v4472 = vsel %vm1660, %v4446, 0.0
      %v4473 = vsel %vm1661, %v4445, 0.0
      %v4474 = vsel %vm1662, %v4444, 0.0
      %v4475 = vsel %vm1663, %v4443, 0.0
      %v4476 = vsel %vm1664, %v4442, 0.0
      %v4477 = vsel %vm1665, %v4441, 0.0
      %v4478 = vsel %vm1666, %v4440, 0.0
      %v4479 = vsel %vm1667, %v4439, 0.0
      %v4480 = vsel %vm1668, %v4438, 0.0
      %v4481 = vsel %vm1669, %v4437, 0.0
      %v4482 = vsel %vm1670, %v4436, 0.0
      %v4483 = vsel %vm1671, %v4435, 0.0
      %v4484 = vsel %vm1672, %v4434, 0.0
      %v4485 = vsel %vm1673, %v4433, 0.0
      %v4486 = vsel %vm1674, %v4432, 0.0
      %v4487 = vsel %vm1675, %v4431, 0.0
      %v4488 = vsel %vm1676, %v4430, 0.0
      %v4489 = vsel %vm1677, %v4429, 0.0
      %v4490 = vsel %vm1678, %v4428, 0.0
      %v4491 = vsel %vm1679, %v4459, 0.0
      %v4492 = vpack.c.bf16 %v4365, %v4364
      %v4493 = vpack.c.bf16 %v4367, %v4366
      %v4494 = vpack.c.bf16 %v4369, %v4368
      %v4495 = vpack.c.bf16 %v4371, %v4370
      %v4496 = vpack.c.bf16 %v4373, %v4372
      %v4497 = vpack.c.bf16 %v4375, %v4374
      %v4498 = vpack.c.bf16 %v4377, %v4376
      %v4499 = vpack.c.bf16 %v4379, %v4378
      %v4500 = vpack.c.bf16 %v4381, %v4380
      %v4501 = vpack.c.bf16 %v4383, %v4382
      %v4502 = vpack.c.bf16 %v4385, %v4384
      %v4503 = vpack.c.bf16 %v4387, %v4386
      %v4504 = vpack.c.bf16 %v4389, %v4388
      %v4505 = vpack.c.bf16 %v4391, %v4390
      %v4506 = vpack.c.bf16 %v4393, %v4392
      %v4507 = vpack.c.bf16 %v4395, %v4394
      %v4508 = vpack.c.bf16 %v3916, %v3915
      %v4509 = vpack.c.bf16 %v3918, %v3917
      %v4510 = vpack.c.bf16 %v3920, %v3919
      %v4511 = vpack.c.bf16 %v3922, %v3921
      %v4512 = vpack.c.bf16 %v3924, %v3923
      %v4513 = vpack.c.bf16 %v3926, %v3925
      %v4514 = vpack.c.bf16 %v3928, %v3927
      %v4515 = vpack.c.bf16 %v3930, %v3929
      %v4516 = vpack.c.bf16 %v3932, %v3931
      %v4517 = vpack.c.bf16 %v3934, %v3933
      %v4518 = vpack.c.bf16 %v3936, %v3935
      %v4519 = vpack.c.bf16 %v3938, %v3937
      %v4520 = vpack.c.bf16 %v3940, %v3939
      %v4521 = vpack.c.bf16 %v3942, %v3941
      %v4522 = vpack.c.bf16 %v3944, %v3943
      %v4523 = vpack.c.bf16 %v3946, %v3945
      %v4524 = vpack.c.bf16 %v4461, %v4460
      %v4525 = vpack.c.bf16 %v4463, %v4462
      %v4526 = vpack.c.bf16 %v4465, %v4464
      %v4527 = vpack.c.bf16 %v4467, %v4466
      %v4528 = vpack.c.bf16 %v4469, %v4468
      %v4529 = vpack.c.bf16 %v4471, %v4470
      %v4530 = vpack.c.bf16 %v4473, %v4472
      %v4531 = vpack.c.bf16 %v4475, %v4474
      %v4532 = vpack.c.bf16 %v4477, %v4476
      %v4533 = vpack.c.bf16 %v4479, %v4478
      %v4534 = vpack.c.bf16 %v4481, %v4480
      %v4535 = vpack.c.bf16 %v4483, %v4482
      %v4536 = vpack.c.bf16 %v4485, %v4484
      %v4537 = vpack.c.bf16 %v4487, %v4486
      %v4538 = vpack.c.bf16 %v4489, %v4488
      %v4539 = vpack.c.bf16 %v4491, %v4490
      %v4540 = vld [vmem:[%s4251 + $0xc0] sm:$0xf]
      %v4541 = vld [vmem:[%s4251 + $0xc4] sm:$0xf]
      %v4542 = vld [vmem:[%s4251 + $0xc8] sm:$0xf]
      %v4543 = vld [vmem:[%s4251 + $0xcc] sm:$0xf]
      %v4544 = vld [vmem:[%s4251 + $0xd0] sm:$0xf]
      %v4545 = vld [vmem:[%s4251 + $0xd4] sm:$0xf]
      %v4546 = vld [vmem:[%s4251 + $0xd8] sm:$0xf]
      %v4547 = vld [vmem:[%s4251 + $0xdc] sm:$0xf]
      %v4548 = vld [vmem:[%s4251 + $0xe0] sm:$0xf]
      %v4549 = vld [vmem:[%s4251 + $0xe4] sm:$0xf]
      %v4550 = vld [vmem:[%s4251 + $0xe8] sm:$0xf]
      %v4551 = vld [vmem:[%s4251 + $0xec] sm:$0xf]
      %v4552 = vld [vmem:[%s4251 + $0xf0] sm:$0xf]
      %v4553 = vld [vmem:[%s4251 + $0xf4] sm:$0xf]
      %v4554 = vld [vmem:[%s4251 + $0xf8] sm:$0xf]
      %v4555 = vld [vmem:[%s4251 + $0xfc] sm:$0xf]
      %v4556 = vld [vmem:[%s4251 + $0x100] sm:$0xf]
      %v4557 = vld [vmem:[%s4251 + $0x104] sm:$0xf]
      %v4558 = vld [vmem:[%s4251 + $0x108] sm:$0xf]
      %v4559 = vld [vmem:[%s4251 + $0x10c] sm:$0xf]
      %v4560 = vld [vmem:[%s4251 + $0x110] sm:$0xf]
      %v4561 = vld [vmem:[%s4251 + $0x114] sm:$0xf]
      %v4562 = vld [vmem:[%s4251 + $0x118] sm:$0xf]
      %v4563 = vld [vmem:[%s4251 + $0x11c] sm:$0xf]
      %v4564 = vld [vmem:[%s4251 + $0x120] sm:$0xf]
      %v4565 = vld [vmem:[%s4251 + $0x124] sm:$0xf]
      %v4566 = vld [vmem:[%s4251 + $0x128] sm:$0xf]
      %v4567 = vld [vmem:[%s4251 + $0x12c] sm:$0xf]
      %v4568 = vld [vmem:[%s4251 + $0x130] sm:$0xf]
      %v4569 = vld [vmem:[%s4251 + $0x134] sm:$0xf]
      %v4570 = vld [vmem:[%s4251 + $0x138] sm:$0xf]
      %v4571 = vld [vmem:[%s4251 + $0x13c] sm:$0xf]
      %v4572 = vld [vmem:[%s4251 + $0x140] sm:$0xf]
      %v4573 = vld [vmem:[%s4251 + $0x144] sm:$0xf]
      %v4574 = vld [vmem:[%s4251 + $0x148] sm:$0xf]
      %v4575 = vld [vmem:[%s4251 + $0x14c] sm:$0xf]
      %v4576 = vld [vmem:[%s4251 + $0x150] sm:$0xf]
      %v4577 = vld [vmem:[%s4251 + $0x154] sm:$0xf]
      %v4578 = vld [vmem:[%s4251 + $0x158] sm:$0xf]
      %v4579 = vld [vmem:[%s4251 + $0x15c] sm:$0xf]
      %v4580 = vld [vmem:[%s4251 + $0x160] sm:$0xf]
      %v4581 = vld [vmem:[%s4251 + $0x164] sm:$0xf]
      %v4582 = vld [vmem:[%s4251 + $0x168] sm:$0xf]
      %v4583 = vld [vmem:[%s4251 + $0x16c] sm:$0xf]
      %v4584 = vld [vmem:[%s4251 + $0x170] sm:$0xf]
      %v4585 = vld [vmem:[%s4251 + $0x174] sm:$0xf]
      %v4586 = vld [vmem:[%s4251 + $0x178] sm:$0xf]
      %v4587 = vld [vmem:[%s4251 + $0x17c] sm:$0xf]
      %v4636 = vunpack.c.l.b16 %v4540
      %v4637 = vunpack.c.l.b16 %v4541
      %v4638 = vunpack.c.l.b16 %v4542
      %v4639 = vunpack.c.l.b16 %v4543
      %v4640 = vunpack.c.l.b16 %v4544
      %v4641 = vunpack.c.l.b16 %v4545
      %v4642 = vunpack.c.l.b16 %v4546
      %v4643 = vunpack.c.l.b16 %v4547
      %v4644 = vunpack.c.l.b16 %v4548
      %v4645 = vunpack.c.l.b16 %v4549
      %v4646 = vunpack.c.l.b16 %v4550
      %v4647 = vunpack.c.l.b16 %v4551
      %v4648 = vunpack.c.l.b16 %v4552
      %v4649 = vunpack.c.l.b16 %v4553
      %v4650 = vunpack.c.l.b16 %v4554
      %v4651 = vunpack.c.l.b16 %v4555
      %v4652 = vunpack.c.l.b16 %v4556
      %v4653 = vunpack.c.l.b16 %v4557
      %v4654 = vunpack.c.l.b16 %v4558
      %v4655 = vunpack.c.l.b16 %v4559
      %v4656 = vunpack.c.l.b16 %v4560
      %v4657 = vunpack.c.l.b16 %v4561
      %v4658 = vunpack.c.l.b16 %v4562
      %v4659 = vunpack.c.l.b16 %v4563
      %v4660 = vunpack.c.l.b16 %v4564
      %v4661 = vunpack.c.l.b16 %v4565
      %v4662 = vunpack.c.l.b16 %v4566
      %v4663 = vunpack.c.l.b16 %v4567
      %v4664 = vunpack.c.l.b16 %v4568
      %v4665 = vunpack.c.l.b16 %v4569
      %v4666 = vunpack.c.l.b16 %v4570
      %v4667 = vunpack.c.l.b16 %v4571
      %v4668 = vunpack.c.l.b16 %v4572
      %v4669 = vunpack.c.l.b16 %v4573
      %v4670 = vunpack.c.l.b16 %v4574
      %v4671 = vunpack.c.l.b16 %v4575
      %v4672 = vunpack.c.l.b16 %v4576
      %v4673 = vunpack.c.l.b16 %v4577
      %v4674 = vunpack.c.l.b16 %v4578
      %v4675 = vunpack.c.l.b16 %v4579
      %v4676 = vunpack.c.l.b16 %v4580
      %v4677 = vunpack.c.l.b16 %v4581
      %v4678 = vunpack.c.l.b16 %v4582
      %v4679 = vunpack.c.l.b16 %v4583
      %v4680 = vunpack.c.l.b16 %v4584
      %v4681 = vunpack.c.l.b16 %v4585
      %v4682 = vunpack.c.l.b16 %v4586
      %v4683 = vunpack.c.l.b16 %v4587
      %v4684 = vpack.c.b16 %v4637, %v4636
      %v4685 = vpack.c.b16 %v4639, %v4638
      %v4686 = vpack.c.b16 %v4641, %v4640
      %v4687 = vpack.c.b16 %v4643, %v4642
      %v4688 = vpack.c.b16 %v4645, %v4644
      %v4689 = vpack.c.b16 %v4647, %v4646
      %v4690 = vpack.c.b16 %v4649, %v4648
      %v4691 = vpack.c.b16 %v4651, %v4650
      %v4692 = vpack.c.b16 %v4653, %v4652
      %v4693 = vpack.c.b16 %v4655, %v4654
      %v4694 = vpack.c.b16 %v4657, %v4656
      %v4695 = vpack.c.b16 %v4659, %v4658
      %v4696 = vpack.c.b16 %v4661, %v4660
      %v4697 = vpack.c.b16 %v4663, %v4662
      %v4698 = vpack.c.b16 %v4665, %v4664
      %v4699 = vpack.c.b16 %v4667, %v4666
      %v4700 = vpack.c.b16 %v4669, %v4668
      %v4701 = vpack.c.b16 %v4671, %v4670
      %v4702 = vpack.c.b16 %v4673, %v4672
      %v4703 = vpack.c.b16 %v4675, %v4674
      %v4704 = vpack.c.b16 %v4677, %v4676
      %v4705 = vpack.c.b16 %v4679, %v4678
      %v4706 = vpack.c.b16 %v4681, %v4680
      %v4707 = vpack.c.b16 %v4683, %v4682
      %4732 = vmatprep.subr.bf16.mxu0 0
      %4733 = vmatpush1.bf16.msra.mxu0 %v4684
      %4734 = vmatprep.subr.bf16.mxu0 0
      %4735 = vmatpush1.bf16.msra.mxu0 %v4685
      %4736 = vmatprep.subr.bf16.mxu0 0
      %4737 = vmatpush1.bf16.msra.mxu0 %v4686
      %4738 = vmatprep.subr.bf16.mxu0 0
      %4739 = vmatpush1.bf16.msra.mxu0 %v4687
      %4740 = vmatprep.subr.bf16.mxu0 0
      %4741 = vmatpush1.bf16.msra.mxu0 %v4688
      %4742 = vmatprep.subr.bf16.mxu0 0
      %4743 = vmatpush1.bf16.msra.mxu0 %v4689
      %4744 = vmatprep.subr.bf16.mxu0 0
      %4745 = vmatpush1.bf16.msra.mxu0 %v4690
      %4746 = vmatprep.subr.bf16.mxu0 0
      %4747 = vmatpush1.bf16.msra.mxu0 %v4691
      %4748 = vmatprep.subr.bf16.mxu0 0
      %4749 = vmatpush1.bf16.msra.mxu0 %v4692
      %4750 = vmatprep.subr.bf16.mxu0 0
      %4751 = vmatpush1.bf16.msra.mxu0 %v4693
      %4752 = vmatprep.subr.bf16.mxu0 0
      %4753 = vmatpush1.bf16.msra.mxu0 %v4694
      %4754 = vmatprep.subr.bf16.mxu0 0
      %4755 = vmatpush1.bf16.msra.mxu0 %v4695
      %4756 = vmatprep.subr.bf16.mxu0 0
      %4757 = vmatpush1.bf16.msra.mxu0 %v4696
      %4758 = vmatprep.subr.bf16.mxu0 0
      %4759 = vmatpush1.bf16.msra.mxu0 %v4697
      %4760 = vmatprep.subr.bf16.mxu0 0
      %4761 = vmatpush1.bf16.msra.mxu0 %v4698
      %4762 = vmatprep.subr.bf16.mxu0 0
      %4763 = vmatpush1.bf16.msra.mxu0 %v4699
      %4764 = vmatprep.mubr.bf16.mxu0 %v4508
      %4765 = vmatmul.mubr.bf16.gmra.mrb[0].mxu0 %v4492
      %v4766 = vpop.f32.mrb[0].mxu0
      %v4767 = vadd.f32 0.0, %v4766
      %v4768 = vpop.f32.mrb[0].mxu0
      %v4769 = vpop.f32.mrb[0].mxu0
      %v4770 = vadd.f32 0.0, %v4769
      %v4771 = vpop.f32.mrb[0].mxu0
      %4772 = vmatprep.mubr.bf16.mxu0 %v4509
      %4773 = vmatmul.mubr.bf16.gmra.mrb[0].mxu0 %v4493
      %v4774 = vpop.f32.mrb[0].mxu0
      %v4775 = vadd.f32 0.0, %v4774
      %v4776 = vpop.f32.mrb[0].mxu0
      %v4777 = vpop.f32.mrb[0].mxu0
      %v4778 = vadd.f32 0.0, %v4777
      %v4779 = vpop.f32.mrb[0].mxu0
      %4780 = vmatprep.mubr.bf16.mxu0 %v4510
      %4781 = vmatmul.mubr.bf16.gmra.mrb[0].mxu0 %v4494
      %v4782 = vpop.f32.mrb[0].mxu0
      %v4783 = vadd.f32 0.0, %v4782
      %v4784 = vpop.f32.mrb[0].mxu0
      %v4785 = vpop.f32.mrb[0].mxu0
      %v4786 = vadd.f32 0.0, %v4785
      %v4787 = vpop.f32.mrb[0].mxu0
      %4788 = vmatprep.mubr.bf16.mxu0 %v4511
      %4789 = vmatmul.mubr.bf16.gmra.mrb[0].mxu0 %v4495
      %v4790 = vpop.f32.mrb[0].mxu0
      %v4791 = vadd.f32 0.0, %v4790
      %v4792 = vpop.f32.mrb[0].mxu0
      %v4793 = vpop.f32.mrb[0].mxu0
      %v4794 = vadd.f32 0.0, %v4793
      %v4795 = vpop.f32.mrb[0].mxu0
      %4796 = vmatprep.mubr.bf16.mxu0 %v4512
      %4797 = vmatmul.mubr.bf16.gmra.mrb[0].mxu0 %v4496
      %v4798 = vpop.f32.mrb[0].mxu0
      %v4799 = vadd.f32 0.0, %v4798
      %v4800 = vpop.f32.mrb[0].mxu0
      %v4801 = vpop.f32.mrb[0].mxu0
      %v4802 = vadd.f32 0.0, %v4801
      %v4803 = vpop.f32.mrb[0].mxu0
      %4804 = vmatprep.mubr.bf16.mxu0 %v4513
      %4805 = vmatmul.mubr.bf16.gmra.mrb[0].mxu0 %v4497
      %v4806 = vpop.f32.mrb[0].mxu0
      %v4807 = vadd.f32 0.0, %v4806
      %v4808 = vpop.f32.mrb[0].mxu0
      %v4809 = vpop.f32.mrb[0].mxu0
      %v4810 = vadd.f32 0.0, %v4809
      %v4811 = vpop.f32.mrb[0].mxu0
      %4812 = vmatprep.mubr.bf16.mxu0 %v4514
      %4813 = vmatmul.mubr.bf16.gmra.mrb[0].mxu0 %v4498
      %v4814 = vpop.f32.mrb[0].mxu0
      %v4815 = vadd.f32 0.0, %v4814
      %v4816 = vpop.f32.mrb[0].mxu0
      %v4817 = vpop.f32.mrb[0].mxu0
      %v4818 = vadd.f32 0.0, %v4817
      %v4819 = vpop.f32.mrb[0].mxu0
      %4820 = vmatprep.mubr.bf16.mxu0 %v4515
      %4821 = vmatmul.mubr.bf16.gmra.mrb[0].mxu0 %v4499
      %v4822 = vpop.f32.mrb[0].mxu0
      %v4823 = vadd.f32 0.0, %v4822
      %v4824 = vpop.f32.mrb[0].mxu0
      %v4825 = vpop.f32.mrb[0].mxu0
      %v4826 = vadd.f32 0.0, %v4825
      %v4827 = vpop.f32.mrb[0].mxu0
      %4828 = vmatprep.mubr.bf16.mxu0 %v4516
      %4829 = vmatmul.mubr.bf16.gmra.mrb[0].mxu0 %v4500
      %v4830 = vpop.f32.mrb[0].mxu0
      %v4831 = vadd.f32 0.0, %v4830
      %v4832 = vpop.f32.mrb[0].mxu0
      %v4833 = vpop.f32.mrb[0].mxu0
      %v4834 = vadd.f32 0.0, %v4833
      %v4835 = vpop.f32.mrb[0].mxu0
      %4836 = vmatprep.mubr.bf16.mxu0 %v4517
      %4837 = vmatmul.mubr.bf16.gmra.mrb[0].mxu0 %v4501
      %v4838 = vpop.f32.mrb[0].mxu0
      %v4839 = vadd.f32 0.0, %v4838
      %v4840 = vpop.f32.mrb[0].mxu0
      %v4841 = vpop.f32.mrb[0].mxu0
      %v4842 = vadd.f32 0.0, %v4841
      %v4843 = vpop.f32.mrb[0].mxu0
      %4844 = vmatprep.mubr.bf16.mxu0 %v4518
      %4845 = vmatmul.mubr.bf16.gmra.mrb[0].mxu0 %v4502
      %v4846 = vpop.f32.mrb[0].mxu0
      %v4847 = vadd.f32 0.0, %v4846
      %v4848 = vpop.f32.mrb[0].mxu0
      %v4849 = vpop.f32.mrb[0].mxu0
      %v4850 = vadd.f32 0.0, %v4849
      %v4851 = vpop.f32.mrb[0].mxu0
      %4852 = vmatprep.mubr.bf16.mxu0 %v4519
      %4853 = vmatmul.mubr.bf16.gmra.mrb[0].mxu0 %v4503
      %v4854 = vpop.f32.mrb[0].mxu0
      %v4855 = vadd.f32 0.0, %v4854
      %v4856 = vpop.f32.mrb[0].mxu0
      %v4857 = vpop.f32.mrb[0].mxu0
      %v4858 = vadd.f32 0.0, %v4857
      %v4859 = vpop.f32.mrb[0].mxu0
      %4860 = vmatprep.mubr.bf16.mxu0 %v4520
      %4861 = vmatmul.mubr.bf16.gmra.mrb[0].mxu0 %v4504
      %v4862 = vpop.f32.mrb[0].mxu0
      %v4863 = vadd.f32 0.0, %v4862
      %v4864 = vpop.f32.mrb[0].mxu0
      %v4865 = vpop.f32.mrb[0].mxu0
      %v4866 = vadd.f32 0.0, %v4865
      %v4867 = vpop.f32.mrb[0].mxu0
      %4868 = vmatprep.mubr.bf16.mxu0 %v4521
      %4869 = vmatmul.mubr.bf16.gmra.mrb[0].mxu0 %v4505
      %v4870 = vpop.f32.mrb[0].mxu0
      %v4871 = vadd.f32 0.0, %v4870
      %v4872 = vpop.f32.mrb[0].mxu0
      %v4873 = vpop.f32.mrb[0].mxu0
      %v4874 = vadd.f32 0.0, %v4873
      %v4875 = vpop.f32.mrb[0].mxu0
      %4876 = vmatprep.mubr.bf16.mxu0 %v4522
      %4877 = vmatmul.mubr.bf16.gmra.mrb[0].mxu0 %v4506
      %v4878 = vpop.f32.mrb[0].mxu0
      %v4879 = vadd.f32 0.0, %v4878
      %v4880 = vpop.f32.mrb[0].mxu0
      %v4881 = vpop.f32.mrb[0].mxu0
      %v4882 = vadd.f32 0.0, %v4881
      %v4883 = vpop.f32.mrb[0].mxu0
      %4884 = vmatprep.mubr.bf16.mxu0 %v4523
      %4885 = vmatmul.mubr.bf16.gmra.mrb[0].mxu0 %v4507
      %v4886 = vpop.f32.mrb[0].mxu0
      %v4887 = vadd.f32 0.0, %v4886
      %v4888 = vpop.f32.mrb[0].mxu0
      %v4889 = vpop.f32.mrb[0].mxu0
      %v4890 = vadd.f32 0.0, %v4889
      %v4891 = vpop.f32.mrb[0].mxu0
      %4892 = vdwg.mxu0
      %4893 = vmatprep.subr.bf16.mxu0 0
      %4894 = vmatpush1.bf16.msra.mxu0 %v4700
      %4895 = vmatprep.subr.bf16.mxu0 0
      %4896 = vmatpush1.bf16.msra.mxu0 %v4701
      %4897 = vmatprep.subr.bf16.mxu0 0
      %4898 = vmatpush1.bf16.msra.mxu0 %v4702
      %4899 = vmatprep.subr.bf16.mxu0 0
      %4900 = vmatpush1.bf16.msra.mxu0 %v4703
      %4901 = vmatprep.subr.bf16.mxu0 0
      %4902 = vmatpush1.bf16.msra.mxu0 %v4704
      %4903 = vmatprep.subr.bf16.mxu0 0
      %4904 = vmatpush1.bf16.msra.mxu0 %v4705
      %4905 = vmatprep.subr.bf16.mxu0 0
      %4906 = vmatpush1.bf16.msra.mxu0 %v4706
      %4907 = vmatprep.subr.bf16.mxu0 0
      %4908 = vmatpush1.bf16.msra.mxu0 %v4707
      %4909 = vmatprep.subr.bf16.mxu0 0
      %4910 = vmatpush1.bf16.msra.mxu0 0
      %4911 = vmatprep.subr.bf16.mxu0 0
      %4912 = vmatpush1.bf16.msra.mxu0 0
      %4913 = vmatprep.subr.bf16.mxu0 0
      %4914 = vmatpush1.bf16.msra.mxu0 0
      %4915 = vmatprep.subr.bf16.mxu0 0
      %4916 = vmatpush1.bf16.msra.mxu0 0
      %4917 = vmatprep.subr.bf16.mxu0 0
      %4918 = vmatpush1.bf16.msra.mxu0 0
      %4919 = vmatprep.subr.bf16.mxu0 0
      %4920 = vmatpush1.bf16.msra.mxu0 0
      %4921 = vmatprep.subr.bf16.mxu0 0
      %4922 = vmatpush1.bf16.msra.mxu0 0
      %4923 = vmatprep.subr.bf16.mxu0 0
      %4924 = vmatpush1.bf16.msra.mxu0 0
      %4925 = vmatprep.mubr.bf16.mxu0 0
      %4926 = vmatmul.mubr.bf16.gmra.mrb[0].mxu0 %v4524
      %v4927 = vpop.f32.mrb[0].mxu0
      %v4928 = vadd.f32 %v4767, %v4927
      %v4929 = vpop.f32.mrb[0].mxu0
      %v4930 = vpop.f32.mrb[0].mxu0
      %v4931 = vadd.f32 %v4770, %v4930
      %v4932 = vpop.f32.mrb[0].mxu0
      %4933 = vmatprep.mubr.bf16.mxu0 0
      %4934 = vmatmul.mubr.bf16.gmra.mrb[0].mxu0 %v4525
      %v4935 = vpop.f32.mrb[0].mxu0
      %v4936 = vadd.f32 %v4775, %v4935
      %v4937 = vpop.f32.mrb[0].mxu0
      %v4938 = vpop.f32.mrb[0].mxu0
      %v4939 = vadd.f32 %v4778, %v4938
      %v4940 = vpop.f32.mrb[0].mxu0
      %4941 = vmatprep.mubr.bf16.mxu0 0
      %4942 = vmatmul.mubr.bf16.gmra.mrb[0].mxu0 %v4526
      %v4943 = vpop.f32.mrb[0].mxu0
      %v4944 = vadd.f32 %v4783, %v4943
      %v4945 = vpop.f32.mrb[0].mxu0
      %v4946 = vpop.f32.mrb[0].mxu0
      %v4947 = vadd.f32 %v4786, %v4946
      %v4948 = vpop.f32.mrb[0].mxu0
      %4949 = vmatprep.mubr.bf16.mxu0 0
      %4950 = vmatmul.mubr.bf16.gmra.mrb[0].mxu0 %v4527
      %v4951 = vpop.f32.mrb[0].mxu0
      %v4952 = vadd.f32 %v4791, %v4951
      %v4953 = vpop.f32.mrb[0].mxu0
      %v4954 = vpop.f32.mrb[0].mxu0
      %v4955 = vadd.f32 %v4794, %v4954
      %v4956 = vpop.f32.mrb[0].mxu0
      %4957 = vmatprep.mubr.bf16.mxu0 0
      %4958 = vmatmul.mubr.bf16.gmra.mrb[0].mxu0 %v4528
      %v4959 = vpop.f32.mrb[0].mxu0
      %v4960 = vadd.f32 %v4799, %v4959
      %v4961 = vpop.f32.mrb[0].mxu0
      %v4962 = vpop.f32.mrb[0].mxu0
      %v4963 = vadd.f32 %v4802, %v4962
      %v4964 = vpop.f32.mrb[0].mxu0
      %4965 = vmatprep.mubr.bf16.mxu0 0
      %4966 = vmatmul.mubr.bf16.gmra.mrb[0].mxu0 %v4529
      %v4967 = vpop.f32.mrb[0].mxu0
      %v4968 = vadd.f32 %v4807, %v4967
      %v4969 = vpop.f32.mrb[0].mxu0
      %v4970 = vpop.f32.mrb[0].mxu0
      %v4971 = vadd.f32 %v4810, %v4970
      %v4972 = vpop.f32.mrb[0].mxu0
      %4973 = vmatprep.mubr.bf16.mxu0 0
      %4974 = vmatmul.mubr.bf16.gmra.mrb[0].mxu0 %v4530
      %v4975 = vpop.f32.mrb[0].mxu0
      %v4976 = vadd.f32 %v4815, %v4975
      %v4977 = vpop.f32.mrb[0].mxu0
      %v4978 = vpop.f32.mrb[0].mxu0
      %v4979 = vadd.f32 %v4818, %v4978
      %v4980 = vpop.f32.mrb[0].mxu0
      %4981 = vmatprep.mubr.bf16.mxu0 0
      %4982 = vmatmul.mubr.bf16.gmra.mrb[0].mxu0 %v4531
      %v4983 = vpop.f32.mrb[0].mxu0
      %v4984 = vadd.f32 %v4823, %v4983
      %v4985 = vpop.f32.mrb[0].mxu0
      %v4986 = vpop.f32.mrb[0].mxu0
      %v4987 = vadd.f32 %v4826, %v4986
      %v4988 = vpop.f32.mrb[0].mxu0
      %4989 = vmatprep.mubr.bf16.mxu0 0
      %4990 = vmatmul.mubr.bf16.gmra.mrb[0].mxu0 %v4532
      %v4991 = vpop.f32.mrb[0].mxu0
      %v4992 = vadd.f32 %v4831, %v4991
      %v4993 = vpop.f32.mrb[0].mxu0
      %v4994 = vpop.f32.mrb[0].mxu0
      %v4995 = vadd.f32 %v4834, %v4994
      %v4996 = vpop.f32.mrb[0].mxu0
      %4997 = vmatprep.mubr.bf16.mxu0 0
      %4998 = vmatmul.mubr.bf16.gmra.mrb[0].mxu0 %v4533
      %v4999 = vpop.f32.mrb[0].mxu0
      %v5000 = vadd.f32 %v4839, %v4999
      %v5001 = vpop.f32.mrb[0].mxu0
      %v5002 = vpop.f32.mrb[0].mxu0
      %v5003 = vadd.f32 %v4842, %v5002
      %v5004 = vpop.f32.mrb[0].mxu0
      %5005 = vmatprep.mubr.bf16.mxu0 0
      %5006 = vmatmul.mubr.bf16.gmra.mrb[0].mxu0 %v4534
      %v5007 = vpop.f32.mrb[0].mxu0
      %v5008 = vadd.f32 %v4847, %v5007
      %v5009 = vpop.f32.mrb[0].mxu0
      %v5010 = vpop.f32.mrb[0].mxu0
      %v5011 = vadd.f32 %v4850, %v5010
      %v5012 = vpop.f32.mrb[0].mxu0
      %5013 = vmatprep.mubr.bf16.mxu0 0
      %5014 = vmatmul.mubr.bf16.gmra.mrb[0].mxu0 %v4535
      %v5015 = vpop.f32.mrb[0].mxu0
      %v5016 = vadd.f32 %v4855, %v5015
      %v5017 = vpop.f32.mrb[0].mxu0
      %v5018 = vpop.f32.mrb[0].mxu0
      %v5019 = vadd.f32 %v4858, %v5018
      %v5020 = vpop.f32.mrb[0].mxu0
      %5021 = vmatprep.mubr.bf16.mxu0 0
      %5022 = vmatmul.mubr.bf16.gmra.mrb[0].mxu0 %v4536
      %v5023 = vpop.f32.mrb[0].mxu0
      %v5024 = vadd.f32 %v4863, %v5023
      %v5025 = vpop.f32.mrb[0].mxu0
      %v5026 = vpop.f32.mrb[0].mxu0
      %v5027 = vadd.f32 %v4866, %v5026
      %v5028 = vpop.f32.mrb[0].mxu0
      %5029 = vmatprep.mubr.bf16.mxu0 0
      %5030 = vmatmul.mubr.bf16.gmra.mrb[0].mxu0 %v4537
      %v5031 = vpop.f32.mrb[0].mxu0
      %v5032 = vadd.f32 %v4871, %v5031
      %v5033 = vpop.f32.mrb[0].mxu0
      %v5034 = vpop.f32.mrb[0].mxu0
      %v5035 = vadd.f32 %v4874, %v5034
      %v5036 = vpop.f32.mrb[0].mxu0
      %5037 = vmatprep.mubr.bf16.mxu0 0
      %5038 = vmatmul.mubr.bf16.gmra.mrb[0].mxu0 %v4538
      %v5039 = vpop.f32.mrb[0].mxu0
      %v5040 = vadd.f32 %v4879, %v5039
      %v5041 = vpop.f32.mrb[0].mxu0
      %v5042 = vpop.f32.mrb[0].mxu0
      %v5043 = vadd.f32 %v4882, %v5042
      %v5044 = vpop.f32.mrb[0].mxu0
      %5045 = vmatprep.mubr.bf16.mxu0 0
      %5046 = vmatmul.mubr.bf16.gmra.mrb[0].mxu0 %v4539
      %v5047 = vpop.f32.mrb[0].mxu0
      %v5048 = vadd.f32 %v4887, %v5047
      %v5049 = vpop.f32.mrb[0].mxu0
      %v5050 = vpop.f32.mrb[0].mxu0
      %v5051 = vadd.f32 %v4890, %v5050
      %v5052 = vpop.f32.mrb[0].mxu0
      %5053 = vdwg.mxu0
      %v5102 = vunpack.c.l.b16 %v4252
      %v5103 = vunpack.c.l.b16 %v4253
      %v5104 = vunpack.c.l.b16 %v4254
      %v5105 = vunpack.c.l.b16 %v4255
      %v5106 = vunpack.c.l.b16 %v4256
      %v5107 = vunpack.c.l.b16 %v4257
      %v5108 = vunpack.c.l.b16 %v4258
      %v5109 = vunpack.c.l.b16 %v4259
      %v5110 = vunpack.c.l.b16 %v4260
      %v5111 = vunpack.c.l.b16 %v4261
      %v5112 = vunpack.c.l.b16 %v4262
      %v5113 = vunpack.c.l.b16 %v4263
      %v5114 = vunpack.c.l.b16 %v4264
      %v5115 = vunpack.c.l.b16 %v4265
      %v5116 = vunpack.c.l.b16 %v4266
      %v5117 = vunpack.c.l.b16 %v4267
      %v5118 = vunpack.c.l.b16 %v4268
      %v5119 = vunpack.c.l.b16 %v4269
      %v5120 = vunpack.c.l.b16 %v4270
      %v5121 = vunpack.c.l.b16 %v4271
      %v5122 = vunpack.c.l.b16 %v4272
      %v5123 = vunpack.c.l.b16 %v4273
      %v5124 = vunpack.c.l.b16 %v4274
      %v5125 = vunpack.c.l.b16 %v4275
      %v5126 = vunpack.c.l.b16 %v4276
      %v5127 = vunpack.c.l.b16 %v4277
      %v5128 = vunpack.c.l.b16 %v4278
      %v5129 = vunpack.c.l.b16 %v4279
      %v5130 = vunpack.c.l.b16 %v4280
      %v5131 = vunpack.c.l.b16 %v4281
      %v5132 = vunpack.c.l.b16 %v4282
      %v5133 = vunpack.c.l.b16 %v4283
      %v5134 = vunpack.c.l.b16 %v4284
      %v5135 = vunpack.c.l.b16 %v4285
      %v5136 = vunpack.c.l.b16 %v4286
      %v5137 = vunpack.c.l.b16 %v4287
      %v5138 = vunpack.c.l.b16 %v4288
      %v5139 = vunpack.c.l.b16 %v4289
      %v5140 = vunpack.c.l.b16 %v4290
      %v5141 = vunpack.c.l.b16 %v4291
      %v5142 = vunpack.c.l.b16 %v4292
      %v5143 = vunpack.c.l.b16 %v4293
      %v5144 = vunpack.c.l.b16 %v4294
      %v5145 = vunpack.c.l.b16 %v4295
      %v5146 = vunpack.c.l.b16 %v4296
      %v5147 = vunpack.c.l.b16 %v4297
      %v5148 = vunpack.c.l.b16 %v4298
      %v5149 = vunpack.c.l.b16 %v4299
      %v5150 = vpack.c.b16 %v5103, %v5102
      %v5151 = vpack.c.b16 %v5105, %v5104
      %v5152 = vpack.c.b16 %v5107, %v5106
      %v5153 = vpack.c.b16 %v5109, %v5108
      %v5154 = vpack.c.b16 %v5111, %v5110
      %v5155 = vpack.c.b16 %v5113, %v5112
      %v5156 = vpack.c.b16 %v5115, %v5114
      %v5157 = vpack.c.b16 %v5117, %v5116
      %v5158 = vpack.c.b16 %v5119, %v5118
      %v5159 = vpack.c.b16 %v5121, %v5120
      %v5160 = vpack.c.b16 %v5123, %v5122
      %v5161 = vpack.c.b16 %v5125, %v5124
      %v5162 = vpack.c.b16 %v5127, %v5126
      %v5163 = vpack.c.b16 %v5129, %v5128
      %v5164 = vpack.c.b16 %v5131, %v5130
      %v5165 = vpack.c.b16 %v5133, %v5132
      %v5166 = vpack.c.b16 %v5135, %v5134
      %v5167 = vpack.c.b16 %v5137, %v5136
      %v5168 = vpack.c.b16 %v5139, %v5138
      %v5169 = vpack.c.b16 %v5141, %v5140
      %v5170 = vpack.c.b16 %v5143, %v5142
      %v5171 = vpack.c.b16 %v5145, %v5144
      %v5172 = vpack.c.b16 %v5147, %v5146
      %v5173 = vpack.c.b16 %v5149, %v5148
      %5198 = vmatprep.subr.bf16.mxu0 0
      %5199 = vmatpush1.bf16.msra.mxu0 %v5150
      %5200 = vmatprep.subr.bf16.mxu0 0
      %5201 = vmatpush1.bf16.msra.mxu0 %v5151
      %5202 = vmatprep.subr.bf16.mxu0 0
      %5203 = vmatpush1.bf16.msra.mxu0 %v5152
      %5204 = vmatprep.subr.bf16.mxu0 0
      %5205 = vmatpush1.bf16.msra.mxu0 %v5153
      %5206 = vmatprep.subr.bf16.mxu0 0
      %5207 = vmatpush1.bf16.msra.mxu0 %v5154
      %5208 = vmatprep.subr.bf16.mxu0 0
      %5209 = vmatpush1.bf16.msra.mxu0 %v5155
      %5210 = vmatprep.subr.bf16.mxu0 0
      %5211 = vmatpush1.bf16.msra.mxu0 %v5156
      %5212 = vmatprep.subr.bf16.mxu0 0
      %5213 = vmatpush1.bf16.msra.mxu0 %v5157
      %5214 = vmatprep.subr.bf16.mxu0 0
      %5215 = vmatpush1.bf16.msra.mxu0 %v5158
      %5216 = vmatprep.subr.bf16.mxu0 0
      %5217 = vmatpush1.bf16.msra.mxu0 %v5159
      %5218 = vmatprep.subr.bf16.mxu0 0
      %5219 = vmatpush1.bf16.msra.mxu0 %v5160
      %5220 = vmatprep.subr.bf16.mxu0 0
      %5221 = vmatpush1.bf16.msra.mxu0 %v5161
      %5222 = vmatprep.subr.bf16.mxu0 0
      %5223 = vmatpush1.bf16.msra.mxu0 %v5162
      %5224 = vmatprep.subr.bf16.mxu0 0
      %5225 = vmatpush1.bf16.msra.mxu0 %v5163
      %5226 = vmatprep.subr.bf16.mxu0 0
      %5227 = vmatpush1.bf16.msra.mxu0 %v5164
      %5228 = vmatprep.subr.bf16.mxu0 0
      %5229 = vmatpush1.bf16.msra.mxu0 %v5165
      %5230 = vmatprep.mubr.bf16.mxu0 %v4219
      %5231 = vmatmul.mubr.bf16.gmra.mrb[0].mxu0 %v4203
      %v5232 = vpop.f32.mrb[0].mxu0
      %v5233 = vadd.f32 %v4928, %v5232
      %v5234 = vpop.f32.mrb[0].mxu0
      %v5235 = vpop.f32.mrb[0].mxu0
      %v5236 = vadd.f32 %v4931, %v5235
      %v5237 = vpop.f32.mrb[0].mxu0
      %5238 = vmatprep.mubr.bf16.mxu0 %v4220
      %5239 = vmatmul.mubr.bf16.gmra.mrb[0].mxu0 %v4204
      %v5240 = vpop.f32.mrb[0].mxu0
      %v5241 = vadd.f32 %v4936, %v5240
      %v5242 = vpop.f32.mrb[0].mxu0
      %v5243 = vpop.f32.mrb[0].mxu0
      %v5244 = vadd.f32 %v4939, %v5243
      %v5245 = vpop.f32.mrb[0].mxu0
      %5246 = vmatprep.mubr.bf16.mxu0 %v4221
      %5247 = vmatmul.mubr.bf16.gmra.mrb[0].mxu0 %v4205
      %v5248 = vpop.f32.mrb[0].mxu0
      %v5249 = vadd.f32 %v4944, %v5248
      %v5250 = vpop.f32.mrb[0].mxu0
      %v5251 = vpop.f32.mrb[0].mxu0
      %v5252 = vadd.f32 %v4947, %v5251
      %v5253 = vpop.f32.mrb[0].mxu0
      %5254 = vmatprep.mubr.bf16.mxu0 %v4222
      %5255 = vmatmul.mubr.bf16.gmra.mrb[0].mxu0 %v4206
      %v5256 = vpop.f32.mrb[0].mxu0
      %v5257 = vadd.f32 %v4952, %v5256
      %v5258 = vpop.f32.mrb[0].mxu0
      %v5259 = vpop.f32.mrb[0].mxu0
      %v5260 = vadd.f32 %v4955, %v5259
      %v5261 = vpop.f32.mrb[0].mxu0
      %5262 = vmatprep.mubr.bf16.mxu0 %v4223
      %5263 = vmatmul.mubr.bf16.gmra.mrb[0].mxu0 %v4207
      %v5264 = vpop.f32.mrb[0].mxu0
      %v5265 = vadd.f32 %v4960, %v5264
      %v5266 = vpop.f32.mrb[0].mxu0
      %v5267 = vpop.f32.mrb[0].mxu0
      %v5268 = vadd.f32 %v4963, %v5267
      %v5269 = vpop.f32.mrb[0].mxu0
      %5270 = vmatprep.mubr.bf16.mxu0 %v4224
      %5271 = vmatmul.mubr.bf16.gmra.mrb[0].mxu0 %v4208
      %v5272 = vpop.f32.mrb[0].mxu0
      %v5273 = vadd.f32 %v4968, %v5272
      %v5274 = vpop.f32.mrb[0].mxu0
      %v5275 = vpop.f32.mrb[0].mxu0
      %v5276 = vadd.f32 %v4971, %v5275
      %v5277 = vpop.f32.mrb[0].mxu0
      %5278 = vmatprep.mubr.bf16.mxu0 %v4225
      %5279 = vmatmul.mubr.bf16.gmra.mrb[0].mxu0 %v4209
      %v5280 = vpop.f32.mrb[0].mxu0
      %v5281 = vadd.f32 %v4976, %v5280
      %v5282 = vpop.f32.mrb[0].mxu0
      %v5283 = vpop.f32.mrb[0].mxu0
      %v5284 = vadd.f32 %v4979, %v5283
      %v5285 = vpop.f32.mrb[0].mxu0
      %5286 = vmatprep.mubr.bf16.mxu0 %v4226
      %5287 = vmatmul.mubr.bf16.gmra.mrb[0].mxu0 %v4210
      %v5288 = vpop.f32.mrb[0].mxu0
      %v5289 = vadd.f32 %v4984, %v5288
      %v5290 = vpop.f32.mrb[0].mxu0
      %v5291 = vpop.f32.mrb[0].mxu0
      %v5292 = vadd.f32 %v4987, %v5291
      %v5293 = vpop.f32.mrb[0].mxu0
      %5294 = vmatprep.mubr.bf16.mxu0 %v4227
      %5295 = vmatmul.mubr.bf16.gmra.mrb[0].mxu0 %v4211
      %v5296 = vpop.f32.mrb[0].mxu0
      %v5297 = vadd.f32 %v4992, %v5296
      %v5298 = vpop.f32.mrb[0].mxu0
      %v5299 = vpop.f32.mrb[0].mxu0
      %v5300 = vadd.f32 %v4995, %v5299
      %v5301 = vpop.f32.mrb[0].mxu0
      %5302 = vmatprep.mubr.bf16.mxu0 %v4228
      %5303 = vmatmul.mubr.bf16.gmra.mrb[0].mxu0 %v4212
      %v5304 = vpop.f32.mrb[0].mxu0
      %v5305 = vadd.f32 %v5000, %v5304
      %v5306 = vpop.f32.mrb[0].mxu0
      %v5307 = vpop.f32.mrb[0].mxu0
      %v5308 = vadd.f32 %v5003, %v5307
      %v5309 = vpop.f32.mrb[0].mxu0
      %5310 = vmatprep.mubr.bf16.mxu0 %v4229
      %5311 = vmatmul.mubr.bf16.gmra.mrb[0].mxu0 %v4213
      %v5312 = vpop.f32.mrb[0].mxu0
      %v5313 = vadd.f32 %v5008, %v5312
      %v5314 = vpop.f32.mrb[0].mxu0
      %v5315 = vpop.f32.mrb[0].mxu0
      %v5316 = vadd.f32 %v5011, %v5315
      %v5317 = vpop.f32.mrb[0].mxu0
      %5318 = vmatprep.mubr.bf16.mxu0 %v4230
      %5319 = vmatmul.mubr.bf16.gmra.mrb[0].mxu0 %v4214
      %v5320 = vpop.f32.mrb[0].mxu0
      %v5321 = vadd.f32 %v5016, %v5320
      %v5322 = vpop.f32.mrb[0].mxu0
      %v5323 = vpop.f32.mrb[0].mxu0
      %v5324 = vadd.f32 %v5019, %v5323
      %v5325 = vpop.f32.mrb[0].mxu0
      %5326 = vmatprep.mubr.bf16.mxu0 %v4231
      %5327 = vmatmul.mubr.bf16.gmra.mrb[0].mxu0 %v4215
      %v5328 = vpop.f32.mrb[0].mxu0
      %v5329 = vadd.f32 %v5024, %v5328
      %v5330 = vpop.f32.mrb[0].mxu0
      %v5331 = vpop.f32.mrb[0].mxu0
      %v5332 = vadd.f32 %v5027, %v5331
      %v5333 = vpop.f32.mrb[0].mxu0
      %5334 = vmatprep.mubr.bf16.mxu0 %v4232
      %5335 = vmatmul.mubr.bf16.gmra.mrb[0].mxu0 %v4216
      %v5336 = vpop.f32.mrb[0].mxu0
      %v5337 = vadd.f32 %v5032, %v5336
      %v5338 = vpop.f32.mrb[0].mxu0
      %v5339 = vpop.f32.mrb[0].mxu0
      %v5340 = vadd.f32 %v5035, %v5339
      %v5341 = vpop.f32.mrb[0].mxu0
      %5342 = vmatprep.mubr.bf16.mxu0 %v4233
      %5343 = vmatmul.mubr.bf16.gmra.mrb[0].mxu0 %v4217
      %v5344 = vpop.f32.mrb[0].mxu0
      %v5345 = vadd.f32 %v5040, %v5344
      %v5346 = vpop.f32.mrb[0].mxu0
      %v5347 = vpop.f32.mrb[0].mxu0
      %v5348 = vadd.f32 %v5043, %v5347
      %v5349 = vpop.f32.mrb[0].mxu0
      %5350 = vmatprep.mubr.bf16.mxu0 %v4234
      %5351 = vmatmul.mubr.bf16.gmra.mrb[0].mxu0 %v4218
      %v5352 = vpop.f32.mrb[0].mxu0
      %v5353 = vadd.f32 %v5048, %v5352
      %v5354 = vpop.f32.mrb[0].mxu0
      %v5355 = vpop.f32.mrb[0].mxu0
      %v5356 = vadd.f32 %v5051, %v5355
      %v5357 = vpop.f32.mrb[0].mxu0
      %5358 = vdwg.mxu0
      %5359 = vmatprep.subr.bf16.mxu0 0
      %5360 = vmatpush1.bf16.msra.mxu0 %v5166
      %5361 = vmatprep.subr.bf16.mxu0 0
      %5362 = vmatpush1.bf16.msra.mxu0 %v5167
      %5363 = vmatprep.subr.bf16.mxu0 0
      %5364 = vmatpush1.bf16.msra.mxu0 %v5168
      %5365 = vmatprep.subr.bf16.mxu0 0
      %5366 = vmatpush1.bf16.msra.mxu0 %v5169
      %5367 = vmatprep.subr.bf16.mxu0 0
      %5368 = vmatpush1.bf16.msra.mxu0 %v5170
      %5369 = vmatprep.subr.bf16.mxu0 0
      %5370 = vmatpush1.bf16.msra.mxu0 %v5171
      %5371 = vmatprep.subr.bf16.mxu0 0
      %5372 = vmatpush1.bf16.msra.mxu0 %v5172
      %5373 = vmatprep.subr.bf16.mxu0 0
      %5374 = vmatpush1.bf16.msra.mxu0 %v5173
      %5375 = vmatprep.subr.bf16.mxu0 0
      %5376 = vmatpush1.bf16.msra.mxu0 0
      %5377 = vmatprep.subr.bf16.mxu0 0
      %5378 = vmatpush1.bf16.msra.mxu0 0
      %5379 = vmatprep.subr.bf16.mxu0 0
      %5380 = vmatpush1.bf16.msra.mxu0 0
      %5381 = vmatprep.subr.bf16.mxu0 0
      %5382 = vmatpush1.bf16.msra.mxu0 0
      %5383 = vmatprep.subr.bf16.mxu0 0
      %5384 = vmatpush1.bf16.msra.mxu0 0
      %5385 = vmatprep.subr.bf16.mxu0 0
      %5386 = vmatpush1.bf16.msra.mxu0 0
      %5387 = vmatprep.subr.bf16.mxu0 0
      %5388 = vmatpush1.bf16.msra.mxu0 0
      %5389 = vmatprep.subr.bf16.mxu0 0
      %5390 = vmatpush1.bf16.msra.mxu0 0
      %5391 = vmatprep.mubr.bf16.mxu0 0
      %5392 = vmatmul.mubr.bf16.gmra.mrb[0].mxu0 %v4235
      %v5393 = vpop.f32.mrb[0].mxu0
      %v5394 = vadd.f32 %v5233, %v5393
      %v5395 = vpop.f32.mrb[0].mxu0
      %v5396 = vpop.f32.mrb[0].mxu0
      %v5397 = vadd.f32 %v5236, %v5396
      %v5398 = vpop.f32.mrb[0].mxu0
      %5399 = vmatprep.mubr.bf16.mxu0 0
      %5400 = vmatmul.mubr.bf16.gmra.mrb[0].mxu0 %v4236
      %v5401 = vpop.f32.mrb[0].mxu0
      %v5402 = vadd.f32 %v5241, %v5401
      %v5403 = vpop.f32.mrb[0].mxu0
      %v5404 = vpop.f32.mrb[0].mxu0
      %v5405 = vadd.f32 %v5244, %v5404
      %v5406 = vpop.f32.mrb[0].mxu0
      %5407 = vmatprep.mubr.bf16.mxu0 0
      %5408 = vmatmul.mubr.bf16.gmra.mrb[0].mxu0 %v4237
      %v5409 = vpop.f32.mrb[0].mxu0
      %v5410 = vadd.f32 %v5249, %v5409
      %v5411 = vpop.f32.mrb[0].mxu0
      %v5412 = vpop.f32.mrb[0].mxu0
      %v5413 = vadd.f32 %v5252, %v5412
      %v5414 = vpop.f32.mrb[0].mxu0
      %5415 = vmatprep.mubr.bf16.mxu0 0
      %5416 = vmatmul.mubr.bf16.gmra.mrb[0].mxu0 %v4238
      %v5417 = vpop.f32.mrb[0].mxu0
      %v5418 = vadd.f32 %v5257, %v5417
      %v5419 = vpop.f32.mrb[0].mxu0
      %v5420 = vpop.f32.mrb[0].mxu0
      %v5421 = vadd.f32 %v5260, %v5420
      %v5422 = vpop.f32.mrb[0].mxu0
      %5423 = vmatprep.mubr.bf16.mxu0 0
      %5424 = vmatmul.mubr.bf16.gmra.mrb[0].mxu0 %v4239
      %v5425 = vpop.f32.mrb[0].mxu0
      %v5426 = vadd.f32 %v5265, %v5425
      %v5427 = vpop.f32.mrb[0].mxu0
      %v5428 = vpop.f32.mrb[0].mxu0
      %v5429 = vadd.f32 %v5268, %v5428
      %v5430 = vpop.f32.mrb[0].mxu0
      %5431 = vmatprep.mubr.bf16.mxu0 0
      %5432 = vmatmul.mubr.bf16.gmra.mrb[0].mxu0 %v4240
      %v5433 = vpop.f32.mrb[0].mxu0
      %v5434 = vadd.f32 %v5273, %v5433
      %v5435 = vpop.f32.mrb[0].mxu0
      %v5436 = vpop.f32.mrb[0].mxu0
      %v5437 = vadd.f32 %v5276, %v5436
      %v5438 = vpop.f32.mrb[0].mxu0
      %5439 = vmatprep.mubr.bf16.mxu0 0
      %5440 = vmatmul.mubr.bf16.gmra.mrb[0].mxu0 %v4241
      %v5441 = vpop.f32.mrb[0].mxu0
      %v5442 = vadd.f32 %v5281, %v5441
      %v5443 = vpop.f32.mrb[0].mxu0
      %v5444 = vpop.f32.mrb[0].mxu0
      %v5445 = vadd.f32 %v5284, %v5444
      %v5446 = vpop.f32.mrb[0].mxu0
      %5447 = vmatprep.mubr.bf16.mxu0 0
      %5448 = vmatmul.mubr.bf16.gmra.mrb[0].mxu0 %v4242
      %v5449 = vpop.f32.mrb[0].mxu0
      %v5450 = vadd.f32 %v5289, %v5449
      %v5451 = vpop.f32.mrb[0].mxu0
      %v5452 = vpop.f32.mrb[0].mxu0
      %v5453 = vadd.f32 %v5292, %v5452
      %v5454 = vpop.f32.mrb[0].mxu0
      %5455 = vmatprep.mubr.bf16.mxu0 0
      %5456 = vmatmul.mubr.bf16.gmra.mrb[0].mxu0 %v4243
      %v5457 = vpop.f32.mrb[0].mxu0
      %v5458 = vadd.f32 %v5297, %v5457
      %v5459 = vpop.f32.mrb[0].mxu0
      %v5460 = vpop.f32.mrb[0].mxu0
      %v5461 = vadd.f32 %v5300, %v5460
      %v5462 = vpop.f32.mrb[0].mxu0
      %5463 = vmatprep.mubr.bf16.mxu0 0
      %5464 = vmatmul.mubr.bf16.gmra.mrb[0].mxu0 %v4244
      %v5465 = vpop.f32.mrb[0].mxu0
      %v5466 = vadd.f32 %v5305, %v5465
      %v5467 = vpop.f32.mrb[0].mxu0
      %v5468 = vpop.f32.mrb[0].mxu0
      %v5469 = vadd.f32 %v5308, %v5468
      %v5470 = vpop.f32.mrb[0].mxu0
      %5471 = vmatprep.mubr.bf16.mxu0 0
      %5472 = vmatmul.mubr.bf16.gmra.mrb[0].mxu0 %v4245
      %v5473 = vpop.f32.mrb[0].mxu0
      %v5474 = vadd.f32 %v5313, %v5473
      %v5475 = vpop.f32.mrb[0].mxu0
      %v5476 = vpop.f32.mrb[0].mxu0
      %v5477 = vadd.f32 %v5316, %v5476
      %v5478 = vpop.f32.mrb[0].mxu0
      %5479 = vmatprep.mubr.bf16.mxu0 0
      %5480 = vmatmul.mubr.bf16.gmra.mrb[0].mxu0 %v4246
      %v5481 = vpop.f32.mrb[0].mxu0
      %v5482 = vadd.f32 %v5321, %v5481
      %v5483 = vpop.f32.mrb[0].mxu0
      %v5484 = vpop.f32.mrb[0].mxu0
      %v5485 = vadd.f32 %v5324, %v5484
      %v5486 = vpop.f32.mrb[0].mxu0
      %5487 = vmatprep.mubr.bf16.mxu0 0
      %5488 = vmatmul.mubr.bf16.gmra.mrb[0].mxu0 %v4247
      %v5489 = vpop.f32.mrb[0].mxu0
      %v5490 = vadd.f32 %v5329, %v5489
      %v5491 = vpop.f32.mrb[0].mxu0
      %v5492 = vpop.f32.mrb[0].mxu0
      %v5493 = vadd.f32 %v5332, %v5492
      %v5494 = vpop.f32.mrb[0].mxu0
      %5495 = vmatprep.mubr.bf16.mxu0 0
      %5496 = vmatmul.mubr.bf16.gmra.mrb[0].mxu0 %v4248
      %v5497 = vpop.f32.mrb[0].mxu0
      %v5498 = vadd.f32 %v5337, %v5497
      %v5499 = vpop.f32.mrb[0].mxu0
      %v5500 = vpop.f32.mrb[0].mxu0
      %v5501 = vadd.f32 %v5340, %v5500
      %v5502 = vpop.f32.mrb[0].mxu0
      %5503 = vmatprep.mubr.bf16.mxu0 0
      %5504 = vmatmul.mubr.bf16.gmra.mrb[0].mxu0 %v4249
      %v5505 = vpop.f32.mrb[0].mxu0
      %v5506 = vadd.f32 %v5345, %v5505
      %v5507 = vpop.f32.mrb[0].mxu0
      %v5508 = vpop.f32.mrb[0].mxu0
      %v5509 = vadd.f32 %v5348, %v5508
      %v5510 = vpop.f32.mrb[0].mxu0
      %5511 = vmatprep.mubr.bf16.mxu0 0
      %5512 = vmatmul.mubr.bf16.gmra.mrb[0].mxu0 %v4250
      %v5513 = vpop.f32.mrb[0].mxu0
      %v5514 = vadd.f32 %v5353, %v5513
      %v5515 = vpop.f32.mrb[0].mxu0
      %v5516 = vpop.f32.mrb[0].mxu0
      %v5517 = vadd.f32 %v5356, %v5516
      %v5518 = vpop.f32.mrb[0].mxu0
      %5519 = vdwg.mxu0
      %v5520 = vrot.slane %v3979, 7
      %v5521 = vrot.slane %v3980, 7
      %v5522 = vrot.slane %v3981, 7
      %v5523 = vrot.slane %v3982, 7
      %v5524 = vrot.slane %v3983, 7
      %v5525 = vrot.slane %v3984, 7
      %v5526 = vrot.slane %v3985, 7
      %v5527 = vrot.slane %v3986, 7
      %v5528 = vrot.slane %v3987, 7
      %v5529 = vrot.slane %v3988, 7
      %v5530 = vrot.slane %v3989, 7
      %v5531 = vrot.slane %v3990, 7
      %v5532 = vrot.slane %v3991, 7
      %v5533 = vrot.slane %v3992, 7
      %v5534 = vrot.slane %v3993, 7
      %v5535 = vrot.slane %v3994, 7
      %v5536 = vrot.slane %v3995, 7
      %v5537 = vrot.slane %v3996, 7
      %v5538 = vrot.slane %v3997, 7
      %v5539 = vrot.slane %v3998, 7
      %v5540 = vrot.slane %v3999, 7
      %v5541 = vrot.slane %v4000, 7
      %v5542 = vrot.slane %v4001, 7
      %v5543 = vrot.slane %v4002, 7
      %v5544 = vrot.slane %v4003, 7
      %v5545 = vrot.slane %v4004, 7
      %v5546 = vrot.slane %v4005, 7
      %v5547 = vrot.slane %v4006, 7
      %v5548 = vrot.slane %v4007, 7
      %v5549 = vrot.slane %v4008, 7
      %v5550 = vrot.slane %v4009, 7
      %v5551 = vrot.slane %v4010, 7
      %v5552 = vsel %vm1422, %v5550, %v5551
      %v5553 = vsel %vm1422, %v5549, %v5550
      %v5554 = vsel %vm1422, %v5548, %v5549
      %v5555 = vsel %vm1422, %v5547, %v5548
      %v5556 = vsel %vm1422, %v5546, %v5547
      %v5557 = vsel %vm1422, %v5545, %v5546
      %v5558 = vsel %vm1422, %v5544, %v5545
      %v5559 = vsel %vm1422, %v5543, %v5544
      %v5560 = vsel %vm1422, %v5542, %v5543
      %v5561 = vsel %vm1422, %v5541, %v5542
      %v5562 = vsel %vm1422, %v5540, %v5541
      %v5563 = vsel %vm1422, %v5539, %v5540
      %v5564 = vsel %vm1422, %v5538, %v5539
      %v5565 = vsel %vm1422, %v5537, %v5538
      %v5566 = vsel %vm1422, %v5536, %v5537
      %v5567 = vsel %vm1422, %v5535, %v5536
      %v5568 = vsel %vm1422, %v5534, %v5535
      %v5569 = vsel %vm1422, %v5533, %v5534
      %v5570 = vsel %vm1422, %v5532, %v5533
      %v5571 = vsel %vm1422, %v5531, %v5532
      %v5572 = vsel %vm1422, %v5530, %v5531
      %v5573 = vsel %vm1422, %v5529, %v5530
      %v5574 = vsel %vm1422, %v5528, %v5529
      %v5575 = vsel %vm1422, %v5527, %v5528
      %v5576 = vsel %vm1422, %v5526, %v5527
      %v5577 = vsel %vm1422, %v5525, %v5526
      %v5578 = vsel %vm1422, %v5524, %v5525
      %v5579 = vsel %vm1422, %v5523, %v5524
      %v5580 = vsel %vm1422, %v5522, %v5523
      %v5581 = vsel %vm1422, %v5521, %v5522
      %v5582 = vsel %vm1422, %v5520, %v5521
      %v5583 = vsel %vm1422, %v5551, %v5520
      %v5584 = vsel %vm1487, %v5583, 0.0
      %v5585 = vsel %vm1488, %v5582, 0.0
      %v5586 = vsel %vm1489, %v5581, 0.0
      %v5587 = vsel %vm1490, %v5580, 0.0
      %v5588 = vsel %vm1491, %v5579, 0.0
      %v5589 = vsel %vm1492, %v5578, 0.0
      %v5590 = vsel %vm1493, %v5577, 0.0
      %v5591 = vsel %vm1494, %v5576, 0.0
      %v5592 = vsel %vm1495, %v5575, 0.0
      %v5593 = vsel %vm1496, %v5574, 0.0
      %v5594 = vsel %vm1497, %v5573, 0.0
      %v5595 = vsel %vm1498, %v5572, 0.0
      %v5596 = vsel %vm1499, %v5571, 0.0
      %v5597 = vsel %vm1500, %v5570, 0.0
      %v5598 = vsel %vm1501, %v5569, 0.0
      %v5599 = vsel %vm1502, %v5568, 0.0
      %v5600 = vsel %vm1503, %v5567, 0.0
      %v5601 = vsel %vm1504, %v5566, 0.0
      %v5602 = vsel %vm1505, %v5565, 0.0
      %v5603 = vsel %vm1506, %v5564, 0.0
      %v5604 = vsel %vm1507, %v5563, 0.0
      %v5605 = vsel %vm1508, %v5562, 0.0
      %v5606 = vsel %vm1509, %v5561, 0.0
      %v5607 = vsel %vm1510, %v5560, 0.0
      %v5608 = vsel %vm1511, %v5559, 0.0
      %v5609 = vsel %vm1512, %v5558, 0.0
      %v5610 = vsel %vm1513, %v5557, 0.0
      %v5611 = vsel %vm1514, %v5556, 0.0
      %v5612 = vsel %vm1515, %v5555, 0.0
      %v5613 = vsel %vm1516, %v5554, 0.0
      %v5614 = vsel %vm1517, %v5553, 0.0
      %v5615 = vsel %vm1518, %v5552, 0.0
      %v5616 = vrot.slane %v3979, 1
      %v5617 = vrot.slane %v3980, 1
      %v5618 = vrot.slane %v3981, 1
      %v5619 = vrot.slane %v3982, 1
      %v5620 = vrot.slane %v3983, 1
      %v5621 = vrot.slane %v3984, 1
      %v5622 = vrot.slane %v3985, 1
      %v5623 = vrot.slane %v3986, 1
      %v5624 = vrot.slane %v3987, 1
      %v5625 = vrot.slane %v3988, 1
      %v5626 = vrot.slane %v3989, 1
      %v5627 = vrot.slane %v3990, 1
      %v5628 = vrot.slane %v3991, 1
      %v5629 = vrot.slane %v3992, 1
      %v5630 = vrot.slane %v3993, 1
      %v5631 = vrot.slane %v3994, 1
      %v5632 = vrot.slane %v3995, 1
      %v5633 = vrot.slane %v3996, 1
      %v5634 = vrot.slane %v3997, 1
      %v5635 = vrot.slane %v3998, 1
      %v5636 = vrot.slane %v3999, 1
      %v5637 = vrot.slane %v4000, 1
      %v5638 = vrot.slane %v4001, 1
      %v5639 = vrot.slane %v4002, 1
      %v5640 = vrot.slane %v4003, 1
      %v5641 = vrot.slane %v4004, 1
      %v5642 = vrot.slane %v4005, 1
      %v5643 = vrot.slane %v4006, 1
      %v5644 = vrot.slane %v4007, 1
      %v5645 = vrot.slane %v4008, 1
      %v5646 = vrot.slane %v4009, 1
      %v5647 = vrot.slane %v4010, 1
      %v5648 = vsel %vm1583, %v5646, %v5647
      %v5649 = vsel %vm1583, %v5645, %v5646
      %v5650 = vsel %vm1583, %v5644, %v5645
      %v5651 = vsel %vm1583, %v5643, %v5644
      %v5652 = vsel %vm1583, %v5642, %v5643
      %v5653 = vsel %vm1583, %v5641, %v5642
      %v5654 = vsel %vm1583, %v5640, %v5641
      %v5655 = vsel %vm1583, %v5639, %v5640
      %v5656 = vsel %vm1583, %v5638, %v5639
      %v5657 = vsel %vm1583, %v5637, %v5638
      %v5658 = vsel %vm1583, %v5636, %v5637
      %v5659 = vsel %vm1583, %v5635, %v5636
      %v5660 = vsel %vm1583, %v5634, %v5635
      %v5661 = vsel %vm1583, %v5633, %v5634
      %v5662 = vsel %vm1583, %v5632, %v5633
      %v5663 = vsel %vm1583, %v5631, %v5632
      %v5664 = vsel %vm1583, %v5630, %v5631
      %v5665 = vsel %vm1583, %v5629, %v5630
      %v5666 = vsel %vm1583, %v5628, %v5629
      %v5667 = vsel %vm1583, %v5627, %v5628
      %v5668 = vsel %vm1583, %v5626, %v5627
      %v5669 = vsel %vm1583, %v5625, %v5626
      %v5670 = vsel %vm1583, %v5624, %v5625
      %v5671 = vsel %vm1583, %v5623, %v5624
      %v5672 = vsel %vm1583, %v5622, %v5623
      %v5673 = vsel %vm1583, %v5621, %v5622
      %v5674 = vsel %vm1583, %v5620, %v5621
      %v5675 = vsel %vm1583, %v5619, %v5620
      %v5676 = vsel %vm1583, %v5618, %v5619
      %v5677 = vsel %vm1583, %v5617, %v5618
      %v5678 = vsel %vm1583, %v5616, %v5617
      %v5679 = vsel %vm1583, %v5647, %v5616
      %v5680 = vsel %vm1648, %v5678, 0.0
      %v5681 = vsel %vm1649, %v5677, 0.0
      %v5682 = vsel %vm1650, %v5676, 0.0
      %v5683 = vsel %vm1651, %v5675, 0.0
      %v5684 = vsel %vm1652, %v5674, 0.0
      %v5685 = vsel %vm1653, %v5673, 0.0
      %v5686 = vsel %vm1654, %v5672, 0.0
      %v5687 = vsel %vm1655, %v5671, 0.0
      %v5688 = vsel %vm1656, %v5670, 0.0
      %v5689 = vsel %vm1657, %v5669, 0.0
      %v5690 = vsel %vm1658, %v5668, 0.0
      %v5691 = vsel %vm1659, %v5667, 0.0
      %v5692 = vsel %vm1660, %v5666, 0.0
      %v5693 = vsel %vm1661, %v5665, 0.0
      %v5694 = vsel %vm1662, %v5664, 0.0
      %v5695 = vsel %vm1663, %v5663, 0.0
      %v5696 = vsel %vm1664, %v5662, 0.0
      %v5697 = vsel %vm1665, %v5661, 0.0
      %v5698 = vsel %vm1666, %v5660, 0.0
      %v5699 = vsel %vm1667, %v5659, 0.0
      %v5700 = vsel %vm1668, %v5658, 0.0
      %v5701 = vsel %vm1669, %v5657, 0.0
      %v5702 = vsel %vm1670, %v5656, 0.0
      %v5703 = vsel %vm1671, %v5655, 0.0
      %v5704 = vsel %vm1672, %v5654, 0.0
      %v5705 = vsel %vm1673, %v5653, 0.0
      %v5706 = vsel %vm1674, %v5652, 0.0
      %v5707 = vsel %vm1675, %v5651, 0.0
      %v5708 = vsel %vm1676, %v5650, 0.0
      %v5709 = vsel %vm1677, %v5649, 0.0
      %v5710 = vsel %vm1678, %v5648, 0.0
      %v5711 = vsel %vm1679, %v5679, 0.0
      %v5712 = vpack.c.bf16 %v5585, %v5584
      %v5713 = vpack.c.bf16 %v5587, %v5586
      %v5714 = vpack.c.bf16 %v5589, %v5588
      %v5715 = vpack.c.bf16 %v5591, %v5590
      %v5716 = vpack.c.bf16 %v5593, %v5592
      %v5717 = vpack.c.bf16 %v5595, %v5594
      %v5718 = vpack.c.bf16 %v5597, %v5596
      %v5719 = vpack.c.bf16 %v5599, %v5598
      %v5720 = vpack.c.bf16 %v5601, %v5600
      %v5721 = vpack.c.bf16 %v5603, %v5602
      %v5722 = vpack.c.bf16 %v5605, %v5604
      %v5723 = vpack.c.bf16 %v5607, %v5606
      %v5724 = vpack.c.bf16 %v5609, %v5608
      %v5725 = vpack.c.bf16 %v5611, %v5610
      %v5726 = vpack.c.bf16 %v5613, %v5612
      %v5727 = vpack.c.bf16 %v5615, %v5614
      %v5728 = vpack.c.bf16 %v3980, %v3979
      %v5729 = vpack.c.bf16 %v3982, %v3981
      %v5730 = vpack.c.bf16 %v3984, %v3983
      %v5731 = vpack.c.bf16 %v3986, %v3985
      %v5732 = vpack.c.bf16 %v3988, %v3987
      %v5733 = vpack.c.bf16 %v3990, %v3989
      %v5734 = vpack.c.bf16 %v3992, %v3991
      %v5735 = vpack.c.bf16 %v3994, %v3993
      %v5736 = vpack.c.bf16 %v3996, %v3995
      %v5737 = vpack.c.bf16 %v3998, %v3997
      %v5738 = vpack.c.bf16 %v4000, %v3999
      %v5739 = vpack.c.bf16 %v4002, %v4001
      %v5740 = vpack.c.bf16 %v4004, %v4003
      %v5741 = vpack.c.bf16 %v4006, %v4005
      %v5742 = vpack.c.bf16 %v4008, %v4007
      %v5743 = vpack.c.bf16 %v4010, %v4009
      %v5744 = vpack.c.bf16 %v5681, %v5680
      %v5745 = vpack.c.bf16 %v5683, %v5682
      %v5746 = vpack.c.bf16 %v5685, %v5684
      %v5747 = vpack.c.bf16 %v5687, %v5686
      %v5748 = vpack.c.bf16 %v5689, %v5688
      %v5749 = vpack.c.bf16 %v5691, %v5690
      %v5750 = vpack.c.bf16 %v5693, %v5692
      %v5751 = vpack.c.bf16 %v5695, %v5694
      %v5752 = vpack.c.bf16 %v5697, %v5696
      %v5753 = vpack.c.bf16 %v5699, %v5698
      %v5754 = vpack.c.bf16 %v5701, %v5700
      %v5755 = vpack.c.bf16 %v5703, %v5702
      %v5756 = vpack.c.bf16 %v5705, %v5704
      %v5757 = vpack.c.bf16 %v5707, %v5706
      %v5758 = vpack.c.bf16 %v5709, %v5708
      %v5759 = vpack.c.bf16 %v5711, %v5710
      %v5760 = vld [vmem:[%s4251 + $0x180] sm:$0xf]
      %v5761 = vld [vmem:[%s4251 + $0x184] sm:$0xf]
      %v5762 = vld [vmem:[%s4251 + $0x188] sm:$0xf]
      %v5763 = vld [vmem:[%s4251 + $0x18c] sm:$0xf]
      %v5764 = vld [vmem:[%s4251 + $0x190] sm:$0xf]
      %v5765 = vld [vmem:[%s4251 + $0x194] sm:$0xf]
      %v5766 = vld [vmem:[%s4251 + $0x198] sm:$0xf]
      %v5767 = vld [vmem:[%s4251 + $0x19c] sm:$0xf]
      %v5768 = vld [vmem:[%s4251 + $0x1a0] sm:$0xf]
      %v5769 = vld [vmem:[%s4251 + $0x1a4] sm:$0xf]
      %v5770 = vld [vmem:[%s4251 + $0x1a8] sm:$0xf]
      %v5771 = vld [vmem:[%s4251 + $0x1ac] sm:$0xf]
      %v5772 = vld [vmem:[%s4251 + $0x1b0] sm:$0xf]
      %v5773 = vld [vmem:[%s4251 + $0x1b4] sm:$0xf]
      %v5774 = vld [vmem:[%s4251 + $0x1b8] sm:$0xf]
      %v5775 = vld [vmem:[%s4251 + $0x1bc] sm:$0xf]
      %v5776 = vld [vmem:[%s4251 + $0x1c0] sm:$0xf]
      %v5777 = vld [vmem:[%s4251 + $0x1c4] sm:$0xf]
      %v5778 = vld [vmem:[%s4251 + $0x1c8] sm:$0xf]
      %v5779 = vld [vmem:[%s4251 + $0x1cc] sm:$0xf]
      %v5780 = vld [vmem:[%s4251 + $0x1d0] sm:$0xf]
      %v5781 = vld [vmem:[%s4251 + $0x1d4] sm:$0xf]
      %v5782 = vld [vmem:[%s4251 + $0x1d8] sm:$0xf]
      %v5783 = vld [vmem:[%s4251 + $0x1dc] sm:$0xf]
      %v5784 = vld [vmem:[%s4251 + $0x1e0] sm:$0xf]
      %v5785 = vld [vmem:[%s4251 + $0x1e4] sm:$0xf]
      %v5786 = vld [vmem:[%s4251 + $0x1e8] sm:$0xf]
      %v5787 = vld [vmem:[%s4251 + $0x1ec] sm:$0xf]
      %v5788 = vld [vmem:[%s4251 + $0x1f0] sm:$0xf]
      %v5789 = vld [vmem:[%s4251 + $0x1f4] sm:$0xf]
      %v5790 = vld [vmem:[%s4251 + $0x1f8] sm:$0xf]
      %v5791 = vld [vmem:[%s4251 + $0x1fc] sm:$0xf]
      %v5792 = vld [vmem:[%s4251 + $0x200] sm:$0xf]
      %v5793 = vld [vmem:[%s4251 + $0x204] sm:$0xf]
      %v5794 = vld [vmem:[%s4251 + $0x208] sm:$0xf]
      %v5795 = vld [vmem:[%s4251 + $0x20c] sm:$0xf]
      %v5796 = vld [vmem:[%s4251 + $0x210] sm:$0xf]
      %v5797 = vld [vmem:[%s4251 + $0x214] sm:$0xf]
      %v5798 = vld [vmem:[%s4251 + $0x218] sm:$0xf]
      %v5799 = vld [vmem:[%s4251 + $0x21c] sm:$0xf]
      %v5800 = vld [vmem:[%s4251 + $0x220] sm:$0xf]
      %v5801 = vld [vmem:[%s4251 + $0x224] sm:$0xf]
      %v5802 = vld [vmem:[%s4251 + $0x228] sm:$0xf]
      %v5803 = vld [vmem:[%s4251 + $0x22c] sm:$0xf]
      %v5804 = vld [vmem:[%s4251 + $0x230] sm:$0xf]
      %v5805 = vld [vmem:[%s4251 + $0x234] sm:$0xf]
      %v5806 = vld [vmem:[%s4251 + $0x238] sm:$0xf]
      %v5807 = vld [vmem:[%s4251 + $0x23c] sm:$0xf]
      %v5856 = vunpack.c.l.b16 %v5760
      %v5857 = vunpack.c.l.b16 %v5761
      %v5858 = vunpack.c.l.b16 %v5762
      %v5859 = vunpack.c.l.b16 %v5763
      %v5860 = vunpack.c.l.b16 %v5764
      %v5861 = vunpack.c.l.b16 %v5765
      %v5862 = vunpack.c.l.b16 %v5766
      %v5863 = vunpack.c.l.b16 %v5767
      %v5864 = vunpack.c.l.b16 %v5768
      %v5865 = vunpack.c.l.b16 %v5769
      %v5866 = vunpack.c.l.b16 %v5770
      %v5867 = vunpack.c.l.b16 %v5771
      %v5868 = vunpack.c.l.b16 %v5772
      %v5869 = vunpack.c.l.b16 %v5773
      %v5870 = vunpack.c.l.b16 %v5774
      %v5871 = vunpack.c.l.b16 %v5775
      %v5872 = vunpack.c.l.b16 %v5776
      %v5873 = vunpack.c.l.b16 %v5777
      %v5874 = vunpack.c.l.b16 %v5778
      %v5875 = vunpack.c.l.b16 %v5779
      %v5876 = vunpack.c.l.b16 %v5780
      %v5877 = vunpack.c.l.b16 %v5781
      %v5878 = vunpack.c.l.b16 %v5782
      %v5879 = vunpack.c.l.b16 %v5783
      %v5880 = vunpack.c.l.b16 %v5784
      %v5881 = vunpack.c.l.b16 %v5785
      %v5882 = vunpack.c.l.b16 %v5786
      %v5883 = vunpack.c.l.b16 %v5787
      %v5884 = vunpack.c.l.b16 %v5788
      %v5885 = vunpack.c.l.b16 %v5789
      %v5886 = vunpack.c.l.b16 %v5790
      %v5887 = vunpack.c.l.b16 %v5791
      %v5888 = vunpack.c.l.b16 %v5792
      %v5889 = vunpack.c.l.b16 %v5793
      %v5890 = vunpack.c.l.b16 %v5794
      %v5891 = vunpack.c.l.b16 %v5795
      %v5892 = vunpack.c.l.b16 %v5796
      %v5893 = vunpack.c.l.b16 %v5797
      %v5894 = vunpack.c.l.b16 %v5798
      %v5895 = vunpack.c.l.b16 %v5799
      %v5896 = vunpack.c.l.b16 %v5800
      %v5897 = vunpack.c.l.b16 %v5801
      %v5898 = vunpack.c.l.b16 %v5802
      %v5899 = vunpack.c.l.b16 %v5803
      %v5900 = vunpack.c.l.b16 %v5804
      %v5901 = vunpack.c.l.b16 %v5805
      %v5902 = vunpack.c.l.b16 %v5806
      %v5903 = vunpack.c.l.b16 %v5807
      %v5904 = vpack.c.b16 %v5857, %v5856
      %v5905 = vpack.c.b16 %v5859, %v5858
      %v5906 = vpack.c.b16 %v5861, %v5860
      %v5907 = vpack.c.b16 %v5863, %v5862
      %v5908 = vpack.c.b16 %v5865, %v5864
      %v5909 = vpack.c.b16 %v5867, %v5866
      %v5910 = vpack.c.b16 %v5869, %v5868
      %v5911 = vpack.c.b16 %v5871, %v5870
      %v5912 = vpack.c.b16 %v5873, %v5872
      %v5913 = vpack.c.b16 %v5875, %v5874
      %v5914 = vpack.c.b16 %v5877, %v5876
      %v5915 = vpack.c.b16 %v5879, %v5878
      %v5916 = vpack.c.b16 %v5881, %v5880
      %v5917 = vpack.c.b16 %v5883, %v5882
      %v5918 = vpack.c.b16 %v5885, %v5884
      %v5919 = vpack.c.b16 %v5887, %v5886
      %v5920 = vpack.c.b16 %v5889, %v5888
      %v5921 = vpack.c.b16 %v5891, %v5890
      %v5922 = vpack.c.b16 %v5893, %v5892
      %v5923 = vpack.c.b16 %v5895, %v5894
      %v5924 = vpack.c.b16 %v5897, %v5896
      %v5925 = vpack.c.b16 %v5899, %v5898
      %v5926 = vpack.c.b16 %v5901, %v5900
      %v5927 = vpack.c.b16 %v5903, %v5902
      %5952 = vmatprep.subr.bf16.mxu0 0
      %5953 = vmatpush1.bf16.msra.mxu0 %v5904
      %5954 = vmatprep.subr.bf16.mxu0 0
      %5955 = vmatpush1.bf16.msra.mxu0 %v5905
      %5956 = vmatprep.subr.bf16.mxu0 0
      %5957 = vmatpush1.bf16.msra.mxu0 %v5906
      %5958 = vmatprep.subr.bf16.mxu0 0
      %5959 = vmatpush1.bf16.msra.mxu0 %v5907
      %5960 = vmatprep.subr.bf16.mxu0 0
      %5961 = vmatpush1.bf16.msra.mxu0 %v5908
      %5962 = vmatprep.subr.bf16.mxu0 0
      %5963 = vmatpush1.bf16.msra.mxu0 %v5909
      %5964 = vmatprep.subr.bf16.mxu0 0
      %5965 = vmatpush1.bf16.msra.mxu0 %v5910
      %5966 = vmatprep.subr.bf16.mxu0 0
      %5967 = vmatpush1.bf16.msra.mxu0 %v5911
      %5968 = vmatprep.subr.bf16.mxu0 0
      %5969 = vmatpush1.bf16.msra.mxu0 %v5912
      %5970 = vmatprep.subr.bf16.mxu0 0
      %5971 = vmatpush1.bf16.msra.mxu0 %v5913
      %5972 = vmatprep.subr.bf16.mxu0 0
      %5973 = vmatpush1.bf16.msra.mxu0 %v5914
      %5974 = vmatprep.subr.bf16.mxu0 0
      %5975 = vmatpush1.bf16.msra.mxu0 %v5915
      %5976 = vmatprep.subr.bf16.mxu0 0
      %5977 = vmatpush1.bf16.msra.mxu0 %v5916
      %5978 = vmatprep.subr.bf16.mxu0 0
      %5979 = vmatpush1.bf16.msra.mxu0 %v5917
      %5980 = vmatprep.subr.bf16.mxu0 0
      %5981 = vmatpush1.bf16.msra.mxu0 %v5918
      %5982 = vmatprep.subr.bf16.mxu0 0
      %5983 = vmatpush1.bf16.msra.mxu0 %v5919
      %5984 = vmatprep.mubr.bf16.mxu0 %v5728
      %5985 = vmatmul.mubr.bf16.gmra.mrb[0].mxu0 %v5712
      %v5986 = vpop.f32.mrb[0].mxu0
      %v5987 = vadd.f32 0.0, %v5986
      %v5988 = vpop.f32.mrb[0].mxu0
      %v5989 = vpop.f32.mrb[0].mxu0
      %v5990 = vadd.f32 0.0, %v5989
      %v5991 = vpop.f32.mrb[0].mxu0
      %5992 = vmatprep.mubr.bf16.mxu0 %v5729
      %5993 = vmatmul.mubr.bf16.gmra.mrb[0].mxu0 %v5713
      %v5994 = vpop.f32.mrb[0].mxu0
      %v5995 = vadd.f32 0.0, %v5994
      %v5996 = vpop.f32.mrb[0].mxu0
      %v5997 = vpop.f32.mrb[0].mxu0
      %v5998 = vadd.f32 0.0, %v5997
      %v5999 = vpop.f32.mrb[0].mxu0
      %6000 = vmatprep.mubr.bf16.mxu0 %v5730
      %6001 = vmatmul.mubr.bf16.gmra.mrb[0].mxu0 %v5714
      %v6002 = vpop.f32.mrb[0].mxu0
      %v6003 = vadd.f32 0.0, %v6002
      %v6004 = vpop.f32.mrb[0].mxu0
      %v6005 = vpop.f32.mrb[0].mxu0
      %v6006 = vadd.f32 0.0, %v6005
      %v6007 = vpop.f32.mrb[0].mxu0
      %6008 = vmatprep.mubr.bf16.mxu0 %v5731
      %6009 = vmatmul.mubr.bf16.gmra.mrb[0].mxu0 %v5715
      %v6010 = vpop.f32.mrb[0].mxu0
      %v6011 = vadd.f32 0.0, %v6010
      %v6012 = vpop.f32.mrb[0].mxu0
      %v6013 = vpop.f32.mrb[0].mxu0
      %v6014 = vadd.f32 0.0, %v6013
      %v6015 = vpop.f32.mrb[0].mxu0
      %6016 = vmatprep.mubr.bf16.mxu0 %v5732
      %6017 = vmatmul.mubr.bf16.gmra.mrb[0].mxu0 %v5716
      %v6018 = vpop.f32.mrb[0].mxu0
      %v6019 = vadd.f32 0.0, %v6018
      %v6020 = vpop.f32.mrb[0].mxu0
      %v6021 = vpop.f32.mrb[0].mxu0
      %v6022 = vadd.f32 0.0, %v6021
      %v6023 = vpop.f32.mrb[0].mxu0
      %6024 = vmatprep.mubr.bf16.mxu0 %v5733
      %6025 = vmatmul.mubr.bf16.gmra.mrb[0].mxu0 %v5717
      %v6026 = vpop.f32.mrb[0].mxu0
      %v6027 = vadd.f32 0.0, %v6026
      %v6028 = vpop.f32.mrb[0].mxu0
      %v6029 = vpop.f32.mrb[0].mxu0
      %v6030 = vadd.f32 0.0, %v6029
      %v6031 = vpop.f32.mrb[0].mxu0
      %6032 = vmatprep.mubr.bf16.mxu0 %v5734
      %6033 = vmatmul.mubr.bf16.gmra.mrb[0].mxu0 %v5718
      %v6034 = vpop.f32.mrb[0].mxu0
      %v6035 = vadd.f32 0.0, %v6034
      %v6036 = vpop.f32.mrb[0].mxu0
      %v6037 = vpop.f32.mrb[0].mxu0
      %v6038 = vadd.f32 0.0, %v6037
      %v6039 = vpop.f32.mrb[0].mxu0
      %6040 = vmatprep.mubr.bf16.mxu0 %v5735
      %6041 = vmatmul.mubr.bf16.gmra.mrb[0].mxu0 %v5719
      %v6042 = vpop.f32.mrb[0].mxu0
      %v6043 = vadd.f32 0.0, %v6042
      %v6044 = vpop.f32.mrb[0].mxu0
      %v6045 = vpop.f32.mrb[0].mxu0
      %v6046 = vadd.f32 0.0, %v6045
      %v6047 = vpop.f32.mrb[0].mxu0
      %6048 = vmatprep.mubr.bf16.mxu0 %v5736
      %6049 = vmatmul.mubr.bf16.gmra.mrb[0].mxu0 %v5720
      %v6050 = vpop.f32.mrb[0].mxu0
      %v6051 = vadd.f32 0.0, %v6050
      %v6052 = vpop.f32.mrb[0].mxu0
      %v6053 = vpop.f32.mrb[0].mxu0
      %v6054 = vadd.f32 0.0, %v6053
      %v6055 = vpop.f32.mrb[0].mxu0
      %6056 = vmatprep.mubr.bf16.mxu0 %v5737
      %6057 = vmatmul.mubr.bf16.gmra.mrb[0].mxu0 %v5721
      %v6058 = vpop.f32.mrb[0].mxu0
      %v6059 = vadd.f32 0.0, %v6058
      %v6060 = vpop.f32.mrb[0].mxu0
      %v6061 = vpop.f32.mrb[0].mxu0
      %v6062 = vadd.f32 0.0, %v6061
      %v6063 = vpop.f32.mrb[0].mxu0
      %6064 = vmatprep.mubr.bf16.mxu0 %v5738
      %6065 = vmatmul.mubr.bf16.gmra.mrb[0].mxu0 %v5722
      %v6066 = vpop.f32.mrb[0].mxu0
      %v6067 = vadd.f32 0.0, %v6066
      %v6068 = vpop.f32.mrb[0].mxu0
      %v6069 = vpop.f32.mrb[0].mxu0
      %v6070 = vadd.f32 0.0, %v6069
      %v6071 = vpop.f32.mrb[0].mxu0
      %6072 = vmatprep.mubr.bf16.mxu0 %v5739
      %6073 = vmatmul.mubr.bf16.gmra.mrb[0].mxu0 %v5723
      %v6074 = vpop.f32.mrb[0].mxu0
      %v6075 = vadd.f32 0.0, %v6074
      %v6076 = vpop.f32.mrb[0].mxu0
      %v6077 = vpop.f32.mrb[0].mxu0
      %v6078 = vadd.f32 0.0, %v6077
      %v6079 = vpop.f32.mrb[0].mxu0
      %6080 = vmatprep.mubr.bf16.mxu0 %v5740
      %6081 = vmatmul.mubr.bf16.gmra.mrb[0].mxu0 %v5724
      %v6082 = vpop.f32.mrb[0].mxu0
      %v6083 = vadd.f32 0.0, %v6082
      %v6084 = vpop.f32.mrb[0].mxu0
      %v6085 = vpop.f32.mrb[0].mxu0
      %v6086 = vadd.f32 0.0, %v6085
      %v6087 = vpop.f32.mrb[0].mxu0
      %6088 = vmatprep.mubr.bf16.mxu0 %v5741
      %6089 = vmatmul.mubr.bf16.gmra.mrb[0].mxu0 %v5725
      %v6090 = vpop.f32.mrb[0].mxu0
      %v6091 = vadd.f32 0.0, %v6090
      %v6092 = vpop.f32.mrb[0].mxu0
      %v6093 = vpop.f32.mrb[0].mxu0
      %v6094 = vadd.f32 0.0, %v6093
      %v6095 = vpop.f32.mrb[0].mxu0
      %6096 = vmatprep.mubr.bf16.mxu0 %v5742
      %6097 = vmatmul.mubr.bf16.gmra.mrb[0].mxu0 %v5726
      %v6098 = vpop.f32.mrb[0].mxu0
      %v6099 = vadd.f32 0.0, %v6098
      %v6100 = vpop.f32.mrb[0].mxu0
      %v6101 = vpop.f32.mrb[0].mxu0
      %v6102 = vadd.f32 0.0, %v6101
      %v6103 = vpop.f32.mrb[0].mxu0
      %6104 = vmatprep.mubr.bf16.mxu0 %v5743
      %6105 = vmatmul.mubr.bf16.gmra.mrb[0].mxu0 %v5727
      %v6106 = vpop.f32.mrb[0].mxu0
      %v6107 = vadd.f32 0.0, %v6106
      %v6108 = vpop.f32.mrb[0].mxu0
      %v6109 = vpop.f32.mrb[0].mxu0
      %v6110 = vadd.f32 0.0, %v6109
      %v6111 = vpop.f32.mrb[0].mxu0
      %6112 = vdwg.mxu0
      %6113 = vmatprep.subr.bf16.mxu0 0
      %6114 = vmatpush1.bf16.msra.mxu0 %v5920
      %6115 = vmatprep.subr.bf16.mxu0 0
      %6116 = vmatpush1.bf16.msra.mxu0 %v5921
      %6117 = vmatprep.subr.bf16.mxu0 0
      %6118 = vmatpush1.bf16.msra.mxu0 %v5922
      %6119 = vmatprep.subr.bf16.mxu0 0
      %6120 = vmatpush1.bf16.msra.mxu0 %v5923
      %6121 = vmatprep.subr.bf16.mxu0 0
      %6122 = vmatpush1.bf16.msra.mxu0 %v5924
      %6123 = vmatprep.subr.bf16.mxu0 0
      %6124 = vmatpush1.bf16.msra.mxu0 %v5925
      %6125 = vmatprep.subr.bf16.mxu0 0
      %6126 = vmatpush1.bf16.msra.mxu0 %v5926
      %6127 = vmatprep.subr.bf16.mxu0 0
      %6128 = vmatpush1.bf16.msra.mxu0 %v5927
      %6129 = vmatprep.subr.bf16.mxu0 0
      %6130 = vmatpush1.bf16.msra.mxu0 0
      %6131 = vmatprep.subr.bf16.mxu0 0
      %6132 = vmatpush1.bf16.msra.mxu0 0
      %6133 = vmatprep.subr.bf16.mxu0 0
      %6134 = vmatpush1.bf16.msra.mxu0 0
      %6135 = vmatprep.subr.bf16.mxu0 0
      %6136 = vmatpush1.bf16.msra.mxu0 0
      %6137 = vmatprep.subr.bf16.mxu0 0
      %6138 = vmatpush1.bf16.msra.mxu0 0
      %6139 = vmatprep.subr.bf16.mxu0 0
      %6140 = vmatpush1.bf16.msra.mxu0 0
      %6141 = vmatprep.subr.bf16.mxu0 0
      %6142 = vmatpush1.bf16.msra.mxu0 0
      %6143 = vmatprep.subr.bf16.mxu0 0
      %6144 = vmatpush1.bf16.msra.mxu0 0
      %6145 = vmatprep.mubr.bf16.mxu0 0
      %6146 = vmatmul.mubr.bf16.gmra.mrb[0].mxu0 %v5744
      %v6147 = vpop.f32.mrb[0].mxu0
      %v6148 = vadd.f32 %v5987, %v6147
      %v6149 = vpop.f32.mrb[0].mxu0
      %v6150 = vpop.f32.mrb[0].mxu0
      %v6151 = vadd.f32 %v5990, %v6150
      %v6152 = vpop.f32.mrb[0].mxu0
      %6153 = vmatprep.mubr.bf16.mxu0 0
      %6154 = vmatmul.mubr.bf16.gmra.mrb[0].mxu0 %v5745
      %v6155 = vpop.f32.mrb[0].mxu0
      %v6156 = vadd.f32 %v5995, %v6155
      %v6157 = vpop.f32.mrb[0].mxu0
      %v6158 = vpop.f32.mrb[0].mxu0
      %v6159 = vadd.f32 %v5998, %v6158
      %v6160 = vpop.f32.mrb[0].mxu0
      %6161 = vmatprep.mubr.bf16.mxu0 0
      %6162 = vmatmul.mubr.bf16.gmra.mrb[0].mxu0 %v5746
      %v6163 = vpop.f32.mrb[0].mxu0
      %v6164 = vadd.f32 %v6003, %v6163
      %v6165 = vpop.f32.mrb[0].mxu0
      %v6166 = vpop.f32.mrb[0].mxu0
      %v6167 = vadd.f32 %v6006, %v6166
      %v6168 = vpop.f32.mrb[0].mxu0
      %6169 = vmatprep.mubr.bf16.mxu0 0
      %6170 = vmatmul.mubr.bf16.gmra.mrb[0].mxu0 %v5747
      %v6171 = vpop.f32.mrb[0].mxu0
      %v6172 = vadd.f32 %v6011, %v6171
      %v6173 = vpop.f32.mrb[0].mxu0
      %v6174 = vpop.f32.mrb[0].mxu0
      %v6175 = vadd.f32 %v6014, %v6174
      %v6176 = vpop.f32.mrb[0].mxu0
      %6177 = vmatprep.mubr.bf16.mxu0 0
      %6178 = vmatmul.mubr.bf16.gmra.mrb[0].mxu0 %v5748
      %v6179 = vpop.f32.mrb[0].mxu0
      %v6180 = vadd.f32 %v6019, %v6179
      %v6181 = vpop.f32.mrb[0].mxu0
      %v6182 = vpop.f32.mrb[0].mxu0
      %v6183 = vadd.f32 %v6022, %v6182
      %v6184 = vpop.f32.mrb[0].mxu0
      %6185 = vmatprep.mubr.bf16.mxu0 0
      %6186 = vmatmul.mubr.bf16.gmra.mrb[0].mxu0 %v5749
      %v6187 = vpop.f32.mrb[0].mxu0
      %v6188 = vadd.f32 %v6027, %v6187
      %v6189 = vpop.f32.mrb[0].mxu0
      %v6190 = vpop.f32.mrb[0].mxu0
      %v6191 = vadd.f32 %v6030, %v6190
      %v6192 = vpop.f32.mrb[0].mxu0
      %6193 = vmatprep.mubr.bf16.mxu0 0
      %6194 = vmatmul.mubr.bf16.gmra.mrb[0].mxu0 %v5750
      %v6195 = vpop.f32.mrb[0].mxu0
      %v6196 = vadd.f32 %v6035, %v6195
      %v6197 = vpop.f32.mrb[0].mxu0
      %v6198 = vpop.f32.mrb[0].mxu0
      %v6199 = vadd.f32 %v6038, %v6198
      %v6200 = vpop.f32.mrb[0].mxu0
      %6201 = vmatprep.mubr.bf16.mxu0 0
      %6202 = vmatmul.mubr.bf16.gmra.mrb[0].mxu0 %v5751
      %v6203 = vpop.f32.mrb[0].mxu0
      %v6204 = vadd.f32 %v6043, %v6203
      %v6205 = vpop.f32.mrb[0].mxu0
      %v6206 = vpop.f32.mrb[0].mxu0
      %v6207 = vadd.f32 %v6046, %v6206
      %v6208 = vpop.f32.mrb[0].mxu0
      %6209 = vmatprep.mubr.bf16.mxu0 0
      %6210 = vmatmul.mubr.bf16.gmra.mrb[0].mxu0 %v5752
      %v6211 = vpop.f32.mrb[0].mxu0
      %v6212 = vadd.f32 %v6051, %v6211
      %v6213 = vpop.f32.mrb[0].mxu0
      %v6214 = vpop.f32.mrb[0].mxu0
      %v6215 = vadd.f32 %v6054, %v6214
      %v6216 = vpop.f32.mrb[0].mxu0
      %6217 = vmatprep.mubr.bf16.mxu0 0
      %6218 = vmatmul.mubr.bf16.gmra.mrb[0].mxu0 %v5753
      %v6219 = vpop.f32.mrb[0].mxu0
      %v6220 = vadd.f32 %v6059, %v6219
      %v6221 = vpop.f32.mrb[0].mxu0
      %v6222 = vpop.f32.mrb[0].mxu0
      %v6223 = vadd.f32 %v6062, %v6222
      %v6224 = vpop.f32.mrb[0].mxu0
      %6225 = vmatprep.mubr.bf16.mxu0 0
      %6226 = vmatmul.mubr.bf16.gmra.mrb[0].mxu0 %v5754
      %v6227 = vpop.f32.mrb[0].mxu0
      %v6228 = vadd.f32 %v6067, %v6227
      %v6229 = vpop.f32.mrb[0].mxu0
      %v6230 = vpop.f32.mrb[0].mxu0
      %v6231 = vadd.f32 %v6070, %v6230
      %v6232 = vpop.f32.mrb[0].mxu0
      %6233 = vmatprep.mubr.bf16.mxu0 0
      %6234 = vmatmul.mubr.bf16.gmra.mrb[0].mxu0 %v5755
      %v6235 = vpop.f32.mrb[0].mxu0
      %v6236 = vadd.f32 %v6075, %v6235
      %v6237 = vpop.f32.mrb[0].mxu0
      %v6238 = vpop.f32.mrb[0].mxu0
      %v6239 = vadd.f32 %v6078, %v6238
      %v6240 = vpop.f32.mrb[0].mxu0
      %6241 = vmatprep.mubr.bf16.mxu0 0
      %6242 = vmatmul.mubr.bf16.gmra.mrb[0].mxu0 %v5756
      %v6243 = vpop.f32.mrb[0].mxu0
      %v6244 = vadd.f32 %v6083, %v6243
      %v6245 = vpop.f32.mrb[0].mxu0
      %v6246 = vpop.f32.mrb[0].mxu0
      %v6247 = vadd.f32 %v6086, %v6246
      %v6248 = vpop.f32.mrb[0].mxu0
      %6249 = vmatprep.mubr.bf16.mxu0 0
      %6250 = vmatmul.mubr.bf16.gmra.mrb[0].mxu0 %v5757
      %v6251 = vpop.f32.mrb[0].mxu0
      %v6252 = vadd.f32 %v6091, %v6251
      %v6253 = vpop.f32.mrb[0].mxu0
      %v6254 = vpop.f32.mrb[0].mxu0
      %v6255 = vadd.f32 %v6094, %v6254
      %v6256 = vpop.f32.mrb[0].mxu0
      %6257 = vmatprep.mubr.bf16.mxu0 0
      %6258 = vmatmul.mubr.bf16.gmra.mrb[0].mxu0 %v5758
      %v6259 = vpop.f32.mrb[0].mxu0
      %v6260 = vadd.f32 %v6099, %v6259
      %v6261 = vpop.f32.mrb[0].mxu0
      %v6262 = vpop.f32.mrb[0].mxu0
      %v6263 = vadd.f32 %v6102, %v6262
      %v6264 = vpop.f32.mrb[0].mxu0
      %6265 = vmatprep.mubr.bf16.mxu0 0
      %6266 = vmatmul.mubr.bf16.gmra.mrb[0].mxu0 %v5759
      %v6267 = vpop.f32.mrb[0].mxu0
      %v6268 = vadd.f32 %v6107, %v6267
      %v6269 = vpop.f32.mrb[0].mxu0
      %v6270 = vpop.f32.mrb[0].mxu0
      %v6271 = vadd.f32 %v6110, %v6270
      %v6272 = vpop.f32.mrb[0].mxu0
      %6273 = vdwg.mxu0
      %v6274 = vadd.f32 %v5394, %v6148
      %v6275 = vadd.f32 %v5397, %v6151
      %v6276 = vadd.f32 %v5402, %v6156
      %v6277 = vadd.f32 %v5405, %v6159
      %v6278 = vadd.f32 %v5410, %v6164
      %v6279 = vadd.f32 %v5413, %v6167
      %v6280 = vadd.f32 %v5418, %v6172
      %v6281 = vadd.f32 %v5421, %v6175
      %v6282 = vadd.f32 %v5426, %v6180
      %v6283 = vadd.f32 %v5429, %v6183
      %v6284 = vadd.f32 %v5434, %v6188
      %v6285 = vadd.f32 %v5437, %v6191
      %v6286 = vadd.f32 %v5442, %v6196
      %v6287 = vadd.f32 %v5445, %v6199
      %v6288 = vadd.f32 %v5450, %v6204
      %v6289 = vadd.f32 %v5453, %v6207
      %v6290 = vadd.f32 %v5458, %v6212
      %v6291 = vadd.f32 %v5461, %v6215
      %v6292 = vadd.f32 %v5466, %v6220
      %v6293 = vadd.f32 %v5469, %v6223
      %v6294 = vadd.f32 %v5474, %v6228
      %v6295 = vadd.f32 %v5477, %v6231
      %v6296 = vadd.f32 %v5482, %v6236
      %v6297 = vadd.f32 %v5485, %v6239
      %v6298 = vadd.f32 %v5490, %v6244
      %v6299 = vadd.f32 %v5493, %v6247
      %v6300 = vadd.f32 %v5498, %v6252
      %v6301 = vadd.f32 %v5501, %v6255
      %v6302 = vadd.f32 %v5506, %v6260
      %v6303 = vadd.f32 %v5509, %v6263
      %v6304 = vadd.f32 %v5514, %v6268
      %v6305 = vadd.f32 %v5517, %v6271
      %v6306 = vld [vmem:[%s3 + $0x2] sm:$0x1]
      %v6307 = vlaneseq
      %v6308 = vshrl.u32 %v6307, 7
      %v6309 = vsub.s32 0, %v6308
      %v6310 = vrot.slane %v6306, %v6309
      %v6311 = vadd.f32 %v6274, %v6310
      %v6312 = vadd.f32 %v6275, %v6310
      %v6313 = vadd.f32 %v6276, %v6310
      %v6314 = vadd.f32 %v6277, %v6310
      %v6315 = vadd.f32 %v6278, %v6310
      %v6316 = vadd.f32 %v6279, %v6310
      %v6317 = vadd.f32 %v6280, %v6310
      %v6318 = vadd.f32 %v6281, %v6310
      %v6319 = vadd.f32 %v6282, %v6310
      %v6320 = vadd.f32 %v6283, %v6310
      %v6321 = vadd.f32 %v6284, %v6310
      %v6322 = vadd.f32 %v6285, %v6310
      %v6323 = vadd.f32 %v6286, %v6310
      %v6324 = vadd.f32 %v6287, %v6310
      %v6325 = vadd.f32 %v6288, %v6310
      %v6326 = vadd.f32 %v6289, %v6310
      %v6327 = vadd.f32 %v6290, %v6310
      %v6328 = vadd.f32 %v6291, %v6310
      %v6329 = vadd.f32 %v6292, %v6310
      %v6330 = vadd.f32 %v6293, %v6310
      %v6331 = vadd.f32 %v6294, %v6310
      %v6332 = vadd.f32 %v6295, %v6310
      %v6333 = vadd.f32 %v6296, %v6310
      %v6334 = vadd.f32 %v6297, %v6310
      %v6335 = vadd.f32 %v6298, %v6310
      %v6336 = vadd.f32 %v6299, %v6310
      %v6337 = vadd.f32 %v6300, %v6310
      %v6338 = vadd.f32 %v6301, %v6310
      %v6339 = vadd.f32 %v6302, %v6310
      %v6340 = vadd.f32 %v6303, %v6310
      %v6341 = vadd.f32 %v6304, %v6310
      %v6342 = vadd.f32 %v6305, %v6310
      %v6343 = vmax.f32 %v6311, 0.0
      %v6344 = vmax.f32 %v6312, 0.0
      %v6345 = vmax.f32 %v6313, 0.0
      %v6346 = vmax.f32 %v6314, 0.0
      %v6347 = vmax.f32 %v6315, 0.0
      %v6348 = vmax.f32 %v6316, 0.0
      %v6349 = vmax.f32 %v6317, 0.0
      %v6350 = vmax.f32 %v6318, 0.0
      %v6351 = vmax.f32 %v6319, 0.0
      %v6352 = vmax.f32 %v6320, 0.0
      %v6353 = vmax.f32 %v6321, 0.0
      %v6354 = vmax.f32 %v6322, 0.0
      %v6355 = vmax.f32 %v6323, 0.0
      %v6356 = vmax.f32 %v6324, 0.0
      %v6357 = vmax.f32 %v6325, 0.0
      %v6358 = vmax.f32 %v6326, 0.0
      %v6359 = vmax.f32 %v6327, 0.0
      %v6360 = vmax.f32 %v6328, 0.0
      %v6361 = vmax.f32 %v6329, 0.0
      %v6362 = vmax.f32 %v6330, 0.0
      %v6363 = vmax.f32 %v6331, 0.0
      %v6364 = vmax.f32 %v6332, 0.0
      %v6365 = vmax.f32 %v6333, 0.0
      %v6366 = vmax.f32 %v6334, 0.0
      %v6367 = vmax.f32 %v6335, 0.0
      %v6368 = vmax.f32 %v6336, 0.0
      %v6369 = vmax.f32 %v6337, 0.0
      %v6370 = vmax.f32 %v6338, 0.0
      %v6371 = vmax.f32 %v6339, 0.0
      %v6372 = vmax.f32 %v6340, 0.0
      %v6373 = vmax.f32 %v6341, 0.0
      %v6374 = vmax.f32 %v6342, 0.0
      %6375 = vst [vmem:[#allocation2] sm:$0xff] %v6343
      %6376 = vst [vmem:[#allocation2 + $0x8] sm:$0xff] %v6344
      %6377 = vst [vmem:[#allocation2 + $0x10] sm:$0xff] %v6345
      %6378 = vst [vmem:[#allocation2 + $0x18] sm:$0xff] %v6346
      %6379 = vst [vmem:[#allocation2 + $0x20] sm:$0xff] %v6347
      %6380 = vst [vmem:[#allocation2 + $0x28] sm:$0xff] %v6348
      %6381 = vst [vmem:[#allocation2 + $0x30] sm:$0xff] %v6349
      %6382 = vst [vmem:[#allocation2 + $0x38] sm:$0xff] %v6350
      %6383 = vst [vmem:[#allocation2 + $0x40] sm:$0xff] %v6351
      %6384 = vst [vmem:[#allocation2 + $0x48] sm:$0xff] %v6352
      %6385 = vst [vmem:[#allocation2 + $0x50] sm:$0xff] %v6353
      %6386 = vst [vmem:[#allocation2 + $0x58] sm:$0xff] %v6354
      %6387 = vst [vmem:[#allocation2 + $0x60] sm:$0xff] %v6355
      %6388 = vst [vmem:[#allocation2 + $0x68] sm:$0xff] %v6356
      %6389 = vst [vmem:[#allocation2 + $0x70] sm:$0xff] %v6357
      %6390 = vst [vmem:[#allocation2 + $0x78] sm:$0xff] %v6358
      %6391 = vst [vmem:[#allocation2 + $0x80] sm:$0xff] %v6359
      %6392 = vst [vmem:[#allocation2 + $0x88] sm:$0xff] %v6360
      %6393 = vst [vmem:[#allocation2 + $0x90] sm:$0xff] %v6361
      %6394 = vst [vmem:[#allocation2 + $0x98] sm:$0xff] %v6362
      %6395 = vst [vmem:[#allocation2 + $0xa0] sm:$0xff] %v6363
      %6396 = vst [vmem:[#allocation2 + $0xa8] sm:$0xff] %v6364
      %6397 = vst [vmem:[#allocation2 + $0xb0] sm:$0xff] %v6365
      %6398 = vst [vmem:[#allocation2 + $0xb8] sm:$0xff] %v6366
      %6399 = vst [vmem:[#allocation2 + $0xc0] sm:$0xff] %v6367
      %6400 = vst [vmem:[#allocation2 + $0xc8] sm:$0xff] %v6368
      %6401 = vst [vmem:[#allocation2 + $0xd0] sm:$0xff] %v6369
      %6402 = vst [vmem:[#allocation2 + $0xd8] sm:$0xff] %v6370
      %6403 = vst [vmem:[#allocation2 + $0xe0] sm:$0xff] %v6371
      %6404 = vst [vmem:[#allocation2 + $0xe8] sm:$0xff] %v6372
      %6405 = vst [vmem:[#allocation2 + $0xf0] sm:$0xff] %v6373
      %6406 = vst [vmem:[#allocation2 + $0xf8] sm:$0xff] %v6374
      %v6407 = vld [vmem:[#allocation2] sm:$0xff]
      %v6408 = vld [vmem:[#allocation2 + $0x8] sm:$0xff]
      %v6409 = vld [vmem:[#allocation2 + $0x10] sm:$0xff]
      %v6410 = vld [vmem:[#allocation2 + $0x18] sm:$0xff]
      %v6411 = vld [vmem:[#allocation2 + $0x20] sm:$0xff]
      %v6412 = vld [vmem:[#allocation2 + $0x28] sm:$0xff]
      %v6413 = vld [vmem:[#allocation2 + $0x30] sm:$0xff]
      %v6414 = vld [vmem:[#allocation2 + $0x38] sm:$0xff]
      %v6415 = vld [vmem:[#allocation2 + $0x40] sm:$0xff]
      %v6416 = vld [vmem:[#allocation2 + $0x48] sm:$0xff]
      %v6417 = vld [vmem:[#allocation2 + $0x50] sm:$0xff]
      %v6418 = vld [vmem:[#allocation2 + $0x58] sm:$0xff]
      %v6419 = vld [vmem:[#allocation2 + $0x60] sm:$0xff]
      %v6420 = vld [vmem:[#allocation2 + $0x68] sm:$0xff]
      %v6421 = vld [vmem:[#allocation2 + $0x70] sm:$0xff]
      %v6422 = vld [vmem:[#allocation2 + $0x78] sm:$0xff]
      %v6423 = vld [vmem:[#allocation2 + $0x80] sm:$0xff]
      %v6424 = vld [vmem:[#allocation2 + $0x88] sm:$0xff]
      %v6425 = vld [vmem:[#allocation2 + $0x90] sm:$0xff]
      %v6426 = vld [vmem:[#allocation2 + $0x98] sm:$0xff]
      %v6427 = vld [vmem:[#allocation2 + $0xa0] sm:$0xff]
      %v6428 = vld [vmem:[#allocation2 + $0xa8] sm:$0xff]
      %v6429 = vld [vmem:[#allocation2 + $0xb0] sm:$0xff]
      %v6430 = vld [vmem:[#allocation2 + $0xb8] sm:$0xff]
      %v6431 = vld [vmem:[#allocation2 + $0xc0] sm:$0xff]
      %v6432 = vld [vmem:[#allocation2 + $0xc8] sm:$0xff]
      %v6433 = vld [vmem:[#allocation2 + $0xd0] sm:$0xff]
      %v6434 = vld [vmem:[#allocation2 + $0xd8] sm:$0xff]
      %v6435 = vld [vmem:[#allocation2 + $0xe0] sm:$0xff]
      %v6436 = vld [vmem:[#allocation2 + $0xe8] sm:$0xff]
      %v6437 = vld [vmem:[#allocation2 + $0xf0] sm:$0xff]
      %v6438 = vld [vmem:[#allocation2 + $0xf8] sm:$0xff]
      %v6439 = vsel %vm1230, %v6437, 0.0
      %v6440 = vsel %vm1231, %v6438, 0.0
      %v6441 = vsel %vm1232, %v6407, 0.0
      %v6442 = vsel %vm1233, %v6408, 0.0
      %v6443 = vsel %vm1234, %v6409, 0.0
      %v6444 = vsel %vm1235, %v6410, 0.0
      %v6445 = vsel %vm1236, %v6411, 0.0
      %v6446 = vsel %vm1237, %v6412, 0.0
      %v6447 = vsel %vm1238, %v6413, 0.0
      %v6448 = vsel %vm1239, %v6414, 0.0
      %v6449 = vsel %vm1240, %v6415, 0.0
      %v6450 = vsel %vm1241, %v6416, 0.0
      %v6451 = vsel %vm1242, %v6417, 0.0
      %v6452 = vsel %vm1243, %v6418, 0.0
      %v6453 = vsel %vm1244, %v6419, 0.0
      %v6454 = vsel %vm1245, %v6420, 0.0
      %v6455 = vsel %vm1246, %v6421, 0.0
      %v6456 = vsel %vm1247, %v6422, 0.0
      %v6457 = vsel %vm1248, %v6423, 0.0
      %v6458 = vsel %vm1249, %v6424, 0.0
      %v6459 = vsel %vm1250, %v6425, 0.0
      %v6460 = vsel %vm1251, %v6426, 0.0
      %v6461 = vsel %vm1252, %v6427, 0.0
      %v6462 = vsel %vm1253, %v6428, 0.0
      %v6463 = vsel %vm1254, %v6429, 0.0
      %v6464 = vsel %vm1255, %v6430, 0.0
      %v6465 = vsel %vm1256, %v6431, 0.0
      %v6466 = vsel %vm1257, %v6432, 0.0
      %v6467 = vsel %vm1258, %v6433, 0.0
      %v6468 = vsel %vm1259, %v6434, 0.0
      %v6469 = vsel %vm1260, %v6435, 0.0
      %v6470 = vsel %vm1261, %v6436, 0.0
      %v6471 = vsel %vm1326, %v6409, 0.0
      %v6472 = vsel %vm1327, %v6410, 0.0
      %v6473 = vsel %vm1328, %v6411, 0.0
      %v6474 = vsel %vm1329, %v6412, 0.0
      %v6475 = vsel %vm1330, %v6413, 0.0
      %v6476 = vsel %vm1331, %v6414, 0.0
      %v6477 = vsel %vm1332, %v6415, 0.0
      %v6478 = vsel %vm1333, %v6416, 0.0
      %v6479 = vsel %vm1334, %v6417, 0.0
      %v6480 = vsel %vm1335, %v6418, 0.0
      %v6481 = vsel %vm1336, %v6419, 0.0
      %v6482 = vsel %vm1337, %v6420, 0.0
      %v6483 = vsel %vm1338, %v6421, 0.0
      %v6484 = vsel %vm1339, %v6422, 0.0
      %v6485 = vsel %vm1340, %v6423, 0.0
      %v6486 = vsel %vm1341, %v6424, 0.0
      %v6487 = vsel %vm1342, %v6425, 0.0
      %v6488 = vsel %vm1343, %v6426, 0.0
      %v6489 = vsel %vm1344, %v6427, 0.0
      %v6490 = vsel %vm1345, %v6428, 0.0
      %v6491 = vsel %vm1346, %v6429, 0.0
      %v6492 = vsel %vm1347, %v6430, 0.0
      %v6493 = vsel %vm1348, %v6431, 0.0
      %v6494 = vsel %vm1349, %v6432, 0.0
      %v6495 = vsel %vm1350, %v6433, 0.0
      %v6496 = vsel %vm1351, %v6434, 0.0
      %v6497 = vsel %vm1352, %v6435, 0.0
      %v6498 = vsel %vm1353, %v6436, 0.0
      %v6499 = vsel %vm1354, %v6437, 0.0
      %v6500 = vsel %vm1355, %v6438, 0.0
      %v6501 = vsel %vm1356, %v6407, 0.0
      %v6502 = vsel %vm1357, %v6408, 0.0
      %v6503 = vrot.slane %v6439, 7
      %v6504 = vrot.slane %v6440, 7
      %v6505 = vrot.slane %v6441, 7
      %v6506 = vrot.slane %v6442, 7
      %v6507 = vrot.slane %v6443, 7
      %v6508 = vrot.slane %v6444, 7
      %v6509 = vrot.slane %v6445, 7
      %v6510 = vrot.slane %v6446, 7
      %v6511 = vrot.slane %v6447, 7
      %v6512 = vrot.slane %v6448, 7
      %v6513 = vrot.slane %v6449, 7
      %v6514 = vrot.slane %v6450, 7
      %v6515 = vrot.slane %v6451, 7
      %v6516 = vrot.slane %v6452, 7
      %v6517 = vrot.slane %v6453, 7
      %v6518 = vrot.slane %v6454, 7
      %v6519 = vrot.slane %v6455, 7
      %v6520 = vrot.slane %v6456, 7
      %v6521 = vrot.slane %v6457, 7
      %v6522 = vrot.slane %v6458, 7
      %v6523 = vrot.slane %v6459, 7
      %v6524 = vrot.slane %v6460, 7
      %v6525 = vrot.slane %v6461, 7
      %v6526 = vrot.slane %v6462, 7
      %v6527 = vrot.slane %v6463, 7
      %v6528 = vrot.slane %v6464, 7
      %v6529 = vrot.slane %v6465, 7
      %v6530 = vrot.slane %v6466, 7
      %v6531 = vrot.slane %v6467, 7
      %v6532 = vrot.slane %v6468, 7
      %v6533 = vrot.slane %v6469, 7
      %v6534 = vrot.slane %v6470, 7
      %v6535 = vsel %vm1422, %v6533, %v6534
      %v6536 = vsel %vm1422, %v6532, %v6533
      %v6537 = vsel %vm1422, %v6531, %v6532
      %v6538 = vsel %vm1422, %v6530, %v6531
      %v6539 = vsel %vm1422, %v6529, %v6530
      %v6540 = vsel %vm1422, %v6528, %v6529
      %v6541 = vsel %vm1422, %v6527, %v6528
      %v6542 = vsel %vm1422, %v6526, %v6527
      %v6543 = vsel %vm1422, %v6525, %v6526
      %v6544 = vsel %vm1422, %v6524, %v6525
      %v6545 = vsel %vm1422, %v6523, %v6524
      %v6546 = vsel %vm1422, %v6522, %v6523
      %v6547 = vsel %vm1422, %v6521, %v6522
      %v6548 = vsel %vm1422, %v6520, %v6521
      %v6549 = vsel %vm1422, %v6519, %v6520
      %v6550 = vsel %vm1422, %v6518, %v6519
      %v6551 = vsel %vm1422, %v6517, %v6518
      %v6552 = vsel %vm1422, %v6516, %v6517
      %v6553 = vsel %vm1422, %v6515, %v6516
      %v6554 = vsel %vm1422, %v6514, %v6515
      %v6555 = vsel %vm1422, %v6513, %v6514
      %v6556 = vsel %vm1422, %v6512, %v6513
      %v6557 = vsel %vm1422, %v6511, %v6512
      %v6558 = vsel %vm1422, %v6510, %v6511
      %v6559 = vsel %vm1422, %v6509, %v6510
      %v6560 = vsel %vm1422, %v6508, %v6509
      %v6561 = vsel %vm1422, %v6507, %v6508
      %v6562 = vsel %vm1422, %v6506, %v6507
      %v6563 = vsel %vm1422, %v6505, %v6506
      %v6564 = vsel %vm1422, %v6504, %v6505
      %v6565 = vsel %vm1422, %v6503, %v6504
      %v6566 = vsel %vm1422, %v6534, %v6503
      %v6567 = vsel %vm1487, %v6566, 0.0
      %v6568 = vsel %vm1488, %v6565, 0.0
      %v6569 = vsel %vm1489, %v6564, 0.0
      %v6570 = vsel %vm1490, %v6563, 0.0
      %v6571 = vsel %vm1491, %v6562, 0.0
      %v6572 = vsel %vm1492, %v6561, 0.0
      %v6573 = vsel %vm1493, %v6560, 0.0
      %v6574 = vsel %vm1494, %v6559, 0.0
      %v6575 = vsel %vm1495, %v6558, 0.0
      %v6576 = vsel %vm1496, %v6557, 0.0
      %v6577 = vsel %vm1497, %v6556, 0.0
      %v6578 = vsel %vm1498, %v6555, 0.0
      %v6579 = vsel %vm1499, %v6554, 0.0
      %v6580 = vsel %vm1500, %v6553, 0.0
      %v6581 = vsel %vm1501, %v6552, 0.0
      %v6582 = vsel %vm1502, %v6551, 0.0
      %v6583 = vsel %vm1503, %v6550, 0.0
      %v6584 = vsel %vm1504, %v6549, 0.0
      %v6585 = vsel %vm1505, %v6548, 0.0
      %v6586 = vsel %vm1506, %v6547, 0.0
      %v6587 = vsel %vm1507, %v6546, 0.0
      %v6588 = vsel %vm1508, %v6545, 0.0
      %v6589 = vsel %vm1509, %v6544, 0.0
      %v6590 = vsel %vm1510, %v6543, 0.0
      %v6591 = vsel %vm1511, %v6542, 0.0
      %v6592 = vsel %vm1512, %v6541, 0.0
      %v6593 = vsel %vm1513, %v6540, 0.0
      %v6594 = vsel %vm1514, %v6539, 0.0
      %v6595 = vsel %vm1515, %v6538, 0.0
      %v6596 = vsel %vm1516, %v6537, 0.0
      %v6597 = vsel %vm1517, %v6536, 0.0
      %v6598 = vsel %vm1518, %v6535, 0.0
      %v6599 = vrot.slane %v6439, 1
      %v6600 = vrot.slane %v6440, 1
      %v6601 = vrot.slane %v6441, 1
      %v6602 = vrot.slane %v6442, 1
      %v6603 = vrot.slane %v6443, 1
      %v6604 = vrot.slane %v6444, 1
      %v6605 = vrot.slane %v6445, 1
      %v6606 = vrot.slane %v6446, 1
      %v6607 = vrot.slane %v6447, 1
      %v6608 = vrot.slane %v6448, 1
      %v6609 = vrot.slane %v6449, 1
      %v6610 = vrot.slane %v6450, 1
      %v6611 = vrot.slane %v6451, 1
      %v6612 = vrot.slane %v6452, 1
      %v6613 = vrot.slane %v6453, 1
      %v6614 = vrot.slane %v6454, 1
      %v6615 = vrot.slane %v6455, 1
      %v6616 = vrot.slane %v6456, 1
      %v6617 = vrot.slane %v6457, 1
      %v6618 = vrot.slane %v6458, 1
      %v6619 = vrot.slane %v6459, 1
      %v6620 = vrot.slane %v6460, 1
      %v6621 = vrot.slane %v6461, 1
      %v6622 = vrot.slane %v6462, 1
      %v6623 = vrot.slane %v6463, 1
      %v6624 = vrot.slane %v6464, 1
      %v6625 = vrot.slane %v6465, 1
      %v6626 = vrot.slane %v6466, 1
      %v6627 = vrot.slane %v6467, 1
      %v6628 = vrot.slane %v6468, 1
      %v6629 = vrot.slane %v6469, 1
      %v6630 = vrot.slane %v6470, 1
      %v6631 = vsel %vm1583, %v6629, %v6630
      %v6632 = vsel %vm1583, %v6628, %v6629
      %v6633 = vsel %vm1583, %v6627, %v6628
      %v6634 = vsel %vm1583, %v6626, %v6627
      %v6635 = vsel %vm1583, %v6625, %v6626
      %v6636 = vsel %vm1583, %v6624, %v6625
      %v6637 = vsel %vm1583, %v6623, %v6624
      %v6638 = vsel %vm1583, %v6622, %v6623
      %v6639 = vsel %vm1583, %v6621, %v6622
      %v6640 = vsel %vm1583, %v6620, %v6621
      %v6641 = vsel %vm1583, %v6619, %v6620
      %v6642 = vsel %vm1583, %v6618, %v6619
      %v6643 = vsel %vm1583, %v6617, %v6618
      %v6644 = vsel %vm1583, %v6616, %v6617
      %v6645 = vsel %vm1583, %v6615, %v6616
      %v6646 = vsel %vm1583, %v6614, %v6615
      %v6647 = vsel %vm1583, %v6613, %v6614
      %v6648 = vsel %vm1583, %v6612, %v6613
      %v6649 = vsel %vm1583, %v6611, %v6612
      %v6650 = vsel %vm1583, %v6610, %v6611
      %v6651 = vsel %vm1583, %v6609, %v6610
      %v6652 = vsel %vm1583, %v6608, %v6609
      %v6653 = vsel %vm1583, %v6607, %v6608
      %v6654 = vsel %vm1583, %v6606, %v6607
      %v6655 = vsel %vm1583, %v6605, %v6606
      %v6656 = vsel %vm1583, %v6604, %v6605
      %v6657 = vsel %vm1583, %v6603, %v6604
      %v6658 = vsel %vm1583, %v6602, %v6603
      %v6659 = vsel %vm1583, %v6601, %v6602
      %v6660 = vsel %vm1583, %v6600, %v6601
      %v6661 = vsel %vm1583, %v6599, %v6600
      %v6662 = vsel %vm1583, %v6630, %v6599
      %v6663 = vsel %vm1648, %v6661, 0.0
      %v6664 = vsel %vm1649, %v6660, 0.0
      %v6665 = vsel %vm1650, %v6659, 0.0
      %v6666 = vsel %vm1651, %v6658, 0.0
      %v6667 = vsel %vm1652, %v6657, 0.0
      %v6668 = vsel %vm1653, %v6656, 0.0
      %v6669 = vsel %vm1654, %v6655, 0.0
      %v6670 = vsel %vm1655, %v6654, 0.0
      %v6671 = vsel %vm1656, %v6653, 0.0
      %v6672 = vsel %vm1657, %v6652, 0.0
      %v6673 = vsel %vm1658, %v6651, 0.0
      %v6674 = vsel %vm1659, %v6650, 0.0
      %v6675 = vsel %vm1660, %v6649, 0.0
      %v6676 = vsel %vm1661, %v6648, 0.0
      %v6677 = vsel %vm1662, %v6647, 0.0
      %v6678 = vsel %vm1663, %v6646, 0.0
      %v6679 = vsel %vm1664, %v6645, 0.0
      %v6680 = vsel %vm1665, %v6644, 0.0
      %v6681 = vsel %vm1666, %v6643, 0.0
      %v6682 = vsel %vm1667, %v6642, 0.0
      %v6683 = vsel %vm1668, %v6641, 0.0
      %v6684 = vsel %vm1669, %v6640, 0.0
      %v6685 = vsel %vm1670, %v6639, 0.0
      %v6686 = vsel %vm1671, %v6638, 0.0
      %v6687 = vsel %vm1672, %v6637, 0.0
      %v6688 = vsel %vm1673, %v6636, 0.0
      %v6689 = vsel %vm1674, %v6635, 0.0
      %v6690 = vsel %vm1675, %v6634, 0.0
      %v6691 = vsel %vm1676, %v6633, 0.0
      %v6692 = vsel %vm1677, %v6632, 0.0
      %v6693 = vsel %vm1678, %v6631, 0.0
      %v6694 = vsel %vm1679, %v6662, 0.0
      %v6695 = vpack.c.bf16 %v6568, %v6567
      %v6696 = vpack.c.bf16 %v6570, %v6569
      %v6697 = vpack.c.bf16 %v6572, %v6571
      %v6698 = vpack.c.bf16 %v6574, %v6573
      %v6699 = vpack.c.bf16 %v6576, %v6575
      %v6700 = vpack.c.bf16 %v6578, %v6577
      %v6701 = vpack.c.bf16 %v6580, %v6579
      %v6702 = vpack.c.bf16 %v6582, %v6581
      %v6703 = vpack.c.bf16 %v6584, %v6583
      %v6704 = vpack.c.bf16 %v6586, %v6585
      %v6705 = vpack.c.bf16 %v6588, %v6587
      %v6706 = vpack.c.bf16 %v6590, %v6589
      %v6707 = vpack.c.bf16 %v6592, %v6591
      %v6708 = vpack.c.bf16 %v6594, %v6593
      %v6709 = vpack.c.bf16 %v6596, %v6595
      %v6710 = vpack.c.bf16 %v6598, %v6597
      %v6711 = vpack.c.bf16 %v6440, %v6439
      %v6712 = vpack.c.bf16 %v6442, %v6441
      %v6713 = vpack.c.bf16 %v6444, %v6443
      %v6714 = vpack.c.bf16 %v6446, %v6445
      %v6715 = vpack.c.bf16 %v6448, %v6447
      %v6716 = vpack.c.bf16 %v6450, %v6449
      %v6717 = vpack.c.bf16 %v6452, %v6451
      %v6718 = vpack.c.bf16 %v6454, %v6453
      %v6719 = vpack.c.bf16 %v6456, %v6455
      %v6720 = vpack.c.bf16 %v6458, %v6457
      %v6721 = vpack.c.bf16 %v6460, %v6459
      %v6722 = vpack.c.bf16 %v6462, %v6461
      %v6723 = vpack.c.bf16 %v6464, %v6463
      %v6724 = vpack.c.bf16 %v6466, %v6465
      %v6725 = vpack.c.bf16 %v6468, %v6467
      %v6726 = vpack.c.bf16 %v6470, %v6469
      %v6727 = vpack.c.bf16 %v6664, %v6663
      %v6728 = vpack.c.bf16 %v6666, %v6665
      %v6729 = vpack.c.bf16 %v6668, %v6667
      %v6730 = vpack.c.bf16 %v6670, %v6669
      %v6731 = vpack.c.bf16 %v6672, %v6671
      %v6732 = vpack.c.bf16 %v6674, %v6673
      %v6733 = vpack.c.bf16 %v6676, %v6675
      %v6734 = vpack.c.bf16 %v6678, %v6677
      %v6735 = vpack.c.bf16 %v6680, %v6679
      %v6736 = vpack.c.bf16 %v6682, %v6681
      %v6737 = vpack.c.bf16 %v6684, %v6683
      %v6738 = vpack.c.bf16 %v6686, %v6685
      %v6739 = vpack.c.bf16 %v6688, %v6687
      %v6740 = vpack.c.bf16 %v6690, %v6689
      %v6741 = vpack.c.bf16 %v6692, %v6691
      %v6742 = vpack.c.bf16 %v6694, %v6693
      %s6743 = scalar_lea.vmem %s2, 1152
      %v6744 = vld [vmem:[%s6743] sm:$0xf]
      %v6745 = vld [vmem:[%s6743 + $0x4] sm:$0xf]
      %v6746 = vld [vmem:[%s6743 + $0x8] sm:$0xf]
      %v6747 = vld [vmem:[%s6743 + $0xc] sm:$0xf]
      %v6748 = vld [vmem:[%s6743 + $0x10] sm:$0xf]
      %v6749 = vld [vmem:[%s6743 + $0x14] sm:$0xf]
      %v6750 = vld [vmem:[%s6743 + $0x18] sm:$0xf]
      %v6751 = vld [vmem:[%s6743 + $0x1c] sm:$0xf]
      %v6752 = vld [vmem:[%s6743 + $0x20] sm:$0xf]
      %v6753 = vld [vmem:[%s6743 + $0x24] sm:$0xf]
      %v6754 = vld [vmem:[%s6743 + $0x28] sm:$0xf]
      %v6755 = vld [vmem:[%s6743 + $0x2c] sm:$0xf]
      %v6756 = vld [vmem:[%s6743 + $0x30] sm:$0xf]
      %v6757 = vld [vmem:[%s6743 + $0x34] sm:$0xf]
      %v6758 = vld [vmem:[%s6743 + $0x38] sm:$0xf]
      %v6759 = vld [vmem:[%s6743 + $0x3c] sm:$0xf]
      %v6760 = vld [vmem:[%s6743 + $0x40] sm:$0xf]
      %v6761 = vld [vmem:[%s6743 + $0x44] sm:$0xf]
      %v6762 = vld [vmem:[%s6743 + $0x48] sm:$0xf]
      %v6763 = vld [vmem:[%s6743 + $0x4c] sm:$0xf]
      %v6764 = vld [vmem:[%s6743 + $0x50] sm:$0xf]
      %v6765 = vld [vmem:[%s6743 + $0x54] sm:$0xf]
      %v6766 = vld [vmem:[%s6743 + $0x58] sm:$0xf]
      %v6767 = vld [vmem:[%s6743 + $0x5c] sm:$0xf]
      %v6768 = vld [vmem:[%s6743 + $0x60] sm:$0xf]
      %v6769 = vld [vmem:[%s6743 + $0x64] sm:$0xf]
      %v6770 = vld [vmem:[%s6743 + $0x68] sm:$0xf]
      %v6771 = vld [vmem:[%s6743 + $0x6c] sm:$0xf]
      %v6772 = vld [vmem:[%s6743 + $0x70] sm:$0xf]
      %v6773 = vld [vmem:[%s6743 + $0x74] sm:$0xf]
      %v6774 = vld [vmem:[%s6743 + $0x78] sm:$0xf]
      %v6775 = vld [vmem:[%s6743 + $0x7c] sm:$0xf]
      %v6776 = vld [vmem:[%s6743 + $0x80] sm:$0xf]
      %v6777 = vld [vmem:[%s6743 + $0x84] sm:$0xf]
      %v6778 = vld [vmem:[%s6743 + $0x88] sm:$0xf]
      %v6779 = vld [vmem:[%s6743 + $0x8c] sm:$0xf]
      %v6780 = vld [vmem:[%s6743 + $0x90] sm:$0xf]
      %v6781 = vld [vmem:[%s6743 + $0x94] sm:$0xf]
      %v6782 = vld [vmem:[%s6743 + $0x98] sm:$0xf]
      %v6783 = vld [vmem:[%s6743 + $0x9c] sm:$0xf]
      %v6784 = vld [vmem:[%s6743 + $0xa0] sm:$0xf]
      %v6785 = vld [vmem:[%s6743 + $0xa4] sm:$0xf]
      %v6786 = vld [vmem:[%s6743 + $0xa8] sm:$0xf]
      %v6787 = vld [vmem:[%s6743 + $0xac] sm:$0xf]
      %v6788 = vld [vmem:[%s6743 + $0xb0] sm:$0xf]
      %v6789 = vld [vmem:[%s6743 + $0xb4] sm:$0xf]
      %v6790 = vld [vmem:[%s6743 + $0xb8] sm:$0xf]
      %v6791 = vld [vmem:[%s6743 + $0xbc] sm:$0xf]
      %v6792 = vrot.slane %v6407, 7
      %v6793 = vrot.slane %v6408, 7
      %v6794 = vrot.slane %v6409, 7
      %v6795 = vrot.slane %v6410, 7
      %v6796 = vrot.slane %v6411, 7
      %v6797 = vrot.slane %v6412, 7
      %v6798 = vrot.slane %v6413, 7
      %v6799 = vrot.slane %v6414, 7
      %v6800 = vrot.slane %v6415, 7
      %v6801 = vrot.slane %v6416, 7
      %v6802 = vrot.slane %v6417, 7
      %v6803 = vrot.slane %v6418, 7
      %v6804 = vrot.slane %v6419, 7
      %v6805 = vrot.slane %v6420, 7
      %v6806 = vrot.slane %v6421, 7
      %v6807 = vrot.slane %v6422, 7
      %v6808 = vrot.slane %v6423, 7
      %v6809 = vrot.slane %v6424, 7
      %v6810 = vrot.slane %v6425, 7
      %v6811 = vrot.slane %v6426, 7
      %v6812 = vrot.slane %v6427, 7
      %v6813 = vrot.slane %v6428, 7
      %v6814 = vrot.slane %v6429, 7
      %v6815 = vrot.slane %v6430, 7
      %v6816 = vrot.slane %v6431, 7
      %v6817 = vrot.slane %v6432, 7
      %v6818 = vrot.slane %v6433, 7
      %v6819 = vrot.slane %v6434, 7
      %v6820 = vrot.slane %v6435, 7
      %v6821 = vrot.slane %v6436, 7
      %v6822 = vrot.slane %v6437, 7
      %v6823 = vrot.slane %v6438, 7
      %v6824 = vsel %vm1422, %v6822, %v6823
      %v6825 = vsel %vm1422, %v6821, %v6822
      %v6826 = vsel %vm1422, %v6820, %v6821
      %v6827 = vsel %vm1422, %v6819, %v6820
      %v6828 = vsel %vm1422, %v6818, %v6819
      %v6829 = vsel %vm1422, %v6817, %v6818
      %v6830 = vsel %vm1422, %v6816, %v6817
      %v6831 = vsel %vm1422, %v6815, %v6816
      %v6832 = vsel %vm1422, %v6814, %v6815
      %v6833 = vsel %vm1422, %v6813, %v6814
      %v6834 = vsel %vm1422, %v6812, %v6813
      %v6835 = vsel %vm1422, %v6811, %v6812
      %v6836 = vsel %vm1422, %v6810, %v6811
      %v6837 = vsel %vm1422, %v6809, %v6810
      %v6838 = vsel %vm1422, %v6808, %v6809
      %v6839 = vsel %vm1422, %v6807, %v6808
      %v6840 = vsel %vm1422, %v6806, %v6807
      %v6841 = vsel %vm1422, %v6805, %v6806
      %v6842 = vsel %vm1422, %v6804, %v6805
      %v6843 = vsel %vm1422, %v6803, %v6804
      %v6844 = vsel %vm1422, %v6802, %v6803
      %v6845 = vsel %vm1422, %v6801, %v6802
      %v6846 = vsel %vm1422, %v6800, %v6801
      %v6847 = vsel %vm1422, %v6799, %v6800
      %v6848 = vsel %vm1422, %v6798, %v6799
      %v6849 = vsel %vm1422, %v6797, %v6798
      %v6850 = vsel %vm1422, %v6796, %v6797
      %v6851 = vsel %vm1422, %v6795, %v6796
      %v6852 = vsel %vm1422, %v6794, %v6795
      %v6853 = vsel %vm1422, %v6793, %v6794
      %v6854 = vsel %vm1422, %v6792, %v6793
      %v6855 = vsel %vm1422, %v6823, %v6792
      %v6856 = vsel %vm1487, %v6855, 0.0
      %v6857 = vsel %vm1488, %v6854, 0.0
      %v6858 = vsel %vm1489, %v6853, 0.0
      %v6859 = vsel %vm1490, %v6852, 0.0
      %v6860 = vsel %vm1491, %v6851, 0.0
      %v6861 = vsel %vm1492, %v6850, 0.0
      %v6862 = vsel %vm1493, %v6849, 0.0
      %v6863 = vsel %vm1494, %v6848, 0.0
      %v6864 = vsel %vm1495, %v6847, 0.0
      %v6865 = vsel %vm1496, %v6846, 0.0
      %v6866 = vsel %vm1497, %v6845, 0.0
      %v6867 = vsel %vm1498, %v6844, 0.0
      %v6868 = vsel %vm1499, %v6843, 0.0
      %v6869 = vsel %vm1500, %v6842, 0.0
      %v6870 = vsel %vm1501, %v6841, 0.0
      %v6871 = vsel %vm1502, %v6840, 0.0
      %v6872 = vsel %vm1503, %v6839, 0.0
      %v6873 = vsel %vm1504, %v6838, 0.0
      %v6874 = vsel %vm1505, %v6837, 0.0
      %v6875 = vsel %vm1506, %v6836, 0.0
      %v6876 = vsel %vm1507, %v6835, 0.0
      %v6877 = vsel %vm1508, %v6834, 0.0
      %v6878 = vsel %vm1509, %v6833, 0.0
      %v6879 = vsel %vm1510, %v6832, 0.0
      %v6880 = vsel %vm1511, %v6831, 0.0
      %v6881 = vsel %vm1512, %v6830, 0.0
      %v6882 = vsel %vm1513, %v6829, 0.0
      %v6883 = vsel %vm1514, %v6828, 0.0
      %v6884 = vsel %vm1515, %v6827, 0.0
      %v6885 = vsel %vm1516, %v6826, 0.0
      %v6886 = vsel %vm1517, %v6825, 0.0
      %v6887 = vsel %vm1518, %v6824, 0.0
      %v6888 = vrot.slane %v6407, 1
      %v6889 = vrot.slane %v6408, 1
      %v6890 = vrot.slane %v6409, 1
      %v6891 = vrot.slane %v6410, 1
      %v6892 = vrot.slane %v6411, 1
      %v6893 = vrot.slane %v6412, 1
      %v6894 = vrot.slane %v6413, 1
      %v6895 = vrot.slane %v6414, 1
      %v6896 = vrot.slane %v6415, 1
      %v6897 = vrot.slane %v6416, 1
      %v6898 = vrot.slane %v6417, 1
      %v6899 = vrot.slane %v6418, 1
      %v6900 = vrot.slane %v6419, 1
      %v6901 = vrot.slane %v6420, 1
      %v6902 = vrot.slane %v6421, 1
      %v6903 = vrot.slane %v6422, 1
      %v6904 = vrot.slane %v6423, 1
      %v6905 = vrot.slane %v6424, 1
      %v6906 = vrot.slane %v6425, 1
      %v6907 = vrot.slane %v6426, 1
      %v6908 = vrot.slane %v6427, 1
      %v6909 = vrot.slane %v6428, 1
      %v6910 = vrot.slane %v6429, 1
      %v6911 = vrot.slane %v6430, 1
      %v6912 = vrot.slane %v6431, 1
      %v6913 = vrot.slane %v6432, 1
      %v6914 = vrot.slane %v6433, 1
      %v6915 = vrot.slane %v6434, 1
      %v6916 = vrot.slane %v6435, 1
      %v6917 = vrot.slane %v6436, 1
      %v6918 = vrot.slane %v6437, 1
      %v6919 = vrot.slane %v6438, 1
      %v6920 = vsel %vm1583, %v6918, %v6919
      %v6921 = vsel %vm1583, %v6917, %v6918
      %v6922 = vsel %vm1583, %v6916, %v6917
      %v6923 = vsel %vm1583, %v6915, %v6916
      %v6924 = vsel %vm1583, %v6914, %v6915
      %v6925 = vsel %vm1583, %v6913, %v6914
      %v6926 = vsel %vm1583, %v6912, %v6913
      %v6927 = vsel %vm1583, %v6911, %v6912
      %v6928 = vsel %vm1583, %v6910, %v6911
      %v6929 = vsel %vm1583, %v6909, %v6910
      %v6930 = vsel %vm1583, %v6908, %v6909
      %v6931 = vsel %vm1583, %v6907, %v6908
      %v6932 = vsel %vm1583, %v6906, %v6907
      %v6933 = vsel %vm1583, %v6905, %v6906
      %v6934 = vsel %vm1583, %v6904, %v6905
      %v6935 = vsel %vm1583, %v6903, %v6904
      %v6936 = vsel %vm1583, %v6902, %v6903
      %v6937 = vsel %vm1583, %v6901, %v6902
      %v6938 = vsel %vm1583, %v6900, %v6901
      %v6939 = vsel %vm1583, %v6899, %v6900
      %v6940 = vsel %vm1583, %v6898, %v6899
      %v6941 = vsel %vm1583, %v6897, %v6898
      %v6942 = vsel %vm1583, %v6896, %v6897
      %v6943 = vsel %vm1583, %v6895, %v6896
      %v6944 = vsel %vm1583, %v6894, %v6895
      %v6945 = vsel %vm1583, %v6893, %v6894
      %v6946 = vsel %vm1583, %v6892, %v6893
      %v6947 = vsel %vm1583, %v6891, %v6892
      %v6948 = vsel %vm1583, %v6890, %v6891
      %v6949 = vsel %vm1583, %v6889, %v6890
      %v6950 = vsel %vm1583, %v6888, %v6889
      %v6951 = vsel %vm1583, %v6919, %v6888
      %v6952 = vsel %vm1648, %v6950, 0.0
      %v6953 = vsel %vm1649, %v6949, 0.0
      %v6954 = vsel %vm1650, %v6948, 0.0
      %v6955 = vsel %vm1651, %v6947, 0.0
      %v6956 = vsel %vm1652, %v6946, 0.0
      %v6957 = vsel %vm1653, %v6945, 0.0
      %v6958 = vsel %vm1654, %v6944, 0.0
      %v6959 = vsel %vm1655, %v6943, 0.0
      %v6960 = vsel %vm1656, %v6942, 0.0
      %v6961 = vsel %vm1657, %v6941, 0.0
      %v6962 = vsel %vm1658, %v6940, 0.0
      %v6963 = vsel %vm1659, %v6939, 0.0
      %v6964 = vsel %vm1660, %v6938, 0.0
      %v6965 = vsel %vm1661, %v6937, 0.0
      %v6966 = vsel %vm1662, %v6936, 0.0
      %v6967 = vsel %vm1663, %v6935, 0.0
      %v6968 = vsel %vm1664, %v6934, 0.0
      %v6969 = vsel %vm1665, %v6933, 0.0
      %v6970 = vsel %vm1666, %v6932, 0.0
      %v6971 = vsel %vm1667, %v6931, 0.0
      %v6972 = vsel %vm1668, %v6930, 0.0
      %v6973 = vsel %vm1669, %v6929, 0.0
      %v6974 = vsel %vm1670, %v6928, 0.0
      %v6975 = vsel %vm1671, %v6927, 0.0
      %v6976 = vsel %vm1672, %v6926, 0.0
      %v6977 = vsel %vm1673, %v6925, 0.0
      %v6978 = vsel %vm1674, %v6924, 0.0
      %v6979 = vsel %vm1675, %v6923, 0.0
      %v6980 = vsel %vm1676, %v6922, 0.0
      %v6981 = vsel %vm1677, %v6921, 0.0
      %v6982 = vsel %vm1678, %v6920, 0.0
      %v6983 = vsel %vm1679, %v6951, 0.0
      %v6984 = vpack.c.bf16 %v6857, %v6856
      %v6985 = vpack.c.bf16 %v6859, %v6858
      %v6986 = vpack.c.bf16 %v6861, %v6860
      %v6987 = vpack.c.bf16 %v6863, %v6862
      %v6988 = vpack.c.bf16 %v6865, %v6864
      %v6989 = vpack.c.bf16 %v6867, %v6866
      %v6990 = vpack.c.bf16 %v6869, %v6868
      %v6991 = vpack.c.bf16 %v6871, %v6870
      %v6992 = vpack.c.bf16 %v6873, %v6872
      %v6993 = vpack.c.bf16 %v6875, %v6874
      %v6994 = vpack.c.bf16 %v6877, %v6876
      %v6995 = vpack.c.bf16 %v6879, %v6878
      %v6996 = vpack.c.bf16 %v6881, %v6880
      %v6997 = vpack.c.bf16 %v6883, %v6882
      %v6998 = vpack.c.bf16 %v6885, %v6884
      %v6999 = vpack.c.bf16 %v6887, %v6886
      %v7000 = vpack.c.bf16 %v6408, %v6407
      %v7001 = vpack.c.bf16 %v6410, %v6409
      %v7002 = vpack.c.bf16 %v6412, %v6411
      %v7003 = vpack.c.bf16 %v6414, %v6413
      %v7004 = vpack.c.bf16 %v6416, %v6415
      %v7005 = vpack.c.bf16 %v6418, %v6417
      %v7006 = vpack.c.bf16 %v6420, %v6419
      %v7007 = vpack.c.bf16 %v6422, %v6421
      %v7008 = vpack.c.bf16 %v6424, %v6423
      %v7009 = vpack.c.bf16 %v6426, %v6425
      %v7010 = vpack.c.bf16 %v6428, %v6427
      %v7011 = vpack.c.bf16 %v6430, %v6429
      %v7012 = vpack.c.bf16 %v6432, %v6431
      %v7013 = vpack.c.bf16 %v6434, %v6433
      %v7014 = vpack.c.bf16 %v6436, %v6435
      %v7015 = vpack.c.bf16 %v6438, %v6437
      %v7016 = vpack.c.bf16 %v6953, %v6952
      %v7017 = vpack.c.bf16 %v6955, %v6954
      %v7018 = vpack.c.bf16 %v6957, %v6956
      %v7019 = vpack.c.bf16 %v6959, %v6958
      %v7020 = vpack.c.bf16 %v6961, %v6960
      %v7021 = vpack.c.bf16 %v6963, %v6962
      %v7022 = vpack.c.bf16 %v6965, %v6964
      %v7023 = vpack.c.bf16 %v6967, %v6966
      %v7024 = vpack.c.bf16 %v6969, %v6968
      %v7025 = vpack.c.bf16 %v6971, %v6970
      %v7026 = vpack.c.bf16 %v6973, %v6972
      %v7027 = vpack.c.bf16 %v6975, %v6974
      %v7028 = vpack.c.bf16 %v6977, %v6976
      %v7029 = vpack.c.bf16 %v6979, %v6978
      %v7030 = vpack.c.bf16 %v6981, %v6980
      %v7031 = vpack.c.bf16 %v6983, %v6982
      %v7032 = vld [vmem:[%s6743 + $0xc0] sm:$0xf]
      %v7033 = vld [vmem:[%s6743 + $0xc4] sm:$0xf]
      %v7034 = vld [vmem:[%s6743 + $0xc8] sm:$0xf]
      %v7035 = vld [vmem:[%s6743 + $0xcc] sm:$0xf]
      %v7036 = vld [vmem:[%s6743 + $0xd0] sm:$0xf]
      %v7037 = vld [vmem:[%s6743 + $0xd4] sm:$0xf]
      %v7038 = vld [vmem:[%s6743 + $0xd8] sm:$0xf]
      %v7039 = vld [vmem:[%s6743 + $0xdc] sm:$0xf]
      %v7040 = vld [vmem:[%s6743 + $0xe0] sm:$0xf]
      %v7041 = vld [vmem:[%s6743 + $0xe4] sm:$0xf]
      %v7042 = vld [vmem:[%s6743 + $0xe8] sm:$0xf]
      %v7043 = vld [vmem:[%s6743 + $0xec] sm:$0xf]
      %v7044 = vld [vmem:[%s6743 + $0xf0] sm:$0xf]
      %v7045 = vld [vmem:[%s6743 + $0xf4] sm:$0xf]
      %v7046 = vld [vmem:[%s6743 + $0xf8] sm:$0xf]
      %v7047 = vld [vmem:[%s6743 + $0xfc] sm:$0xf]
      %v7048 = vld [vmem:[%s6743 + $0x100] sm:$0xf]
      %v7049 = vld [vmem:[%s6743 + $0x104] sm:$0xf]
      %v7050 = vld [vmem:[%s6743 + $0x108] sm:$0xf]
      %v7051 = vld [vmem:[%s6743 + $0x10c] sm:$0xf]
      %v7052 = vld [vmem:[%s6743 + $0x110] sm:$0xf]
      %v7053 = vld [vmem:[%s6743 + $0x114] sm:$0xf]
      %v7054 = vld [vmem:[%s6743 + $0x118] sm:$0xf]
      %v7055 = vld [vmem:[%s6743 + $0x11c] sm:$0xf]
      %v7056 = vld [vmem:[%s6743 + $0x120] sm:$0xf]
      %v7057 = vld [vmem:[%s6743 + $0x124] sm:$0xf]
      %v7058 = vld [vmem:[%s6743 + $0x128] sm:$0xf]
      %v7059 = vld [vmem:[%s6743 + $0x12c] sm:$0xf]
      %v7060 = vld [vmem:[%s6743 + $0x130] sm:$0xf]
      %v7061 = vld [vmem:[%s6743 + $0x134] sm:$0xf]
      %v7062 = vld [vmem:[%s6743 + $0x138] sm:$0xf]
      %v7063 = vld [vmem:[%s6743 + $0x13c] sm:$0xf]
      %v7064 = vld [vmem:[%s6743 + $0x140] sm:$0xf]
      %v7065 = vld [vmem:[%s6743 + $0x144] sm:$0xf]
      %v7066 = vld [vmem:[%s6743 + $0x148] sm:$0xf]
      %v7067 = vld [vmem:[%s6743 + $0x14c] sm:$0xf]
      %v7068 = vld [vmem:[%s6743 + $0x150] sm:$0xf]
      %v7069 = vld [vmem:[%s6743 + $0x154] sm:$0xf]
      %v7070 = vld [vmem:[%s6743 + $0x158] sm:$0xf]
      %v7071 = vld [vmem:[%s6743 + $0x15c] sm:$0xf]
      %v7072 = vld [vmem:[%s6743 + $0x160] sm:$0xf]
      %v7073 = vld [vmem:[%s6743 + $0x164] sm:$0xf]
      %v7074 = vld [vmem:[%s6743 + $0x168] sm:$0xf]
      %v7075 = vld [vmem:[%s6743 + $0x16c] sm:$0xf]
      %v7076 = vld [vmem:[%s6743 + $0x170] sm:$0xf]
      %v7077 = vld [vmem:[%s6743 + $0x174] sm:$0xf]
      %v7078 = vld [vmem:[%s6743 + $0x178] sm:$0xf]
      %v7079 = vld [vmem:[%s6743 + $0x17c] sm:$0xf]
      %v7128 = vunpack.c.l.b16 %v7032
      %v7129 = vunpack.c.l.b16 %v7033
      %v7130 = vunpack.c.l.b16 %v7034
      %v7131 = vunpack.c.l.b16 %v7035
      %v7132 = vunpack.c.l.b16 %v7036
      %v7133 = vunpack.c.l.b16 %v7037
      %v7134 = vunpack.c.l.b16 %v7038
      %v7135 = vunpack.c.l.b16 %v7039
      %v7136 = vunpack.c.l.b16 %v7040
      %v7137 = vunpack.c.l.b16 %v7041
      %v7138 = vunpack.c.l.b16 %v7042
      %v7139 = vunpack.c.l.b16 %v7043
      %v7140 = vunpack.c.l.b16 %v7044
      %v7141 = vunpack.c.l.b16 %v7045
      %v7142 = vunpack.c.l.b16 %v7046
      %v7143 = vunpack.c.l.b16 %v7047
      %v7144 = vunpack.c.l.b16 %v7048
      %v7145 = vunpack.c.l.b16 %v7049
      %v7146 = vunpack.c.l.b16 %v7050
      %v7147 = vunpack.c.l.b16 %v7051
      %v7148 = vunpack.c.l.b16 %v7052
      %v7149 = vunpack.c.l.b16 %v7053
      %v7150 = vunpack.c.l.b16 %v7054
      %v7151 = vunpack.c.l.b16 %v7055
      %v7152 = vunpack.c.l.b16 %v7056
      %v7153 = vunpack.c.l.b16 %v7057
      %v7154 = vunpack.c.l.b16 %v7058
      %v7155 = vunpack.c.l.b16 %v7059
      %v7156 = vunpack.c.l.b16 %v7060
      %v7157 = vunpack.c.l.b16 %v7061
      %v7158 = vunpack.c.l.b16 %v7062
      %v7159 = vunpack.c.l.b16 %v7063
      %v7160 = vunpack.c.l.b16 %v7064
      %v7161 = vunpack.c.l.b16 %v7065
      %v7162 = vunpack.c.l.b16 %v7066
      %v7163 = vunpack.c.l.b16 %v7067
      %v7164 = vunpack.c.l.b16 %v7068
      %v7165 = vunpack.c.l.b16 %v7069
      %v7166 = vunpack.c.l.b16 %v7070
      %v7167 = vunpack.c.l.b16 %v7071
      %v7168 = vunpack.c.l.b16 %v7072
      %v7169 = vunpack.c.l.b16 %v7073
      %v7170 = vunpack.c.l.b16 %v7074
      %v7171 = vunpack.c.l.b16 %v7075
      %v7172 = vunpack.c.l.b16 %v7076
      %v7173 = vunpack.c.l.b16 %v7077
      %v7174 = vunpack.c.l.b16 %v7078
      %v7175 = vunpack.c.l.b16 %v7079
      %v7176 = vpack.c.b16 %v7129, %v7128
      %v7177 = vpack.c.b16 %v7131, %v7130
      %v7178 = vpack.c.b16 %v7133, %v7132
      %v7179 = vpack.c.b16 %v7135, %v7134
      %v7180 = vpack.c.b16 %v7137, %v7136
      %v7181 = vpack.c.b16 %v7139, %v7138
      %v7182 = vpack.c.b16 %v7141, %v7140
      %v7183 = vpack.c.b16 %v7143, %v7142
      %v7184 = vpack.c.b16 %v7145, %v7144
      %v7185 = vpack.c.b16 %v7147, %v7146
      %v7186 = vpack.c.b16 %v7149, %v7148
      %v7187 = vpack.c.b16 %v7151, %v7150
      %v7188 = vpack.c.b16 %v7153, %v7152
      %v7189 = vpack.c.b16 %v7155, %v7154
      %v7190 = vpack.c.b16 %v7157, %v7156
      %v7191 = vpack.c.b16 %v7159, %v7158
      %v7192 = vpack.c.b16 %v7161, %v7160
      %v7193 = vpack.c.b16 %v7163, %v7162
      %v7194 = vpack.c.b16 %v7165, %v7164
      %v7195 = vpack.c.b16 %v7167, %v7166
      %v7196 = vpack.c.b16 %v7169, %v7168
      %v7197 = vpack.c.b16 %v7171, %v7170
      %v7198 = vpack.c.b16 %v7173, %v7172
      %v7199 = vpack.c.b16 %v7175, %v7174
      %7224 = vmatprep.subr.bf16.mxu0 0
      %7225 = vmatpush1.bf16.msra.mxu0 %v7176
      %7226 = vmatprep.subr.bf16.mxu0 0
      %7227 = vmatpush1.bf16.msra.mxu0 %v7177
      %7228 = vmatprep.subr.bf16.mxu0 0
      %7229 = vmatpush1.bf16.msra.mxu0 %v7178
      %7230 = vmatprep.subr.bf16.mxu0 0
      %7231 = vmatpush1.bf16.msra.mxu0 %v7179
      %7232 = vmatprep.subr.bf16.mxu0 0
      %7233 = vmatpush1.bf16.msra.mxu0 %v7180
      %7234 = vmatprep.subr.bf16.mxu0 0
      %7235 = vmatpush1.bf16.msra.mxu0 %v7181
      %7236 = vmatprep.subr.bf16.mxu0 0
      %7237 = vmatpush1.bf16.msra.mxu0 %v7182
      %7238 = vmatprep.subr.bf16.mxu0 0
      %7239 = vmatpush1.bf16.msra.mxu0 %v7183
      %7240 = vmatprep.subr.bf16.mxu0 0
      %7241 = vmatpush1.bf16.msra.mxu0 %v7184
      %7242 = vmatprep.subr.bf16.mxu0 0
      %7243 = vmatpush1.bf16.msra.mxu0 %v7185
      %7244 = vmatprep.subr.bf16.mxu0 0
      %7245 = vmatpush1.bf16.msra.mxu0 %v7186
      %7246 = vmatprep.subr.bf16.mxu0 0
      %7247 = vmatpush1.bf16.msra.mxu0 %v7187
      %7248 = vmatprep.subr.bf16.mxu0 0
      %7249 = vmatpush1.bf16.msra.mxu0 %v7188
      %7250 = vmatprep.subr.bf16.mxu0 0
      %7251 = vmatpush1.bf16.msra.mxu0 %v7189
      %7252 = vmatprep.subr.bf16.mxu0 0
      %7253 = vmatpush1.bf16.msra.mxu0 %v7190
      %7254 = vmatprep.subr.bf16.mxu0 0
      %7255 = vmatpush1.bf16.msra.mxu0 %v7191
      %7256 = vmatprep.mubr.bf16.mxu0 %v7000
      %7257 = vmatmul.mubr.bf16.gmra.mrb[0].mxu0 %v6984
      %v7258 = vpop.f32.mrb[0].mxu0
      %v7259 = vadd.f32 0.0, %v7258
      %v7260 = vpop.f32.mrb[0].mxu0
      %v7261 = vpop.f32.mrb[0].mxu0
      %v7262 = vadd.f32 0.0, %v7261
      %v7263 = vpop.f32.mrb[0].mxu0
      %7264 = vmatprep.mubr.bf16.mxu0 %v7001
      %7265 = vmatmul.mubr.bf16.gmra.mrb[0].mxu0 %v6985
      %v7266 = vpop.f32.mrb[0].mxu0
      %v7267 = vadd.f32 0.0, %v7266
      %v7268 = vpop.f32.mrb[0].mxu0
      %v7269 = vpop.f32.mrb[0].mxu0
      %v7270 = vadd.f32 0.0, %v7269
      %v7271 = vpop.f32.mrb[0].mxu0
      %7272 = vmatprep.mubr.bf16.mxu0 %v7002
      %7273 = vmatmul.mubr.bf16.gmra.mrb[0].mxu0 %v6986
      %v7274 = vpop.f32.mrb[0].mxu0
      %v7275 = vadd.f32 0.0, %v7274
      %v7276 = vpop.f32.mrb[0].mxu0
      %v7277 = vpop.f32.mrb[0].mxu0
      %v7278 = vadd.f32 0.0, %v7277
      %v7279 = vpop.f32.mrb[0].mxu0
      %7280 = vmatprep.mubr.bf16.mxu0 %v7003
      %7281 = vmatmul.mubr.bf16.gmra.mrb[0].mxu0 %v6987
      %v7282 = vpop.f32.mrb[0].mxu0
      %v7283 = vadd.f32 0.0, %v7282
      %v7284 = vpop.f32.mrb[0].mxu0
      %v7285 = vpop.f32.mrb[0].mxu0
      %v7286 = vadd.f32 0.0, %v7285
      %v7287 = vpop.f32.mrb[0].mxu0
      %7288 = vmatprep.mubr.bf16.mxu0 %v7004
      %7289 = vmatmul.mubr.bf16.gmra.mrb[0].mxu0 %v6988
      %v7290 = vpop.f32.mrb[0].mxu0
      %v7291 = vadd.f32 0.0, %v7290
      %v7292 = vpop.f32.mrb[0].mxu0
      %v7293 = vpop.f32.mrb[0].mxu0
      %v7294 = vadd.f32 0.0, %v7293
      %v7295 = vpop.f32.mrb[0].mxu0
      %7296 = vmatprep.mubr.bf16.mxu0 %v7005
      %7297 = vmatmul.mubr.bf16.gmra.mrb[0].mxu0 %v6989
      %v7298 = vpop.f32.mrb[0].mxu0
      %v7299 = vadd.f32 0.0, %v7298
      %v7300 = vpop.f32.mrb[0].mxu0
      %v7301 = vpop.f32.mrb[0].mxu0
      %v7302 = vadd.f32 0.0, %v7301
      %v7303 = vpop.f32.mrb[0].mxu0
      %7304 = vmatprep.mubr.bf16.mxu0 %v7006
      %7305 = vmatmul.mubr.bf16.gmra.mrb[0].mxu0 %v6990
      %v7306 = vpop.f32.mrb[0].mxu0
      %v7307 = vadd.f32 0.0, %v7306
      %v7308 = vpop.f32.mrb[0].mxu0
      %v7309 = vpop.f32.mrb[0].mxu0
      %v7310 = vadd.f32 0.0, %v7309
      %v7311 = vpop.f32.mrb[0].mxu0
      %7312 = vmatprep.mubr.bf16.mxu0 %v7007
      %7313 = vmatmul.mubr.bf16.gmra.mrb[0].mxu0 %v6991
      %v7314 = vpop.f32.mrb[0].mxu0
      %v7315 = vadd.f32 0.0, %v7314
      %v7316 = vpop.f32.mrb[0].mxu0
      %v7317 = vpop.f32.mrb[0].mxu0
      %v7318 = vadd.f32 0.0, %v7317
      %v7319 = vpop.f32.mrb[0].mxu0
      %7320 = vmatprep.mubr.bf16.mxu0 %v7008
      %7321 = vmatmul.mubr.bf16.gmra.mrb[0].mxu0 %v6992
      %v7322 = vpop.f32.mrb[0].mxu0
      %v7323 = vadd.f32 0.0, %v7322
      %v7324 = vpop.f32.mrb[0].mxu0
      %v7325 = vpop.f32.mrb[0].mxu0
      %v7326 = vadd.f32 0.0, %v7325
      %v7327 = vpop.f32.mrb[0].mxu0
      %7328 = vmatprep.mubr.bf16.mxu0 %v7009
      %7329 = vmatmul.mubr.bf16.gmra.mrb[0].mxu0 %v6993
      %v7330 = vpop.f32.mrb[0].mxu0
      %v7331 = vadd.f32 0.0, %v7330
      %v7332 = vpop.f32.mrb[0].mxu0
      %v7333 = vpop.f32.mrb[0].mxu0
      %v7334 = vadd.f32 0.0, %v7333
      %v7335 = vpop.f32.mrb[0].mxu0
      %7336 = vmatprep.mubr.bf16.mxu0 %v7010
      %7337 = vmatmul.mubr.bf16.gmra.mrb[0].mxu0 %v6994
      %v7338 = vpop.f32.mrb[0].mxu0
      %v7339 = vadd.f32 0.0, %v7338
      %v7340 = vpop.f32.mrb[0].mxu0
      %v7341 = vpop.f32.mrb[0].mxu0
      %v7342 = vadd.f32 0.0, %v7341
      %v7343 = vpop.f32.mrb[0].mxu0
      %7344 = vmatprep.mubr.bf16.mxu0 %v7011
      %7345 = vmatmul.mubr.bf16.gmra.mrb[0].mxu0 %v6995
      %v7346 = vpop.f32.mrb[0].mxu0
      %v7347 = vadd.f32 0.0, %v7346
      %v7348 = vpop.f32.mrb[0].mxu0
      %v7349 = vpop.f32.mrb[0].mxu0
      %v7350 = vadd.f32 0.0, %v7349
      %v7351 = vpop.f32.mrb[0].mxu0
      %7352 = vmatprep.mubr.bf16.mxu0 %v7012
      %7353 = vmatmul.mubr.bf16.gmra.mrb[0].mxu0 %v6996
      %v7354 = vpop.f32.mrb[0].mxu0
      %v7355 = vadd.f32 0.0, %v7354
      %v7356 = vpop.f32.mrb[0].mxu0
      %v7357 = vpop.f32.mrb[0].mxu0
      %v7358 = vadd.f32 0.0, %v7357
      %v7359 = vpop.f32.mrb[0].mxu0
      %7360 = vmatprep.mubr.bf16.mxu0 %v7013
      %7361 = vmatmul.mubr.bf16.gmra.mrb[0].mxu0 %v6997
      %v7362 = vpop.f32.mrb[0].mxu0
      %v7363 = vadd.f32 0.0, %v7362
      %v7364 = vpop.f32.mrb[0].mxu0
      %v7365 = vpop.f32.mrb[0].mxu0
      %v7366 = vadd.f32 0.0, %v7365
      %v7367 = vpop.f32.mrb[0].mxu0
      %7368 = vmatprep.mubr.bf16.mxu0 %v7014
      %7369 = vmatmul.mubr.bf16.gmra.mrb[0].mxu0 %v6998
      %v7370 = vpop.f32.mrb[0].mxu0
      %v7371 = vadd.f32 0.0, %v7370
      %v7372 = vpop.f32.mrb[0].mxu0
      %v7373 = vpop.f32.mrb[0].mxu0
      %v7374 = vadd.f32 0.0, %v7373
      %v7375 = vpop.f32.mrb[0].mxu0
      %7376 = vmatprep.mubr.bf16.mxu0 %v7015
      %7377 = vmatmul.mubr.bf16.gmra.mrb[0].mxu0 %v6999
      %v7378 = vpop.f32.mrb[0].mxu0
      %v7379 = vadd.f32 0.0, %v7378
      %v7380 = vpop.f32.mrb[0].mxu0
      %v7381 = vpop.f32.mrb[0].mxu0
      %v7382 = vadd.f32 0.0, %v7381
      %v7383 = vpop.f32.mrb[0].mxu0
      %7384 = vdwg.mxu0
      %7385 = vmatprep.subr.bf16.mxu0 0
      %7386 = vmatpush1.bf16.msra.mxu0 %v7192
      %7387 = vmatprep.subr.bf16.mxu0 0
      %7388 = vmatpush1.bf16.msra.mxu0 %v7193
      %7389 = vmatprep.subr.bf16.mxu0 0
      %7390 = vmatpush1.bf16.msra.mxu0 %v7194
      %7391 = vmatprep.subr.bf16.mxu0 0
      %7392 = vmatpush1.bf16.msra.mxu0 %v7195
      %7393 = vmatprep.subr.bf16.mxu0 0
      %7394 = vmatpush1.bf16.msra.mxu0 %v7196
      %7395 = vmatprep.subr.bf16.mxu0 0
      %7396 = vmatpush1.bf16.msra.mxu0 %v7197
      %7397 = vmatprep.subr.bf16.mxu0 0
      %7398 = vmatpush1.bf16.msra.mxu0 %v7198
      %7399 = vmatprep.subr.bf16.mxu0 0
      %7400 = vmatpush1.bf16.msra.mxu0 %v7199
      %7401 = vmatprep.subr.bf16.mxu0 0
      %7402 = vmatpush1.bf16.msra.mxu0 0
      %7403 = vmatprep.subr.bf16.mxu0 0
      %7404 = vmatpush1.bf16.msra.mxu0 0
      %7405 = vmatprep.subr.bf16.mxu0 0
      %7406 = vmatpush1.bf16.msra.mxu0 0
      %7407 = vmatprep.subr.bf16.mxu0 0
      %7408 = vmatpush1.bf16.msra.mxu0 0
      %7409 = vmatprep.subr.bf16.mxu0 0
      %7410 = vmatpush1.bf16.msra.mxu0 0
      %7411 = vmatprep.subr.bf16.mxu0 0
      %7412 = vmatpush1.bf16.msra.mxu0 0
      %7413 = vmatprep.subr.bf16.mxu0 0
      %7414 = vmatpush1.bf16.msra.mxu0 0
      %7415 = vmatprep.subr.bf16.mxu0 0
      %7416 = vmatpush1.bf16.msra.mxu0 0
      %7417 = vmatprep.mubr.bf16.mxu0 0
      %7418 = vmatmul.mubr.bf16.gmra.mrb[0].mxu0 %v7016
      %v7419 = vpop.f32.mrb[0].mxu0
      %v7420 = vadd.f32 %v7259, %v7419
      %v7421 = vpop.f32.mrb[0].mxu0
      %v7422 = vpop.f32.mrb[0].mxu0
      %v7423 = vadd.f32 %v7262, %v7422
      %v7424 = vpop.f32.mrb[0].mxu0
      %7425 = vmatprep.mubr.bf16.mxu0 0
      %7426 = vmatmul.mubr.bf16.gmra.mrb[0].mxu0 %v7017
      %v7427 = vpop.f32.mrb[0].mxu0
      %v7428 = vadd.f32 %v7267, %v7427
      %v7429 = vpop.f32.mrb[0].mxu0
      %v7430 = vpop.f32.mrb[0].mxu0
      %v7431 = vadd.f32 %v7270, %v7430
      %v7432 = vpop.f32.mrb[0].mxu0
      %7433 = vmatprep.mubr.bf16.mxu0 0
      %7434 = vmatmul.mubr.bf16.gmra.mrb[0].mxu0 %v7018
      %v7435 = vpop.f32.mrb[0].mxu0
      %v7436 = vadd.f32 %v7275, %v7435
      %v7437 = vpop.f32.mrb[0].mxu0
      %v7438 = vpop.f32.mrb[0].mxu0
      %v7439 = vadd.f32 %v7278, %v7438
      %v7440 = vpop.f32.mrb[0].mxu0
      %7441 = vmatprep.mubr.bf16.mxu0 0
      %7442 = vmatmul.mubr.bf16.gmra.mrb[0].mxu0 %v7019
      %v7443 = vpop.f32.mrb[0].mxu0
      %v7444 = vadd.f32 %v7283, %v7443
      %v7445 = vpop.f32.mrb[0].mxu0
      %v7446 = vpop.f32.mrb[0].mxu0
      %v7447 = vadd.f32 %v7286, %v7446
      %v7448 = vpop.f32.mrb[0].mxu0
      %7449 = vmatprep.mubr.bf16.mxu0 0
      %7450 = vmatmul.mubr.bf16.gmra.mrb[0].mxu0 %v7020
      %v7451 = vpop.f32.mrb[0].mxu0
      %v7452 = vadd.f32 %v7291, %v7451
      %v7453 = vpop.f32.mrb[0].mxu0
      %v7454 = vpop.f32.mrb[0].mxu0
      %v7455 = vadd.f32 %v7294, %v7454
      %v7456 = vpop.f32.mrb[0].mxu0
      %7457 = vmatprep.mubr.bf16.mxu0 0
      %7458 = vmatmul.mubr.bf16.gmra.mrb[0].mxu0 %v7021
      %v7459 = vpop.f32.mrb[0].mxu0
      %v7460 = vadd.f32 %v7299, %v7459
      %v7461 = vpop.f32.mrb[0].mxu0
      %v7462 = vpop.f32.mrb[0].mxu0
      %v7463 = vadd.f32 %v7302, %v7462
      %v7464 = vpop.f32.mrb[0].mxu0
      %7465 = vmatprep.mubr.bf16.mxu0 0
      %7466 = vmatmul.mubr.bf16.gmra.mrb[0].mxu0 %v7022
      %v7467 = vpop.f32.mrb[0].mxu0
      %v7468 = vadd.f32 %v7307, %v7467
      %v7469 = vpop.f32.mrb[0].mxu0
      %v7470 = vpop.f32.mrb[0].mxu0
      %v7471 = vadd.f32 %v7310, %v7470
      %v7472 = vpop.f32.mrb[0].mxu0
      %7473 = vmatprep.mubr.bf16.mxu0 0
      %7474 = vmatmul.mubr.bf16.gmra.mrb[0].mxu0 %v7023
      %v7475 = vpop.f32.mrb[0].mxu0
      %v7476 = vadd.f32 %v7315, %v7475
      %v7477 = vpop.f32.mrb[0].mxu0
      %v7478 = vpop.f32.mrb[0].mxu0
      %v7479 = vadd.f32 %v7318, %v7478
      %v7480 = vpop.f32.mrb[0].mxu0
      %7481 = vmatprep.mubr.bf16.mxu0 0
      %7482 = vmatmul.mubr.bf16.gmra.mrb[0].mxu0 %v7024
      %v7483 = vpop.f32.mrb[0].mxu0
      %v7484 = vadd.f32 %v7323, %v7483
      %v7485 = vpop.f32.mrb[0].mxu0
      %v7486 = vpop.f32.mrb[0].mxu0
      %v7487 = vadd.f32 %v7326, %v7486
      %v7488 = vpop.f32.mrb[0].mxu0
      %7489 = vmatprep.mubr.bf16.mxu0 0
      %7490 = vmatmul.mubr.bf16.gmra.mrb[0].mxu0 %v7025
      %v7491 = vpop.f32.mrb[0].mxu0
      %v7492 = vadd.f32 %v7331, %v7491
      %v7493 = vpop.f32.mrb[0].mxu0
      %v7494 = vpop.f32.mrb[0].mxu0
      %v7495 = vadd.f32 %v7334, %v7494
      %v7496 = vpop.f32.mrb[0].mxu0
      %7497 = vmatprep.mubr.bf16.mxu0 0
      %7498 = vmatmul.mubr.bf16.gmra.mrb[0].mxu0 %v7026
      %v7499 = vpop.f32.mrb[0].mxu0
      %v7500 = vadd.f32 %v7339, %v7499
      %v7501 = vpop.f32.mrb[0].mxu0
      %v7502 = vpop.f32.mrb[0].mxu0
      %v7503 = vadd.f32 %v7342, %v7502
      %v7504 = vpop.f32.mrb[0].mxu0
      %7505 = vmatprep.mubr.bf16.mxu0 0
      %7506 = vmatmul.mubr.bf16.gmra.mrb[0].mxu0 %v7027
      %v7507 = vpop.f32.mrb[0].mxu0
      %v7508 = vadd.f32 %v7347, %v7507
      %v7509 = vpop.f32.mrb[0].mxu0
      %v7510 = vpop.f32.mrb[0].mxu0
      %v7511 = vadd.f32 %v7350, %v7510
      %v7512 = vpop.f32.mrb[0].mxu0
      %7513 = vmatprep.mubr.bf16.mxu0 0
      %7514 = vmatmul.mubr.bf16.gmra.mrb[0].mxu0 %v7028
      %v7515 = vpop.f32.mrb[0].mxu0
      %v7516 = vadd.f32 %v7355, %v7515
      %v7517 = vpop.f32.mrb[0].mxu0
      %v7518 = vpop.f32.mrb[0].mxu0
      %v7519 = vadd.f32 %v7358, %v7518
      %v7520 = vpop.f32.mrb[0].mxu0
      %7521 = vmatprep.mubr.bf16.mxu0 0
      %7522 = vmatmul.mubr.bf16.gmra.mrb[0].mxu0 %v7029
      %v7523 = vpop.f32.mrb[0].mxu0
      %v7524 = vadd.f32 %v7363, %v7523
      %v7525 = vpop.f32.mrb[0].mxu0
      %v7526 = vpop.f32.mrb[0].mxu0
      %v7527 = vadd.f32 %v7366, %v7526
      %v7528 = vpop.f32.mrb[0].mxu0
      %7529 = vmatprep.mubr.bf16.mxu0 0
      %7530 = vmatmul.mubr.bf16.gmra.mrb[0].mxu0 %v7030
      %v7531 = vpop.f32.mrb[0].mxu0
      %v7532 = vadd.f32 %v7371, %v7531
      %v7533 = vpop.f32.mrb[0].mxu0
      %v7534 = vpop.f32.mrb[0].mxu0
      %v7535 = vadd.f32 %v7374, %v7534
      %v7536 = vpop.f32.mrb[0].mxu0
      %7537 = vmatprep.mubr.bf16.mxu0 0
      %7538 = vmatmul.mubr.bf16.gmra.mrb[0].mxu0 %v7031
      %v7539 = vpop.f32.mrb[0].mxu0
      %v7540 = vadd.f32 %v7379, %v7539
      %v7541 = vpop.f32.mrb[0].mxu0
      %v7542 = vpop.f32.mrb[0].mxu0
      %v7543 = vadd.f32 %v7382, %v7542
      %v7544 = vpop.f32.mrb[0].mxu0
      %7545 = vdwg.mxu0
      %v7594 = vunpack.c.l.b16 %v6744
      %v7595 = vunpack.c.l.b16 %v6745
      %v7596 = vunpack.c.l.b16 %v6746
      %v7597 = vunpack.c.l.b16 %v6747
      %v7598 = vunpack.c.l.b16 %v6748
      %v7599 = vunpack.c.l.b16 %v6749
      %v7600 = vunpack.c.l.b16 %v6750
      %v7601 = vunpack.c.l.b16 %v6751
      %v7602 = vunpack.c.l.b16 %v6752
      %v7603 = vunpack.c.l.b16 %v6753
      %v7604 = vunpack.c.l.b16 %v6754
      %v7605 = vunpack.c.l.b16 %v6755
      %v7606 = vunpack.c.l.b16 %v6756
      %v7607 = vunpack.c.l.b16 %v6757
      %v7608 = vunpack.c.l.b16 %v6758
      %v7609 = vunpack.c.l.b16 %v6759
      %v7610 = vunpack.c.l.b16 %v6760
      %v7611 = vunpack.c.l.b16 %v6761
      %v7612 = vunpack.c.l.b16 %v6762
      %v7613 = vunpack.c.l.b16 %v6763
      %v7614 = vunpack.c.l.b16 %v6764
      %v7615 = vunpack.c.l.b16 %v6765
      %v7616 = vunpack.c.l.b16 %v6766
      %v7617 = vunpack.c.l.b16 %v6767
      %v7618 = vunpack.c.l.b16 %v6768
      %v7619 = vunpack.c.l.b16 %v6769
      %v7620 = vunpack.c.l.b16 %v6770
      %v7621 = vunpack.c.l.b16 %v6771
      %v7622 = vunpack.c.l.b16 %v6772
      %v7623 = vunpack.c.l.b16 %v6773
      %v7624 = vunpack.c.l.b16 %v6774
      %v7625 = vunpack.c.l.b16 %v6775
      %v7626 = vunpack.c.l.b16 %v6776
      %v7627 = vunpack.c.l.b16 %v6777
      %v7628 = vunpack.c.l.b16 %v6778
      %v7629 = vunpack.c.l.b16 %v6779
      %v7630 = vunpack.c.l.b16 %v6780
      %v7631 = vunpack.c.l.b16 %v6781
      %v7632 = vunpack.c.l.b16 %v6782
      %v7633 = vunpack.c.l.b16 %v6783
      %v7634 = vunpack.c.l.b16 %v6784
      %v7635 = vunpack.c.l.b16 %v6785
      %v7636 = vunpack.c.l.b16 %v6786
      %v7637 = vunpack.c.l.b16 %v6787
      %v7638 = vunpack.c.l.b16 %v6788
      %v7639 = vunpack.c.l.b16 %v6789
      %v7640 = vunpack.c.l.b16 %v6790
      %v7641 = vunpack.c.l.b16 %v6791
      %v7642 = vpack.c.b16 %v7595, %v7594
      %v7643 = vpack.c.b16 %v7597, %v7596
      %v7644 = vpack.c.b16 %v7599, %v7598
      %v7645 = vpack.c.b16 %v7601, %v7600
      %v7646 = vpack.c.b16 %v7603, %v7602
      %v7647 = vpack.c.b16 %v7605, %v7604
      %v7648 = vpack.c.b16 %v7607, %v7606
      %v7649 = vpack.c.b16 %v7609, %v7608
      %v7650 = vpack.c.b16 %v7611, %v7610
      %v7651 = vpack.c.b16 %v7613, %v7612
      %v7652 = vpack.c.b16 %v7615, %v7614
      %v7653 = vpack.c.b16 %v7617, %v7616
      %v7654 = vpack.c.b16 %v7619, %v7618
      %v7655 = vpack.c.b16 %v7621, %v7620
      %v7656 = vpack.c.b16 %v7623, %v7622
      %v7657 = vpack.c.b16 %v7625, %v7624
      %v7658 = vpack.c.b16 %v7627, %v7626
      %v7659 = vpack.c.b16 %v7629, %v7628
      %v7660 = vpack.c.b16 %v7631, %v7630
      %v7661 = vpack.c.b16 %v7633, %v7632
      %v7662 = vpack.c.b16 %v7635, %v7634
      %v7663 = vpack.c.b16 %v7637, %v7636
      %v7664 = vpack.c.b16 %v7639, %v7638
      %v7665 = vpack.c.b16 %v7641, %v7640
      %7690 = vmatprep.subr.bf16.mxu0 0
      %7691 = vmatpush1.bf16.msra.mxu0 %v7642
      %7692 = vmatprep.subr.bf16.mxu0 0
      %7693 = vmatpush1.bf16.msra.mxu0 %v7643
      %7694 = vmatprep.subr.bf16.mxu0 0
      %7695 = vmatpush1.bf16.msra.mxu0 %v7644
      %7696 = vmatprep.subr.bf16.mxu0 0
      %7697 = vmatpush1.bf16.msra.mxu0 %v7645
      %7698 = vmatprep.subr.bf16.mxu0 0
      %7699 = vmatpush1.bf16.msra.mxu0 %v7646
      %7700 = vmatprep.subr.bf16.mxu0 0
      %7701 = vmatpush1.bf16.msra.mxu0 %v7647
      %7702 = vmatprep.subr.bf16.mxu0 0
      %7703 = vmatpush1.bf16.msra.mxu0 %v7648
      %7704 = vmatprep.subr.bf16.mxu0 0
      %7705 = vmatpush1.bf16.msra.mxu0 %v7649
      %7706 = vmatprep.subr.bf16.mxu0 0
      %7707 = vmatpush1.bf16.msra.mxu0 %v7650
      %7708 = vmatprep.subr.bf16.mxu0 0
      %7709 = vmatpush1.bf16.msra.mxu0 %v7651
      %7710 = vmatprep.subr.bf16.mxu0 0
      %7711 = vmatpush1.bf16.msra.mxu0 %v7652
      %7712 = vmatprep.subr.bf16.mxu0 0
      %7713 = vmatpush1.bf16.msra.mxu0 %v7653
      %7714 = vmatprep.subr.bf16.mxu0 0
      %7715 = vmatpush1.bf16.msra.mxu0 %v7654
      %7716 = vmatprep.subr.bf16.mxu0 0
      %7717 = vmatpush1.bf16.msra.mxu0 %v7655
      %7718 = vmatprep.subr.bf16.mxu0 0
      %7719 = vmatpush1.bf16.msra.mxu0 %v7656
      %7720 = vmatprep.subr.bf16.mxu0 0
      %7721 = vmatpush1.bf16.msra.mxu0 %v7657
      %7722 = vmatprep.mubr.bf16.mxu0 %v6711
      %7723 = vmatmul.mubr.bf16.gmra.mrb[0].mxu0 %v6695
      %v7724 = vpop.f32.mrb[0].mxu0
      %v7725 = vadd.f32 %v7420, %v7724
      %v7726 = vpop.f32.mrb[0].mxu0
      %v7727 = vpop.f32.mrb[0].mxu0
      %v7728 = vadd.f32 %v7423, %v7727
      %v7729 = vpop.f32.mrb[0].mxu0
      %7730 = vmatprep.mubr.bf16.mxu0 %v6712
      %7731 = vmatmul.mubr.bf16.gmra.mrb[0].mxu0 %v6696
      %v7732 = vpop.f32.mrb[0].mxu0
      %v7733 = vadd.f32 %v7428, %v7732
      %v7734 = vpop.f32.mrb[0].mxu0
      %v7735 = vpop.f32.mrb[0].mxu0
      %v7736 = vadd.f32 %v7431, %v7735
      %v7737 = vpop.f32.mrb[0].mxu0
      %7738 = vmatprep.mubr.bf16.mxu0 %v6713
      %7739 = vmatmul.mubr.bf16.gmra.mrb[0].mxu0 %v6697
      %v7740 = vpop.f32.mrb[0].mxu0
      %v7741 = vadd.f32 %v7436, %v7740
      %v7742 = vpop.f32.mrb[0].mxu0
      %v7743 = vpop.f32.mrb[0].mxu0
      %v7744 = vadd.f32 %v7439, %v7743
      %v7745 = vpop.f32.mrb[0].mxu0
      %7746 = vmatprep.mubr.bf16.mxu0 %v6714
      %7747 = vmatmul.mubr.bf16.gmra.mrb[0].mxu0 %v6698
      %v7748 = vpop.f32.mrb[0].mxu0
      %v7749 = vadd.f32 %v7444, %v7748
      %v7750 = vpop.f32.mrb[0].mxu0
      %v7751 = vpop.f32.mrb[0].mxu0
      %v7752 = vadd.f32 %v7447, %v7751
      %v7753 = vpop.f32.mrb[0].mxu0
      %7754 = vmatprep.mubr.bf16.mxu0 %v6715
      %7755 = vmatmul.mubr.bf16.gmra.mrb[0].mxu0 %v6699
      %v7756 = vpop.f32.mrb[0].mxu0
      %v7757 = vadd.f32 %v7452, %v7756
      %v7758 = vpop.f32.mrb[0].mxu0
      %v7759 = vpop.f32.mrb[0].mxu0
      %v7760 = vadd.f32 %v7455, %v7759
      %v7761 = vpop.f32.mrb[0].mxu0
      %7762 = vmatprep.mubr.bf16.mxu0 %v6716
      %7763 = vmatmul.mubr.bf16.gmra.mrb[0].mxu0 %v6700
      %v7764 = vpop.f32.mrb[0].mxu0
      %v7765 = vadd.f32 %v7460, %v7764
      %v7766 = vpop.f32.mrb[0].mxu0
      %v7767 = vpop.f32.mrb[0].mxu0
      %v7768 = vadd.f32 %v7463, %v7767
      %v7769 = vpop.f32.mrb[0].mxu0
      %7770 = vmatprep.mubr.bf16.mxu0 %v6717
      %7771 = vmatmul.mubr.bf16.gmra.mrb[0].mxu0 %v6701
      %v7772 = vpop.f32.mrb[0].mxu0
      %v7773 = vadd.f32 %v7468, %v7772
      %v7774 = vpop.f32.mrb[0].mxu0
      %v7775 = vpop.f32.mrb[0].mxu0
      %v7776 = vadd.f32 %v7471, %v7775
      %v7777 = vpop.f32.mrb[0].mxu0
      %7778 = vmatprep.mubr.bf16.mxu0 %v6718
      %7779 = vmatmul.mubr.bf16.gmra.mrb[0].mxu0 %v6702
      %v7780 = vpop.f32.mrb[0].mxu0
      %v7781 = vadd.f32 %v7476, %v7780
      %v7782 = vpop.f32.mrb[0].mxu0
      %v7783 = vpop.f32.mrb[0].mxu0
      %v7784 = vadd.f32 %v7479, %v7783
      %v7785 = vpop.f32.mrb[0].mxu0
      %7786 = vmatprep.mubr.bf16.mxu0 %v6719
      %7787 = vmatmul.mubr.bf16.gmra.mrb[0].mxu0 %v6703
      %v7788 = vpop.f32.mrb[0].mxu0
      %v7789 = vadd.f32 %v7484, %v7788
      %v7790 = vpop.f32.mrb[0].mxu0
      %v7791 = vpop.f32.mrb[0].mxu0
      %v7792 = vadd.f32 %v7487, %v7791
      %v7793 = vpop.f32.mrb[0].mxu0
      %7794 = vmatprep.mubr.bf16.mxu0 %v6720
      %7795 = vmatmul.mubr.bf16.gmra.mrb[0].mxu0 %v6704
      %v7796 = vpop.f32.mrb[0].mxu0
      %v7797 = vadd.f32 %v7492, %v7796
      %v7798 = vpop.f32.mrb[0].mxu0
      %v7799 = vpop.f32.mrb[0].mxu0
      %v7800 = vadd.f32 %v7495, %v7799
      %v7801 = vpop.f32.mrb[0].mxu0
      %7802 = vmatprep.mubr.bf16.mxu0 %v6721
      %7803 = vmatmul.mubr.bf16.gmra.mrb[0].mxu0 %v6705
      %v7804 = vpop.f32.mrb[0].mxu0
      %v7805 = vadd.f32 %v7500, %v7804
      %v7806 = vpop.f32.mrb[0].mxu0
      %v7807 = vpop.f32.mrb[0].mxu0
      %v7808 = vadd.f32 %v7503, %v7807
      %v7809 = vpop.f32.mrb[0].mxu0
      %7810 = vmatprep.mubr.bf16.mxu0 %v6722
      %7811 = vmatmul.mubr.bf16.gmra.mrb[0].mxu0 %v6706
      %v7812 = vpop.f32.mrb[0].mxu0
      %v7813 = vadd.f32 %v7508, %v7812
      %v7814 = vpop.f32.mrb[0].mxu0
      %v7815 = vpop.f32.mrb[0].mxu0
      %v7816 = vadd.f32 %v7511, %v7815
      %v7817 = vpop.f32.mrb[0].mxu0
      %7818 = vmatprep.mubr.bf16.mxu0 %v6723
      %7819 = vmatmul.mubr.bf16.gmra.mrb[0].mxu0 %v6707
      %v7820 = vpop.f32.mrb[0].mxu0
      %v7821 = vadd.f32 %v7516, %v7820
      %v7822 = vpop.f32.mrb[0].mxu0
      %v7823 = vpop.f32.mrb[0].mxu0
      %v7824 = vadd.f32 %v7519, %v7823
      %v7825 = vpop.f32.mrb[0].mxu0
      %7826 = vmatprep.mubr.bf16.mxu0 %v6724
      %7827 = vmatmul.mubr.bf16.gmra.mrb[0].mxu0 %v6708
      %v7828 = vpop.f32.mrb[0].mxu0
      %v7829 = vadd.f32 %v7524, %v7828
      %v7830 = vpop.f32.mrb[0].mxu0
      %v7831 = vpop.f32.mrb[0].mxu0
      %v7832 = vadd.f32 %v7527, %v7831
      %v7833 = vpop.f32.mrb[0].mxu0
      %7834 = vmatprep.mubr.bf16.mxu0 %v6725
      %7835 = vmatmul.mubr.bf16.gmra.mrb[0].mxu0 %v6709
      %v7836 = vpop.f32.mrb[0].mxu0
      %v7837 = vadd.f32 %v7532, %v7836
      %v7838 = vpop.f32.mrb[0].mxu0
      %v7839 = vpop.f32.mrb[0].mxu0
      %v7840 = vadd.f32 %v7535, %v7839
      %v7841 = vpop.f32.mrb[0].mxu0
      %7842 = vmatprep.mubr.bf16.mxu0 %v6726
      %7843 = vmatmul.mubr.bf16.gmra.mrb[0].mxu0 %v6710
      %v7844 = vpop.f32.mrb[0].mxu0
      %v7845 = vadd.f32 %v7540, %v7844
      %v7846 = vpop.f32.mrb[0].mxu0
      %v7847 = vpop.f32.mrb[0].mxu0
      %v7848 = vadd.f32 %v7543, %v7847
      %v7849 = vpop.f32.mrb[0].mxu0
      %7850 = vdwg.mxu0
      %7851 = vmatprep.subr.bf16.mxu0 0
      %7852 = vmatpush1.bf16.msra.mxu0 %v7658
      %7853 = vmatprep.subr.bf16.mxu0 0
      %7854 = vmatpush1.bf16.msra.mxu0 %v7659
      %7855 = vmatprep.subr.bf16.mxu0 0
      %7856 = vmatpush1.bf16.msra.mxu0 %v7660
      %7857 = vmatprep.subr.bf16.mxu0 0
      %7858 = vmatpush1.bf16.msra.mxu0 %v7661
      %7859 = vmatprep.subr.bf16.mxu0 0
      %7860 = vmatpush1.bf16.msra.mxu0 %v7662
      %7861 = vmatprep.subr.bf16.mxu0 0
      %7862 = vmatpush1.bf16.msra.mxu0 %v7663
      %7863 = vmatprep.subr.bf16.mxu0 0
      %7864 = vmatpush1.bf16.msra.mxu0 %v7664
      %7865 = vmatprep.subr.bf16.mxu0 0
      %7866 = vmatpush1.bf16.msra.mxu0 %v7665
      %7867 = vmatprep.subr.bf16.mxu0 0
      %7868 = vmatpush1.bf16.msra.mxu0 0
      %7869 = vmatprep.subr.bf16.mxu0 0
      %7870 = vmatpush1.bf16.msra.mxu0 0
      %7871 = vmatprep.subr.bf16.mxu0 0
      %7872 = vmatpush1.bf16.msra.mxu0 0
      %7873 = vmatprep.subr.bf16.mxu0 0
      %7874 = vmatpush1.bf16.msra.mxu0 0
      %7875 = vmatprep.subr.bf16.mxu0 0
      %7876 = vmatpush1.bf16.msra.mxu0 0
      %7877 = vmatprep.subr.bf16.mxu0 0
      %7878 = vmatpush1.bf16.msra.mxu0 0
      %7879 = vmatprep.subr.bf16.mxu0 0
      %7880 = vmatpush1.bf16.msra.mxu0 0
      %7881 = vmatprep.subr.bf16.mxu0 0
      %7882 = vmatpush1.bf16.msra.mxu0 0
      %7883 = vmatprep.mubr.bf16.mxu0 0
      %7884 = vmatmul.mubr.bf16.gmra.mrb[0].mxu0 %v6727
      %v7885 = vpop.f32.mrb[0].mxu0
      %v7886 = vadd.f32 %v7725, %v7885
      %v7887 = vpop.f32.mrb[0].mxu0
      %v7888 = vpop.f32.mrb[0].mxu0
      %v7889 = vadd.f32 %v7728, %v7888
      %v7890 = vpop.f32.mrb[0].mxu0
      %7891 = vmatprep.mubr.bf16.mxu0 0
      %7892 = vmatmul.mubr.bf16.gmra.mrb[0].mxu0 %v6728
      %v7893 = vpop.f32.mrb[0].mxu0
      %v7894 = vadd.f32 %v7733, %v7893
      %v7895 = vpop.f32.mrb[0].mxu0
      %v7896 = vpop.f32.mrb[0].mxu0
      %v7897 = vadd.f32 %v7736, %v7896
      %v7898 = vpop.f32.mrb[0].mxu0
      %7899 = vmatprep.mubr.bf16.mxu0 0
      %7900 = vmatmul.mubr.bf16.gmra.mrb[0].mxu0 %v6729
      %v7901 = vpop.f32.mrb[0].mxu0
      %v7902 = vadd.f32 %v7741, %v7901
      %v7903 = vpop.f32.mrb[0].mxu0
      %v7904 = vpop.f32.mrb[0].mxu0
      %v7905 = vadd.f32 %v7744, %v7904
      %v7906 = vpop.f32.mrb[0].mxu0
      %7907 = vmatprep.mubr.bf16.mxu0 0
      %7908 = vmatmul.mubr.bf16.gmra.mrb[0].mxu0 %v6730
      %v7909 = vpop.f32.mrb[0].mxu0
      %v7910 = vadd.f32 %v7749, %v7909
      %v7911 = vpop.f32.mrb[0].mxu0
      %v7912 = vpop.f32.mrb[0].mxu0
      %v7913 = vadd.f32 %v7752, %v7912
      %v7914 = vpop.f32.mrb[0].mxu0
      %7915 = vmatprep.mubr.bf16.mxu0 0
      %7916 = vmatmul.mubr.bf16.gmra.mrb[0].mxu0 %v6731
      %v7917 = vpop.f32.mrb[0].mxu0
      %v7918 = vadd.f32 %v7757, %v7917
      %v7919 = vpop.f32.mrb[0].mxu0
      %v7920 = vpop.f32.mrb[0].mxu0
      %v7921 = vadd.f32 %v7760, %v7920
      %v7922 = vpop.f32.mrb[0].mxu0
      %7923 = vmatprep.mubr.bf16.mxu0 0
      %7924 = vmatmul.mubr.bf16.gmra.mrb[0].mxu0 %v6732
      %v7925 = vpop.f32.mrb[0].mxu0
      %v7926 = vadd.f32 %v7765, %v7925
      %v7927 = vpop.f32.mrb[0].mxu0
      %v7928 = vpop.f32.mrb[0].mxu0
      %v7929 = vadd.f32 %v7768, %v7928
      %v7930 = vpop.f32.mrb[0].mxu0
      %7931 = vmatprep.mubr.bf16.mxu0 0
      %7932 = vmatmul.mubr.bf16.gmra.mrb[0].mxu0 %v6733
      %v7933 = vpop.f32.mrb[0].mxu0
      %v7934 = vadd.f32 %v7773, %v7933
      %v7935 = vpop.f32.mrb[0].mxu0
      %v7936 = vpop.f32.mrb[0].mxu0
      %v7937 = vadd.f32 %v7776, %v7936
      %v7938 = vpop.f32.mrb[0].mxu0
      %7939 = vmatprep.mubr.bf16.mxu0 0
      %7940 = vmatmul.mubr.bf16.gmra.mrb[0].mxu0 %v6734
      %v7941 = vpop.f32.mrb[0].mxu0
      %v7942 = vadd.f32 %v7781, %v7941
      %v7943 = vpop.f32.mrb[0].mxu0
      %v7944 = vpop.f32.mrb[0].mxu0
      %v7945 = vadd.f32 %v7784, %v7944
      %v7946 = vpop.f32.mrb[0].mxu0
      %7947 = vmatprep.mubr.bf16.mxu0 0
      %7948 = vmatmul.mubr.bf16.gmra.mrb[0].mxu0 %v6735
      %v7949 = vpop.f32.mrb[0].mxu0
      %v7950 = vadd.f32 %v7789, %v7949
      %v7951 = vpop.f32.mrb[0].mxu0
      %v7952 = vpop.f32.mrb[0].mxu0
      %v7953 = vadd.f32 %v7792, %v7952
      %v7954 = vpop.f32.mrb[0].mxu0
      %7955 = vmatprep.mubr.bf16.mxu0 0
      %7956 = vmatmul.mubr.bf16.gmra.mrb[0].mxu0 %v6736
      %v7957 = vpop.f32.mrb[0].mxu0
      %v7958 = vadd.f32 %v7797, %v7957
      %v7959 = vpop.f32.mrb[0].mxu0
      %v7960 = vpop.f32.mrb[0].mxu0
      %v7961 = vadd.f32 %v7800, %v7960
      %v7962 = vpop.f32.mrb[0].mxu0
      %7963 = vmatprep.mubr.bf16.mxu0 0
      %7964 = vmatmul.mubr.bf16.gmra.mrb[0].mxu0 %v6737
      %v7965 = vpop.f32.mrb[0].mxu0
      %v7966 = vadd.f32 %v7805, %v7965
      %v7967 = vpop.f32.mrb[0].mxu0
      %v7968 = vpop.f32.mrb[0].mxu0
      %v7969 = vadd.f32 %v7808, %v7968
      %v7970 = vpop.f32.mrb[0].mxu0
      %7971 = vmatprep.mubr.bf16.mxu0 0
      %7972 = vmatmul.mubr.bf16.gmra.mrb[0].mxu0 %v6738
      %v7973 = vpop.f32.mrb[0].mxu0
      %v7974 = vadd.f32 %v7813, %v7973
      %v7975 = vpop.f32.mrb[0].mxu0
      %v7976 = vpop.f32.mrb[0].mxu0
      %v7977 = vadd.f32 %v7816, %v7976
      %v7978 = vpop.f32.mrb[0].mxu0
      %7979 = vmatprep.mubr.bf16.mxu0 0
      %7980 = vmatmul.mubr.bf16.gmra.mrb[0].mxu0 %v6739
      %v7981 = vpop.f32.mrb[0].mxu0
      %v7982 = vadd.f32 %v7821, %v7981
      %v7983 = vpop.f32.mrb[0].mxu0
      %v7984 = vpop.f32.mrb[0].mxu0
      %v7985 = vadd.f32 %v7824, %v7984
      %v7986 = vpop.f32.mrb[0].mxu0
      %7987 = vmatprep.mubr.bf16.mxu0 0
      %7988 = vmatmul.mubr.bf16.gmra.mrb[0].mxu0 %v6740
      %v7989 = vpop.f32.mrb[0].mxu0
      %v7990 = vadd.f32 %v7829, %v7989
      %v7991 = vpop.f32.mrb[0].mxu0
      %v7992 = vpop.f32.mrb[0].mxu0
      %v7993 = vadd.f32 %v7832, %v7992
      %v7994 = vpop.f32.mrb[0].mxu0
      %7995 = vmatprep.mubr.bf16.mxu0 0
      %7996 = vmatmul.mubr.bf16.gmra.mrb[0].mxu0 %v6741
      %v7997 = vpop.f32.mrb[0].mxu0
      %v7998 = vadd.f32 %v7837, %v7997
      %v7999 = vpop.f32.mrb[0].mxu0
      %v8000 = vpop.f32.mrb[0].mxu0
      %v8001 = vadd.f32 %v7840, %v8000
      %v8002 = vpop.f32.mrb[0].mxu0
      %8003 = vmatprep.mubr.bf16.mxu0 0
      %8004 = vmatmul.mubr.bf16.gmra.mrb[0].mxu0 %v6742
      %v8005 = vpop.f32.mrb[0].mxu0
      %v8006 = vadd.f32 %v7845, %v8005
      %v8007 = vpop.f32.mrb[0].mxu0
      %v8008 = vpop.f32.mrb[0].mxu0
      %v8009 = vadd.f32 %v7848, %v8008
      %v8010 = vpop.f32.mrb[0].mxu0
      %8011 = vdwg.mxu0
      %v8012 = vrot.slane %v6471, 7
      %v8013 = vrot.slane %v6472, 7
      %v8014 = vrot.slane %v6473, 7
      %v8015 = vrot.slane %v6474, 7
      %v8016 = vrot.slane %v6475, 7
      %v8017 = vrot.slane %v6476, 7
      %v8018 = vrot.slane %v6477, 7
      %v8019 = vrot.slane %v6478, 7
      %v8020 = vrot.slane %v6479, 7
      %v8021 = vrot.slane %v6480, 7
      %v8022 = vrot.slane %v6481, 7
      %v8023 = vrot.slane %v6482, 7
      %v8024 = vrot.slane %v6483, 7
      %v8025 = vrot.slane %v6484, 7
      %v8026 = vrot.slane %v6485, 7
      %v8027 = vrot.slane %v6486, 7
      %v8028 = vrot.slane %v6487, 7
      %v8029 = vrot.slane %v6488, 7
      %v8030 = vrot.slane %v6489, 7
      %v8031 = vrot.slane %v6490, 7
      %v8032 = vrot.slane %v6491, 7
      %v8033 = vrot.slane %v6492, 7
      %v8034 = vrot.slane %v6493, 7
      %v8035 = vrot.slane %v6494, 7
      %v8036 = vrot.slane %v6495, 7
      %v8037 = vrot.slane %v6496, 7
      %v8038 = vrot.slane %v6497, 7
      %v8039 = vrot.slane %v6498, 7
      %v8040 = vrot.slane %v6499, 7
      %v8041 = vrot.slane %v6500, 7
      %v8042 = vrot.slane %v6501, 7
      %v8043 = vrot.slane %v6502, 7
      %v8044 = vsel %vm1422, %v8042, %v8043
      %v8045 = vsel %vm1422, %v8041, %v8042
      %v8046 = vsel %vm1422, %v8040, %v8041
      %v8047 = vsel %vm1422, %v8039, %v8040
      %v8048 = vsel %vm1422, %v8038, %v8039
      %v8049 = vsel %vm1422, %v8037, %v8038
      %v8050 = vsel %vm1422, %v8036, %v8037
      %v8051 = vsel %vm1422, %v8035, %v8036
      %v8052 = vsel %vm1422, %v8034, %v8035
      %v8053 = vsel %vm1422, %v8033, %v8034
      %v8054 = vsel %vm1422, %v8032, %v8033
      %v8055 = vsel %vm1422, %v8031, %v8032
      %v8056 = vsel %vm1422, %v8030, %v8031
      %v8057 = vsel %vm1422, %v8029, %v8030
      %v8058 = vsel %vm1422, %v8028, %v8029
      %v8059 = vsel %vm1422, %v8027, %v8028
      %v8060 = vsel %vm1422, %v8026, %v8027
      %v8061 = vsel %vm1422, %v8025, %v8026
      %v8062 = vsel %vm1422, %v8024, %v8025
      %v8063 = vsel %vm1422, %v8023, %v8024
      %v8064 = vsel %vm1422, %v8022, %v8023
      %v8065 = vsel %vm1422, %v8021, %v8022
      %v8066 = vsel %vm1422, %v8020, %v8021
      %v8067 = vsel %vm1422, %v8019, %v8020
      %v8068 = vsel %vm1422, %v8018, %v8019
      %v8069 = vsel %vm1422, %v8017, %v8018
      %v8070 = vsel %vm1422, %v8016, %v8017
      %v8071 = vsel %vm1422, %v8015, %v8016
      %v8072 = vsel %vm1422, %v8014, %v8015
      %v8073 = vsel %vm1422, %v8013, %v8014
      %v8074 = vsel %vm1422, %v8012, %v8013
      %v8075 = vsel %vm1422, %v8043, %v8012
      %v8076 = vsel %vm1487, %v8075, 0.0
      %v8077 = vsel %vm1488, %v8074, 0.0
      %v8078 = vsel %vm1489, %v8073, 0.0
      %v8079 = vsel %vm1490, %v8072, 0.0
      %v8080 = vsel %vm1491, %v8071, 0.0
      %v8081 = vsel %vm1492, %v8070, 0.0
      %v8082 = vsel %vm1493, %v8069, 0.0
      %v8083 = vsel %vm1494, %v8068, 0.0
      %v8084 = vsel %vm1495, %v8067, 0.0
      %v8085 = vsel %vm1496, %v8066, 0.0
      %v8086 = vsel %vm1497, %v8065, 0.0
      %v8087 = vsel %vm1498, %v8064, 0.0
      %v8088 = vsel %vm1499, %v8063, 0.0
      %v8089 = vsel %vm1500, %v8062, 0.0
      %v8090 = vsel %vm1501, %v8061, 0.0
      %v8091 = vsel %vm1502, %v8060, 0.0
      %v8092 = vsel %vm1503, %v8059, 0.0
      %v8093 = vsel %vm1504, %v8058, 0.0
      %v8094 = vsel %vm1505, %v8057, 0.0
      %v8095 = vsel %vm1506, %v8056, 0.0
      %v8096 = vsel %vm1507, %v8055, 0.0
      %v8097 = vsel %vm1508, %v8054, 0.0
      %v8098 = vsel %vm1509, %v8053, 0.0
      %v8099 = vsel %vm1510, %v8052, 0.0
      %v8100 = vsel %vm1511, %v8051, 0.0
      %v8101 = vsel %vm1512, %v8050, 0.0
      %v8102 = vsel %vm1513, %v8049, 0.0
      %v8103 = vsel %vm1514, %v8048, 0.0
      %v8104 = vsel %vm1515, %v8047, 0.0
      %v8105 = vsel %vm1516, %v8046, 0.0
      %v8106 = vsel %vm1517, %v8045, 0.0
      %v8107 = vsel %vm1518, %v8044, 0.0
      %v8108 = vrot.slane %v6471, 1
      %v8109 = vrot.slane %v6472, 1
      %v8110 = vrot.slane %v6473, 1
      %v8111 = vrot.slane %v6474, 1
      %v8112 = vrot.slane %v6475, 1
      %v8113 = vrot.slane %v6476, 1
      %v8114 = vrot.slane %v6477, 1
      %v8115 = vrot.slane %v6478, 1
      %v8116 = vrot.slane %v6479, 1
      %v8117 = vrot.slane %v6480, 1
      %v8118 = vrot.slane %v6481, 1
      %v8119 = vrot.slane %v6482, 1
      %v8120 = vrot.slane %v6483, 1
      %v8121 = vrot.slane %v6484, 1
      %v8122 = vrot.slane %v6485, 1
      %v8123 = vrot.slane %v6486, 1
      %v8124 = vrot.slane %v6487, 1
      %v8125 = vrot.slane %v6488, 1
      %v8126 = vrot.slane %v6489, 1
      %v8127 = vrot.slane %v6490, 1
      %v8128 = vrot.slane %v6491, 1
      %v8129 = vrot.slane %v6492, 1
      %v8130 = vrot.slane %v6493, 1
      %v8131 = vrot.slane %v6494, 1
      %v8132 = vrot.slane %v6495, 1
      %v8133 = vrot.slane %v6496, 1
      %v8134 = vrot.slane %v6497, 1
      %v8135 = vrot.slane %v6498, 1
      %v8136 = vrot.slane %v6499, 1
      %v8137 = vrot.slane %v6500, 1
      %v8138 = vrot.slane %v6501, 1
      %v8139 = vrot.slane %v6502, 1
      %v8140 = vsel %vm1583, %v8138, %v8139
      %v8141 = vsel %vm1583, %v8137, %v8138
      %v8142 = vsel %vm1583, %v8136, %v8137
      %v8143 = vsel %vm1583, %v8135, %v8136
      %v8144 = vsel %vm1583, %v8134, %v8135
      %v8145 = vsel %vm1583, %v8133, %v8134
      %v8146 = vsel %vm1583, %v8132, %v8133
      %v8147 = vsel %vm1583, %v8131, %v8132
      %v8148 = vsel %vm1583, %v8130, %v8131
      %v8149 = vsel %vm1583, %v8129, %v8130
      %v8150 = vsel %vm1583, %v8128, %v8129
      %v8151 = vsel %vm1583, %v8127, %v8128
      %v8152 = vsel %vm1583, %v8126, %v8127
      %v8153 = vsel %vm1583, %v8125, %v8126
      %v8154 = vsel %vm1583, %v8124, %v8125
      %v8155 = vsel %vm1583, %v8123, %v8124
      %v8156 = vsel %vm1583, %v8122, %v8123
      %v8157 = vsel %vm1583, %v8121, %v8122
      %v8158 = vsel %vm1583, %v8120, %v8121
      %v8159 = vsel %vm1583, %v8119, %v8120
      %v8160 = vsel %vm1583, %v8118, %v8119
      %v8161 = vsel %vm1583, %v8117, %v8118
      %v8162 = vsel %vm1583, %v8116, %v8117
      %v8163 = vsel %vm1583, %v8115, %v8116
      %v8164 = vsel %vm1583, %v8114, %v8115
      %v8165 = vsel %vm1583, %v8113, %v8114
      %v8166 = vsel %vm1583, %v8112, %v8113
      %v8167 = vsel %vm1583, %v8111, %v8112
      %v8168 = vsel %vm1583, %v8110, %v8111
      %v8169 = vsel %vm1583, %v8109, %v8110
      %v8170 = vsel %vm1583, %v8108, %v8109
      %v8171 = vsel %vm1583, %v8139, %v8108
      %v8172 = vsel %vm1648, %v8170, 0.0
      %v8173 = vsel %vm1649, %v8169, 0.0
      %v8174 = vsel %vm1650, %v8168, 0.0
      %v8175 = vsel %vm1651, %v8167, 0.0
      %v8176 = vsel %vm1652, %v8166, 0.0
      %v8177 = vsel %vm1653, %v8165, 0.0
      %v8178 = vsel %vm1654, %v8164, 0.0
      %v8179 = vsel %vm1655, %v8163, 0.0
      %v8180 = vsel %vm1656, %v8162, 0.0
      %v8181 = vsel %vm1657, %v8161, 0.0
      %v8182 = vsel %vm1658, %v8160, 0.0
      %v8183 = vsel %vm1659, %v8159, 0.0
      %v8184 = vsel %vm1660, %v8158, 0.0
      %v8185 = vsel %vm1661, %v8157, 0.0
      %v8186 = vsel %vm1662, %v8156, 0.0
      %v8187 = vsel %vm1663, %v8155, 0.0
      %v8188 = vsel %vm1664, %v8154, 0.0
      %v8189 = vsel %vm1665, %v8153, 0.0
      %v8190 = vsel %vm1666, %v8152, 0.0
      %v8191 = vsel %vm1667, %v8151, 0.0
      %v8192 = vsel %vm1668, %v8150, 0.0
      %v8193 = vsel %vm1669, %v8149, 0.0
      %v8194 = vsel %vm1670, %v8148, 0.0
      %v8195 = vsel %vm1671, %v8147, 0.0
      %v8196 = vsel %vm1672, %v8146, 0.0
      %v8197 = vsel %vm1673, %v8145, 0.0
      %v8198 = vsel %vm1674, %v8144, 0.0
      %v8199 = vsel %vm1675, %v8143, 0.0
      %v8200 = vsel %vm1676, %v8142, 0.0
      %v8201 = vsel %vm1677, %v8141, 0.0
      %v8202 = vsel %vm1678, %v8140, 0.0
      %v8203 = vsel %vm1679, %v8171, 0.0
      %v8204 = vpack.c.bf16 %v8077, %v8076
      %v8205 = vpack.c.bf16 %v8079, %v8078
      %v8206 = vpack.c.bf16 %v8081, %v8080
      %v8207 = vpack.c.bf16 %v8083, %v8082
      %v8208 = vpack.c.bf16 %v8085, %v8084
      %v8209 = vpack.c.bf16 %v8087, %v8086
      %v8210 = vpack.c.bf16 %v8089, %v8088
      %v8211 = vpack.c.bf16 %v8091, %v8090
      %v8212 = vpack.c.bf16 %v8093, %v8092
      %v8213 = vpack.c.bf16 %v8095, %v8094
      %v8214 = vpack.c.bf16 %v8097, %v8096
      %v8215 = vpack.c.bf16 %v8099, %v8098
      %v8216 = vpack.c.bf16 %v8101, %v8100
      %v8217 = vpack.c.bf16 %v8103, %v8102
      %v8218 = vpack.c.bf16 %v8105, %v8104
      %v8219 = vpack.c.bf16 %v8107, %v8106
      %v8220 = vpack.c.bf16 %v6472, %v6471
      %v8221 = vpack.c.bf16 %v6474, %v6473
      %v8222 = vpack.c.bf16 %v6476, %v6475
      %v8223 = vpack.c.bf16 %v6478, %v6477
      %v8224 = vpack.c.bf16 %v6480, %v6479
      %v8225 = vpack.c.bf16 %v6482, %v6481
      %v8226 = vpack.c.bf16 %v6484, %v6483
      %v8227 = vpack.c.bf16 %v6486, %v6485
      %v8228 = vpack.c.bf16 %v6488, %v6487
      %v8229 = vpack.c.bf16 %v6490, %v6489
      %v8230 = vpack.c.bf16 %v6492, %v6491
      %v8231 = vpack.c.bf16 %v6494, %v6493
      %v8232 = vpack.c.bf16 %v6496, %v6495
      %v8233 = vpack.c.bf16 %v6498, %v6497
      %v8234 = vpack.c.bf16 %v6500, %v6499
      %v8235 = vpack.c.bf16 %v6502, %v6501
      %v8236 = vpack.c.bf16 %v8173, %v8172
      %v8237 = vpack.c.bf16 %v8175, %v8174
      %v8238 = vpack.c.bf16 %v8177, %v8176
      %v8239 = vpack.c.bf16 %v8179, %v8178
      %v8240 = vpack.c.bf16 %v8181, %v8180
      %v8241 = vpack.c.bf16 %v8183, %v8182
      %v8242 = vpack.c.bf16 %v8185, %v8184
      %v8243 = vpack.c.bf16 %v8187, %v8186
      %v8244 = vpack.c.bf16 %v8189, %v8188
      %v8245 = vpack.c.bf16 %v8191, %v8190
      %v8246 = vpack.c.bf16 %v8193, %v8192
      %v8247 = vpack.c.bf16 %v8195, %v8194
      %v8248 = vpack.c.bf16 %v8197, %v8196
      %v8249 = vpack.c.bf16 %v8199, %v8198
      %v8250 = vpack.c.bf16 %v8201, %v8200
      %v8251 = vpack.c.bf16 %v8203, %v8202
      %v8252 = vld [vmem:[%s6743 + $0x180] sm:$0xf]
      %v8253 = vld [vmem:[%s6743 + $0x184] sm:$0xf]
      %v8254 = vld [vmem:[%s6743 + $0x188] sm:$0xf]
      %v8255 = vld [vmem:[%s6743 + $0x18c] sm:$0xf]
      %v8256 = vld [vmem:[%s6743 + $0x190] sm:$0xf]
      %v8257 = vld [vmem:[%s6743 + $0x194] sm:$0xf]
      %v8258 = vld [vmem:[%s6743 + $0x198] sm:$0xf]
      %v8259 = vld [vmem:[%s6743 + $0x19c] sm:$0xf]
      %v8260 = vld [vmem:[%s6743 + $0x1a0] sm:$0xf]
      %v8261 = vld [vmem:[%s6743 + $0x1a4] sm:$0xf]
      %v8262 = vld [vmem:[%s6743 + $0x1a8] sm:$0xf]
      %v8263 = vld [vmem:[%s6743 + $0x1ac] sm:$0xf]
      %v8264 = vld [vmem:[%s6743 + $0x1b0] sm:$0xf]
      %v8265 = vld [vmem:[%s6743 + $0x1b4] sm:$0xf]
      %v8266 = vld [vmem:[%s6743 + $0x1b8] sm:$0xf]
      %v8267 = vld [vmem:[%s6743 + $0x1bc] sm:$0xf]
      %v8268 = vld [vmem:[%s6743 + $0x1c0] sm:$0xf]
      %v8269 = vld [vmem:[%s6743 + $0x1c4] sm:$0xf]
      %v8270 = vld [vmem:[%s6743 + $0x1c8] sm:$0xf]
      %v8271 = vld [vmem:[%s6743 + $0x1cc] sm:$0xf]
      %v8272 = vld [vmem:[%s6743 + $0x1d0] sm:$0xf]
      %v8273 = vld [vmem:[%s6743 + $0x1d4] sm:$0xf]
      %v8274 = vld [vmem:[%s6743 + $0x1d8] sm:$0xf]
      %v8275 = vld [vmem:[%s6743 + $0x1dc] sm:$0xf]
      %v8276 = vld [vmem:[%s6743 + $0x1e0] sm:$0xf]
      %v8277 = vld [vmem:[%s6743 + $0x1e4] sm:$0xf]
      %v8278 = vld [vmem:[%s6743 + $0x1e8] sm:$0xf]
      %v8279 = vld [vmem:[%s6743 + $0x1ec] sm:$0xf]
      %v8280 = vld [vmem:[%s6743 + $0x1f0] sm:$0xf]
      %v8281 = vld [vmem:[%s6743 + $0x1f4] sm:$0xf]
      %v8282 = vld [vmem:[%s6743 + $0x1f8] sm:$0xf]
      %v8283 = vld [vmem:[%s6743 + $0x1fc] sm:$0xf]
      %v8284 = vld [vmem:[%s6743 + $0x200] sm:$0xf]
      %v8285 = vld [vmem:[%s6743 + $0x204] sm:$0xf]
      %v8286 = vld [vmem:[%s6743 + $0x208] sm:$0xf]
      %v8287 = vld [vmem:[%s6743 + $0x20c] sm:$0xf]
      %v8288 = vld [vmem:[%s6743 + $0x210] sm:$0xf]
      %v8289 = vld [vmem:[%s6743 + $0x214] sm:$0xf]
      %v8290 = vld [vmem:[%s6743 + $0x218] sm:$0xf]
      %v8291 = vld [vmem:[%s6743 + $0x21c] sm:$0xf]
      %v8292 = vld [vmem:[%s6743 + $0x220] sm:$0xf]
      %v8293 = vld [vmem:[%s6743 + $0x224] sm:$0xf]
      %v8294 = vld [vmem:[%s6743 + $0x228] sm:$0xf]
      %v8295 = vld [vmem:[%s6743 + $0x22c] sm:$0xf]
      %v8296 = vld [vmem:[%s6743 + $0x230] sm:$0xf]
      %v8297 = vld [vmem:[%s6743 + $0x234] sm:$0xf]
      %v8298 = vld [vmem:[%s6743 + $0x238] sm:$0xf]
      %v8299 = vld [vmem:[%s6743 + $0x23c] sm:$0xf]
      %v8348 = vunpack.c.l.b16 %v8252
      %v8349 = vunpack.c.l.b16 %v8253
      %v8350 = vunpack.c.l.b16 %v8254
      %v8351 = vunpack.c.l.b16 %v8255
      %v8352 = vunpack.c.l.b16 %v8256
      %v8353 = vunpack.c.l.b16 %v8257
      %v8354 = vunpack.c.l.b16 %v8258
      %v8355 = vunpack.c.l.b16 %v8259
      %v8356 = vunpack.c.l.b16 %v8260
      %v8357 = vunpack.c.l.b16 %v8261
      %v8358 = vunpack.c.l.b16 %v8262
      %v8359 = vunpack.c.l.b16 %v8263
      %v8360 = vunpack.c.l.b16 %v8264
      %v8361 = vunpack.c.l.b16 %v8265
      %v8362 = vunpack.c.l.b16 %v8266
      %v8363 = vunpack.c.l.b16 %v8267
      %v8364 = vunpack.c.l.b16 %v8268
      %v8365 = vunpack.c.l.b16 %v8269
      %v8366 = vunpack.c.l.b16 %v8270
      %v8367 = vunpack.c.l.b16 %v8271
      %v8368 = vunpack.c.l.b16 %v8272
      %v8369 = vunpack.c.l.b16 %v8273
      %v8370 = vunpack.c.l.b16 %v8274
      %v8371 = vunpack.c.l.b16 %v8275
      %v8372 = vunpack.c.l.b16 %v8276
      %v8373 = vunpack.c.l.b16 %v8277
      %v8374 = vunpack.c.l.b16 %v8278
      %v8375 = vunpack.c.l.b16 %v8279
      %v8376 = vunpack.c.l.b16 %v8280
      %v8377 = vunpack.c.l.b16 %v8281
      %v8378 = vunpack.c.l.b16 %v8282
      %v8379 = vunpack.c.l.b16 %v8283
      %v8380 = vunpack.c.l.b16 %v8284
      %v8381 = vunpack.c.l.b16 %v8285
      %v8382 = vunpack.c.l.b16 %v8286
      %v8383 = vunpack.c.l.b16 %v8287
      %v8384 = vunpack.c.l.b16 %v8288
      %v8385 = vunpack.c.l.b16 %v8289
      %v8386 = vunpack.c.l.b16 %v8290
      %v8387 = vunpack.c.l.b16 %v8291
      %v8388 = vunpack.c.l.b16 %v8292
      %v8389 = vunpack.c.l.b16 %v8293
      %v8390 = vunpack.c.l.b16 %v8294
      %v8391 = vunpack.c.l.b16 %v8295
      %v8392 = vunpack.c.l.b16 %v8296
      %v8393 = vunpack.c.l.b16 %v8297
      %v8394 = vunpack.c.l.b16 %v8298
      %v8395 = vunpack.c.l.b16 %v8299
      %v8396 = vpack.c.b16 %v8349, %v8348
      %v8397 = vpack.c.b16 %v8351, %v8350
      %v8398 = vpack.c.b16 %v8353, %v8352
      %v8399 = vpack.c.b16 %v8355, %v8354
      %v8400 = vpack.c.b16 %v8357, %v8356
      %v8401 = vpack.c.b16 %v8359, %v8358
      %v8402 = vpack.c.b16 %v8361, %v8360
      %v8403 = vpack.c.b16 %v8363, %v8362
      %v8404 = vpack.c.b16 %v8365, %v8364
      %v8405 = vpack.c.b16 %v8367, %v8366
      %v8406 = vpack.c.b16 %v8369, %v8368
      %v8407 = vpack.c.b16 %v8371, %v8370
      %v8408 = vpack.c.b16 %v8373, %v8372
      %v8409 = vpack.c.b16 %v8375, %v8374
      %v8410 = vpack.c.b16 %v8377, %v8376
      %v8411 = vpack.c.b16 %v8379, %v8378
      %v8412 = vpack.c.b16 %v8381, %v8380
      %v8413 = vpack.c.b16 %v8383, %v8382
      %v8414 = vpack.c.b16 %v8385, %v8384
      %v8415 = vpack.c.b16 %v8387, %v8386
      %v8416 = vpack.c.b16 %v8389, %v8388
      %v8417 = vpack.c.b16 %v8391, %v8390
      %v8418 = vpack.c.b16 %v8393, %v8392
      %v8419 = vpack.c.b16 %v8395, %v8394
      %8444 = vmatprep.subr.bf16.mxu0 0
      %8445 = vmatpush1.bf16.msra.mxu0 %v8396
      %8446 = vmatprep.subr.bf16.mxu0 0
      %8447 = vmatpush1.bf16.msra.mxu0 %v8397
      %8448 = vmatprep.subr.bf16.mxu0 0
      %8449 = vmatpush1.bf16.msra.mxu0 %v8398
      %8450 = vmatprep.subr.bf16.mxu0 0
      %8451 = vmatpush1.bf16.msra.mxu0 %v8399
      %8452 = vmatprep.subr.bf16.mxu0 0
      %8453 = vmatpush1.bf16.msra.mxu0 %v8400
      %8454 = vmatprep.subr.bf16.mxu0 0
      %8455 = vmatpush1.bf16.msra.mxu0 %v8401
      %8456 = vmatprep.subr.bf16.mxu0 0
      %8457 = vmatpush1.bf16.msra.mxu0 %v8402
      %8458 = vmatprep.subr.bf16.mxu0 0
      %8459 = vmatpush1.bf16.msra.mxu0 %v8403
      %8460 = vmatprep.subr.bf16.mxu0 0
      %8461 = vmatpush1.bf16.msra.mxu0 %v8404
      %8462 = vmatprep.subr.bf16.mxu0 0
      %8463 = vmatpush1.bf16.msra.mxu0 %v8405
      %8464 = vmatprep.subr.bf16.mxu0 0
      %8465 = vmatpush1.bf16.msra.mxu0 %v8406
      %8466 = vmatprep.subr.bf16.mxu0 0
      %8467 = vmatpush1.bf16.msra.mxu0 %v8407
      %8468 = vmatprep.subr.bf16.mxu0 0
      %8469 = vmatpush1.bf16.msra.mxu0 %v8408
      %8470 = vmatprep.subr.bf16.mxu0 0
      %8471 = vmatpush1.bf16.msra.mxu0 %v8409
      %8472 = vmatprep.subr.bf16.mxu0 0
      %8473 = vmatpush1.bf16.msra.mxu0 %v8410
      %8474 = vmatprep.subr.bf16.mxu0 0
      %8475 = vmatpush1.bf16.msra.mxu0 %v8411
      %8476 = vmatprep.mubr.bf16.mxu0 %v8220
      %8477 = vmatmul.mubr.bf16.gmra.mrb[0].mxu0 %v8204
      %v8478 = vpop.f32.mrb[0].mxu0
      %v8479 = vadd.f32 0.0, %v8478
      %v8480 = vpop.f32.mrb[0].mxu0
      %v8481 = vpop.f32.mrb[0].mxu0
      %v8482 = vadd.f32 0.0, %v8481
      %v8483 = vpop.f32.mrb[0].mxu0
      %8484 = vmatprep.mubr.bf16.mxu0 %v8221
      %8485 = vmatmul.mubr.bf16.gmra.mrb[0].mxu0 %v8205
      %v8486 = vpop.f32.mrb[0].mxu0
      %v8487 = vadd.f32 0.0, %v8486
      %v8488 = vpop.f32.mrb[0].mxu0
      %v8489 = vpop.f32.mrb[0].mxu0
      %v8490 = vadd.f32 0.0, %v8489
      %v8491 = vpop.f32.mrb[0].mxu0
      %8492 = vmatprep.mubr.bf16.mxu0 %v8222
      %8493 = vmatmul.mubr.bf16.gmra.mrb[0].mxu0 %v8206
      %v8494 = vpop.f32.mrb[0].mxu0
      %v8495 = vadd.f32 0.0, %v8494
      %v8496 = vpop.f32.mrb[0].mxu0
      %v8497 = vpop.f32.mrb[0].mxu0
      %v8498 = vadd.f32 0.0, %v8497
      %v8499 = vpop.f32.mrb[0].mxu0
      %8500 = vmatprep.mubr.bf16.mxu0 %v8223
      %8501 = vmatmul.mubr.bf16.gmra.mrb[0].mxu0 %v8207
      %v8502 = vpop.f32.mrb[0].mxu0
      %v8503 = vadd.f32 0.0, %v8502
      %v8504 = vpop.f32.mrb[0].mxu0
      %v8505 = vpop.f32.mrb[0].mxu0
      %v8506 = vadd.f32 0.0, %v8505
      %v8507 = vpop.f32.mrb[0].mxu0
      %8508 = vmatprep.mubr.bf16.mxu0 %v8224
      %8509 = vmatmul.mubr.bf16.gmra.mrb[0].mxu0 %v8208
      %v8510 = vpop.f32.mrb[0].mxu0
      %v8511 = vadd.f32 0.0, %v8510
      %v8512 = vpop.f32.mrb[0].mxu0
      %v8513 = vpop.f32.mrb[0].mxu0
      %v8514 = vadd.f32 0.0, %v8513
      %v8515 = vpop.f32.mrb[0].mxu0
      %8516 = vmatprep.mubr.bf16.mxu0 %v8225
      %8517 = vmatmul.mubr.bf16.gmra.mrb[0].mxu0 %v8209
      %v8518 = vpop.f32.mrb[0].mxu0
      %v8519 = vadd.f32 0.0, %v8518
      %v8520 = vpop.f32.mrb[0].mxu0
      %v8521 = vpop.f32.mrb[0].mxu0
      %v8522 = vadd.f32 0.0, %v8521
      %v8523 = vpop.f32.mrb[0].mxu0
      %8524 = vmatprep.mubr.bf16.mxu0 %v8226
      %8525 = vmatmul.mubr.bf16.gmra.mrb[0].mxu0 %v8210
      %v8526 = vpop.f32.mrb[0].mxu0
      %v8527 = vadd.f32 0.0, %v8526
      %v8528 = vpop.f32.mrb[0].mxu0
      %v8529 = vpop.f32.mrb[0].mxu0
      %v8530 = vadd.f32 0.0, %v8529
      %v8531 = vpop.f32.mrb[0].mxu0
      %8532 = vmatprep.mubr.bf16.mxu0 %v8227
      %8533 = vmatmul.mubr.bf16.gmra.mrb[0].mxu0 %v8211
      %v8534 = vpop.f32.mrb[0].mxu0
      %v8535 = vadd.f32 0.0, %v8534
      %v8536 = vpop.f32.mrb[0].mxu0
      %v8537 = vpop.f32.mrb[0].mxu0
      %v8538 = vadd.f32 0.0, %v8537
      %v8539 = vpop.f32.mrb[0].mxu0
      %8540 = vmatprep.mubr.bf16.mxu0 %v8228
      %8541 = vmatmul.mubr.bf16.gmra.mrb[0].mxu0 %v8212
      %v8542 = vpop.f32.mrb[0].mxu0
      %v8543 = vadd.f32 0.0, %v8542
      %v8544 = vpop.f32.mrb[0].mxu0
      %v8545 = vpop.f32.mrb[0].mxu0
      %v8546 = vadd.f32 0.0, %v8545
      %v8547 = vpop.f32.mrb[0].mxu0
      %8548 = vmatprep.mubr.bf16.mxu0 %v8229
      %8549 = vmatmul.mubr.bf16.gmra.mrb[0].mxu0 %v8213
      %v8550 = vpop.f32.mrb[0].mxu0
      %v8551 = vadd.f32 0.0, %v8550
      %v8552 = vpop.f32.mrb[0].mxu0
      %v8553 = vpop.f32.mrb[0].mxu0
      %v8554 = vadd.f32 0.0, %v8553
      %v8555 = vpop.f32.mrb[0].mxu0
      %8556 = vmatprep.mubr.bf16.mxu0 %v8230
      %8557 = vmatmul.mubr.bf16.gmra.mrb[0].mxu0 %v8214
      %v8558 = vpop.f32.mrb[0].mxu0
      %v8559 = vadd.f32 0.0, %v8558
      %v8560 = vpop.f32.mrb[0].mxu0
      %v8561 = vpop.f32.mrb[0].mxu0
      %v8562 = vadd.f32 0.0, %v8561
      %v8563 = vpop.f32.mrb[0].mxu0
      %8564 = vmatprep.mubr.bf16.mxu0 %v8231
      %8565 = vmatmul.mubr.bf16.gmra.mrb[0].mxu0 %v8215
      %v8566 = vpop.f32.mrb[0].mxu0
      %v8567 = vadd.f32 0.0, %v8566
      %v8568 = vpop.f32.mrb[0].mxu0
      %v8569 = vpop.f32.mrb[0].mxu0
      %v8570 = vadd.f32 0.0, %v8569
      %v8571 = vpop.f32.mrb[0].mxu0
      %8572 = vmatprep.mubr.bf16.mxu0 %v8232
      %8573 = vmatmul.mubr.bf16.gmra.mrb[0].mxu0 %v8216
      %v8574 = vpop.f32.mrb[0].mxu0
      %v8575 = vadd.f32 0.0, %v8574
      %v8576 = vpop.f32.mrb[0].mxu0
      %v8577 = vpop.f32.mrb[0].mxu0
      %v8578 = vadd.f32 0.0, %v8577
      %v8579 = vpop.f32.mrb[0].mxu0
      %8580 = vmatprep.mubr.bf16.mxu0 %v8233
      %8581 = vmatmul.mubr.bf16.gmra.mrb[0].mxu0 %v8217
      %v8582 = vpop.f32.mrb[0].mxu0
      %v8583 = vadd.f32 0.0, %v8582
      %v8584 = vpop.f32.mrb[0].mxu0
      %v8585 = vpop.f32.mrb[0].mxu0
      %v8586 = vadd.f32 0.0, %v8585
      %v8587 = vpop.f32.mrb[0].mxu0
      %8588 = vmatprep.mubr.bf16.mxu0 %v8234
      %8589 = vmatmul.mubr.bf16.gmra.mrb[0].mxu0 %v8218
      %v8590 = vpop.f32.mrb[0].mxu0
      %v8591 = vadd.f32 0.0, %v8590
      %v8592 = vpop.f32.mrb[0].mxu0
      %v8593 = vpop.f32.mrb[0].mxu0
      %v8594 = vadd.f32 0.0, %v8593
      %v8595 = vpop.f32.mrb[0].mxu0
      %8596 = vmatprep.mubr.bf16.mxu0 %v8235
      %8597 = vmatmul.mubr.bf16.gmra.mrb[0].mxu0 %v8219
      %v8598 = vpop.f32.mrb[0].mxu0
      %v8599 = vadd.f32 0.0, %v8598
      %v8600 = vpop.f32.mrb[0].mxu0
      %v8601 = vpop.f32.mrb[0].mxu0
      %v8602 = vadd.f32 0.0, %v8601
      %v8603 = vpop.f32.mrb[0].mxu0
      %8604 = vdwg.mxu0
      %8605 = vmatprep.subr.bf16.mxu0 0
      %8606 = vmatpush1.bf16.msra.mxu0 %v8412
      %8607 = vmatprep.subr.bf16.mxu0 0
      %8608 = vmatpush1.bf16.msra.mxu0 %v8413
      %8609 = vmatprep.subr.bf16.mxu0 0
      %8610 = vmatpush1.bf16.msra.mxu0 %v8414
      %8611 = vmatprep.subr.bf16.mxu0 0
      %8612 = vmatpush1.bf16.msra.mxu0 %v8415
      %8613 = vmatprep.subr.bf16.mxu0 0
      %8614 = vmatpush1.bf16.msra.mxu0 %v8416
      %8615 = vmatprep.subr.bf16.mxu0 0
      %8616 = vmatpush1.bf16.msra.mxu0 %v8417
      %8617 = vmatprep.subr.bf16.mxu0 0
      %8618 = vmatpush1.bf16.msra.mxu0 %v8418
      %8619 = vmatprep.subr.bf16.mxu0 0
      %8620 = vmatpush1.bf16.msra.mxu0 %v8419
      %8621 = vmatprep.subr.bf16.mxu0 0
      %8622 = vmatpush1.bf16.msra.mxu0 0
      %8623 = vmatprep.subr.bf16.mxu0 0
      %8624 = vmatpush1.bf16.msra.mxu0 0
      %8625 = vmatprep.subr.bf16.mxu0 0
      %8626 = vmatpush1.bf16.msra.mxu0 0
      %8627 = vmatprep.subr.bf16.mxu0 0
      %8628 = vmatpush1.bf16.msra.mxu0 0
      %8629 = vmatprep.subr.bf16.mxu0 0
      %8630 = vmatpush1.bf16.msra.mxu0 0
      %8631 = vmatprep.subr.bf16.mxu0 0
      %8632 = vmatpush1.bf16.msra.mxu0 0
      %8633 = vmatprep.subr.bf16.mxu0 0
      %8634 = vmatpush1.bf16.msra.mxu0 0
      %8635 = vmatprep.subr.bf16.mxu0 0
      %8636 = vmatpush1.bf16.msra.mxu0 0
      %8637 = vmatprep.mubr.bf16.mxu0 0
      %8638 = vmatmul.mubr.bf16.gmra.mrb[0].mxu0 %v8236
      %v8639 = vpop.f32.mrb[0].mxu0
      %v8640 = vadd.f32 %v8479, %v8639
      %v8641 = vpop.f32.mrb[0].mxu0
      %v8642 = vpop.f32.mrb[0].mxu0
      %v8643 = vadd.f32 %v8482, %v8642
      %v8644 = vpop.f32.mrb[0].mxu0
      %8645 = vmatprep.mubr.bf16.mxu0 0
      %8646 = vmatmul.mubr.bf16.gmra.mrb[0].mxu0 %v8237
      %v8647 = vpop.f32.mrb[0].mxu0
      %v8648 = vadd.f32 %v8487, %v8647
      %v8649 = vpop.f32.mrb[0].mxu0
      %v8650 = vpop.f32.mrb[0].mxu0
      %v8651 = vadd.f32 %v8490, %v8650
      %v8652 = vpop.f32.mrb[0].mxu0
      %8653 = vmatprep.mubr.bf16.mxu0 0
      %8654 = vmatmul.mubr.bf16.gmra.mrb[0].mxu0 %v8238
      %v8655 = vpop.f32.mrb[0].mxu0
      %v8656 = vadd.f32 %v8495, %v8655
      %v8657 = vpop.f32.mrb[0].mxu0
      %v8658 = vpop.f32.mrb[0].mxu0
      %v8659 = vadd.f32 %v8498, %v8658
      %v8660 = vpop.f32.mrb[0].mxu0
      %8661 = vmatprep.mubr.bf16.mxu0 0
      %8662 = vmatmul.mubr.bf16.gmra.mrb[0].mxu0 %v8239
      %v8663 = vpop.f32.mrb[0].mxu0
      %v8664 = vadd.f32 %v8503, %v8663
      %v8665 = vpop.f32.mrb[0].mxu0
      %v8666 = vpop.f32.mrb[0].mxu0
      %v8667 = vadd.f32 %v8506, %v8666
      %v8668 = vpop.f32.mrb[0].mxu0
      %8669 = vmatprep.mubr.bf16.mxu0 0
      %8670 = vmatmul.mubr.bf16.gmra.mrb[0].mxu0 %v8240
      %v8671 = vpop.f32.mrb[0].mxu0
      %v8672 = vadd.f32 %v8511, %v8671
      %v8673 = vpop.f32.mrb[0].mxu0
      %v8674 = vpop.f32.mrb[0].mxu0
      %v8675 = vadd.f32 %v8514, %v8674
      %v8676 = vpop.f32.mrb[0].mxu0
      %8677 = vmatprep.mubr.bf16.mxu0 0
      %8678 = vmatmul.mubr.bf16.gmra.mrb[0].mxu0 %v8241
      %v8679 = vpop.f32.mrb[0].mxu0
      %v8680 = vadd.f32 %v8519, %v8679
      %v8681 = vpop.f32.mrb[0].mxu0
      %v8682 = vpop.f32.mrb[0].mxu0
      %v8683 = vadd.f32 %v8522, %v8682
      %v8684 = vpop.f32.mrb[0].mxu0
      %8685 = vmatprep.mubr.bf16.mxu0 0
      %8686 = vmatmul.mubr.bf16.gmra.mrb[0].mxu0 %v8242
      %v8687 = vpop.f32.mrb[0].mxu0
      %v8688 = vadd.f32 %v8527, %v8687
      %v8689 = vpop.f32.mrb[0].mxu0
      %v8690 = vpop.f32.mrb[0].mxu0
      %v8691 = vadd.f32 %v8530, %v8690
      %v8692 = vpop.f32.mrb[0].mxu0
      %8693 = vmatprep.mubr.bf16.mxu0 0
      %8694 = vmatmul.mubr.bf16.gmra.mrb[0].mxu0 %v8243
      %v8695 = vpop.f32.mrb[0].mxu0
      %v8696 = vadd.f32 %v8535, %v8695
      %v8697 = vpop.f32.mrb[0].mxu0
      %v8698 = vpop.f32.mrb[0].mxu0
      %v8699 = vadd.f32 %v8538, %v8698
      %v8700 = vpop.f32.mrb[0].mxu0
      %8701 = vmatprep.mubr.bf16.mxu0 0
      %8702 = vmatmul.mubr.bf16.gmra.mrb[0].mxu0 %v8244
      %v8703 = vpop.f32.mrb[0].mxu0
      %v8704 = vadd.f32 %v8543, %v8703
      %v8705 = vpop.f32.mrb[0].mxu0
      %v8706 = vpop.f32.mrb[0].mxu0
      %v8707 = vadd.f32 %v8546, %v8706
      %v8708 = vpop.f32.mrb[0].mxu0
      %8709 = vmatprep.mubr.bf16.mxu0 0
      %8710 = vmatmul.mubr.bf16.gmra.mrb[0].mxu0 %v8245
      %v8711 = vpop.f32.mrb[0].mxu0
      %v8712 = vadd.f32 %v8551, %v8711
      %v8713 = vpop.f32.mrb[0].mxu0
      %v8714 = vpop.f32.mrb[0].mxu0
      %v8715 = vadd.f32 %v8554, %v8714
      %v8716 = vpop.f32.mrb[0].mxu0
      %8717 = vmatprep.mubr.bf16.mxu0 0
      %8718 = vmatmul.mubr.bf16.gmra.mrb[0].mxu0 %v8246
      %v8719 = vpop.f32.mrb[0].mxu0
      %v8720 = vadd.f32 %v8559, %v8719
      %v8721 = vpop.f32.mrb[0].mxu0
      %v8722 = vpop.f32.mrb[0].mxu0
      %v8723 = vadd.f32 %v8562, %v8722
      %v8724 = vpop.f32.mrb[0].mxu0
      %8725 = vmatprep.mubr.bf16.mxu0 0
      %8726 = vmatmul.mubr.bf16.gmra.mrb[0].mxu0 %v8247
      %v8727 = vpop.f32.mrb[0].mxu0
      %v8728 = vadd.f32 %v8567, %v8727
      %v8729 = vpop.f32.mrb[0].mxu0
      %v8730 = vpop.f32.mrb[0].mxu0
      %v8731 = vadd.f32 %v8570, %v8730
      %v8732 = vpop.f32.mrb[0].mxu0
      %8733 = vmatprep.mubr.bf16.mxu0 0
      %8734 = vmatmul.mubr.bf16.gmra.mrb[0].mxu0 %v8248
      %v8735 = vpop.f32.mrb[0].mxu0
      %v8736 = vadd.f32 %v8575, %v8735
      %v8737 = vpop.f32.mrb[0].mxu0
      %v8738 = vpop.f32.mrb[0].mxu0
      %v8739 = vadd.f32 %v8578, %v8738
      %v8740 = vpop.f32.mrb[0].mxu0
      %8741 = vmatprep.mubr.bf16.mxu0 0
      %8742 = vmatmul.mubr.bf16.gmra.mrb[0].mxu0 %v8249
      %v8743 = vpop.f32.mrb[0].mxu0
      %v8744 = vadd.f32 %v8583, %v8743
      %v8745 = vpop.f32.mrb[0].mxu0
      %v8746 = vpop.f32.mrb[0].mxu0
      %v8747 = vadd.f32 %v8586, %v8746
      %v8748 = vpop.f32.mrb[0].mxu0
      %8749 = vmatprep.mubr.bf16.mxu0 0
      %8750 = vmatmul.mubr.bf16.gmra.mrb[0].mxu0 %v8250
      %v8751 = vpop.f32.mrb[0].mxu0
      %v8752 = vadd.f32 %v8591, %v8751
      %v8753 = vpop.f32.mrb[0].mxu0
      %v8754 = vpop.f32.mrb[0].mxu0
      %v8755 = vadd.f32 %v8594, %v8754
      %v8756 = vpop.f32.mrb[0].mxu0
      %8757 = vmatprep.mubr.bf16.mxu0 0
      %8758 = vmatmul.mubr.bf16.gmra.mrb[0].mxu0 %v8251
      %v8759 = vpop.f32.mrb[0].mxu0
      %v8760 = vadd.f32 %v8599, %v8759
      %v8761 = vpop.f32.mrb[0].mxu0
      %v8762 = vpop.f32.mrb[0].mxu0
      %v8763 = vadd.f32 %v8602, %v8762
      %v8764 = vpop.f32.mrb[0].mxu0
      %8765 = vdwg.mxu0
      %v8766 = vadd.f32 %v7886, %v8640
      %v8767 = vadd.f32 %v7889, %v8643
      %v8768 = vadd.f32 %v7894, %v8648
      %v8769 = vadd.f32 %v7897, %v8651
      %v8770 = vadd.f32 %v7902, %v8656
      %v8771 = vadd.f32 %v7905, %v8659
      %v8772 = vadd.f32 %v7910, %v8664
      %v8773 = vadd.f32 %v7913, %v8667
      %v8774 = vadd.f32 %v7918, %v8672
      %v8775 = vadd.f32 %v7921, %v8675
      %v8776 = vadd.f32 %v7926, %v8680
      %v8777 = vadd.f32 %v7929, %v8683
      %v8778 = vadd.f32 %v7934, %v8688
      %v8779 = vadd.f32 %v7937, %v8691
      %v8780 = vadd.f32 %v7942, %v8696
      %v8781 = vadd.f32 %v7945, %v8699
      %v8782 = vadd.f32 %v7950, %v8704
      %v8783 = vadd.f32 %v7953, %v8707
      %v8784 = vadd.f32 %v7958, %v8712
      %v8785 = vadd.f32 %v7961, %v8715
      %v8786 = vadd.f32 %v7966, %v8720
      %v8787 = vadd.f32 %v7969, %v8723
      %v8788 = vadd.f32 %v7974, %v8728
      %v8789 = vadd.f32 %v7977, %v8731
      %v8790 = vadd.f32 %v7982, %v8736
      %v8791 = vadd.f32 %v7985, %v8739
      %v8792 = vadd.f32 %v7990, %v8744
      %v8793 = vadd.f32 %v7993, %v8747
      %v8794 = vadd.f32 %v7998, %v8752
      %v8795 = vadd.f32 %v8001, %v8755
      %v8796 = vadd.f32 %v8006, %v8760
      %v8797 = vadd.f32 %v8009, %v8763
      %v8798 = vld [vmem:[%s3 + $0x3] sm:$0x1]
      %v8799 = vlaneseq
      %v8800 = vshrl.u32 %v8799, 7
      %v8801 = vsub.s32 0, %v8800
      %v8802 = vrot.slane %v8798, %v8801
      %v8803 = vadd.f32 %v8766, %v8802
      %v8804 = vadd.f32 %v8767, %v8802
      %v8805 = vadd.f32 %v8768, %v8802
      %v8806 = vadd.f32 %v8769, %v8802
      %v8807 = vadd.f32 %v8770, %v8802
      %v8808 = vadd.f32 %v8771, %v8802
      %v8809 = vadd.f32 %v8772, %v8802
      %v8810 = vadd.f32 %v8773, %v8802
      %v8811 = vadd.f32 %v8774, %v8802
      %v8812 = vadd.f32 %v8775, %v8802
      %v8813 = vadd.f32 %v8776, %v8802
      %v8814 = vadd.f32 %v8777, %v8802
      %v8815 = vadd.f32 %v8778, %v8802
      %v8816 = vadd.f32 %v8779, %v8802
      %v8817 = vadd.f32 %v8780, %v8802
      %v8818 = vadd.f32 %v8781, %v8802
      %v8819 = vadd.f32 %v8782, %v8802
      %v8820 = vadd.f32 %v8783, %v8802
      %v8821 = vadd.f32 %v8784, %v8802
      %v8822 = vadd.f32 %v8785, %v8802
      %v8823 = vadd.f32 %v8786, %v8802
      %v8824 = vadd.f32 %v8787, %v8802
      %v8825 = vadd.f32 %v8788, %v8802
      %v8826 = vadd.f32 %v8789, %v8802
      %v8827 = vadd.f32 %v8790, %v8802
      %v8828 = vadd.f32 %v8791, %v8802
      %v8829 = vadd.f32 %v8792, %v8802
      %v8830 = vadd.f32 %v8793, %v8802
      %v8831 = vadd.f32 %v8794, %v8802
      %v8832 = vadd.f32 %v8795, %v8802
      %v8833 = vadd.f32 %v8796, %v8802
      %v8834 = vadd.f32 %v8797, %v8802
      %8835 = vst [vmem:[%s197] sm:$0xff] %v8803
      %8836 = vst [vmem:[%s197 + $0x8] sm:$0xff] %v8804
      %8837 = vst [vmem:[%s197 + $0x10] sm:$0xff] %v8805
      %8838 = vst [vmem:[%s197 + $0x18] sm:$0xff] %v8806
      %8839 = vst [vmem:[%s197 + $0x20] sm:$0xff] %v8807
      %8840 = vst [vmem:[%s197 + $0x28] sm:$0xff] %v8808
      %8841 = vst [vmem:[%s197 + $0x30] sm:$0xff] %v8809
      %8842 = vst [vmem:[%s197 + $0x38] sm:$0xff] %v8810
      %8843 = vst [vmem:[%s197 + $0x40] sm:$0xff] %v8811
      %8844 = vst [vmem:[%s197 + $0x48] sm:$0xff] %v8812
      %8845 = vst [vmem:[%s197 + $0x50] sm:$0xff] %v8813
      %8846 = vst [vmem:[%s197 + $0x58] sm:$0xff] %v8814
      %8847 = vst [vmem:[%s197 + $0x60] sm:$0xff] %v8815
      %8848 = vst [vmem:[%s197 + $0x68] sm:$0xff] %v8816
      %8849 = vst [vmem:[%s197 + $0x70] sm:$0xff] %v8817
      %8850 = vst [vmem:[%s197 + $0x78] sm:$0xff] %v8818
      %8851 = vst [vmem:[%s197 + $0x80] sm:$0xff] %v8819
      %8852 = vst [vmem:[%s197 + $0x88] sm:$0xff] %v8820
      %8853 = vst [vmem:[%s197 + $0x90] sm:$0xff] %v8821
      %8854 = vst [vmem:[%s197 + $0x98] sm:$0xff] %v8822
      %8855 = vst [vmem:[%s197 + $0xa0] sm:$0xff] %v8823
      %8856 = vst [vmem:[%s197 + $0xa8] sm:$0xff] %v8824
      %8857 = vst [vmem:[%s197 + $0xb0] sm:$0xff] %v8825
      %8858 = vst [vmem:[%s197 + $0xb8] sm:$0xff] %v8826
      %8859 = vst [vmem:[%s197 + $0xc0] sm:$0xff] %v8827
      %8860 = vst [vmem:[%s197 + $0xc8] sm:$0xff] %v8828
      %8861 = vst [vmem:[%s197 + $0xd0] sm:$0xff] %v8829
      %8862 = vst [vmem:[%s197 + $0xd8] sm:$0xff] %v8830
      %8863 = vst [vmem:[%s197 + $0xe0] sm:$0xff] %v8831
      %8864 = vst [vmem:[%s197 + $0xe8] sm:$0xff] %v8832
      %8865 = vst [vmem:[%s197 + $0xf0] sm:$0xff] %v8833
      %8866 = vst [vmem:[%s197 + $0xf8] sm:$0xff] %v8834
      %p8867 = scmp.lt.s32.totalorder %s15, 1
      %s8868 = scalar_select %p8867, %s15, 1
      %s8869 = smul.addr %s8868, 32
      %s8870 = smul.addr %s8869, 8
      %s8871 = scalar_lea.vmem %s4, %s8870
      // Predicated region
      $region37: #{generator_forward.1} parent=35 // pred_check
        %p8872 = pneg %p122
      $region38: #{generator_forward.1} parent=35 // pred_check_branch
        %8874 = sbr.rel (%p8872) target = $region40
      $region39: #{generator_forward.1} parent=35 // pred_region
        _
      $region40: #{generator_forward.1} parent=35 // pred_fallthru
        _
    $region36: #{generator_forward.1} parent=5 // pred_fallthru
      _
    %p8875 = scmp.le.s32.totalorder 2, %s10
    // Predicated region
    $region41: #{generator_forward.1} parent=5 // pred_check
      %p8876 = pneg %p8875
    $region42: #{generator_forward.1} parent=5 // pred_check_branch
      %8878 = sbr.rel (%p8876) target = $region44
    $region43: #{generator_forward.1} parent=5 // pred_region
      %s8879 = ssub.s32 %s10, 2
      // Predicated region
      $region45: #{generator_forward.1} parent=43 // pred_check
        %p8880 = pneg %p128
      $region46: #{generator_forward.1} parent=43 // pred_check_branch
        %8882 = sbr.rel (%p8880) target = $region48
      $region47: #{generator_forward.1} parent=43 // pred_region
        %p8883 = scmp.lt.s32.totalorder %s16, 1
        %s8884 = scalar_select %p8883, %s16, 1
        %s8885 = smul.addr %s8884, 32
        %s8886 = smul.addr %s8885, 8
        %s8887 = scalar_lea.vmem %s4, %s8886
      $region48: #{generator_forward.1} parent=43 // pred_fallthru
        _
    $region44: #{generator_forward.1} parent=5 // pred_fallthru
      _
  $region6: #{generator_forward.1} parent=0 // loop_footer
    %s14 = sadd.s32 1, %s10
  $region7: #{generator_forward.1} parent=0 // loop_footer_branch
    %9 = sbr.rel target = $region3
  $region8: #{generator_forward.1} parent=0 // loop_exit
    _

</llo_original>
